<compile_context>
chip_gen: v7x
topology: tpu7x:2x2x1
jax: 0.10.0
libtpu: 0.0.40
codegen_flags: <defaults>
</compile_context>

<pallas_src>
import math

import jax
import jax.numpy as jnp
from jax.experimental import pallas as pl
from jax.experimental.pallas import tpu as pltpu

# Model hyper-parameters (PyTorch module defaults).
HIDDEN = 32                 # hidden_dim
NUM_HEADS = 8
HEAD_DIM = HIDDEN // NUM_HEADS
FF_DIM = HIDDEN * 4         # TransformerEncoderLayer dim_feedforward / FFN ratio=4
NUM_UNI_LAYERS = 2          # nn.TransformerEncoder(num_layers=2)
NUM_TOKENS = 4              # BottleneckTransformer num_tokens
LN_EPS = 1e-5

H2 = 2 * HIDDEN             # fused [vid | aud] lane width
NH2 = 2 * NUM_HEADS         # heads of a fused (dual) attention
_PACK_LANES = 256


# ---------------------------------------------------------------------------
# Parameter packing: many tiny tensors -> two flat (rows, 256) buffers.
# ---------------------------------------------------------------------------
class _Packer:
    """Packs small 2-D params into one (rows, _PACK_LANES) buffer with aligned offsets."""

    def __init__(self, dtype, row_align):
        self.dtype = dtype
        self.row_align = row_align
        self.blocks = []
        self.index = {}
        self.rows = 0

    def add(self, name, arr):
        arr = jnp.asarray(arr, jnp.float32)
        if arr.ndim == 1:
            arr = arr[None, :]
        r, c = arr.shape
        assert c <= _PACK_LANES, name
        r_pad = ((r + self.row_align - 1) // self.row_align) * self.row_align
        blk = jnp.pad(arr, ((0, r_pad - r), (0, _PACK_LANES - c))).astype(self.dtype)
        self.blocks.append(blk)
        self.index[name] = (self.rows, r, c)
        self.rows += r_pad

    def finalize(self):
        return jnp.concatenate(self.blocks, axis=0), dict(self.index)


def sinusoidal_pe(length, dims):
    pos = jnp.arange(length, dtype=jnp.float32)[:, None]
    div = jnp.exp(jnp.arange(0, dims, 2, dtype=jnp.float32)
                  * (-math.log(10000.0) / dims))
    pe = jnp.zeros((length, dims), jnp.float32)
    pe = pe.at[:, 0::2].set(jnp.sin(pos * div))
    pe = pe.at[:, 1::2].set(jnp.cos(pos * div))
    return pe


def _block_diag(a, b):
    a = jnp.asarray(a, jnp.float32)
    b = jnp.asarray(b, jnp.float32)
    ra, ca = a.shape
    rb, cb = b.shape
    out = jnp.zeros((ra + rb, ca + cb), jnp.float32)
    return out.at[:ra, :ca].set(a).at[ra:, ca:].set(b)


def _split_qkv(m):
    wq, wk, wv = [w.T for w in jnp.split(m["in_w"], 3, axis=0)]   # (in, out) each
    bq, bk, bv = jnp.split(m["in_b"], 3)
    return wq, wk, wv, bq, bk, bv


def pack_params(params, S):
    """Build the bf16 matmul-weight buffer and the f32 vector-param buffer."""
    wp = _Packer(jnp.bfloat16, 16)   # pre-transposed (in, out) MXU weights
    vp = _Packer(jnp.float32, 8)     # biases / LN params / PEs / tokens

    pe = sinusoidal_pe(S, HIDDEN)
    scale = 1.0 / math.sqrt(HEAD_DIM)

    # ---- fused (vid | aud) uni-modal encoders: block-diagonal weights ----------
    uv, ua = params["vid"], params["aud"]
    wp.add("u_map", _block_diag(uv["map"]["w"].T, ua["map"]["w"].T))          # (Din, 64)
    vp.add("u_pe", jnp.concatenate([pe + uv["map"]["b"][None, :],
                                    pe + ua["map"]["b"][None, :]], axis=1))   # (S, 64)
    for l in range(NUM_UNI_LAYERS):
        lv, la = uv["layers"][l], ua["layers"][l]
        wqv, wkv_, wvv, bqv, bkv_, bvv = _split_qkv(lv["attn"])
        wqa, wka, wva, bqa, bka, bva = _split_qkv(la["attn"])
        wp.add(f"u{l}_wqkv", jnp.concatenate(
            [_block_diag(wqv * scale, wqa * scale),      # 1/sqrt(hd) folded into q
             _block_diag(wkv_, wka),
             _block_diag(wvv, wva)], axis=1))                                 # (64, 192)
        vp.add(f"u{l}_bqkv", jnp.concatenate(
            [bqv * scale, bqa * scale, bkv_, bka, bvv, bva])[None, :])
        wp.add(f"u{l}_wo", _block_diag(lv["attn"]["out_w"].T, la["attn"]["out_w"].T))
        vp.add(f"u{l}_bo",
               jnp.concatenate([lv["attn"]["out_b"], la["attn"]["out_b"]])[None, :])
        wp.add(f"u{l}_w1", _block_diag(lv["ff1"]["w"].T, la["ff1"]["w"].T))   # (64, 256)
        vp.add(f"u{l}_b1", jnp.concatenate([lv["ff1"]["b"], la["ff1"]["b"]])[None, :])
        wp.add(f"u{l}_w2", _block_diag(lv["ff2"]["w"].T, la["ff2"]["w"].T))   # (256, 64)
        vp.add(f"u{l}_b2", jnp.concatenate([lv["ff2"]["b"], la["ff2"]["b"]])[None, :])
        vp.add(f"u{l}_ln1", jnp.stack(
            [jnp.concatenate([lv["ln1"]["w"], la["ln1"]["w"]]),
             jnp.concatenate([lv["ln1"]["b"], la["ln1"]["b"]])]))
        vp.add(f"u{l}_ln2", jnp.stack(
            [jnp.concatenate([lv["ln2"]["w"], la["ln2"]["w"]]),
             jnp.concatenate([lv["ln2"]["b"], la["ln2"]["b"]])]))
    vp.add("u_norm", jnp.stack(
        [jnp.concatenate([uv["norm"]["w"], ua["norm"]["w"]]),
         jnp.concatenate([uv["norm"]["b"], ua["norm"]["b"]])]))

    # ---- CrossModalEncoder / BottleneckTransformer (attention pairs fused) -----
    c = params["cross"]
    token = jnp.zeros((S, HIDDEN), jnp.float32).at[:NUM_TOKENS].set(c["token"])
    vp.add("c_token", token)                     # tokens zero-padded to S rows
    n = c["norms"]
    vp.add("c_n01", jnp.stack([jnp.concatenate([n[0]["w"], n[1]["w"]]),
                               jnp.concatenate([n[0]["b"], n[1]["b"]])]))
    vp.add("c_n2", jnp.stack([n[2]["w"], n[2]["b"]]))
    vp.add("c_n3", jnp.stack([n[3]["w"], n[3]["b"]]))
    vp.add("c_n45", jnp.stack([jnp.concatenate([n[4]["w"], n[5]["w"]]),
                               jnp.concatenate([n[4]["b"], n[5]["b"]])]))
    vp.add("c_norm", jnp.stack([c["norm"]["w"], c["norm"]["b"]]))

    a1, a2, a3, a4 = c["att"]
    # att1 + att2 : queries = token stream, keys = da+pe / db+pe, values = da / db
    wq1, wk1, wv1, bq1, bk1, bv1 = _split_qkv(a1)
    wq2, wk2, wv2, bq2, bk2, bv2 = _split_qkv(a2)
    wp.add("c_a12_wq", jnp.concatenate([wq1 * scale, wq2 * scale], axis=1))   # (32, 64)
    vp.add("c_a12_bq", jnp.concatenate([bq1 * scale, bq2 * scale])[None, :])
    wkv12 = jnp.zeros((H2, 2 * H2), jnp.float32)          # input [da|db] -> [k1|k2|v1|v2]
    wkv12 = wkv12.at[:HIDDEN, 0:HIDDEN].set(wk1)
    wkv12 = wkv12.at[HIDDEN:, HIDDEN:H2].set(wk2)
    wkv12 = wkv12.at[:HIDDEN, H2:H2 + HIDDEN].set(wv1)
    wkv12 = wkv12.at[HIDDEN:, H2 + HIDDEN:].set(wv2)
    wp.add("c_a12_wkv", wkv12)                                                # (64, 128)
    vp.add("c_a12_bkv", jnp.concatenate([bk1, bk2, bv1, bv2])[None, :])
    vp.add("c_a12_pek", jnp.concatenate(                   # pe folded into the key bias
        [pe @ wk1, pe @ wk2, jnp.zeros((S, H2), jnp.float32)], axis=1))       # (S, 128)
    wp.add("c_a12_wo", _block_diag(a1["out_w"].T, a2["out_w"].T))
    vp.add("c_a12_bo", jnp.concatenate([a1["out_b"], a2["out_b"]])[None, :])
    # att3 + att4 : queries = da+pe / db+pe, keys = values = token stream
    wq3, wk3, wv3, bq3, bk3, bv3 = _split_qkv(a3)
    wq4, wk4, wv4, bq4, bk4, bv4 = _split_qkv(a4)
    wp.add("c_a34_wq", _block_diag(wq3 * scale, wq4 * scale))                 # (64, 64)
    vp.add("c_a34_bq", jnp.concatenate([bq3 * scale, bq4 * scale])[None, :])
    vp.add("c_a34_peq", jnp.concatenate(                   # pe folded into the query bias
        [pe @ (wq3 * scale), pe @ (wq4 * scale)], axis=1))                    # (S, 64)
    wp.add("c_a34_wkv", jnp.concatenate([wk3, wk4, wv3, wv4], axis=1))        # (32, 128)
    vp.add("c_a34_bkv", jnp.concatenate([bk3, bk4, bv3, bv4])[None, :])
    wp.add("c_a34_wo", _block_diag(a3["out_w"].T, a4["out_w"].T))
    vp.add("c_a34_bo", jnp.concatenate([a3["out_b"], a4["out_b"]])[None, :])
    # ffn1 + ffn2 fused
    f1, f2 = c["ffn"]
    wp.add("c_ffn_w1", _block_diag(f1["fc1"]["w"].T, f2["fc1"]["w"].T))       # (64, 256)
    vp.add("c_ffn_b1", jnp.concatenate([f1["fc1"]["b"], f2["fc1"]["b"]])[None, :])
    wp.add("c_ffn_w2", _block_diag(f1["fc2"]["w"].T, f2["fc2"]["w"].T))       # (256, 64)
    vp.add("c_ffn_b2", jnp.concatenate([f1["fc2"]["b"], f2["fc2"]["b"]])[None, :])

    # 0/1 head-pooling matrices (exact in bf16): sum / expand 4-lane head groups.
    d = jnp.arange(H2)
    p2 = (d[:, None] // HEAD_DIM == jnp.arange(NH2)[None, :]).astype(jnp.float32)
    wp.add("P_head", p2)        # (64, 16)
    wp.add("P_headT", p2.T)     # (16, 64)

    wbuf, widx = wp.finalize()
    vbuf, vidx = vp.finalize()
    return wbuf, widx, vbuf, vidx


# ---------------------------------------------------------------------------
# Kernel
# ---------------------------------------------------------------------------
def make_kernel(Bt, S, Din, widx, vidx):
    L = S                              # token sequence is zero-padded to S rows

    def kernel(x_ref, w_ref, v_ref, o_ref):
        def W(name):                   # bf16 pre-transposed (in, out) weight
            off, r, c = widx[name]
            return w_ref[off:off + r, 0:c]

        def V(name):                   # f32 vector / small param
            off, r, c = vidx[name]
            return v_ref[off:off + r, 0:c]

        def mm(x, w):                  # bf16 MXU matmul, f32 accumulate
            return jnp.dot(x.astype(jnp.bfloat16), w,
                           preferred_element_type=jnp.float32)

        def ln(x, wb, groups):         # wb: (2, C) = [gamma; beta]
            gamma, beta = wb[0:1, :], wb[1:2, :]
            if groups == 1:
                mu = jnp.mean(x, axis=-1, keepdims=True)
                d = x - mu
                var = jnp.mean(d * d, axis=-1, keepdims=True)
                return d * jax.lax.rsqrt(var + LN_EPS) * gamma + beta
            # grouped LN over lane halves (per-modality), exact f32, no reshapes
            g = x.shape[-1] // groups
            lane = jax.lax.broadcasted_iota(jnp.int32, x.shape, x.ndim - 1)
            lo = lane < g
            zeros = jnp.zeros_like(x)
            s_all = jnp.sum(x, axis=-1, keepdims=True)
            s_lo = jnp.sum(jnp.where(lo, x, zeros), axis=-1, keepdims=True)
            mu = jnp.where(lo, s_lo, s_all - s_lo) * (1.0 / g)
            d = x - mu
            d2 = d * d
            v_all = jnp.sum(d2, axis=-1, keepdims=True)
            v_lo = jnp.sum(jnp.where(lo, d2, zeros), axis=-1, keepdims=True)
            var = jnp.where(lo, v_lo, v_all - v_lo) * (1.0 / g)
            return d * jax.lax.rsqrt(var + LN_EPS) * gamma + beta

        def add_rows(x2, rows):        # (Bt*L, C) + per-position bias (L, C)
            C = x2.shape[-1]
            return (x2.reshape(Bt, L, C) + rows[None, :, :]).reshape(Bt * L, C)

        p_head = W("P_head")           # (64, 16) bf16 0/1
        p_headT = W("P_headT")         # (16, 64) bf16 0/1

        def attn(q, k, v, key_len):
            """Two fused nn.MultiheadAttention's (8 heads each) on 64-lane slabs.

            q, k, v: (Bt, L, 64) f32; 1/sqrt(head_dim) already folded into q.
            """
            e = q[:, :, None, :] * k[:, None, :, :]               # (Bt,L,L,64) VPU
            s = mm(e.reshape(Bt * L * L, H2), p_head)             # per-head scores
            s = s.reshape(Bt, L, L, NH2)                          # [b, query, key, head]
            if key_len < L:                                       # mask padded keys
                kidx = jax.lax.broadcasted_iota(jnp.int32, s.shape, 2)
                s = jnp.where(kidx < key_len, s, -1e30)
            m = jnp.max(s, axis=2, keepdims=True)
            p = jnp.exp(s - m)
            den = jnp.sum(p, axis=2, keepdims=True)
            p = p * pl.reciprocal(den, approx=True)
            pw = mm(p.reshape(Bt * L * L, NH2), p_headT)          # expand to lanes
            ctx = jnp.sum(pw.reshape(Bt, L, L, H2) * v[:, None, :, :], axis=2)
            return ctx.reshape(Bt * L, H2)

        # ---------------- fused uni-modal encoders (lanes: [vid | aud]) --------
        x = x_ref[...].reshape(Bt * L, Din).astype(jnp.float32)
        h = add_rows(mm(x, W("u_map")), V("u_pe"))                # map bias folded in PE
        for l in range(NUM_UNI_LAYERS):
            u = f"u{l}"
            qkv = mm(h, W(u + "_wqkv")) + V(u + "_bqkv")          # (Bt*L, 192)
            ctx = attn(qkv[:, 0:H2].reshape(Bt, L, H2),
                       qkv[:, H2:2 * H2].reshape(Bt, L, H2),
                       qkv[:, 2 * H2:3 * H2].reshape(Bt, L, H2), L)
            h = ln(h + mm(ctx, W(u + "_wo")) + V(u + "_bo"), V(u + "_ln1"), 2)
            ff = mm(jnp.maximum(mm(h, W(u + "_w1")) + V(u + "_b1"), 0.0),
                    W(u + "_w2")) + V(u + "_b2")
            h = ln(h + ff, V(u + "_ln2"), 2)
        ab = ln(h, V("u_norm"), 2)                                # (Bt*L, 64) = [a | b]

        # ---------------- cross-modal bottleneck (1 layer, 'sum' fusion) -------
        dab = ln(ab, V("c_n01"), 2)                               # [norm1(a) | norm2(b)]
        t0 = V("c_token")                                         # (L, 32), rows>=4 zero
        dt0 = ln(t0, V("c_n2"), 1)                                # batch-independent
        q12 = mm(dt0, W("c_a12_wq")) + V("c_a12_bq")              # (L, 64) [q1 | q2]
        kv12 = add_rows(mm(dab, W("c_a12_wkv")) + V("c_a12_bkv"), V("c_a12_pek"))
        ctx12 = attn(jnp.broadcast_to(q12[None, :, :], (Bt, L, H2)),
                     kv12[:, 0:H2].reshape(Bt, L, H2),
                     kv12[:, H2:2 * H2].reshape(Bt, L, H2), L)
        atbt = mm(ctx12, W("c_a12_wo")) + V("c_a12_bo")           # (Bt*L, 64) [at | bt]
        t = (jnp.broadcast_to(t0[None, :, :], (Bt, L, HIDDEN)).reshape(Bt * L, HIDDEN)
             + atbt[:, 0:HIDDEN] + atbt[:, HIDDEN:H2])
        dt = ln(t, V("c_n3"), 1)                                  # (Bt*L, 32)
        q34 = add_rows(mm(dab, W("c_a34_wq")) + V("c_a34_bq"), V("c_a34_peq"))
        kv34 = mm(dt, W("c_a34_wkv")) + V("c_a34_bkv")            # (Bt*L, 128)
        ctx34 = attn(q34.reshape(Bt, L, H2),
                     kv34[:, 0:H2].reshape(Bt, L, H2),
                     kv34[:, H2:2 * H2].reshape(Bt, L, H2), NUM_TOKENS)
        ab = ab + mm(ctx34, W("c_a34_wo")) + V("c_a34_bo")
        dab2 = ln(ab, V("c_n45"), 2)                              # [norm5(a) | norm6(b)]
        ff = mm(jnp.maximum(mm(dab2, W("c_ffn_w1")) + V("c_ffn_b1"), 0.0),
                W("c_ffn_w2")) + V("c_ffn_b2")
        ab = ab + ff
        fused = ab[:, 0:HIDDEN] + ab[:, HIDDEN:H2]                # 'sum' fusion a + b
        out = ln(fused, V("c_norm"), 1)
        o_ref[...] = out.reshape(Bt, L, HIDDEN).astype(o_ref.dtype)

    return kernel


# ---------------------------------------------------------------------------
# Wrapper
# ---------------------------------------------------------------------------
def _num_tensorcores():
    try:
        n = getattr(pltpu.get_tpu_info(), "num_cores", None)
        if n:
            return int(n)
    except Exception:
        pass
    try:
        n = getattr(jax.devices()[0], "num_cores", None)
        if n:
            return int(n)
    except Exception:
        pass
    return 1


def _pick_grid(B, S):
    """Number of batch blocks: 1 on single-core chips unless VMEM forces a split."""
    budget = 8 * 1024 * 1024  # cap for the (Bt, S, S, 64) f32 attention intermediates

    def attn_bytes(bt):
        return 3 * bt * S * S * H2 * 4

    nb = 1
    for d in range(1, B + 1):
        if B % d == 0:
            nb = d
            if attn_bytes(B // d) <= budget:
                break
    if nb == 1 and B % 2 == 0 and _num_tensorcores() >= 2 and (B // 2) * S >= 256:
        nb = 2                          # megacore sharding (v7x) with enough MXU rows
    return nb


def umt_fusion(vid, aud, params, mask=None):
    """vid: (B, S, vid_dim), aud: (B, S, aud_dim) -> (B, S, HIDDEN) f32."""
    # TODO(synk): src_key_padding_mask path (mask != None) is not implemented.
    assert mask is None
    B, S, vid_dim = vid.shape
    Ba, Sa, aud_dim = aud.shape
    assert (Ba, Sa) == (B, S)
    assert NUM_TOKENS <= S and HIDDEN % NUM_HEADS == 0

    nb = _pick_grid(B, S)
    Bt = B // nb
    Din = vid_dim + aud_dim

    wbuf, widx, vbuf, vidx = pack_params(params, S)
    kernel = make_kernel(Bt, S, Din, widx, vidx)

    # Single lane-dense input slab [vid | aud] feeding the block-diagonal mapping.
    x = jnp.concatenate([vid.astype(jnp.float32), aud.astype(jnp.float32)], axis=-1)

    return pl.pallas_call(
        kernel,
        out_shape=jax.ShapeDtypeStruct((B, S, HIDDEN), jnp.float32),
        grid_spec=pltpu.PrefetchScalarGridSpec(
            num_scalar_prefetch=0,
            grid=(nb,),
            in_specs=[
                pl.BlockSpec((Bt, S, Din), lambda i: (i, 0, 0)),
                pl.BlockSpec(wbuf.shape, lambda i: (0, 0)),     # resident weights
                pl.BlockSpec(vbuf.shape, lambda i: (0, 0)),     # resident vectors
            ],
            out_specs=pl.BlockSpec((Bt, S, HIDDEN), lambda i: (i, 0, 0)),
        ),
        compiler_params=pltpu.CompilerParams(
            dimension_semantics=("parallel",),
            vmem_limit_bytes=32 * 1024 * 1024),
    )(x, wbuf, vbuf)


# ---------------------------------------------------------------------------
# Deterministic synthetic parameters (PyTorch layout/conventions).
# ---------------------------------------------------------------------------
def init_params(key, vid_dim, aud_dim):
    keys = iter(jax.random.split(key, 256))

    def nrm(shape, scl=0.02):
        return jax.random.normal(next(keys), shape, jnp.float32) * scl

    def lin(out_f, in_f):
        return {"w": nrm((out_f, in_f)), "b": nrm((out_f,))}

    def mha():
        return {"in_w": nrm((3 * HIDDEN, HIDDEN)), "in_b": nrm((3 * HIDDEN,)),
                "out_w": nrm((HIDDEN, HIDDEN)), "out_b": nrm((HIDDEN,))}

    def ln():
        return {"w": jnp.ones((HIDDEN,), jnp.float32),
                "b": jnp.zeros((HIDDEN,), jnp.float32)}

    def enc_layer():
        return {"attn": mha(), "ff1": lin(FF_DIM, HIDDEN),
                "ff2": lin(HIDDEN, FF_DIM), "ln1": ln(), "ln2": ln()}

    def uni(in_dim):
        return {"map": lin(HIDDEN, in_dim),
                "layers": [enc_layer() for _ in range(NUM_UNI_LAYERS)],
                "norm": ln()}

    def ffn():
        return {"fc1": lin(FF_DIM, HIDDEN), "fc2": lin(HIDDEN, FF_DIM)}

    cross = {"token": nrm((NUM_TOKENS, HIDDEN), 0.5),
             "att": [mha() for _ in range(4)],
             "ffn": [ffn() for _ in range(2)],
             "norms": [ln() for _ in range(6)],
             "norm": ln()}
    return {"vid": uni(vid_dim), "aud": uni(aud_dim), "cross": cross}


if __name__ == "__main__":
    key = jax.random.PRNGKey(0)
    pkey, vkey, akey = jax.random.split(key, 3)

    B, S, VID_DIM, AUD_DIM = 2, 8, 16, 8
    params = init_params(pkey, VID_DIM, AUD_DIM)
    vid = jax.random.normal(vkey, (B, S, VID_DIM), jnp.float32)
    aud = jax.random.normal(akey, (B, S, AUD_DIM), jnp.float32)

    out = umt_fusion(vid, aud, params)
    out = jax.block_until_ready(out)
    assert out.shape == (B, S, HIDDEN) and out.dtype == jnp.float32
    assert bool(jnp.all(jnp.isfinite(out)))
    print("KERNEL_OK")
</pallas_src>

<mosaic_0001>
module attributes {stable_mosaic.version = 11 : i64} {
  func.func @kernel(%arg0: i32, %arg1: memref<2x8x24xf32, #tpu.memory_space<vmem>>, %arg2: memref<1648x256xbf16, #tpu.memory_space<vmem>>, %arg3: memref<240x256xf32, #tpu.memory_space<vmem>>, %arg4: memref<2x8x32xf32, #tpu.memory_space<vmem>>) attributes {dimension_semantics = [#tpu.dimension_semantics<parallel>], iteration_bounds = array<i64: 1>, scalar_prefetch = 0 : i64, scratch_operands = 0 : i64, tpu.core_type = #tpu.core_type<tc>, window_params = [{transform_indices = @transform_0, window_bounds = array<i64: 2, 8, 24>}, {pipeline_mode = #tpu.pipeline_mode<synchronous>, transform_indices = @transform_1, window_bounds = array<i64: 1648, 256>}, {pipeline_mode = #tpu.pipeline_mode<synchronous>, transform_indices = @transform_2, window_bounds = array<i64: 240, 256>}, {transform_indices = @transform_3, window_bounds = array<i64: 2, 8, 32>}]} {
    %c1568 = arith.constant 1568 : index
    %c0 = arith.constant 0 : index
    %0 = vector.load %arg2[%c1568, %c0] : memref<1648x256xbf16, #tpu.memory_space<vmem>>, vector<64x16xbf16>
    %c1632 = arith.constant 1632 : index
    %c0_0 = arith.constant 0 : index
    %1 = vector.load %arg2[%c1632, %c0_0] : memref<1648x256xbf16, #tpu.memory_space<vmem>>, vector<16x64xbf16>
    %c0_1 = arith.constant 0 : index
    %c0_2 = arith.constant 0 : index
    %c0_3 = arith.constant 0 : index
    %2 = vector.load %arg1[%c0_1, %c0_2, %c0_3] : memref<2x8x24xf32, #tpu.memory_space<vmem>>, vector<2x8x24xf32>
    %3 = vector.shape_cast %2 : vector<2x8x24xf32> to vector<16x24xf32>
    %c0_4 = arith.constant 0 : index
    %c0_5 = arith.constant 0 : index
    %4 = vector.load %arg2[%c0_4, %c0_5] : memref<1648x256xbf16, #tpu.memory_space<vmem>>, vector<24x64xbf16>
    %5 = arith.truncf %3 : vector<16x24xf32> to vector<16x24xbf16>
    %cst = arith.constant dense<0.000000e+00> : vector<16x64xf32>
    %6 = tpu.matmul %5, %4, %cst {dimension_numbers = #tpu.dot_dimension_numbers<[1], [0], [0], [1], [0, 0, 1, 1], [], []>} : vector<16x24xbf16>, vector<24x64xbf16>, vector<16x64xf32> -> vector<16x64xf32>
    %c0_6 = arith.constant 0 : index
    %c0_7 = arith.constant 0 : index
    %7 = vector.load %arg3[%c0_6, %c0_7] : memref<240x256xf32, #tpu.memory_space<vmem>>, vector<8x64xf32>
    %8 = vector.shape_cast %6 : vector<16x64xf32> to vector<2x8x64xf32>
    %9 = vector.shape_cast %7 : vector<8x64xf32> to vector<1x8x64xf32>
    %10 = vector.broadcast %9 : vector<1x8x64xf32> to vector<2x8x64xf32>
    %11 = arith.addf %8, %10 : vector<2x8x64xf32>
    %12 = vector.shape_cast %11 : vector<2x8x64xf32> to vector<16x64xf32>
    %c32 = arith.constant 32 : index
    %c0_8 = arith.constant 0 : index
    %13 = vector.load %arg2[%c32, %c0_8] : memref<1648x256xbf16, #tpu.memory_space<vmem>>, vector<64x192xbf16>
    %14 = arith.truncf %12 : vector<16x64xf32> to vector<16x64xbf16>
    %cst_9 = arith.constant dense<0.000000e+00> : vector<16x192xf32>
    %15 = tpu.matmul %14, %13, %cst_9 {dimension_numbers = #tpu.dot_dimension_numbers<[1], [0], [0], [1], [0, 0, 1, 1], [], []>} : vector<16x64xbf16>, vector<64x192xbf16>, vector<16x192xf32> -> vector<16x192xf32>
    %c8 = arith.constant 8 : index
    %c0_10 = arith.constant 0 : index
    %16 = vector.load %arg3[%c8, %c0_10] : memref<240x256xf32, #tpu.memory_space<vmem>>, vector<1x192xf32>
    %17 = vector.broadcast %16 : vector<1x192xf32> to vector<16x192xf32>
    %18 = arith.addf %15, %17 : vector<16x192xf32>
    %19 = vector.extract_strided_slice %18 {offsets = [0, 0], sizes = [16, 64], strides = [1, 1]} : vector<16x192xf32> to vector<16x64xf32>
    %20 = vector.shape_cast %19 : vector<16x64xf32> to vector<2x8x64xf32>
    %21 = vector.extract_strided_slice %18 {offsets = [0, 64], sizes = [16, 64], strides = [1, 1]} : vector<16x192xf32> to vector<16x64xf32>
    %22 = vector.shape_cast %21 : vector<16x64xf32> to vector<2x8x64xf32>
    %23 = vector.extract_strided_slice %18 {offsets = [0, 128], sizes = [16, 64], strides = [1, 1]} : vector<16x192xf32> to vector<16x64xf32>
    %24 = vector.shape_cast %23 : vector<16x64xf32> to vector<2x8x64xf32>
    %25 = vector.shape_cast %20 : vector<2x8x64xf32> to vector<2x8x1x64xf32>
    %26 = vector.shape_cast %22 : vector<2x8x64xf32> to vector<2x1x8x64xf32>
    %27 = vector.broadcast %25 : vector<2x8x1x64xf32> to vector<2x8x8x64xf32>
    %28 = vector.broadcast %26 : vector<2x1x8x64xf32> to vector<2x8x8x64xf32>
    %29 = arith.mulf %27, %28 : vector<2x8x8x64xf32>
    %30 = vector.shape_cast %29 : vector<2x8x8x64xf32> to vector<128x64xf32>
    %31 = arith.truncf %30 : vector<128x64xf32> to vector<128x64xbf16>
    %cst_11 = arith.constant dense<0.000000e+00> : vector<128x16xf32>
    %32 = tpu.matmul %31, %0, %cst_11 {dimension_numbers = #tpu.dot_dimension_numbers<[1], [0], [0], [1], [0, 0, 1, 1], [], []>} : vector<128x64xbf16>, vector<64x16xbf16>, vector<128x16xf32> -> vector<128x16xf32>
    %33 = vector.shape_cast %32 : vector<128x16xf32> to vector<2x8x8x16xf32>
    %cst_12 = arith.constant dense<0xFF800000> : vector<2x8x16xf32>
    %34 = vector.multi_reduction <maximumf>, %33, %cst_12 [2] : vector<2x8x8x16xf32> to vector<2x8x16xf32>
    %35 = vector.shape_cast %34 : vector<2x8x16xf32> to vector<2x8x1x16xf32>
    %36 = vector.broadcast %35 : vector<2x8x1x16xf32> to vector<2x8x8x16xf32>
    %37 = arith.subf %33, %36 : vector<2x8x8x16xf32>
    %38 = math.exp %37 : vector<2x8x8x16xf32>
    %cst_13 = arith.constant dense<0.000000e+00> : vector<2x8x16xf32>
    %39 = vector.multi_reduction <add>, %38, %cst_13 [2] : vector<2x8x8x16xf32> to vector<2x8x16xf32>
    %40 = vector.shape_cast %39 : vector<2x8x16xf32> to vector<2x8x1x16xf32>
    %41 = tpu.reciprocal %40 {approx = true} : vector<2x8x1x16xf32> -> vector<2x8x1x16xf32>
    %42 = vector.broadcast %41 : vector<2x8x1x16xf32> to vector<2x8x8x16xf32>
    %43 = arith.mulf %38, %42 : vector<2x8x8x16xf32>
    %44 = vector.shape_cast %43 : vector<2x8x8x16xf32> to vector<128x16xf32>
    %45 = arith.truncf %44 : vector<128x16xf32> to vector<128x16xbf16>
    %cst_14 = arith.constant dense<0.000000e+00> : vector<128x64xf32>
    %46 = tpu.matmul %45, %1, %cst_14 {dimension_numbers = #tpu.dot_dimension_numbers<[1], [0], [0], [1], [0, 0, 1, 1], [], []>} : vector<128x16xbf16>, vector<16x64xbf16>, vector<128x64xf32> -> vector<128x64xf32>
    %47 = vector.shape_cast %46 : vector<128x64xf32> to vector<2x8x8x64xf32>
    %48 = vector.shape_cast %24 : vector<2x8x64xf32> to vector<2x1x8x64xf32>
    %49 = vector.broadcast %48 : vector<2x1x8x64xf32> to vector<2x8x8x64xf32>
    %50 = arith.mulf %47, %49 : vector<2x8x8x64xf32>
    %cst_15 = arith.constant dense<0.000000e+00> : vector<2x8x64xf32>
    %51 = vector.multi_reduction <add>, %50, %cst_15 [2] : vector<2x8x8x64xf32> to vector<2x8x64xf32>
    %52 = vector.shape_cast %51 : vector<2x8x64xf32> to vector<16x64xf32>
    %c96 = arith.constant 96 : index
    %c0_16 = arith.constant 0 : index
    %53 = vector.load %arg2[%c96, %c0_16] : memref<1648x256xbf16, #tpu.memory_space<vmem>>, vector<64x64xbf16>
    %54 = arith.truncf %52 : vector<16x64xf32> to vector<16x64xbf16>
    %cst_17 = arith.constant dense<0.000000e+00> : vector<16x64xf32>
    %55 = tpu.matmul %54, %53, %cst_17 {dimension_numbers = #tpu.dot_dimension_numbers<[1], [0], [0], [1], [0, 0, 1, 1], [], []>} : vector<16x64xbf16>, vector<64x64xbf16>, vector<16x64xf32> -> vector<16x64xf32>
    %56 = arith.addf %12, %55 : vector<16x64xf32>
    %c16 = arith.constant 16 : index
    %c0_18 = arith.constant 0 : index
    %57 = vector.load %arg3[%c16, %c0_18] : memref<240x256xf32, #tpu.memory_space<vmem>>, vector<1x64xf32>
    %58 = vector.broadcast %57 : vector<1x64xf32> to vector<16x64xf32>
    %59 = arith.addf %56, %58 : vector<16x64xf32>
    %c40 = arith.constant 40 : index
    %c0_19 = arith.constant 0 : index
    %60 = vector.load %arg3[%c40, %c0_19] : memref<240x256xf32, #tpu.memory_space<vmem>>, vector<2x64xf32>
    %61 = vector.extract_strided_slice %60 {offsets = [0, 0], sizes = [1, 64], strides = [1, 1]} : vector<2x64xf32> to vector<1x64xf32>
    %62 = vector.extract_strided_slice %60 {offsets = [1, 0], sizes = [1, 64], strides = [1, 1]} : vector<2x64xf32> to vector<1x64xf32>
    %63 = tpu.iota {dimensions = array<i32: 1>} : vector<16x64xi32>
    %c32_i32 = arith.constant 32 : i32
    %64 = vector.broadcast %c32_i32 : i32 to vector<16x64xi32>
    %65 = arith.cmpi slt, %63, %64 : vector<16x64xi32>
    %cst_20 = arith.constant 0.000000e+00 : f32
    %66 = vector.broadcast %cst_20 : f32 to vector<16x64xf32>
    %cst_21 = arith.constant dense<0.000000e+00> : vector<16xf32>
    %67 = vector.multi_reduction <add>, %59, %cst_21 [1] : vector<16x64xf32> to vector<16xf32>
    %68 = vector.shape_cast %67 : vector<16xf32> to vector<16x1xf32>
    %69 = arith.select %65, %59, %66 : vector<16x64xi1>, vector<16x64xf32>
    %cst_22 = arith.constant dense<0.000000e+00> : vector<16xf32>
    %70 = vector.multi_reduction <add>, %69, %cst_22 [1] : vector<16x64xf32> to vector<16xf32>
    %71 = vector.shape_cast %70 : vector<16xf32> to vector<16x1xf32>
    %72 = arith.subf %68, %71 : vector<16x1xf32>
    %73 = vector.shape_cast %71 : vector<16x1xf32> to vector<16x1xf32>
    %74 = vector.broadcast %73 : vector<16x1xf32> to vector<16x64xf32>
    %75 = vector.shape_cast %72 : vector<16x1xf32> to vector<16x1xf32>
    %76 = vector.broadcast %75 : vector<16x1xf32> to vector<16x64xf32>
    %77 = arith.select %65, %74, %76 : vector<16x64xi1>, vector<16x64xf32>
    %cst_23 = arith.constant 3.125000e-02 : f32
    %78 = vector.broadcast %cst_23 : f32 to vector<16x64xf32>
    %79 = arith.mulf %77, %78 : vector<16x64xf32>
    %80 = arith.subf %59, %79 : vector<16x64xf32>
    %81 = arith.mulf %80, %80 : vector<16x64xf32>
    %cst_24 = arith.constant dense<0.000000e+00> : vector<16xf32>
    %82 = vector.multi_reduction <add>, %81, %cst_24 [1] : vector<16x64xf32> to vector<16xf32>
    %83 = vector.shape_cast %82 : vector<16xf32> to vector<16x1xf32>
    %84 = arith.select %65, %81, %66 : vector<16x64xi1>, vector<16x64xf32>
    %cst_25 = arith.constant dense<0.000000e+00> : vector<16xf32>
    %85 = vector.multi_reduction <add>, %84, %cst_25 [1] : vector<16x64xf32> to vector<16xf32>
    %86 = vector.shape_cast %85 : vector<16xf32> to vector<16x1xf32>
    %87 = arith.subf %83, %86 : vector<16x1xf32>
    %88 = vector.shape_cast %86 : vector<16x1xf32> to vector<16x1xf32>
    %89 = vector.broadcast %88 : vector<16x1xf32> to vector<16x64xf32>
    %90 = vector.shape_cast %87 : vector<16x1xf32> to vector<16x1xf32>
    %91 = vector.broadcast %90 : vector<16x1xf32> to vector<16x64xf32>
    %92 = arith.select %65, %89, %91 : vector<16x64xi1>, vector<16x64xf32>
    %cst_26 = arith.constant 3.125000e-02 : f32
    %93 = vector.broadcast %cst_26 : f32 to vector<16x64xf32>
    %94 = arith.mulf %92, %93 : vector<16x64xf32>
    %cst_27 = arith.constant 9.99999974E-6 : f32
    %95 = vector.broadcast %cst_27 : f32 to vector<16x64xf32>
    %96 = arith.addf %94, %95 : vector<16x64xf32>
    %97 = math.rsqrt %96 : vector<16x64xf32>
    %98 = arith.mulf %80, %97 : vector<16x64xf32>
    %99 = vector.broadcast %61 : vector<1x64xf32> to vector<16x64xf32>
    %100 = arith.mulf %98, %99 : vector<16x64xf32>
    %101 = vector.broadcast %62 : vector<1x64xf32> to vector<16x64xf32>
    %102 = arith.addf %100, %101 : vector<16x64xf32>
    %c160 = arith.constant 160 : index
    %c0_28 = arith.constant 0 : index
    %103 = vector.load %arg2[%c160, %c0_28] : memref<1648x256xbf16, #tpu.memory_space<vmem>>, vector<64x256xbf16>
    %104 = arith.truncf %102 : vector<16x64xf32> to vector<16x64xbf16>
    %cst_29 = arith.constant dense<0.000000e+00> : vector<16x256xf32>
    %105 = tpu.matmul %104, %103, %cst_29 {dimension_numbers = #tpu.dot_dimension_numbers<[1], [0], [0], [1], [0, 0, 1, 1], [], []>} : vector<16x64xbf16>, vector<64x256xbf16>, vector<16x256xf32> -> vector<16x256xf32>
    %c24 = arith.constant 24 : index
    %c0_30 = arith.constant 0 : index
    %106 = vector.load %arg3[%c24, %c0_30] : memref<240x256xf32, #tpu.memory_space<vmem>>, vector<1x256xf32>
    %107 = vector.broadcast %106 : vector<1x256xf32> to vector<16x256xf32>
    %108 = arith.addf %105, %107 : vector<16x256xf32>
    %cst_31 = arith.constant 0.000000e+00 : f32
    %109 = vector.broadcast %cst_31 : f32 to vector<16x256xf32>
    %110 = arith.maximumf %108, %109 : vector<16x256xf32>
    %c224 = arith.constant 224 : index
    %c0_32 = arith.constant 0 : index
    %111 = vector.load %arg2[%c224, %c0_32] : memref<1648x256xbf16, #tpu.memory_space<vmem>>, vector<256x64xbf16>
    %112 = arith.truncf %110 : vector<16x256xf32> to vector<16x256xbf16>
    %cst_33 = arith.constant dense<0.000000e+00> : vector<16x64xf32>
    %113 = tpu.matmul %112, %111, %cst_33 {dimension_numbers = #tpu.dot_dimension_numbers<[1], [0], [0], [1], [0, 0, 1, 1], [], []>} : vector<16x256xbf16>, vector<256x64xbf16>, vector<16x64xf32> -> vector<16x64xf32>
    %c32_34 = arith.constant 32 : index
    %c0_35 = arith.constant 0 : index
    %114 = vector.load %arg3[%c32_34, %c0_35] : memref<240x256xf32, #tpu.memory_space<vmem>>, vector<1x64xf32>
    %115 = vector.broadcast %114 : vector<1x64xf32> to vector<16x64xf32>
    %116 = arith.addf %113, %115 : vector<16x64xf32>
    %117 = arith.addf %102, %116 : vector<16x64xf32>
    %c48 = arith.constant 48 : index
    %c0_36 = arith.constant 0 : index
    %118 = vector.load %arg3[%c48, %c0_36] : memref<240x256xf32, #tpu.memory_space<vmem>>, vector<2x64xf32>
    %119 = vector.extract_strided_slice %118 {offsets = [0, 0], sizes = [1, 64], strides = [1, 1]} : vector<2x64xf32> to vector<1x64xf32>
    %120 = vector.extract_strided_slice %118 {offsets = [1, 0], sizes = [1, 64], strides = [1, 1]} : vector<2x64xf32> to vector<1x64xf32>
    %121 = tpu.iota {dimensions = array<i32: 1>} : vector<16x64xi32>
    %c32_i32_37 = arith.constant 32 : i32
    %122 = vector.broadcast %c32_i32_37 : i32 to vector<16x64xi32>
    %123 = arith.cmpi slt, %121, %122 : vector<16x64xi32>
    %cst_38 = arith.constant 0.000000e+00 : f32
    %124 = vector.broadcast %cst_38 : f32 to vector<16x64xf32>
    %cst_39 = arith.constant dense<0.000000e+00> : vector<16xf32>
    %125 = vector.multi_reduction <add>, %117, %cst_39 [1] : vector<16x64xf32> to vector<16xf32>
    %126 = vector.shape_cast %125 : vector<16xf32> to vector<16x1xf32>
    %127 = arith.select %123, %117, %124 : vector<16x64xi1>, vector<16x64xf32>
    %cst_40 = arith.constant dense<0.000000e+00> : vector<16xf32>
    %128 = vector.multi_reduction <add>, %127, %cst_40 [1] : vector<16x64xf32> to vector<16xf32>
    %129 = vector.shape_cast %128 : vector<16xf32> to vector<16x1xf32>
    %130 = arith.subf %126, %129 : vector<16x1xf32>
    %131 = vector.shape_cast %129 : vector<16x1xf32> to vector<16x1xf32>
    %132 = vector.broadcast %131 : vector<16x1xf32> to vector<16x64xf32>
    %133 = vector.shape_cast %130 : vector<16x1xf32> to vector<16x1xf32>
    %134 = vector.broadcast %133 : vector<16x1xf32> to vector<16x64xf32>
    %135 = arith.select %123, %132, %134 : vector<16x64xi1>, vector<16x64xf32>
    %cst_41 = arith.constant 3.125000e-02 : f32
    %136 = vector.broadcast %cst_41 : f32 to vector<16x64xf32>
    %137 = arith.mulf %135, %136 : vector<16x64xf32>
    %138 = arith.subf %117, %137 : vector<16x64xf32>
    %139 = arith.mulf %138, %138 : vector<16x64xf32>
    %cst_42 = arith.constant dense<0.000000e+00> : vector<16xf32>
    %140 = vector.multi_reduction <add>, %139, %cst_42 [1] : vector<16x64xf32> to vector<16xf32>
    %141 = vector.shape_cast %140 : vector<16xf32> to vector<16x1xf32>
    %142 = arith.select %123, %139, %124 : vector<16x64xi1>, vector<16x64xf32>
    %cst_43 = arith.constant dense<0.000000e+00> : vector<16xf32>
    %143 = vector.multi_reduction <add>, %142, %cst_43 [1] : vector<16x64xf32> to vector<16xf32>
    %144 = vector.shape_cast %143 : vector<16xf32> to vector<16x1xf32>
    %145 = arith.subf %141, %144 : vector<16x1xf32>
    %146 = vector.shape_cast %144 : vector<16x1xf32> to vector<16x1xf32>
    %147 = vector.broadcast %146 : vector<16x1xf32> to vector<16x64xf32>
    %148 = vector.shape_cast %145 : vector<16x1xf32> to vector<16x1xf32>
    %149 = vector.broadcast %148 : vector<16x1xf32> to vector<16x64xf32>
    %150 = arith.select %123, %147, %149 : vector<16x64xi1>, vector<16x64xf32>
    %cst_44 = arith.constant 3.125000e-02 : f32
    %151 = vector.broadcast %cst_44 : f32 to vector<16x64xf32>
    %152 = arith.mulf %150, %151 : vector<16x64xf32>
    %cst_45 = arith.constant 9.99999974E-6 : f32
    %153 = vector.broadcast %cst_45 : f32 to vector<16x64xf32>
    %154 = arith.addf %152, %153 : vector<16x64xf32>
    %155 = math.rsqrt %154 : vector<16x64xf32>
    %156 = arith.mulf %138, %155 : vector<16x64xf32>
    %157 = vector.broadcast %119 : vector<1x64xf32> to vector<16x64xf32>
    %158 = arith.mulf %156, %157 : vector<16x64xf32>
    %159 = vector.broadcast %120 : vector<1x64xf32> to vector<16x64xf32>
    %160 = arith.addf %158, %159 : vector<16x64xf32>
    %c480 = arith.constant 480 : index
    %c0_46 = arith.constant 0 : index
    %161 = vector.load %arg2[%c480, %c0_46] : memref<1648x256xbf16, #tpu.memory_space<vmem>>, vector<64x192xbf16>
    %162 = arith.truncf %160 : vector<16x64xf32> to vector<16x64xbf16>
    %cst_47 = arith.constant dense<0.000000e+00> : vector<16x192xf32>
    %163 = tpu.matmul %162, %161, %cst_47 {dimension_numbers = #tpu.dot_dimension_numbers<[1], [0], [0], [1], [0, 0, 1, 1], [], []>} : vector<16x64xbf16>, vector<64x192xbf16>, vector<16x192xf32> -> vector<16x192xf32>
    %c56 = arith.constant 56 : index
    %c0_48 = arith.constant 0 : index
    %164 = vector.load %arg3[%c56, %c0_48] : memref<240x256xf32, #tpu.memory_space<vmem>>, vector<1x192xf32>
    %165 = vector.broadcast %164 : vector<1x192xf32> to vector<16x192xf32>
    %166 = arith.addf %163, %165 : vector<16x192xf32>
    %167 = vector.extract_strided_slice %166 {offsets = [0, 0], sizes = [16, 64], strides = [1, 1]} : vector<16x192xf32> to vector<16x64xf32>
    %168 = vector.shape_cast %167 : vector<16x64xf32> to vector<2x8x64xf32>
    %169 = vector.extract_strided_slice %166 {offsets = [0, 64], sizes = [16, 64], strides = [1, 1]} : vector<16x192xf32> to vector<16x64xf32>
    %170 = vector.shape_cast %169 : vector<16x64xf32> to vector<2x8x64xf32>
    %171 = vector.extract_strided_slice %166 {offsets = [0, 128], sizes = [16, 64], strides = [1, 1]} : vector<16x192xf32> to vector<16x64xf32>
    %172 = vector.shape_cast %171 : vector<16x64xf32> to vector<2x8x64xf32>
    %173 = vector.shape_cast %168 : vector<2x8x64xf32> to vector<2x8x1x64xf32>
    %174 = vector.shape_cast %170 : vector<2x8x64xf32> to vector<2x1x8x64xf32>
    %175 = vector.broadcast %173 : vector<2x8x1x64xf32> to vector<2x8x8x64xf32>
    %176 = vector.broadcast %174 : vector<2x1x8x64xf32> to vector<2x8x8x64xf32>
    %177 = arith.mulf %175, %176 : vector<2x8x8x64xf32>
    %178 = vector.shape_cast %177 : vector<2x8x8x64xf32> to vector<128x64xf32>
    %179 = arith.truncf %178 : vector<128x64xf32> to vector<128x64xbf16>
    %cst_49 = arith.constant dense<0.000000e+00> : vector<128x16xf32>
    %180 = tpu.matmul %179, %0, %cst_49 {dimension_numbers = #tpu.dot_dimension_numbers<[1], [0], [0], [1], [0, 0, 1, 1], [], []>} : vector<128x64xbf16>, vector<64x16xbf16>, vector<128x16xf32> -> vector<128x16xf32>
    %181 = vector.shape_cast %180 : vector<128x16xf32> to vector<2x8x8x16xf32>
    %cst_50 = arith.constant dense<0xFF800000> : vector<2x8x16xf32>
    %182 = vector.multi_reduction <maximumf>, %181, %cst_50 [2] : vector<2x8x8x16xf32> to vector<2x8x16xf32>
    %183 = vector.shape_cast %182 : vector<2x8x16xf32> to vector<2x8x1x16xf32>
    %184 = vector.broadcast %183 : vector<2x8x1x16xf32> to vector<2x8x8x16xf32>
    %185 = arith.subf %181, %184 : vector<2x8x8x16xf32>
    %186 = math.exp %185 : vector<2x8x8x16xf32>
    %cst_51 = arith.constant dense<0.000000e+00> : vector<2x8x16xf32>
    %187 = vector.multi_reduction <add>, %186, %cst_51 [2] : vector<2x8x8x16xf32> to vector<2x8x16xf32>
    %188 = vector.shape_cast %187 : vector<2x8x16xf32> to vector<2x8x1x16xf32>
    %189 = tpu.reciprocal %188 {approx = true} : vector<2x8x1x16xf32> -> vector<2x8x1x16xf32>
    %190 = vector.broadcast %189 : vector<2x8x1x16xf32> to vector<2x8x8x16xf32>
    %191 = arith.mulf %186, %190 : vector<2x8x8x16xf32>
    %192 = vector.shape_cast %191 : vector<2x8x8x16xf32> to vector<128x16xf32>
    %193 = arith.truncf %192 : vector<128x16xf32> to vector<128x16xbf16>
    %cst_52 = arith.constant dense<0.000000e+00> : vector<128x64xf32>
    %194 = tpu.matmul %193, %1, %cst_52 {dimension_numbers = #tpu.dot_dimension_numbers<[1], [0], [0], [1], [0, 0, 1, 1], [], []>} : vector<128x16xbf16>, vector<16x64xbf16>, vector<128x64xf32> -> vector<128x64xf32>
    %195 = vector.shape_cast %194 : vector<128x64xf32> to vector<2x8x8x64xf32>
    %196 = vector.shape_cast %172 : vector<2x8x64xf32> to vector<2x1x8x64xf32>
    %197 = vector.broadcast %196 : vector<2x1x8x64xf32> to vector<2x8x8x64xf32>
    %198 = arith.mulf %195, %197 : vector<2x8x8x64xf32>
    %cst_53 = arith.constant dense<0.000000e+00> : vector<2x8x64xf32>
    %199 = vector.multi_reduction <add>, %198, %cst_53 [2] : vector<2x8x8x64xf32> to vector<2x8x64xf32>
    %200 = vector.shape_cast %199 : vector<2x8x64xf32> to vector<16x64xf32>
    %c544 = arith.constant 544 : index
    %c0_54 = arith.constant 0 : index
    %201 = vector.load %arg2[%c544, %c0_54] : memref<1648x256xbf16, #tpu.memory_space<vmem>>, vector<64x64xbf16>
    %202 = arith.truncf %200 : vector<16x64xf32> to vector<16x64xbf16>
    %cst_55 = arith.constant dense<0.000000e+00> : vector<16x64xf32>
    %203 = tpu.matmul %202, %201, %cst_55 {dimension_numbers = #tpu.dot_dimension_numbers<[1], [0], [0], [1], [0, 0, 1, 1], [], []>} : vector<16x64xbf16>, vector<64x64xbf16>, vector<16x64xf32> -> vector<16x64xf32>
    %204 = arith.addf %160, %203 : vector<16x64xf32>
    %c64 = arith.constant 64 : index
    %c0_56 = arith.constant 0 : index
    %205 = vector.load %arg3[%c64, %c0_56] : memref<240x256xf32, #tpu.memory_space<vmem>>, vector<1x64xf32>
    %206 = vector.broadcast %205 : vector<1x64xf32> to vector<16x64xf32>
    %207 = arith.addf %204, %206 : vector<16x64xf32>
    %c88 = arith.constant 88 : index
    %c0_57 = arith.constant 0 : index
    %208 = vector.load %arg3[%c88, %c0_57] : memref<240x256xf32, #tpu.memory_space<vmem>>, vector<2x64xf32>
    %209 = vector.extract_strided_slice %208 {offsets = [0, 0], sizes = [1, 64], strides = [1, 1]} : vector<2x64xf32> to vector<1x64xf32>
    %210 = vector.extract_strided_slice %208 {offsets = [1, 0], sizes = [1, 64], strides = [1, 1]} : vector<2x64xf32> to vector<1x64xf32>
    %211 = tpu.iota {dimensions = array<i32: 1>} : vector<16x64xi32>
    %c32_i32_58 = arith.constant 32 : i32
    %212 = vector.broadcast %c32_i32_58 : i32 to vector<16x64xi32>
    %213 = arith.cmpi slt, %211, %212 : vector<16x64xi32>
    %cst_59 = arith.constant 0.000000e+00 : f32
    %214 = vector.broadcast %cst_59 : f32 to vector<16x64xf32>
    %cst_60 = arith.constant dense<0.000000e+00> : vector<16xf32>
    %215 = vector.multi_reduction <add>, %207, %cst_60 [1] : vector<16x64xf32> to vector<16xf32>
    %216 = vector.shape_cast %215 : vector<16xf32> to vector<16x1xf32>
    %217 = arith.select %213, %207, %214 : vector<16x64xi1>, vector<16x64xf32>
    %cst_61 = arith.constant dense<0.000000e+00> : vector<16xf32>
    %218 = vector.multi_reduction <add>, %217, %cst_61 [1] : vector<16x64xf32> to vector<16xf32>
    %219 = vector.shape_cast %218 : vector<16xf32> to vector<16x1xf32>
    %220 = arith.subf %216, %219 : vector<16x1xf32>
    %221 = vector.shape_cast %219 : vector<16x1xf32> to vector<16x1xf32>
    %222 = vector.broadcast %221 : vector<16x1xf32> to vector<16x64xf32>
    %223 = vector.shape_cast %220 : vector<16x1xf32> to vector<16x1xf32>
    %224 = vector.broadcast %223 : vector<16x1xf32> to vector<16x64xf32>
    %225 = arith.select %213, %222, %224 : vector<16x64xi1>, vector<16x64xf32>
    %cst_62 = arith.constant 3.125000e-02 : f32
    %226 = vector.broadcast %cst_62 : f32 to vector<16x64xf32>
    %227 = arith.mulf %225, %226 : vector<16x64xf32>
    %228 = arith.subf %207, %227 : vector<16x64xf32>
    %229 = arith.mulf %228, %228 : vector<16x64xf32>
    %cst_63 = arith.constant dense<0.000000e+00> : vector<16xf32>
    %230 = vector.multi_reduction <add>, %229, %cst_63 [1] : vector<16x64xf32> to vector<16xf32>
    %231 = vector.shape_cast %230 : vector<16xf32> to vector<16x1xf32>
    %232 = arith.select %213, %229, %214 : vector<16x64xi1>, vector<16x64xf32>
    %cst_64 = arith.constant dense<0.000000e+00> : vector<16xf32>
    %233 = vector.multi_reduction <add>, %232, %cst_64 [1] : vector<16x64xf32> to vector<16xf32>
    %234 = vector.shape_cast %233 : vector<16xf32> to vector<16x1xf32>
    %235 = arith.subf %231, %234 : vector<16x1xf32>
    %236 = vector.shape_cast %234 : vector<16x1xf32> to vector<16x1xf32>
    %237 = vector.broadcast %236 : vector<16x1xf32> to vector<16x64xf32>
    %238 = vector.shape_cast %235 : vector<16x1xf32> to vector<16x1xf32>
    %239 = vector.broadcast %238 : vector<16x1xf32> to vector<16x64xf32>
    %240 = arith.select %213, %237, %239 : vector<16x64xi1>, vector<16x64xf32>
    %cst_65 = arith.constant 3.125000e-02 : f32
    %241 = vector.broadcast %cst_65 : f32 to vector<16x64xf32>
    %242 = arith.mulf %240, %241 : vector<16x64xf32>
    %cst_66 = arith.constant 9.99999974E-6 : f32
    %243 = vector.broadcast %cst_66 : f32 to vector<16x64xf32>
    %244 = arith.addf %242, %243 : vector<16x64xf32>
    %245 = math.rsqrt %244 : vector<16x64xf32>
    %246 = arith.mulf %228, %245 : vector<16x64xf32>
    %247 = vector.broadcast %209 : vector<1x64xf32> to vector<16x64xf32>
    %248 = arith.mulf %246, %247 : vector<16x64xf32>
    %249 = vector.broadcast %210 : vector<1x64xf32> to vector<16x64xf32>
    %250 = arith.addf %248, %249 : vector<16x64xf32>
    %c608 = arith.constant 608 : index
    %c0_67 = arith.constant 0 : index
    %251 = vector.load %arg2[%c608, %c0_67] : memref<1648x256xbf16, #tpu.memory_space<vmem>>, vector<64x256xbf16>
    %252 = arith.truncf %250 : vector<16x64xf32> to vector<16x64xbf16>
    %cst_68 = arith.constant dense<0.000000e+00> : vector<16x256xf32>
    %253 = tpu.matmul %252, %251, %cst_68 {dimension_numbers = #tpu.dot_dimension_numbers<[1], [0], [0], [1], [0, 0, 1, 1], [], []>} : vector<16x64xbf16>, vector<64x256xbf16>, vector<16x256xf32> -> vector<16x256xf32>
    %c72 = arith.constant 72 : index
    %c0_69 = arith.constant 0 : index
    %254 = vector.load %arg3[%c72, %c0_69] : memref<240x256xf32, #tpu.memory_space<vmem>>, vector<1x256xf32>
    %255 = vector.broadcast %254 : vector<1x256xf32> to vector<16x256xf32>
    %256 = arith.addf %253, %255 : vector<16x256xf32>
    %cst_70 = arith.constant 0.000000e+00 : f32
    %257 = vector.broadcast %cst_70 : f32 to vector<16x256xf32>
    %258 = arith.maximumf %256, %257 : vector<16x256xf32>
    %c672 = arith.constant 672 : index
    %c0_71 = arith.constant 0 : index
    %259 = vector.load %arg2[%c672, %c0_71] : memref<1648x256xbf16, #tpu.memory_space<vmem>>, vector<256x64xbf16>
    %260 = arith.truncf %258 : vector<16x256xf32> to vector<16x256xbf16>
    %cst_72 = arith.constant dense<0.000000e+00> : vector<16x64xf32>
    %261 = tpu.matmul %260, %259, %cst_72 {dimension_numbers = #tpu.dot_dimension_numbers<[1], [0], [0], [1], [0, 0, 1, 1], [], []>} : vector<16x256xbf16>, vector<256x64xbf16>, vector<16x64xf32> -> vector<16x64xf32>
    %c80 = arith.constant 80 : index
    %c0_73 = arith.constant 0 : index
    %262 = vector.load %arg3[%c80, %c0_73] : memref<240x256xf32, #tpu.memory_space<vmem>>, vector<1x64xf32>
    %263 = vector.broadcast %262 : vector<1x64xf32> to vector<16x64xf32>
    %264 = arith.addf %261, %263 : vector<16x64xf32>
    %265 = arith.addf %250, %264 : vector<16x64xf32>
    %c96_74 = arith.constant 96 : index
    %c0_75 = arith.constant 0 : index
    %266 = vector.load %arg3[%c96_74, %c0_75] : memref<240x256xf32, #tpu.memory_space<vmem>>, vector<2x64xf32>
    %267 = vector.extract_strided_slice %266 {offsets = [0, 0], sizes = [1, 64], strides = [1, 1]} : vector<2x64xf32> to vector<1x64xf32>
    %268 = vector.extract_strided_slice %266 {offsets = [1, 0], sizes = [1, 64], strides = [1, 1]} : vector<2x64xf32> to vector<1x64xf32>
    %269 = tpu.iota {dimensions = array<i32: 1>} : vector<16x64xi32>
    %c32_i32_76 = arith.constant 32 : i32
    %270 = vector.broadcast %c32_i32_76 : i32 to vector<16x64xi32>
    %271 = arith.cmpi slt, %269, %270 : vector<16x64xi32>
    %cst_77 = arith.constant 0.000000e+00 : f32
    %272 = vector.broadcast %cst_77 : f32 to vector<16x64xf32>
    %cst_78 = arith.constant dense<0.000000e+00> : vector<16xf32>
    %273 = vector.multi_reduction <add>, %265, %cst_78 [1] : vector<16x64xf32> to vector<16xf32>
    %274 = vector.shape_cast %273 : vector<16xf32> to vector<16x1xf32>
    %275 = arith.select %271, %265, %272 : vector<16x64xi1>, vector<16x64xf32>
    %cst_79 = arith.constant dense<0.000000e+00> : vector<16xf32>
    %276 = vector.multi_reduction <add>, %275, %cst_79 [1] : vector<16x64xf32> to vector<16xf32>
    %277 = vector.shape_cast %276 : vector<16xf32> to vector<16x1xf32>
    %278 = arith.subf %274, %277 : vector<16x1xf32>
    %279 = vector.shape_cast %277 : vector<16x1xf32> to vector<16x1xf32>
    %280 = vector.broadcast %279 : vector<16x1xf32> to vector<16x64xf32>
    %281 = vector.shape_cast %278 : vector<16x1xf32> to vector<16x1xf32>
    %282 = vector.broadcast %281 : vector<16x1xf32> to vector<16x64xf32>
    %283 = arith.select %271, %280, %282 : vector<16x64xi1>, vector<16x64xf32>
    %cst_80 = arith.constant 3.125000e-02 : f32
    %284 = vector.broadcast %cst_80 : f32 to vector<16x64xf32>
    %285 = arith.mulf %283, %284 : vector<16x64xf32>
    %286 = arith.subf %265, %285 : vector<16x64xf32>
    %287 = arith.mulf %286, %286 : vector<16x64xf32>
    %cst_81 = arith.constant dense<0.000000e+00> : vector<16xf32>
    %288 = vector.multi_reduction <add>, %287, %cst_81 [1] : vector<16x64xf32> to vector<16xf32>
    %289 = vector.shape_cast %288 : vector<16xf32> to vector<16x1xf32>
    %290 = arith.select %271, %287, %272 : vector<16x64xi1>, vector<16x64xf32>
    %cst_82 = arith.constant dense<0.000000e+00> : vector<16xf32>
    %291 = vector.multi_reduction <add>, %290, %cst_82 [1] : vector<16x64xf32> to vector<16xf32>
    %292 = vector.shape_cast %291 : vector<16xf32> to vector<16x1xf32>
    %293 = arith.subf %289, %292 : vector<16x1xf32>
    %294 = vector.shape_cast %292 : vector<16x1xf32> to vector<16x1xf32>
    %295 = vector.broadcast %294 : vector<16x1xf32> to vector<16x64xf32>
    %296 = vector.shape_cast %293 : vector<16x1xf32> to vector<16x1xf32>
    %297 = vector.broadcast %296 : vector<16x1xf32> to vector<16x64xf32>
    %298 = arith.select %271, %295, %297 : vector<16x64xi1>, vector<16x64xf32>
    %cst_83 = arith.constant 3.125000e-02 : f32
    %299 = vector.broadcast %cst_83 : f32 to vector<16x64xf32>
    %300 = arith.mulf %298, %299 : vector<16x64xf32>
    %cst_84 = arith.constant 9.99999974E-6 : f32
    %301 = vector.broadcast %cst_84 : f32 to vector<16x64xf32>
    %302 = arith.addf %300, %301 : vector<16x64xf32>
    %303 = math.rsqrt %302 : vector<16x64xf32>
    %304 = arith.mulf %286, %303 : vector<16x64xf32>
    %305 = vector.broadcast %267 : vector<1x64xf32> to vector<16x64xf32>
    %306 = arith.mulf %304, %305 : vector<16x64xf32>
    %307 = vector.broadcast %268 : vector<1x64xf32> to vector<16x64xf32>
    %308 = arith.addf %306, %307 : vector<16x64xf32>
    %c104 = arith.constant 104 : index
    %c0_85 = arith.constant 0 : index
    %309 = vector.load %arg3[%c104, %c0_85] : memref<240x256xf32, #tpu.memory_space<vmem>>, vector<2x64xf32>
    %310 = vector.extract_strided_slice %309 {offsets = [0, 0], sizes = [1, 64], strides = [1, 1]} : vector<2x64xf32> to vector<1x64xf32>
    %311 = vector.extract_strided_slice %309 {offsets = [1, 0], sizes = [1, 64], strides = [1, 1]} : vector<2x64xf32> to vector<1x64xf32>
    %312 = tpu.iota {dimensions = array<i32: 1>} : vector<16x64xi32>
    %c32_i32_86 = arith.constant 32 : i32
    %313 = vector.broadcast %c32_i32_86 : i32 to vector<16x64xi32>
    %314 = arith.cmpi slt, %312, %313 : vector<16x64xi32>
    %cst_87 = arith.constant 0.000000e+00 : f32
    %315 = vector.broadcast %cst_87 : f32 to vector<16x64xf32>
    %cst_88 = arith.constant dense<0.000000e+00> : vector<16xf32>
    %316 = vector.multi_reduction <add>, %308, %cst_88 [1] : vector<16x64xf32> to vector<16xf32>
    %317 = vector.shape_cast %316 : vector<16xf32> to vector<16x1xf32>
    %318 = arith.select %314, %308, %315 : vector<16x64xi1>, vector<16x64xf32>
    %cst_89 = arith.constant dense<0.000000e+00> : vector<16xf32>
    %319 = vector.multi_reduction <add>, %318, %cst_89 [1] : vector<16x64xf32> to vector<16xf32>
    %320 = vector.shape_cast %319 : vector<16xf32> to vector<16x1xf32>
    %321 = arith.subf %317, %320 : vector<16x1xf32>
    %322 = vector.shape_cast %320 : vector<16x1xf32> to vector<16x1xf32>
    %323 = vector.broadcast %322 : vector<16x1xf32> to vector<16x64xf32>
    %324 = vector.shape_cast %321 : vector<16x1xf32> to vector<16x1xf32>
    %325 = vector.broadcast %324 : vector<16x1xf32> to vector<16x64xf32>
    %326 = arith.select %314, %323, %325 : vector<16x64xi1>, vector<16x64xf32>
    %cst_90 = arith.constant 3.125000e-02 : f32
    %327 = vector.broadcast %cst_90 : f32 to vector<16x64xf32>
    %328 = arith.mulf %326, %327 : vector<16x64xf32>
    %329 = arith.subf %308, %328 : vector<16x64xf32>
    %330 = arith.mulf %329, %329 : vector<16x64xf32>
    %cst_91 = arith.constant dense<0.000000e+00> : vector<16xf32>
    %331 = vector.multi_reduction <add>, %330, %cst_91 [1] : vector<16x64xf32> to vector<16xf32>
    %332 = vector.shape_cast %331 : vector<16xf32> to vector<16x1xf32>
    %333 = arith.select %314, %330, %315 : vector<16x64xi1>, vector<16x64xf32>
    %cst_92 = arith.constant dense<0.000000e+00> : vector<16xf32>
    %334 = vector.multi_reduction <add>, %333, %cst_92 [1] : vector<16x64xf32> to vector<16xf32>
    %335 = vector.shape_cast %334 : vector<16xf32> to vector<16x1xf32>
    %336 = arith.subf %332, %335 : vector<16x1xf32>
    %337 = vector.shape_cast %335 : vector<16x1xf32> to vector<16x1xf32>
    %338 = vector.broadcast %337 : vector<16x1xf32> to vector<16x64xf32>
    %339 = vector.shape_cast %336 : vector<16x1xf32> to vector<16x1xf32>
    %340 = vector.broadcast %339 : vector<16x1xf32> to vector<16x64xf32>
    %341 = arith.select %314, %338, %340 : vector<16x64xi1>, vector<16x64xf32>
    %cst_93 = arith.constant 3.125000e-02 : f32
    %342 = vector.broadcast %cst_93 : f32 to vector<16x64xf32>
    %343 = arith.mulf %341, %342 : vector<16x64xf32>
    %cst_94 = arith.constant 9.99999974E-6 : f32
    %344 = vector.broadcast %cst_94 : f32 to vector<16x64xf32>
    %345 = arith.addf %343, %344 : vector<16x64xf32>
    %346 = math.rsqrt %345 : vector<16x64xf32>
    %347 = arith.mulf %329, %346 : vector<16x64xf32>
    %348 = vector.broadcast %310 : vector<1x64xf32> to vector<16x64xf32>
    %349 = arith.mulf %347, %348 : vector<16x64xf32>
    %350 = vector.broadcast %311 : vector<1x64xf32> to vector<16x64xf32>
    %351 = arith.addf %349, %350 : vector<16x64xf32>
    %c120 = arith.constant 120 : index
    %c0_95 = arith.constant 0 : index
    %352 = vector.load %arg3[%c120, %c0_95] : memref<240x256xf32, #tpu.memory_space<vmem>>, vector<2x64xf32>
    %353 = vector.extract_strided_slice %352 {offsets = [0, 0], sizes = [1, 64], strides = [1, 1]} : vector<2x64xf32> to vector<1x64xf32>
    %354 = vector.extract_strided_slice %352 {offsets = [1, 0], sizes = [1, 64], strides = [1, 1]} : vector<2x64xf32> to vector<1x64xf32>
    %355 = tpu.iota {dimensions = array<i32: 1>} : vector<16x64xi32>
    %c32_i32_96 = arith.constant 32 : i32
    %356 = vector.broadcast %c32_i32_96 : i32 to vector<16x64xi32>
    %357 = arith.cmpi slt, %355, %356 : vector<16x64xi32>
    %cst_97 = arith.constant 0.000000e+00 : f32
    %358 = vector.broadcast %cst_97 : f32 to vector<16x64xf32>
    %cst_98 = arith.constant dense<0.000000e+00> : vector<16xf32>
    %359 = vector.multi_reduction <add>, %351, %cst_98 [1] : vector<16x64xf32> to vector<16xf32>
    %360 = vector.shape_cast %359 : vector<16xf32> to vector<16x1xf32>
    %361 = arith.select %357, %351, %358 : vector<16x64xi1>, vector<16x64xf32>
    %cst_99 = arith.constant dense<0.000000e+00> : vector<16xf32>
    %362 = vector.multi_reduction <add>, %361, %cst_99 [1] : vector<16x64xf32> to vector<16xf32>
    %363 = vector.shape_cast %362 : vector<16xf32> to vector<16x1xf32>
    %364 = arith.subf %360, %363 : vector<16x1xf32>
    %365 = vector.shape_cast %363 : vector<16x1xf32> to vector<16x1xf32>
    %366 = vector.broadcast %365 : vector<16x1xf32> to vector<16x64xf32>
    %367 = vector.shape_cast %364 : vector<16x1xf32> to vector<16x1xf32>
    %368 = vector.broadcast %367 : vector<16x1xf32> to vector<16x64xf32>
    %369 = arith.select %357, %366, %368 : vector<16x64xi1>, vector<16x64xf32>
    %cst_100 = arith.constant 3.125000e-02 : f32
    %370 = vector.broadcast %cst_100 : f32 to vector<16x64xf32>
    %371 = arith.mulf %369, %370 : vector<16x64xf32>
    %372 = arith.subf %351, %371 : vector<16x64xf32>
    %373 = arith.mulf %372, %372 : vector<16x64xf32>
    %cst_101 = arith.constant dense<0.000000e+00> : vector<16xf32>
    %374 = vector.multi_reduction <add>, %373, %cst_101 [1] : vector<16x64xf32> to vector<16xf32>
    %375 = vector.shape_cast %374 : vector<16xf32> to vector<16x1xf32>
    %376 = arith.select %357, %373, %358 : vector<16x64xi1>, vector<16x64xf32>
    %cst_102 = arith.constant dense<0.000000e+00> : vector<16xf32>
    %377 = vector.multi_reduction <add>, %376, %cst_102 [1] : vector<16x64xf32> to vector<16xf32>
    %378 = vector.shape_cast %377 : vector<16xf32> to vector<16x1xf32>
    %379 = arith.subf %375, %378 : vector<16x1xf32>
    %380 = vector.shape_cast %378 : vector<16x1xf32> to vector<16x1xf32>
    %381 = vector.broadcast %380 : vector<16x1xf32> to vector<16x64xf32>
    %382 = vector.shape_cast %379 : vector<16x1xf32> to vector<16x1xf32>
    %383 = vector.broadcast %382 : vector<16x1xf32> to vector<16x64xf32>
    %384 = arith.select %357, %381, %383 : vector<16x64xi1>, vector<16x64xf32>
    %cst_103 = arith.constant 3.125000e-02 : f32
    %385 = vector.broadcast %cst_103 : f32 to vector<16x64xf32>
    %386 = arith.mulf %384, %385 : vector<16x64xf32>
    %cst_104 = arith.constant 9.99999974E-6 : f32
    %387 = vector.broadcast %cst_104 : f32 to vector<16x64xf32>
    %388 = arith.addf %386, %387 : vector<16x64xf32>
    %389 = math.rsqrt %388 : vector<16x64xf32>
    %390 = arith.mulf %372, %389 : vector<16x64xf32>
    %391 = vector.broadcast %353 : vector<1x64xf32> to vector<16x64xf32>
    %392 = arith.mulf %390, %391 : vector<16x64xf32>
    %393 = vector.broadcast %354 : vector<1x64xf32> to vector<16x64xf32>
    %394 = arith.addf %392, %393 : vector<16x64xf32>
    %c112 = arith.constant 112 : index
    %c0_105 = arith.constant 0 : index
    %395 = vector.load %arg3[%c112, %c0_105] : memref<240x256xf32, #tpu.memory_space<vmem>>, vector<8x32xf32>
    %c128 = arith.constant 128 : index
    %c0_106 = arith.constant 0 : index
    %396 = vector.load %arg3[%c128, %c0_106] : memref<240x256xf32, #tpu.memory_space<vmem>>, vector<2x32xf32>
    %397 = vector.extract_strided_slice %396 {offsets = [0, 0], sizes = [1, 32], strides = [1, 1]} : vector<2x32xf32> to vector<1x32xf32>
    %398 = vector.extract_strided_slice %396 {offsets = [1, 0], sizes = [1, 32], strides = [1, 1]} : vector<2x32xf32> to vector<1x32xf32>
    %cst_107 = arith.constant dense<0.000000e+00> : vector<8xf32>
    %399 = vector.multi_reduction <add>, %395, %cst_107 [1] : vector<8x32xf32> to vector<8xf32>
    %400 = vector.shape_cast %399 : vector<8xf32> to vector<8x1xf32>
    %cst_108 = arith.constant 3.200000e+01 : f32
    %401 = vector.broadcast %cst_108 : f32 to vector<8x1xf32>
    %402 = arith.divf %400, %401 : vector<8x1xf32>
    %403 = vector.broadcast %402 : vector<8x1xf32> to vector<8x32xf32>
    %404 = arith.subf %395, %403 : vector<8x32xf32>
    %405 = arith.mulf %404, %404 : vector<8x32xf32>
    %cst_109 = arith.constant dense<0.000000e+00> : vector<8xf32>
    %406 = vector.multi_reduction <add>, %405, %cst_109 [1] : vector<8x32xf32> to vector<8xf32>
    %407 = vector.shape_cast %406 : vector<8xf32> to vector<8x1xf32>
    %cst_110 = arith.constant 3.200000e+01 : f32
    %408 = vector.broadcast %cst_110 : f32 to vector<8x1xf32>
    %409 = arith.divf %407, %408 : vector<8x1xf32>
    %cst_111 = arith.constant 9.99999974E-6 : f32
    %410 = vector.broadcast %cst_111 : f32 to vector<8x1xf32>
    %411 = arith.addf %409, %410 : vector<8x1xf32>
    %412 = math.rsqrt %411 : vector<8x1xf32>
    %413 = vector.broadcast %412 : vector<8x1xf32> to vector<8x32xf32>
    %414 = arith.mulf %404, %413 : vector<8x32xf32>
    %415 = vector.broadcast %397 : vector<1x32xf32> to vector<8x32xf32>
    %416 = arith.mulf %414, %415 : vector<8x32xf32>
    %417 = vector.broadcast %398 : vector<1x32xf32> to vector<8x32xf32>
    %418 = arith.addf %416, %417 : vector<8x32xf32>
    %c928 = arith.constant 928 : index
    %c0_112 = arith.constant 0 : index
    %419 = vector.load %arg2[%c928, %c0_112] : memref<1648x256xbf16, #tpu.memory_space<vmem>>, vector<32x64xbf16>
    %420 = arith.truncf %418 : vector<8x32xf32> to vector<8x32xbf16>
    %cst_113 = arith.constant dense<0.000000e+00> : vector<8x64xf32>
    %421 = tpu.matmul %420, %419, %cst_113 {dimension_numbers = #tpu.dot_dimension_numbers<[1], [0], [0], [1], [0, 0, 1, 1], [], []>} : vector<8x32xbf16>, vector<32x64xbf16>, vector<8x64xf32> -> vector<8x64xf32>
    %c160_114 = arith.constant 160 : index
    %c0_115 = arith.constant 0 : index
    %422 = vector.load %arg3[%c160_114, %c0_115] : memref<240x256xf32, #tpu.memory_space<vmem>>, vector<1x64xf32>
    %423 = vector.broadcast %422 : vector<1x64xf32> to vector<8x64xf32>
    %424 = arith.addf %421, %423 : vector<8x64xf32>
    %c960 = arith.constant 960 : index
    %c0_116 = arith.constant 0 : index
    %425 = vector.load %arg2[%c960, %c0_116] : memref<1648x256xbf16, #tpu.memory_space<vmem>>, vector<64x128xbf16>
    %426 = arith.truncf %394 : vector<16x64xf32> to vector<16x64xbf16>
    %cst_117 = arith.constant dense<0.000000e+00> : vector<16x128xf32>
    %427 = tpu.matmul %426, %425, %cst_117 {dimension_numbers = #tpu.dot_dimension_numbers<[1], [0], [0], [1], [0, 0, 1, 1], [], []>} : vector<16x64xbf16>, vector<64x128xbf16>, vector<16x128xf32> -> vector<16x128xf32>
    %c168 = arith.constant 168 : index
    %c0_118 = arith.constant 0 : index
    %428 = vector.load %arg3[%c168, %c0_118] : memref<240x256xf32, #tpu.memory_space<vmem>>, vector<1x128xf32>
    %429 = vector.broadcast %428 : vector<1x128xf32> to vector<16x128xf32>
    %430 = arith.addf %427, %429 : vector<16x128xf32>
    %c176 = arith.constant 176 : index
    %c0_119 = arith.constant 0 : index
    %431 = vector.load %arg3[%c176, %c0_119] : memref<240x256xf32, #tpu.memory_space<vmem>>, vector<8x128xf32>
    %432 = vector.shape_cast %430 : vector<16x128xf32> to vector<2x8x128xf32>
    %433 = vector.shape_cast %431 : vector<8x128xf32> to vector<1x8x128xf32>
    %434 = vector.broadcast %433 : vector<1x8x128xf32> to vector<2x8x128xf32>
    %435 = arith.addf %432, %434 : vector<2x8x128xf32>
    %436 = vector.shape_cast %435 : vector<2x8x128xf32> to vector<16x128xf32>
    %437 = vector.shape_cast %424 : vector<8x64xf32> to vector<1x8x64xf32>
    %438 = vector.shape_cast %437 : vector<1x8x64xf32> to vector<1x8x64xf32>
    %439 = vector.broadcast %438 : vector<1x8x64xf32> to vector<2x8x64xf32>
    %440 = vector.extract_strided_slice %436 {offsets = [0, 0], sizes = [16, 64], strides = [1, 1]} : vector<16x128xf32> to vector<16x64xf32>
    %441 = vector.shape_cast %440 : vector<16x64xf32> to vector<2x8x64xf32>
    %442 = vector.extract_strided_slice %436 {offsets = [0, 64], sizes = [16, 64], strides = [1, 1]} : vector<16x128xf32> to vector<16x64xf32>
    %443 = vector.shape_cast %442 : vector<16x64xf32> to vector<2x8x64xf32>
    %444 = vector.shape_cast %439 : vector<2x8x64xf32> to vector<2x8x1x64xf32>
    %445 = vector.shape_cast %441 : vector<2x8x64xf32> to vector<2x1x8x64xf32>
    %446 = vector.broadcast %444 : vector<2x8x1x64xf32> to vector<2x8x8x64xf32>
    %447 = vector.broadcast %445 : vector<2x1x8x64xf32> to vector<2x8x8x64xf32>
    %448 = arith.mulf %446, %447 : vector<2x8x8x64xf32>
    %449 = vector.shape_cast %448 : vector<2x8x8x64xf32> to vector<128x64xf32>
    %450 = arith.truncf %449 : vector<128x64xf32> to vector<128x64xbf16>
    %cst_120 = arith.constant dense<0.000000e+00> : vector<128x16xf32>
    %451 = tpu.matmul %450, %0, %cst_120 {dimension_numbers = #tpu.dot_dimension_numbers<[1], [0], [0], [1], [0, 0, 1, 1], [], []>} : vector<128x64xbf16>, vector<64x16xbf16>, vector<128x16xf32> -> vector<128x16xf32>
    %452 = vector.shape_cast %451 : vector<128x16xf32> to vector<2x8x8x16xf32>
    %cst_121 = arith.constant dense<0xFF800000> : vector<2x8x16xf32>
    %453 = vector.multi_reduction <maximumf>, %452, %cst_121 [2] : vector<2x8x8x16xf32> to vector<2x8x16xf32>
    %454 = vector.shape_cast %453 : vector<2x8x16xf32> to vector<2x8x1x16xf32>
    %455 = vector.broadcast %454 : vector<2x8x1x16xf32> to vector<2x8x8x16xf32>
    %456 = arith.subf %452, %455 : vector<2x8x8x16xf32>
    %457 = math.exp %456 : vector<2x8x8x16xf32>
    %cst_122 = arith.constant dense<0.000000e+00> : vector<2x8x16xf32>
    %458 = vector.multi_reduction <add>, %457, %cst_122 [2] : vector<2x8x8x16xf32> to vector<2x8x16xf32>
    %459 = vector.shape_cast %458 : vector<2x8x16xf32> to vector<2x8x1x16xf32>
    %460 = tpu.reciprocal %459 {approx = true} : vector<2x8x1x16xf32> -> vector<2x8x1x16xf32>
    %461 = vector.broadcast %460 : vector<2x8x1x16xf32> to vector<2x8x8x16xf32>
    %462 = arith.mulf %457, %461 : vector<2x8x8x16xf32>
    %463 = vector.shape_cast %462 : vector<2x8x8x16xf32> to vector<128x16xf32>
    %464 = arith.truncf %463 : vector<128x16xf32> to vector<128x16xbf16>
    %cst_123 = arith.constant dense<0.000000e+00> : vector<128x64xf32>
    %465 = tpu.matmul %464, %1, %cst_123 {dimension_numbers = #tpu.dot_dimension_numbers<[1], [0], [0], [1], [0, 0, 1, 1], [], []>} : vector<128x16xbf16>, vector<16x64xbf16>, vector<128x64xf32> -> vector<128x64xf32>
    %466 = vector.shape_cast %465 : vector<128x64xf32> to vector<2x8x8x64xf32>
    %467 = vector.shape_cast %443 : vector<2x8x64xf32> to vector<2x1x8x64xf32>
    %468 = vector.broadcast %467 : vector<2x1x8x64xf32> to vector<2x8x8x64xf32>
    %469 = arith.mulf %466, %468 : vector<2x8x8x64xf32>
    %cst_124 = arith.constant dense<0.000000e+00> : vector<2x8x64xf32>
    %470 = vector.multi_reduction <add>, %469, %cst_124 [2] : vector<2x8x8x64xf32> to vector<2x8x64xf32>
    %471 = vector.shape_cast %470 : vector<2x8x64xf32> to vector<16x64xf32>
    %c1024 = arith.constant 1024 : index
    %c0_125 = arith.constant 0 : index
    %472 = vector.load %arg2[%c1024, %c0_125] : memref<1648x256xbf16, #tpu.memory_space<vmem>>, vector<64x64xbf16>
    %473 = arith.truncf %471 : vector<16x64xf32> to vector<16x64xbf16>
    %cst_126 = arith.constant dense<0.000000e+00> : vector<16x64xf32>
    %474 = tpu.matmul %473, %472, %cst_126 {dimension_numbers = #tpu.dot_dimension_numbers<[1], [0], [0], [1], [0, 0, 1, 1], [], []>} : vector<16x64xbf16>, vector<64x64xbf16>, vector<16x64xf32> -> vector<16x64xf32>
    %c184 = arith.constant 184 : index
    %c0_127 = arith.constant 0 : index
    %475 = vector.load %arg3[%c184, %c0_127] : memref<240x256xf32, #tpu.memory_space<vmem>>, vector<1x64xf32>
    %476 = vector.broadcast %475 : vector<1x64xf32> to vector<16x64xf32>
    %477 = arith.addf %474, %476 : vector<16x64xf32>
    %478 = vector.shape_cast %395 : vector<8x32xf32> to vector<1x8x32xf32>
    %479 = vector.shape_cast %478 : vector<1x8x32xf32> to vector<1x8x32xf32>
    %480 = vector.broadcast %479 : vector<1x8x32xf32> to vector<2x8x32xf32>
    %481 = vector.shape_cast %480 : vector<2x8x32xf32> to vector<16x32xf32>
    %482 = vector.extract_strided_slice %477 {offsets = [0, 0], sizes = [16, 32], strides = [1, 1]} : vector<16x64xf32> to vector<16x32xf32>
    %483 = arith.addf %481, %482 : vector<16x32xf32>
    %484 = vector.extract_strided_slice %477 {offsets = [0, 32], sizes = [16, 32], strides = [1, 1]} : vector<16x64xf32> to vector<16x32xf32>
    %485 = arith.addf %483, %484 : vector<16x32xf32>
    %c136 = arith.constant 136 : index
    %c0_128 = arith.constant 0 : index
    %486 = vector.load %arg3[%c136, %c0_128] : memref<240x256xf32, #tpu.memory_space<vmem>>, vector<2x32xf32>
    %487 = vector.extract_strided_slice %486 {offsets = [0, 0], sizes = [1, 32], strides = [1, 1]} : vector<2x32xf32> to vector<1x32xf32>
    %488 = vector.extract_strided_slice %486 {offsets = [1, 0], sizes = [1, 32], strides = [1, 1]} : vector<2x32xf32> to vector<1x32xf32>
    %cst_129 = arith.constant dense<0.000000e+00> : vector<16xf32>
    %489 = vector.multi_reduction <add>, %485, %cst_129 [1] : vector<16x32xf32> to vector<16xf32>
    %490 = vector.shape_cast %489 : vector<16xf32> to vector<16x1xf32>
    %cst_130 = arith.constant 3.200000e+01 : f32
    %491 = vector.broadcast %cst_130 : f32 to vector<16x1xf32>
    %492 = arith.divf %490, %491 : vector<16x1xf32>
    %493 = vector.broadcast %492 : vector<16x1xf32> to vector<16x32xf32>
    %494 = arith.subf %485, %493 : vector<16x32xf32>
    %495 = arith.mulf %494, %494 : vector<16x32xf32>
    %cst_131 = arith.constant dense<0.000000e+00> : vector<16xf32>
    %496 = vector.multi_reduction <add>, %495, %cst_131 [1] : vector<16x32xf32> to vector<16xf32>
    %497 = vector.shape_cast %496 : vector<16xf32> to vector<16x1xf32>
    %cst_132 = arith.constant 3.200000e+01 : f32
    %498 = vector.broadcast %cst_132 : f32 to vector<16x1xf32>
    %499 = arith.divf %497, %498 : vector<16x1xf32>
    %cst_133 = arith.constant 9.99999974E-6 : f32
    %500 = vector.broadcast %cst_133 : f32 to vector<16x1xf32>
    %501 = arith.addf %499, %500 : vector<16x1xf32>
    %502 = math.rsqrt %501 : vector<16x1xf32>
    %503 = vector.broadcast %502 : vector<16x1xf32> to vector<16x32xf32>
    %504 = arith.mulf %494, %503 : vector<16x32xf32>
    %505 = vector.broadcast %487 : vector<1x32xf32> to vector<16x32xf32>
    %506 = arith.mulf %504, %505 : vector<16x32xf32>
    %507 = vector.broadcast %488 : vector<1x32xf32> to vector<16x32xf32>
    %508 = arith.addf %506, %507 : vector<16x32xf32>
    %c1088 = arith.constant 1088 : index
    %c0_134 = arith.constant 0 : index
    %509 = vector.load %arg2[%c1088, %c0_134] : memref<1648x256xbf16, #tpu.memory_space<vmem>>, vector<64x64xbf16>
    %510 = arith.truncf %394 : vector<16x64xf32> to vector<16x64xbf16>
    %cst_135 = arith.constant dense<0.000000e+00> : vector<16x64xf32>
    %511 = tpu.matmul %510, %509, %cst_135 {dimension_numbers = #tpu.dot_dimension_numbers<[1], [0], [0], [1], [0, 0, 1, 1], [], []>} : vector<16x64xbf16>, vector<64x64xbf16>, vector<16x64xf32> -> vector<16x64xf32>
    %c192 = arith.constant 192 : index
    %c0_136 = arith.constant 0 : index
    %512 = vector.load %arg3[%c192, %c0_136] : memref<240x256xf32, #tpu.memory_space<vmem>>, vector<1x64xf32>
    %513 = vector.broadcast %512 : vector<1x64xf32> to vector<16x64xf32>
    %514 = arith.addf %511, %513 : vector<16x64xf32>
    %c200 = arith.constant 200 : index
    %c0_137 = arith.constant 0 : index
    %515 = vector.load %arg3[%c200, %c0_137] : memref<240x256xf32, #tpu.memory_space<vmem>>, vector<8x64xf32>
    %516 = vector.shape_cast %514 : vector<16x64xf32> to vector<2x8x64xf32>
    %517 = vector.shape_cast %515 : vector<8x64xf32> to vector<1x8x64xf32>
    %518 = vector.broadcast %517 : vector<1x8x64xf32> to vector<2x8x64xf32>
    %519 = arith.addf %516, %518 : vector<2x8x64xf32>
    %520 = vector.shape_cast %519 : vector<2x8x64xf32> to vector<16x64xf32>
    %c1152 = arith.constant 1152 : index
    %c0_138 = arith.constant 0 : index
    %521 = vector.load %arg2[%c1152, %c0_138] : memref<1648x256xbf16, #tpu.memory_space<vmem>>, vector<32x128xbf16>
    %522 = arith.truncf %508 : vector<16x32xf32> to vector<16x32xbf16>
    %cst_139 = arith.constant dense<0.000000e+00> : vector<16x128xf32>
    %523 = tpu.matmul %522, %521, %cst_139 {dimension_numbers = #tpu.dot_dimension_numbers<[1], [0], [0], [1], [0, 0, 1, 1], [], []>} : vector<16x32xbf16>, vector<32x128xbf16>, vector<16x128xf32> -> vector<16x128xf32>
    %c208 = arith.constant 208 : index
    %c0_140 = arith.constant 0 : index
    %524 = vector.load %arg3[%c208, %c0_140] : memref<240x256xf32, #tpu.memory_space<vmem>>, vector<1x128xf32>
    %525 = vector.broadcast %524 : vector<1x128xf32> to vector<16x128xf32>
    %526 = arith.addf %523, %525 : vector<16x128xf32>
    %527 = vector.shape_cast %520 : vector<16x64xf32> to vector<2x8x64xf32>
    %528 = vector.extract_strided_slice %526 {offsets = [0, 0], sizes = [16, 64], strides = [1, 1]} : vector<16x128xf32> to vector<16x64xf32>
    %529 = vector.shape_cast %528 : vector<16x64xf32> to vector<2x8x64xf32>
    %530 = vector.extract_strided_slice %526 {offsets = [0, 64], sizes = [16, 64], strides = [1, 1]} : vector<16x128xf32> to vector<16x64xf32>
    %531 = vector.shape_cast %530 : vector<16x64xf32> to vector<2x8x64xf32>
    %532 = vector.shape_cast %527 : vector<2x8x64xf32> to vector<2x8x1x64xf32>
    %533 = vector.shape_cast %529 : vector<2x8x64xf32> to vector<2x1x8x64xf32>
    %534 = vector.broadcast %532 : vector<2x8x1x64xf32> to vector<2x8x8x64xf32>
    %535 = vector.broadcast %533 : vector<2x1x8x64xf32> to vector<2x8x8x64xf32>
    %536 = arith.mulf %534, %535 : vector<2x8x8x64xf32>
    %537 = vector.shape_cast %536 : vector<2x8x8x64xf32> to vector<128x64xf32>
    %538 = arith.truncf %537 : vector<128x64xf32> to vector<128x64xbf16>
    %cst_141 = arith.constant dense<0.000000e+00> : vector<128x16xf32>
    %539 = tpu.matmul %538, %0, %cst_141 {dimension_numbers = #tpu.dot_dimension_numbers<[1], [0], [0], [1], [0, 0, 1, 1], [], []>} : vector<128x64xbf16>, vector<64x16xbf16>, vector<128x16xf32> -> vector<128x16xf32>
    %540 = vector.shape_cast %539 : vector<128x16xf32> to vector<2x8x8x16xf32>
    %541 = tpu.iota {dimensions = array<i32: 2>} : vector<2x8x8x16xi32>
    %c4_i32 = arith.constant 4 : i32
    %542 = vector.broadcast %c4_i32 : i32 to vector<2x8x8x16xi32>
    %543 = arith.cmpi slt, %541, %542 : vector<2x8x8x16xi32>
    %cst_142 = arith.constant -1.000000e+30 : f32
    %544 = vector.broadcast %cst_142 : f32 to vector<2x8x8x16xf32>
    %545 = arith.select %543, %540, %544 : vector<2x8x8x16xi1>, vector<2x8x8x16xf32>
    %cst_143 = arith.constant dense<0xFF800000> : vector<2x8x16xf32>
    %546 = vector.multi_reduction <maximumf>, %545, %cst_143 [2] : vector<2x8x8x16xf32> to vector<2x8x16xf32>
    %547 = vector.shape_cast %546 : vector<2x8x16xf32> to vector<2x8x1x16xf32>
    %548 = vector.broadcast %547 : vector<2x8x1x16xf32> to vector<2x8x8x16xf32>
    %549 = arith.subf %545, %548 : vector<2x8x8x16xf32>
    %550 = math.exp %549 : vector<2x8x8x16xf32>
    %cst_144 = arith.constant dense<0.000000e+00> : vector<2x8x16xf32>
    %551 = vector.multi_reduction <add>, %550, %cst_144 [2] : vector<2x8x8x16xf32> to vector<2x8x16xf32>
    %552 = vector.shape_cast %551 : vector<2x8x16xf32> to vector<2x8x1x16xf32>
    %553 = tpu.reciprocal %552 {approx = true} : vector<2x8x1x16xf32> -> vector<2x8x1x16xf32>
    %554 = vector.broadcast %553 : vector<2x8x1x16xf32> to vector<2x8x8x16xf32>
    %555 = arith.mulf %550, %554 : vector<2x8x8x16xf32>
    %556 = vector.shape_cast %555 : vector<2x8x8x16xf32> to vector<128x16xf32>
    %557 = arith.truncf %556 : vector<128x16xf32> to vector<128x16xbf16>
    %cst_145 = arith.constant dense<0.000000e+00> : vector<128x64xf32>
    %558 = tpu.matmul %557, %1, %cst_145 {dimension_numbers = #tpu.dot_dimension_numbers<[1], [0], [0], [1], [0, 0, 1, 1], [], []>} : vector<128x16xbf16>, vector<16x64xbf16>, vector<128x64xf32> -> vector<128x64xf32>
    %559 = vector.shape_cast %558 : vector<128x64xf32> to vector<2x8x8x64xf32>
    %560 = vector.shape_cast %531 : vector<2x8x64xf32> to vector<2x1x8x64xf32>
    %561 = vector.broadcast %560 : vector<2x1x8x64xf32> to vector<2x8x8x64xf32>
    %562 = arith.mulf %559, %561 : vector<2x8x8x64xf32>
    %cst_146 = arith.constant dense<0.000000e+00> : vector<2x8x64xf32>
    %563 = vector.multi_reduction <add>, %562, %cst_146 [2] : vector<2x8x8x64xf32> to vector<2x8x64xf32>
    %564 = vector.shape_cast %563 : vector<2x8x64xf32> to vector<16x64xf32>
    %c1184 = arith.constant 1184 : index
    %c0_147 = arith.constant 0 : index
    %565 = vector.load %arg2[%c1184, %c0_147] : memref<1648x256xbf16, #tpu.memory_space<vmem>>, vector<64x64xbf16>
    %566 = arith.truncf %564 : vector<16x64xf32> to vector<16x64xbf16>
    %cst_148 = arith.constant dense<0.000000e+00> : vector<16x64xf32>
    %567 = tpu.matmul %566, %565, %cst_148 {dimension_numbers = #tpu.dot_dimension_numbers<[1], [0], [0], [1], [0, 0, 1, 1], [], []>} : vector<16x64xbf16>, vector<64x64xbf16>, vector<16x64xf32> -> vector<16x64xf32>
    %568 = arith.addf %351, %567 : vector<16x64xf32>
    %c216 = arith.constant 216 : index
    %c0_149 = arith.constant 0 : index
    %569 = vector.load %arg3[%c216, %c0_149] : memref<240x256xf32, #tpu.memory_space<vmem>>, vector<1x64xf32>
    %570 = vector.broadcast %569 : vector<1x64xf32> to vector<16x64xf32>
    %571 = arith.addf %568, %570 : vector<16x64xf32>
    %c144 = arith.constant 144 : index
    %c0_150 = arith.constant 0 : index
    %572 = vector.load %arg3[%c144, %c0_150] : memref<240x256xf32, #tpu.memory_space<vmem>>, vector<2x64xf32>
    %573 = vector.extract_strided_slice %572 {offsets = [0, 0], sizes = [1, 64], strides = [1, 1]} : vector<2x64xf32> to vector<1x64xf32>
    %574 = vector.extract_strided_slice %572 {offsets = [1, 0], sizes = [1, 64], strides = [1, 1]} : vector<2x64xf32> to vector<1x64xf32>
    %575 = tpu.iota {dimensions = array<i32: 1>} : vector<16x64xi32>
    %c32_i32_151 = arith.constant 32 : i32
    %576 = vector.broadcast %c32_i32_151 : i32 to vector<16x64xi32>
    %577 = arith.cmpi slt, %575, %576 : vector<16x64xi32>
    %cst_152 = arith.constant 0.000000e+00 : f32
    %578 = vector.broadcast %cst_152 : f32 to vector<16x64xf32>
    %cst_153 = arith.constant dense<0.000000e+00> : vector<16xf32>
    %579 = vector.multi_reduction <add>, %571, %cst_153 [1] : vector<16x64xf32> to vector<16xf32>
    %580 = vector.shape_cast %579 : vector<16xf32> to vector<16x1xf32>
    %581 = arith.select %577, %571, %578 : vector<16x64xi1>, vector<16x64xf32>
    %cst_154 = arith.constant dense<0.000000e+00> : vector<16xf32>
    %582 = vector.multi_reduction <add>, %581, %cst_154 [1] : vector<16x64xf32> to vector<16xf32>
    %583 = vector.shape_cast %582 : vector<16xf32> to vector<16x1xf32>
    %584 = arith.subf %580, %583 : vector<16x1xf32>
    %585 = vector.shape_cast %583 : vector<16x1xf32> to vector<16x1xf32>
    %586 = vector.broadcast %585 : vector<16x1xf32> to vector<16x64xf32>
    %587 = vector.shape_cast %584 : vector<16x1xf32> to vector<16x1xf32>
    %588 = vector.broadcast %587 : vector<16x1xf32> to vector<16x64xf32>
    %589 = arith.select %577, %586, %588 : vector<16x64xi1>, vector<16x64xf32>
    %cst_155 = arith.constant 3.125000e-02 : f32
    %590 = vector.broadcast %cst_155 : f32 to vector<16x64xf32>
    %591 = arith.mulf %589, %590 : vector<16x64xf32>
    %592 = arith.subf %571, %591 : vector<16x64xf32>
    %593 = arith.mulf %592, %592 : vector<16x64xf32>
    %cst_156 = arith.constant dense<0.000000e+00> : vector<16xf32>
    %594 = vector.multi_reduction <add>, %593, %cst_156 [1] : vector<16x64xf32> to vector<16xf32>
    %595 = vector.shape_cast %594 : vector<16xf32> to vector<16x1xf32>
    %596 = arith.select %577, %593, %578 : vector<16x64xi1>, vector<16x64xf32>
    %cst_157 = arith.constant dense<0.000000e+00> : vector<16xf32>
    %597 = vector.multi_reduction <add>, %596, %cst_157 [1] : vector<16x64xf32> to vector<16xf32>
    %598 = vector.shape_cast %597 : vector<16xf32> to vector<16x1xf32>
    %599 = arith.subf %595, %598 : vector<16x1xf32>
    %600 = vector.shape_cast %598 : vector<16x1xf32> to vector<16x1xf32>
    %601 = vector.broadcast %600 : vector<16x1xf32> to vector<16x64xf32>
    %602 = vector.shape_cast %599 : vector<16x1xf32> to vector<16x1xf32>
    %603 = vector.broadcast %602 : vector<16x1xf32> to vector<16x64xf32>
    %604 = arith.select %577, %601, %603 : vector<16x64xi1>, vector<16x64xf32>
    %cst_158 = arith.constant 3.125000e-02 : f32
    %605 = vector.broadcast %cst_158 : f32 to vector<16x64xf32>
    %606 = arith.mulf %604, %605 : vector<16x64xf32>
    %cst_159 = arith.constant 9.99999974E-6 : f32
    %607 = vector.broadcast %cst_159 : f32 to vector<16x64xf32>
    %608 = arith.addf %606, %607 : vector<16x64xf32>
    %609 = math.rsqrt %608 : vector<16x64xf32>
    %610 = arith.mulf %592, %609 : vector<16x64xf32>
    %611 = vector.broadcast %573 : vector<1x64xf32> to vector<16x64xf32>
    %612 = arith.mulf %610, %611 : vector<16x64xf32>
    %613 = vector.broadcast %574 : vector<1x64xf32> to vector<16x64xf32>
    %614 = arith.addf %612, %613 : vector<16x64xf32>
    %c1248 = arith.constant 1248 : index
    %c0_160 = arith.constant 0 : index
    %615 = vector.load %arg2[%c1248, %c0_160] : memref<1648x256xbf16, #tpu.memory_space<vmem>>, vector<64x256xbf16>
    %616 = arith.truncf %614 : vector<16x64xf32> to vector<16x64xbf16>
    %cst_161 = arith.constant dense<0.000000e+00> : vector<16x256xf32>
    %617 = tpu.matmul %616, %615, %cst_161 {dimension_numbers = #tpu.dot_dimension_numbers<[1], [0], [0], [1], [0, 0, 1, 1], [], []>} : vector<16x64xbf16>, vector<64x256xbf16>, vector<16x256xf32> -> vector<16x256xf32>
    %c224_162 = arith.constant 224 : index
    %c0_163 = arith.constant 0 : index
    %618 = vector.load %arg3[%c224_162, %c0_163] : memref<240x256xf32, #tpu.memory_space<vmem>>, vector<1x256xf32>
    %619 = vector.broadcast %618 : vector<1x256xf32> to vector<16x256xf32>
    %620 = arith.addf %617, %619 : vector<16x256xf32>
    %cst_164 = arith.constant 0.000000e+00 : f32
    %621 = vector.broadcast %cst_164 : f32 to vector<16x256xf32>
    %622 = arith.maximumf %620, %621 : vector<16x256xf32>
    %c1312 = arith.constant 1312 : index
    %c0_165 = arith.constant 0 : index
    %623 = vector.load %arg2[%c1312, %c0_165] : memref<1648x256xbf16, #tpu.memory_space<vmem>>, vector<256x64xbf16>
    %624 = arith.truncf %622 : vector<16x256xf32> to vector<16x256xbf16>
    %cst_166 = arith.constant dense<0.000000e+00> : vector<16x64xf32>
    %625 = tpu.matmul %624, %623, %cst_166 {dimension_numbers = #tpu.dot_dimension_numbers<[1], [0], [0], [1], [0, 0, 1, 1], [], []>} : vector<16x256xbf16>, vector<256x64xbf16>, vector<16x64xf32> -> vector<16x64xf32>
    %c232 = arith.constant 232 : index
    %c0_167 = arith.constant 0 : index
    %626 = vector.load %arg3[%c232, %c0_167] : memref<240x256xf32, #tpu.memory_space<vmem>>, vector<1x64xf32>
    %627 = vector.broadcast %626 : vector<1x64xf32> to vector<16x64xf32>
    %628 = arith.addf %625, %627 : vector<16x64xf32>
    %629 = arith.addf %571, %628 : vector<16x64xf32>
    %630 = vector.extract_strided_slice %629 {offsets = [0, 0], sizes = [16, 32], strides = [1, 1]} : vector<16x64xf32> to vector<16x32xf32>
    %631 = vector.extract_strided_slice %629 {offsets = [0, 32], sizes = [16, 32], strides = [1, 1]} : vector<16x64xf32> to vector<16x32xf32>
    %632 = arith.addf %630, %631 : vector<16x32xf32>
    %c152 = arith.constant 152 : index
    %c0_168 = arith.constant 0 : index
    %633 = vector.load %arg3[%c152, %c0_168] : memref<240x256xf32, #tpu.memory_space<vmem>>, vector<2x32xf32>
    %634 = vector.extract_strided_slice %633 {offsets = [0, 0], sizes = [1, 32], strides = [1, 1]} : vector<2x32xf32> to vector<1x32xf32>
    %635 = vector.extract_strided_slice %633 {offsets = [1, 0], sizes = [1, 32], strides = [1, 1]} : vector<2x32xf32> to vector<1x32xf32>
    %cst_169 = arith.constant dense<0.000000e+00> : vector<16xf32>
    %636 = vector.multi_reduction <add>, %632, %cst_169 [1] : vector<16x32xf32> to vector<16xf32>
    %637 = vector.shape_cast %636 : vector<16xf32> to vector<16x1xf32>
    %cst_170 = arith.constant 3.200000e+01 : f32
    %638 = vector.broadcast %cst_170 : f32 to vector<16x1xf32>
    %639 = arith.divf %637, %638 : vector<16x1xf32>
    %640 = vector.broadcast %639 : vector<16x1xf32> to vector<16x32xf32>
    %641 = arith.subf %632, %640 : vector<16x32xf32>
    %642 = arith.mulf %641, %641 : vector<16x32xf32>
    %cst_171 = arith.constant dense<0.000000e+00> : vector<16xf32>
    %643 = vector.multi_reduction <add>, %642, %cst_171 [1] : vector<16x32xf32> to vector<16xf32>
    %644 = vector.shape_cast %643 : vector<16xf32> to vector<16x1xf32>
    %cst_172 = arith.constant 3.200000e+01 : f32
    %645 = vector.broadcast %cst_172 : f32 to vector<16x1xf32>
    %646 = arith.divf %644, %645 : vector<16x1xf32>
    %cst_173 = arith.constant 9.99999974E-6 : f32
    %647 = vector.broadcast %cst_173 : f32 to vector<16x1xf32>
    %648 = arith.addf %646, %647 : vector<16x1xf32>
    %649 = math.rsqrt %648 : vector<16x1xf32>
    %650 = vector.broadcast %649 : vector<16x1xf32> to vector<16x32xf32>
    %651 = arith.mulf %641, %650 : vector<16x32xf32>
    %652 = vector.broadcast %634 : vector<1x32xf32> to vector<16x32xf32>
    %653 = arith.mulf %651, %652 : vector<16x32xf32>
    %654 = vector.broadcast %635 : vector<1x32xf32> to vector<16x32xf32>
    %655 = arith.addf %653, %654 : vector<16x32xf32>
    %656 = vector.shape_cast %655 : vector<16x32xf32> to vector<2x8x32xf32>
    %c0_174 = arith.constant 0 : index
    %c0_175 = arith.constant 0 : index
    %c0_176 = arith.constant 0 : index
    %657 = vector.load %arg4[%c0_174, %c0_175, %c0_176] : memref<2x8x32xf32, #tpu.memory_space<vmem>>, vector<2x8x32xf32>
    tpu.vector_store %arg4[%c0_174, %c0_175, %c0_176], %656 {strides = array<i32>} : memref<2x8x32xf32, #tpu.memory_space<vmem>>, vector<2x8x32xf32>,
    return
  }
  func.func @transform_0(%arg0: i32) -> (i32, i32, i32) {
    %c0_i32 = arith.constant 0 : i32
    %c0_i32_0 = arith.constant 0 : i32
    %c0_i32_1 = arith.constant 0 : i32
    return %arg0, %c0_i32, %c0_i32_0 : i32, i32, i32
  }
  func.func @transform_1(%arg0: i32) -> (i32, i32) {
    %c0_i32 = arith.constant 0 : i32
    %c0_i32_0 = arith.constant 0 : i32
    %c0_i32_1 = arith.constant 0 : i32
    return %c0_i32, %c0_i32_0 : i32, i32
  }
  func.func @transform_2(%arg0: i32) -> (i32, i32) {
    %c0_i32 = arith.constant 0 : i32
    %c0_i32_0 = arith.constant 0 : i32
    %c0_i32_1 = arith.constant 0 : i32
    return %c0_i32, %c0_i32_0 : i32, i32
  }
  func.func @transform_3(%arg0: i32) -> (i32, i32, i32) {
    %c0_i32 = arith.constant 0 : i32
    %c0_i32_0 = arith.constant 0 : i32
    %c0_i32_1 = arith.constant 0 : i32
    return %arg0, %c0_i32, %c0_i32_0 : i32, i32, i32
  }
}

</mosaic_0001>

<llo_original>
// kernel: tpu_custom_call.1
$region0: #{tpu_custom_call.1}
  #allocation0 [shape = 'u32[]', space=smem, size = 0x4, offset = 0x4, fixed_abs, tag = 'smem constant byte address 0x4 - core index']
  #allocation1 [shape = 'u32[144,128]{1,0:T(1,128)}', space=vmem, size = 0x12000, scoped, tag = 'internal scratch']
  %s0 = inlined_call_operand.hbm [shape: f32[2,8,24], index: 0, kind: input, shape index: {}]
  %s1 = inlined_call_operand.hbm [shape: bf16[1648,256], index: 1, kind: input, shape index: {}]
  %s2 = inlined_call_operand.hbm [shape: f32[240,256], index: 2, kind: input, shape index: {}]
  %s3 = inlined_call_operand.hbm [shape: f32[2,8,32], index: 3, kind: output, shape index: {}]
  %s4 = sld [smem:[#allocation0]]
  $region34: #{tpu_custom_call.1} parent=0
    _
  %s6 = ssub.s32 1, %s4
  %s7 = scalar_select 0, %s6, %s4
  $region1: #{tpu_custom_call.1} parent=0
    #allocation2 [shape = 'u8[8192]{0}', space=vmem, size = 0x2000, scoped, tag = 'input window, operand 0, single buffered']
    #allocation3 [shape = 's32[1]{0}', space=sflag, size = 0x4, scoped, tag = 'scoped memory for tpu_custom_call.1']
    #allocation4 [shape = 's32[1]{0}', space=sflag, size = 0x4, scoped, tag = 'scoped memory for tpu_custom_call.1']
    #allocation5 [shape = 'u8[843776]{0}', space=vmem, size = 0xce000, scoped, tag = 'input window, operand 1, single buffered']
    #allocation6 [shape = 's32[1]{0}', space=sflag, size = 0x4, scoped, tag = 'scoped memory for tpu_custom_call.1']
    #allocation7 [shape = 'u8[245760]{0}', space=vmem, size = 0x3c000, scoped, tag = 'input window, operand 2, single buffered']
    #allocation8 [shape = 'u8[8192]{0}', space=vmem, size = 0x2000, scoped, tag = 'output window, operand 0, single buffered']
    %8 = vsyncpa [#allocation3], 0
    %9 = vsyncpa [#allocation6], 0
    %10 = vsyncpa [#allocation4], 0
    // Predicated region
    $region2: #{tpu_custom_call.1} parent=1 // pred_check
      _
    $region3: #{tpu_custom_call.1} parent=1 // pred_check_branch
      %12 = sbr.rel (0) target = $region5
    $region4: #{tpu_custom_call.1} parent=1 // pred_region
      %s14 = ssub.s32 256, 256
      %15 = vsyncadd [#allocation3], %s14
      %s16 = sshll.u32 [#allocation2], 4
      %s17 = int_to_ptr.vmem [resolvable:$true] %s16
      %22 = dma.hbm_to_vmem [thread:$0]  %s0, 256, %s17, [#allocation3], 128, 128, 8
    $region5: #{tpu_custom_call.1} parent=1 // pred_fallthru
      _
    // Predicated region
    $region6: #{tpu_custom_call.1} parent=1 // pred_check
      _
    $region7: #{tpu_custom_call.1} parent=1 // pred_check_branch
      %24 = sbr.rel (0) target = $region9
    $region8: #{tpu_custom_call.1} parent=1 // pred_region
      %s26 = ssub.s32 26368, 26368
      %27 = vsyncadd [#allocation6], %s26
      %s28 = sshll.u32 [#allocation5], 4
      %s29 = int_to_ptr.vmem [resolvable:$true] %s28
      %34 = dma.hbm_to_vmem [thread:$0]  %s1, 26368, %s29, [#allocation6], 128, 128, 8
    $region9: #{tpu_custom_call.1} parent=1 // pred_fallthru
      _
    // Predicated region
    $region10: #{tpu_custom_call.1} parent=1 // pred_check
      _
    $region11: #{tpu_custom_call.1} parent=1 // pred_check_branch
      %36 = sbr.rel (0) target = $region13
    $region12: #{tpu_custom_call.1} parent=1 // pred_region
      %s38 = ssub.s32 7680, 7680
      %39 = vsyncadd [#allocation6], %s38
      %s40 = sshll.u32 [#allocation7], 4
      %s41 = int_to_ptr.vmem [resolvable:$true] %s40
      %46 = dma.hbm_to_vmem [thread:$0]  %s2, 7680, %s41, [#allocation6], 256, 256, 16
    $region13: #{tpu_custom_call.1} parent=1 // pred_fallthru
      _
    // Predicated region
    $region14: #{tpu_custom_call.1} parent=1 // pred_check
      _
    $region15: #{tpu_custom_call.1} parent=1 // pred_check_branch
      %48 = sbr.rel (0) target = $region17
    $region16: #{tpu_custom_call.1} parent=1 // pred_region
      %49 = dma.done [#allocation3], 256
    $region17: #{tpu_custom_call.1} parent=1 // pred_fallthru
      _
    // Predicated region
    $region18: #{tpu_custom_call.1} parent=1 // pred_check
      _
    $region19: #{tpu_custom_call.1} parent=1 // pred_check_branch
      %51 = sbr.rel (0) target = $region21
    $region20: #{tpu_custom_call.1} parent=1 // pred_region
      %52 = dma.done [#allocation6], 26368
    $region21: #{tpu_custom_call.1} parent=1 // pred_fallthru
      _
    // Predicated region
    $region22: #{tpu_custom_call.1} parent=1 // pred_check
      _
    $region23: #{tpu_custom_call.1} parent=1 // pred_check_branch
      %54 = sbr.rel (0) target = $region25
    $region24: #{tpu_custom_call.1} parent=1 // pred_region
      %55 = dma.done [#allocation6], 7680
    $region25: #{tpu_custom_call.1} parent=1 // pred_fallthru
      _
    %v57 = vld [vmem:[#allocation5 + $0x620] sm:$0xf]
    %v58 = vld [vmem:[#allocation5 + $0x628] sm:$0xf]
    %v59 = vld [vmem:[#allocation5 + $0x630] sm:$0xf]
    %v60 = vld [vmem:[#allocation5 + $0x638] sm:$0xf]
    %v61 = vld [vmem:[#allocation5 + $0x640] sm:$0xf]
    %v62 = vld [vmem:[#allocation5 + $0x648] sm:$0xf]
    %v63 = vld [vmem:[#allocation5 + $0x650] sm:$0xf]
    %v64 = vld [vmem:[#allocation5 + $0x658] sm:$0xf]
    %v65 = vld [vmem:[#allocation5 + $0x660] sm:$0xf]
    %v66 = vld [vmem:[#allocation5 + $0x668] sm:$0xf]
    %v67 = vld [vmem:[#allocation2] sm:$0xff]
    %v68 = vld [vmem:[#allocation2 + $0x8] sm:$0xff]
    %v69 = vld [vmem:[#allocation5] sm:$0xf]
    %v70 = vld [vmem:[#allocation5 + $0x8] sm:$0xf]
    %v71 = vld [vmem:[#allocation5 + $0x10] sm:$0xf]
    %v72 = vpack.c.bf16 %v68, %v67
    %v76 = vunpack.c.l.b16 %v69
    %v77 = vunpack.c.l.b16 %v70
    %v78 = vunpack.c.l.b16 %v71
    %v79 = vpack.c.b16 %v77, %v76
    %v80 = vpack.c.b16 %v78, %v78
    %vm82 = vcmask 195584
    %v84 = vsel %vm82, %v72, 0
    %vm86 = vcmask 1043456
    %v88 = vsel %vm86, %v80, 0
    %90 = vmatprep.subr.bf16.mxu0 0
    %91 = vmatpush1.bf16.msra.mxu0 %v79
    %92 = vmatprep.subr.bf16.mxu0 0
    %93 = vmatpush1.bf16.msra.mxu0 %v88
    %94 = vmatprep.subr.bf16.mxu0 0
    %95 = vmatpush1.bf16.msra.mxu0 0
    %96 = vmatprep.subr.bf16.mxu0 0
    %97 = vmatpush1.bf16.msra.mxu0 0
    %98 = vmatprep.subr.bf16.mxu0 0
    %99 = vmatpush1.bf16.msra.mxu0 0
    %100 = vmatprep.subr.bf16.mxu0 0
    %101 = vmatpush1.bf16.msra.mxu0 0
    %102 = vmatprep.subr.bf16.mxu0 0
    %103 = vmatpush1.bf16.msra.mxu0 0
    %104 = vmatprep.subr.bf16.mxu0 0
    %105 = vmatpush1.bf16.msra.mxu0 0
    %106 = vmatprep.subr.bf16.mxu0 0
    %107 = vmatpush1.bf16.msra.mxu0 0
    %108 = vmatprep.subr.bf16.mxu0 0
    %109 = vmatpush1.bf16.msra.mxu0 0
    %110 = vmatprep.subr.bf16.mxu0 0
    %111 = vmatpush1.bf16.msra.mxu0 0
    %112 = vmatprep.subr.bf16.mxu0 0
    %113 = vmatpush1.bf16.msra.mxu0 0
    %114 = vmatprep.subr.bf16.mxu0 0
    %115 = vmatpush1.bf16.msra.mxu0 0
    %116 = vmatprep.subr.bf16.mxu0 0
    %117 = vmatpush1.bf16.msra.mxu0 0
    %118 = vmatprep.subr.bf16.mxu0 0
    %119 = vmatpush1.bf16.msra.mxu0 0
    %120 = vmatprep.subr.bf16.mxu0 0
    %121 = vmatpush1.bf16.msra.mxu0 0
    %122 = vmatprep.mubr.bf16.mxu0 0
    %123 = vmatmul.mubr.bf16.gmra.mrb[0].mxu0 %v84
    %v124 = vpop.f32.mrb[0].mxu0
    %v125 = vadd.f32 0.0, %v124
    %v126 = vpop.f32.mrb[0].mxu0
    %v127 = vpop.f32.mrb[0].mxu0
    %v128 = vadd.f32 0.0, %v127
    %v129 = vpop.f32.mrb[0].mxu0
    %130 = vdwg.mxu0
    %v131 = vld [vmem:[#allocation7] sm:$0xff]
    %v132 = vadd.f32 %v125, %v131
    %v133 = vadd.f32 %v128, %v131
    %v134 = vld [vmem:[#allocation5 + $0x20] sm:$0xff]
    %v135 = vld [vmem:[#allocation5 + $0x28] sm:$0xff]
    %v136 = vld [vmem:[#allocation5 + $0x30] sm:$0xff]
    %v137 = vld [vmem:[#allocation5 + $0x38] sm:$0xff]
    %v138 = vld [vmem:[#allocation5 + $0x40] sm:$0xff]
    %v139 = vld [vmem:[#allocation5 + $0x48] sm:$0xff]
    %v140 = vld [vmem:[#allocation5 + $0x50] sm:$0xff]
    %v141 = vld [vmem:[#allocation5 + $0x58] sm:$0xff]
    %v142 = vpack.c.bf16 %v133, %v132
    %s143 = scalar_lea.vmem [#allocation7], 16
    %v144 = vld [vmem:[%s143] ss:$8 sm:$0x3]
    %v146 = vlaneseq
    %v147 = vshrl.u32 %v146, 7
    %v148 = vsub.s32 0, %v147
    %v149 = vrot.slane %v144, %v148
    %v150 = vlaneseq
    %v151 = vshrl.u32 %v150, 7
    %v152 = vsub.s32 1, %v151
    %v153 = vrot.slane %v144, %v152
    %v164 = vunpack.c.l.b16 %v134
    %v165 = vunpack.c.h.b16 %v134
    %v166 = vunpack.c.l.b16 %v135
    %v167 = vunpack.c.h.b16 %v135
    %v168 = vunpack.c.l.b16 %v136
    %v169 = vunpack.c.h.b16 %v136
    %v170 = vunpack.c.l.b16 %v137
    %v171 = vunpack.c.h.b16 %v137
    %v172 = vunpack.c.l.b16 %v138
    %v173 = vunpack.c.h.b16 %v138
    %v174 = vunpack.c.l.b16 %v139
    %v175 = vunpack.c.h.b16 %v139
    %v176 = vunpack.c.l.b16 %v140
    %v177 = vunpack.c.h.b16 %v140
    %v178 = vunpack.c.l.b16 %v141
    %v179 = vunpack.c.h.b16 %v141
    %v180 = vpack.c.b16 %v166, %v164
    %v181 = vpack.c.b16 %v167, %v165
    %v182 = vpack.c.b16 %v170, %v168
    %v183 = vpack.c.b16 %v171, %v169
    %v184 = vpack.c.b16 %v174, %v172
    %v185 = vpack.c.b16 %v175, %v173
    %v186 = vpack.c.b16 %v178, %v176
    %v187 = vpack.c.b16 %v179, %v177
    %vm196 = vcmask 523264
    %v198 = vsel %vm196, %v142, 0
    %200 = vmatprep.subr.bf16.mxu0 %v181
    %201 = vmatpush1.bf16.msra.mxu0 %v180
    %202 = vmatprep.subr.bf16.mxu0 %v183
    %203 = vmatpush1.bf16.msra.mxu0 %v182
    %204 = vmatprep.subr.bf16.mxu0 %v185
    %205 = vmatpush1.bf16.msra.mxu0 %v184
    %206 = vmatprep.subr.bf16.mxu0 %v187
    %207 = vmatpush1.bf16.msra.mxu0 %v186
    %208 = vmatprep.subr.bf16.mxu0 0
    %209 = vmatpush1.bf16.msra.mxu0 0
    %210 = vmatprep.subr.bf16.mxu0 0
    %211 = vmatpush1.bf16.msra.mxu0 0
    %212 = vmatprep.subr.bf16.mxu0 0
    %213 = vmatpush1.bf16.msra.mxu0 0
    %214 = vmatprep.subr.bf16.mxu0 0
    %215 = vmatpush1.bf16.msra.mxu0 0
    %216 = vmatprep.subr.bf16.mxu0 0
    %217 = vmatpush1.bf16.msra.mxu0 0
    %218 = vmatprep.subr.bf16.mxu0 0
    %219 = vmatpush1.bf16.msra.mxu0 0
    %220 = vmatprep.subr.bf16.mxu0 0
    %221 = vmatpush1.bf16.msra.mxu0 0
    %222 = vmatprep.subr.bf16.mxu0 0
    %223 = vmatpush1.bf16.msra.mxu0 0
    %224 = vmatprep.subr.bf16.mxu0 0
    %225 = vmatpush1.bf16.msra.mxu0 0
    %226 = vmatprep.subr.bf16.mxu0 0
    %227 = vmatpush1.bf16.msra.mxu0 0
    %228 = vmatprep.subr.bf16.mxu0 0
    %229 = vmatpush1.bf16.msra.mxu0 0
    %230 = vmatprep.subr.bf16.mxu0 0
    %231 = vmatpush1.bf16.msra.mxu0 0
    %232 = vmatprep.mubr.bf16.mxu0 0
    %233 = vmatmul.mubr.bf16.gmra.mrb[0].mxu0 %v198
    %v234 = vpop.f32.mrb[0].mxu0
    %v235 = vadd.f32 %v149, %v234
    %v236 = vpop.f32.mrb[0].mxu0
    %v237 = vadd.f32 %v153, %v236
    %v238 = vpop.f32.mrb[0].mxu0
    %v239 = vadd.f32 %v149, %v238
    %v240 = vpop.f32.mrb[0].mxu0
    %v241 = vadd.f32 %v153, %v240
    %242 = vdwg.mxu0
    %v245 = vcombine.high %v235, %v235
    %v247 = vunpack.c.l.s4 1966171168
    %v248 = vunpack.c.0.s8 %v247
    %v249 = vlaneseq
    %v250 = vshrl.u32 %v249, 7
    %v251 = vsub.s32 %v248, %v250
    %v252 = vrot.slane %v235, %v251
    %v254 = vunpack.c.l.s4 1966171168
    %v255 = vunpack.c.0.s8 %v254
    %v256 = vlaneseq
    %v257 = vshrl.u32 %v256, 7
    %v258 = vsub.s32 %v255, %v257
    %v259 = vrot.slane %v245, %v258
    %v260 = vcombine.high %v252, %v252
    %v261 = vcombine.high %v259, %v259
    %v263 = vunpack.c.l.s4 1966171168
    %v264 = vunpack.c.0.s8 %v263
    %v265 = vlaneseq
    %v266 = vshrl.u32 %v265, 7
    %v267 = vsub.s32 %v264, %v266
    %v268 = vrot.slane %v252, %v267
    %v270 = vunpack.c.l.s4 1966171168
    %v271 = vunpack.c.0.s8 %v270
    %v272 = vlaneseq
    %v273 = vshrl.u32 %v272, 7
    %v274 = vsub.s32 %v271, %v273
    %v275 = vrot.slane %v259, %v274
    %v277 = vunpack.c.l.s4 1966171168
    %v278 = vunpack.c.0.s8 %v277
    %v279 = vlaneseq
    %v280 = vshrl.u32 %v279, 7
    %v281 = vsub.s32 %v278, %v280
    %v282 = vrot.slane %v260, %v281
    %v284 = vunpack.c.l.s4 1966171168
    %v285 = vunpack.c.0.s8 %v284
    %v286 = vlaneseq
    %v287 = vshrl.u32 %v286, 7
    %v288 = vsub.s32 %v285, %v287
    %v289 = vrot.slane %v261, %v288
    %v290 = vcombine.high %v268, %v268
    %v291 = vcombine.high %v275, %v275
    %v292 = vcombine.high %v282, %v282
    %v293 = vcombine.high %v289, %v289
    %v294 = vcombine.high %v239, %v239
    %v296 = vunpack.c.l.s4 1966171168
    %v297 = vunpack.c.0.s8 %v296
    %v298 = vlaneseq
    %v299 = vshrl.u32 %v298, 7
    %v300 = vsub.s32 %v297, %v299
    %v301 = vrot.slane %v239, %v300
    %v303 = vunpack.c.l.s4 1966171168
    %v304 = vunpack.c.0.s8 %v303
    %v305 = vlaneseq
    %v306 = vshrl.u32 %v305, 7
    %v307 = vsub.s32 %v304, %v306
    %v308 = vrot.slane %v294, %v307
    %v309 = vcombine.high %v301, %v301
    %v310 = vcombine.high %v308, %v308
    %v312 = vunpack.c.l.s4 1966171168
    %v313 = vunpack.c.0.s8 %v312
    %v314 = vlaneseq
    %v315 = vshrl.u32 %v314, 7
    %v316 = vsub.s32 %v313, %v315
    %v317 = vrot.slane %v301, %v316
    %v319 = vunpack.c.l.s4 1966171168
    %v320 = vunpack.c.0.s8 %v319
    %v321 = vlaneseq
    %v322 = vshrl.u32 %v321, 7
    %v323 = vsub.s32 %v320, %v322
    %v324 = vrot.slane %v308, %v323
    %v326 = vunpack.c.l.s4 1966171168
    %v327 = vunpack.c.0.s8 %v326
    %v328 = vlaneseq
    %v329 = vshrl.u32 %v328, 7
    %v330 = vsub.s32 %v327, %v329
    %v331 = vrot.slane %v309, %v330
    %v333 = vunpack.c.l.s4 1966171168
    %v334 = vunpack.c.0.s8 %v333
    %v335 = vlaneseq
    %v336 = vshrl.u32 %v335, 7
    %v337 = vsub.s32 %v334, %v336
    %v338 = vrot.slane %v310, %v337
    %v339 = vcombine.high %v317, %v317
    %v340 = vcombine.high %v324, %v324
    %v341 = vcombine.high %v331, %v331
    %v342 = vcombine.high %v338, %v338
    %v343 = vlaneseq
    %v344 = vshrl.u32 %v343, 7
    %v345 = vsub.s32 0, %v344
    %v346 = vrot.slane %v268, %v345
    %v347 = vlaneseq
    %v348 = vshrl.u32 %v347, 7
    %v349 = vsub.s32 0, %v348
    %v350 = vrot.slane %v282, %v349
    %v351 = vlaneseq
    %v352 = vshrl.u32 %v351, 7
    %v353 = vsub.s32 0, %v352
    %v354 = vrot.slane %v290, %v353
    %v355 = vlaneseq
    %v356 = vshrl.u32 %v355, 7
    %v357 = vsub.s32 0, %v356
    %v358 = vrot.slane %v292, %v357
    %v359 = vlaneseq
    %v360 = vshrl.u32 %v359, 7
    %v361 = vsub.s32 0, %v360
    %v362 = vrot.slane %v275, %v361
    %v363 = vlaneseq
    %v364 = vshrl.u32 %v363, 7
    %v365 = vsub.s32 0, %v364
    %v366 = vrot.slane %v289, %v365
    %v367 = vlaneseq
    %v368 = vshrl.u32 %v367, 7
    %v369 = vsub.s32 0, %v368
    %v370 = vrot.slane %v291, %v369
    %v371 = vlaneseq
    %v372 = vshrl.u32 %v371, 7
    %v373 = vsub.s32 0, %v372
    %v374 = vrot.slane %v293, %v373
    %v375 = vlaneseq
    %v376 = vshrl.u32 %v375, 7
    %v377 = vsub.s32 0, %v376
    %v378 = vrot.slane %v317, %v377
    %v379 = vlaneseq
    %v380 = vshrl.u32 %v379, 7
    %v381 = vsub.s32 0, %v380
    %v382 = vrot.slane %v331, %v381
    %v383 = vlaneseq
    %v384 = vshrl.u32 %v383, 7
    %v385 = vsub.s32 0, %v384
    %v386 = vrot.slane %v339, %v385
    %v387 = vlaneseq
    %v388 = vshrl.u32 %v387, 7
    %v389 = vsub.s32 0, %v388
    %v390 = vrot.slane %v341, %v389
    %v391 = vlaneseq
    %v392 = vshrl.u32 %v391, 7
    %v393 = vsub.s32 0, %v392
    %v394 = vrot.slane %v324, %v393
    %v395 = vlaneseq
    %v396 = vshrl.u32 %v395, 7
    %v397 = vsub.s32 0, %v396
    %v398 = vrot.slane %v338, %v397
    %v399 = vlaneseq
    %v400 = vshrl.u32 %v399, 7
    %v401 = vsub.s32 0, %v400
    %v402 = vrot.slane %v340, %v401
    %v403 = vlaneseq
    %v404 = vshrl.u32 %v403, 7
    %v405 = vsub.s32 0, %v404
    %v406 = vrot.slane %v342, %v405
    %423 = vrot.lane.b32.xlu0 %v235, 64
    %v424 = vpop.permute.xlu0 %423
    %425 = vrot.lane.b32.xlu0 %v239, 64
    %v426 = vpop.permute.xlu0 %425
    %v429 = vmul.f32 %v346, %v424
    %v430 = vmul.f32 %v350, %v424
    %v431 = vmul.f32 %v354, %v424
    %v432 = vmul.f32 %v358, %v424
    %v433 = vmul.f32 %v362, %v424
    %v434 = vmul.f32 %v366, %v424
    %v435 = vmul.f32 %v370, %v424
    %v436 = vmul.f32 %v374, %v424
    %v437 = vmul.f32 %v378, %v426
    %v438 = vmul.f32 %v382, %v426
    %v439 = vmul.f32 %v386, %v426
    %v440 = vmul.f32 %v390, %v426
    %v441 = vmul.f32 %v394, %v426
    %v442 = vmul.f32 %v398, %v426
    %v443 = vmul.f32 %v402, %v426
    %v444 = vmul.f32 %v406, %v426
    %v445 = vpack.c.bf16 %v430, %v429
    %v446 = vpack.c.bf16 %v432, %v431
    %v447 = vpack.c.bf16 %v434, %v433
    %v448 = vpack.c.bf16 %v436, %v435
    %v449 = vpack.c.bf16 %v438, %v437
    %v450 = vpack.c.bf16 %v440, %v439
    %v451 = vpack.c.bf16 %v442, %v441
    %v452 = vpack.c.bf16 %v444, %v443
    %v461 = vunpack.c.l.b16 %v57
    %v462 = vunpack.c.l.b16 %v58
    %v463 = vunpack.c.l.b16 %v59
    %v464 = vunpack.c.l.b16 %v60
    %v465 = vunpack.c.l.b16 %v61
    %v466 = vunpack.c.l.b16 %v62
    %v467 = vunpack.c.l.b16 %v63
    %v468 = vunpack.c.l.b16 %v64
    %v469 = vpack.c.b16 %v462, %v461
    %v470 = vpack.c.b16 %v464, %v463
    %v471 = vpack.c.b16 %v466, %v465
    %v472 = vpack.c.b16 %v468, %v467
    %v478 = vsel %vm196, %v445, 0
    %v481 = vsel %vm196, %v446, 0
    %v484 = vsel %vm196, %v447, 0
    %v487 = vsel %vm196, %v448, 0
    %v490 = vsel %vm196, %v449, 0
    %v493 = vsel %vm196, %v450, 0
    %v496 = vsel %vm196, %v451, 0
    %v499 = vsel %vm196, %v452, 0
    %501 = vmatprep.subr.bf16.mxu0 0
    %502 = vmatpush1.bf16.msra.mxu0 %v469
    %503 = vmatprep.subr.bf16.mxu0 0
    %504 = vmatpush1.bf16.msra.mxu0 %v470
    %505 = vmatprep.subr.bf16.mxu0 0
    %506 = vmatpush1.bf16.msra.mxu0 %v471
    %507 = vmatprep.subr.bf16.mxu0 0
    %508 = vmatpush1.bf16.msra.mxu0 %v472
    %509 = vmatprep.subr.bf16.mxu0 0
    %510 = vmatpush1.bf16.msra.mxu0 0
    %511 = vmatprep.subr.bf16.mxu0 0
    %512 = vmatpush1.bf16.msra.mxu0 0
    %513 = vmatprep.subr.bf16.mxu0 0
    %514 = vmatpush1.bf16.msra.mxu0 0
    %515 = vmatprep.subr.bf16.mxu0 0
    %516 = vmatpush1.bf16.msra.mxu0 0
    %517 = vmatprep.subr.bf16.mxu0 0
    %518 = vmatpush1.bf16.msra.mxu0 0
    %519 = vmatprep.subr.bf16.mxu0 0
    %520 = vmatpush1.bf16.msra.mxu0 0
    %521 = vmatprep.subr.bf16.mxu0 0
    %522 = vmatpush1.bf16.msra.mxu0 0
    %523 = vmatprep.subr.bf16.mxu0 0
    %524 = vmatpush1.bf16.msra.mxu0 0
    %525 = vmatprep.subr.bf16.mxu0 0
    %526 = vmatpush1.bf16.msra.mxu0 0
    %527 = vmatprep.subr.bf16.mxu0 0
    %528 = vmatpush1.bf16.msra.mxu0 0
    %529 = vmatprep.subr.bf16.mxu0 0
    %530 = vmatpush1.bf16.msra.mxu0 0
    %531 = vmatprep.subr.bf16.mxu0 0
    %532 = vmatpush1.bf16.msra.mxu0 0
    %533 = vmatprep.mubr.bf16.mxu0 0
    %534 = vmatmul.mubr.bf16.gmra.mrb[0].mxu0 %v478
    %v535 = vpop.f32.mrb[0].mxu0
    %v536 = vadd.f32 0.0, %v535
    %v537 = vpop.f32.mrb[0].mxu0
    %v538 = vpop.f32.mrb[0].mxu0
    %v539 = vadd.f32 0.0, %v538
    %v540 = vpop.f32.mrb[0].mxu0
    %541 = vmatprep.mubr.bf16.mxu0 0
    %542 = vmatmul.mubr.bf16.gmra.mrb[0].mxu0 %v481
    %v543 = vpop.f32.mrb[0].mxu0
    %v544 = vadd.f32 0.0, %v543
    %v545 = vpop.f32.mrb[0].mxu0
    %v546 = vpop.f32.mrb[0].mxu0
    %v547 = vadd.f32 0.0, %v546
    %v548 = vpop.f32.mrb[0].mxu0
    %549 = vmatprep.mubr.bf16.mxu0 0
    %550 = vmatmul.mubr.bf16.gmra.mrb[0].mxu0 %v484
    %v551 = vpop.f32.mrb[0].mxu0
    %v552 = vadd.f32 0.0, %v551
    %v553 = vpop.f32.mrb[0].mxu0
    %v554 = vpop.f32.mrb[0].mxu0
    %v555 = vadd.f32 0.0, %v554
    %v556 = vpop.f32.mrb[0].mxu0
    %557 = vmatprep.mubr.bf16.mxu0 0
    %558 = vmatmul.mubr.bf16.gmra.mrb[0].mxu0 %v487
    %v559 = vpop.f32.mrb[0].mxu0
    %v560 = vadd.f32 0.0, %v559
    %v561 = vpop.f32.mrb[0].mxu0
    %v562 = vpop.f32.mrb[0].mxu0
    %v563 = vadd.f32 0.0, %v562
    %v564 = vpop.f32.mrb[0].mxu0
    %565 = vmatprep.mubr.bf16.mxu0 0
    %566 = vmatmul.mubr.bf16.gmra.mrb[0].mxu0 %v490
    %v567 = vpop.f32.mrb[0].mxu0
    %v568 = vadd.f32 0.0, %v567
    %v569 = vpop.f32.mrb[0].mxu0
    %v570 = vpop.f32.mrb[0].mxu0
    %v571 = vadd.f32 0.0, %v570
    %v572 = vpop.f32.mrb[0].mxu0
    %573 = vmatprep.mubr.bf16.mxu0 0
    %574 = vmatmul.mubr.bf16.gmra.mrb[0].mxu0 %v493
    %v575 = vpop.f32.mrb[0].mxu0
    %v576 = vadd.f32 0.0, %v575
    %v577 = vpop.f32.mrb[0].mxu0
    %v578 = vpop.f32.mrb[0].mxu0
    %v579 = vadd.f32 0.0, %v578
    %v580 = vpop.f32.mrb[0].mxu0
    %581 = vmatprep.mubr.bf16.mxu0 0
    %582 = vmatmul.mubr.bf16.gmra.mrb[0].mxu0 %v496
    %v583 = vpop.f32.mrb[0].mxu0
    %v584 = vadd.f32 0.0, %v583
    %v585 = vpop.f32.mrb[0].mxu0
    %v586 = vpop.f32.mrb[0].mxu0
    %v587 = vadd.f32 0.0, %v586
    %v588 = vpop.f32.mrb[0].mxu0
    %589 = vmatprep.mubr.bf16.mxu0 0
    %590 = vmatmul.mubr.bf16.gmra.mrb[0].mxu0 %v499
    %v591 = vpop.f32.mrb[0].mxu0
    %v592 = vadd.f32 0.0, %v591
    %v593 = vpop.f32.mrb[0].mxu0
    %v594 = vpop.f32.mrb[0].mxu0
    %v595 = vadd.f32 0.0, %v594
    %v596 = vpop.f32.mrb[0].mxu0
    %597 = vdwg.mxu0
    %vm598 = vcmask 130048
    %v599 = vsel %vm598, %v536, -inf
    %v600 = vrot.slane %v599, 4
    %v601 = vmax.f32 %v599, %v600
    %v602 = vrot.slane %v601, 2
    %v603 = vmax.f32 %v601, %v602
    %v604 = vrot.slane %v603, 1
    %v605 = vmax.f32 %v603, %v604
    %v606 = vsel %vm598, %v539, -inf
    %v607 = vrot.slane %v606, 4
    %v608 = vmax.f32 %v606, %v607
    %v609 = vrot.slane %v608, 2
    %v610 = vmax.f32 %v608, %v609
    %v611 = vrot.slane %v610, 1
    %v612 = vmax.f32 %v610, %v611
    %v613 = vsel %vm598, %v544, -inf
    %v614 = vrot.slane %v613, 4
    %v615 = vmax.f32 %v613, %v614
    %v616 = vrot.slane %v615, 2
    %v617 = vmax.f32 %v615, %v616
    %v618 = vrot.slane %v617, 1
    %v619 = vmax.f32 %v617, %v618
    %v620 = vsel %vm598, %v547, -inf
    %v621 = vrot.slane %v620, 4
    %v622 = vmax.f32 %v620, %v621
    %v623 = vrot.slane %v622, 2
    %v624 = vmax.f32 %v622, %v623
    %v625 = vrot.slane %v624, 1
    %v626 = vmax.f32 %v624, %v625
    %v627 = vsel %vm598, %v552, -inf
    %v628 = vrot.slane %v627, 4
    %v629 = vmax.f32 %v627, %v628
    %v630 = vrot.slane %v629, 2
    %v631 = vmax.f32 %v629, %v630
    %v632 = vrot.slane %v631, 1
    %v633 = vmax.f32 %v631, %v632
    %v634 = vsel %vm598, %v555, -inf
    %v635 = vrot.slane %v634, 4
    %v636 = vmax.f32 %v634, %v635
    %v637 = vrot.slane %v636, 2
    %v638 = vmax.f32 %v636, %v637
    %v639 = vrot.slane %v638, 1
    %v640 = vmax.f32 %v638, %v639
    %v641 = vsel %vm598, %v560, -inf
    %v642 = vrot.slane %v641, 4
    %v643 = vmax.f32 %v641, %v642
    %v644 = vrot.slane %v643, 2
    %v645 = vmax.f32 %v643, %v644
    %v646 = vrot.slane %v645, 1
    %v647 = vmax.f32 %v645, %v646
    %v648 = vsel %vm598, %v563, -inf
    %v649 = vrot.slane %v648, 4
    %v650 = vmax.f32 %v648, %v649
    %v651 = vrot.slane %v650, 2
    %v652 = vmax.f32 %v650, %v651
    %v653 = vrot.slane %v652, 1
    %v654 = vmax.f32 %v652, %v653
    %v655 = vsel %vm598, %v568, -inf
    %v656 = vrot.slane %v655, 4
    %v657 = vmax.f32 %v655, %v656
    %v658 = vrot.slane %v657, 2
    %v659 = vmax.f32 %v657, %v658
    %v660 = vrot.slane %v659, 1
    %v661 = vmax.f32 %v659, %v660
    %v662 = vsel %vm598, %v571, -inf
    %v663 = vrot.slane %v662, 4
    %v664 = vmax.f32 %v662, %v663
    %v665 = vrot.slane %v664, 2
    %v666 = vmax.f32 %v664, %v665
    %v667 = vrot.slane %v666, 1
    %v668 = vmax.f32 %v666, %v667
    %v669 = vsel %vm598, %v576, -inf
    %v670 = vrot.slane %v669, 4
    %v671 = vmax.f32 %v669, %v670
    %v672 = vrot.slane %v671, 2
    %v673 = vmax.f32 %v671, %v672
    %v674 = vrot.slane %v673, 1
    %v675 = vmax.f32 %v673, %v674
    %v676 = vsel %vm598, %v579, -inf
    %v677 = vrot.slane %v676, 4
    %v678 = vmax.f32 %v676, %v677
    %v679 = vrot.slane %v678, 2
    %v680 = vmax.f32 %v678, %v679
    %v681 = vrot.slane %v680, 1
    %v682 = vmax.f32 %v680, %v681
    %v683 = vsel %vm598, %v584, -inf
    %v684 = vrot.slane %v683, 4
    %v685 = vmax.f32 %v683, %v684
    %v686 = vrot.slane %v685, 2
    %v687 = vmax.f32 %v685, %v686
    %v688 = vrot.slane %v687, 1
    %v689 = vmax.f32 %v687, %v688
    %v690 = vsel %vm598, %v587, -inf
    %v691 = vrot.slane %v690, 4
    %v692 = vmax.f32 %v690, %v691
    %v693 = vrot.slane %v692, 2
    %v694 = vmax.f32 %v692, %v693
    %v695 = vrot.slane %v694, 1
    %v696 = vmax.f32 %v694, %v695
    %v697 = vsel %vm598, %v592, -inf
    %v698 = vrot.slane %v697, 4
    %v699 = vmax.f32 %v697, %v698
    %v700 = vrot.slane %v699, 2
    %v701 = vmax.f32 %v699, %v700
    %v702 = vrot.slane %v701, 1
    %v703 = vmax.f32 %v701, %v702
    %v704 = vsel %vm598, %v595, -inf
    %v705 = vrot.slane %v704, 4
    %v706 = vmax.f32 %v704, %v705
    %v707 = vrot.slane %v706, 2
    %v708 = vmax.f32 %v706, %v707
    %v709 = vrot.slane %v708, 1
    %v710 = vmax.f32 %v708, %v709
    %v711 = vsub.f32 %v536, %v605
    %v712 = vsub.f32 %v539, %v612
    %v713 = vsub.f32 %v544, %v619
    %v714 = vsub.f32 %v547, %v626
    %v715 = vsub.f32 %v552, %v633
    %v716 = vsub.f32 %v555, %v640
    %v717 = vsub.f32 %v560, %v647
    %v718 = vsub.f32 %v563, %v654
    %v719 = vsub.f32 %v568, %v661
    %v720 = vsub.f32 %v571, %v668
    %v721 = vsub.f32 %v576, %v675
    %v722 = vsub.f32 %v579, %v682
    %v723 = vsub.f32 %v584, %v689
    %v724 = vsub.f32 %v587, %v696
    %v725 = vsub.f32 %v592, %v703
    %v726 = vsub.f32 %v595, %v710
    %v727 = vmul.f32 %v711, 1.442695
    %v728 = vpow.pop %v727
    %v729 = vmul.f32 %v712, 1.442695
    %v730 = vpow.pop %v729
    %v731 = vmul.f32 %v713, 1.442695
    %v732 = vpow.pop %v731
    %v733 = vmul.f32 %v714, 1.442695
    %v734 = vpow.pop %v733
    %v735 = vmul.f32 %v715, 1.442695
    %v736 = vpow.pop %v735
    %v737 = vmul.f32 %v716, 1.442695
    %v738 = vpow.pop %v737
    %v739 = vmul.f32 %v717, 1.442695
    %v740 = vpow.pop %v739
    %v741 = vmul.f32 %v718, 1.442695
    %v742 = vpow.pop %v741
    %v743 = vmul.f32 %v719, 1.442695
    %v744 = vpow.pop %v743
    %v745 = vmul.f32 %v720, 1.442695
    %v746 = vpow.pop %v745
    %v747 = vmul.f32 %v721, 1.442695
    %v748 = vpow.pop %v747
    %v749 = vmul.f32 %v722, 1.442695
    %v750 = vpow.pop %v749
    %v751 = vmul.f32 %v723, 1.442695
    %v752 = vpow.pop %v751
    %v753 = vmul.f32 %v724, 1.442695
    %v754 = vpow.pop %v753
    %v755 = vmul.f32 %v725, 1.442695
    %v756 = vpow.pop %v755
    %v757 = vmul.f32 %v726, 1.442695
    %v758 = vpow.pop %v757
    %v759 = vsel %vm598, %v728, 0.0
    %v760 = vrot.slane %v759, 4
    %v761 = vadd.f32 %v759, %v760
    %v762 = vrot.slane %v761, 2
    %v763 = vadd.f32 %v761, %v762
    %v764 = vrot.slane %v763, 1
    %v765 = vadd.f32 %v763, %v764
    %v766 = vsel %vm598, %v730, 0.0
    %v767 = vrot.slane %v766, 4
    %v768 = vadd.f32 %v766, %v767
    %v769 = vrot.slane %v768, 2
    %v770 = vadd.f32 %v768, %v769
    %v771 = vrot.slane %v770, 1
    %v772 = vadd.f32 %v770, %v771
    %v773 = vsel %vm598, %v732, 0.0
    %v774 = vrot.slane %v773, 4
    %v775 = vadd.f32 %v773, %v774
    %v776 = vrot.slane %v775, 2
    %v777 = vadd.f32 %v775, %v776
    %v778 = vrot.slane %v777, 1
    %v779 = vadd.f32 %v777, %v778
    %v780 = vsel %vm598, %v734, 0.0
    %v781 = vrot.slane %v780, 4
    %v782 = vadd.f32 %v780, %v781
    %v783 = vrot.slane %v782, 2
    %v784 = vadd.f32 %v782, %v783
    %v785 = vrot.slane %v784, 1
    %v786 = vadd.f32 %v784, %v785
    %v787 = vsel %vm598, %v736, 0.0
    %v788 = vrot.slane %v787, 4
    %v789 = vadd.f32 %v787, %v788
    %v790 = vrot.slane %v789, 2
    %v791 = vadd.f32 %v789, %v790
    %v792 = vrot.slane %v791, 1
    %v793 = vadd.f32 %v791, %v792
    %v794 = vsel %vm598, %v738, 0.0
    %v795 = vrot.slane %v794, 4
    %v796 = vadd.f32 %v794, %v795
    %v797 = vrot.slane %v796, 2
    %v798 = vadd.f32 %v796, %v797
    %v799 = vrot.slane %v798, 1
    %v800 = vadd.f32 %v798, %v799
    %v801 = vsel %vm598, %v740, 0.0
    %v802 = vrot.slane %v801, 4
    %v803 = vadd.f32 %v801, %v802
    %v804 = vrot.slane %v803, 2
    %v805 = vadd.f32 %v803, %v804
    %v806 = vrot.slane %v805, 1
    %v807 = vadd.f32 %v805, %v806
    %v808 = vsel %vm598, %v742, 0.0
    %v809 = vrot.slane %v808, 4
    %v810 = vadd.f32 %v808, %v809
    %v811 = vrot.slane %v810, 2
    %v812 = vadd.f32 %v810, %v811
    %v813 = vrot.slane %v812, 1
    %v814 = vadd.f32 %v812, %v813
    %v815 = vsel %vm598, %v744, 0.0
    %v816 = vrot.slane %v815, 4
    %v817 = vadd.f32 %v815, %v816
    %v818 = vrot.slane %v817, 2
    %v819 = vadd.f32 %v817, %v818
    %v820 = vrot.slane %v819, 1
    %v821 = vadd.f32 %v819, %v820
    %v822 = vsel %vm598, %v746, 0.0
    %v823 = vrot.slane %v822, 4
    %v824 = vadd.f32 %v822, %v823
    %v825 = vrot.slane %v824, 2
    %v826 = vadd.f32 %v824, %v825
    %v827 = vrot.slane %v826, 1
    %v828 = vadd.f32 %v826, %v827
    %v829 = vsel %vm598, %v748, 0.0
    %v830 = vrot.slane %v829, 4
    %v831 = vadd.f32 %v829, %v830
    %v832 = vrot.slane %v831, 2
    %v833 = vadd.f32 %v831, %v832
    %v834 = vrot.slane %v833, 1
    %v835 = vadd.f32 %v833, %v834
    %v836 = vsel %vm598, %v750, 0.0
    %v837 = vrot.slane %v836, 4
    %v838 = vadd.f32 %v836, %v837
    %v839 = vrot.slane %v838, 2
    %v840 = vadd.f32 %v838, %v839
    %v841 = vrot.slane %v840, 1
    %v842 = vadd.f32 %v840, %v841
    %v843 = vsel %vm598, %v752, 0.0
    %v844 = vrot.slane %v843, 4
    %v845 = vadd.f32 %v843, %v844
    %v846 = vrot.slane %v845, 2
    %v847 = vadd.f32 %v845, %v846
    %v848 = vrot.slane %v847, 1
    %v849 = vadd.f32 %v847, %v848
    %v850 = vsel %vm598, %v754, 0.0
    %v851 = vrot.slane %v850, 4
    %v852 = vadd.f32 %v850, %v851
    %v853 = vrot.slane %v852, 2
    %v854 = vadd.f32 %v852, %v853
    %v855 = vrot.slane %v854, 1
    %v856 = vadd.f32 %v854, %v855
    %v857 = vsel %vm598, %v756, 0.0
    %v858 = vrot.slane %v857, 4
    %v859 = vadd.f32 %v857, %v858
    %v860 = vrot.slane %v859, 2
    %v861 = vadd.f32 %v859, %v860
    %v862 = vrot.slane %v861, 1
    %v863 = vadd.f32 %v861, %v862
    %v864 = vsel %vm598, %v758, 0.0
    %v865 = vrot.slane %v864, 4
    %v866 = vadd.f32 %v864, %v865
    %v867 = vrot.slane %v866, 2
    %v868 = vadd.f32 %v866, %v867
    %v869 = vrot.slane %v868, 1
    %v870 = vadd.f32 %v868, %v869
    %v871 = vrcp.pop %v765
    %v872 = vrcp.pop %v772
    %v873 = vrcp.pop %v779
    %v874 = vrcp.pop %v786
    %v875 = vrcp.pop %v793
    %v876 = vrcp.pop %v800
    %v877 = vrcp.pop %v807
    %v878 = vrcp.pop %v814
    %v879 = vrcp.pop %v821
    %v880 = vrcp.pop %v828
    %v881 = vrcp.pop %v835
    %v882 = vrcp.pop %v842
    %v883 = vrcp.pop %v849
    %v884 = vrcp.pop %v856
    %v885 = vrcp.pop %v863
    %v886 = vrcp.pop %v870
    %v887 = vmul.f32 %v728, %v871
    %v888 = vmul.f32 %v730, %v872
    %v889 = vmul.f32 %v732, %v873
    %v890 = vmul.f32 %v734, %v874
    %v891 = vmul.f32 %v736, %v875
    %v892 = vmul.f32 %v738, %v876
    %v893 = vmul.f32 %v740, %v877
    %v894 = vmul.f32 %v742, %v878
    %v895 = vmul.f32 %v744, %v879
    %v896 = vmul.f32 %v746, %v880
    %v897 = vmul.f32 %v748, %v881
    %v898 = vmul.f32 %v750, %v882
    %v899 = vmul.f32 %v752, %v883
    %v900 = vmul.f32 %v754, %v884
    %v901 = vmul.f32 %v756, %v885
    %v902 = vmul.f32 %v758, %v886
    %v903 = vpack.c.bf16 %v888, %v887
    %v904 = vpack.c.bf16 %v890, %v889
    %v905 = vpack.c.bf16 %v892, %v891
    %v906 = vpack.c.bf16 %v894, %v893
    %v907 = vpack.c.bf16 %v896, %v895
    %v908 = vpack.c.bf16 %v898, %v897
    %v909 = vpack.c.bf16 %v900, %v899
    %v910 = vpack.c.bf16 %v902, %v901
    %v913 = vunpack.c.l.b16 %v65
    %v914 = vunpack.c.l.b16 %v66
    %v915 = vpack.c.b16 %v914, %v913
    %v918 = vsel %vm598, %v903, 0
    %v921 = vsel %vm598, %v904, 0
    %v924 = vsel %vm598, %v905, 0
    %v927 = vsel %vm598, %v906, 0
    %v930 = vsel %vm598, %v907, 0
    %v933 = vsel %vm598, %v908, 0
    %v936 = vsel %vm598, %v909, 0
    %v939 = vsel %vm598, %v910, 0
    %941 = vmatprep.subr.bf16.mxu0 0
    %942 = vmatpush1.bf16.msra.mxu0 %v915
    %943 = vmatprep.subr.bf16.mxu0 0
    %944 = vmatpush1.bf16.msra.mxu0 0
    %945 = vmatprep.subr.bf16.mxu0 0
    %946 = vmatpush1.bf16.msra.mxu0 0
    %947 = vmatprep.subr.bf16.mxu0 0
    %948 = vmatpush1.bf16.msra.mxu0 0
    %949 = vmatprep.subr.bf16.mxu0 0
    %950 = vmatpush1.bf16.msra.mxu0 0
    %951 = vmatprep.subr.bf16.mxu0 0
    %952 = vmatpush1.bf16.msra.mxu0 0
    %953 = vmatprep.subr.bf16.mxu0 0
    %954 = vmatpush1.bf16.msra.mxu0 0
    %955 = vmatprep.subr.bf16.mxu0 0
    %956 = vmatpush1.bf16.msra.mxu0 0
    %957 = vmatprep.subr.bf16.mxu0 0
    %958 = vmatpush1.bf16.msra.mxu0 0
    %959 = vmatprep.subr.bf16.mxu0 0
    %960 = vmatpush1.bf16.msra.mxu0 0
    %961 = vmatprep.subr.bf16.mxu0 0
    %962 = vmatpush1.bf16.msra.mxu0 0
    %963 = vmatprep.subr.bf16.mxu0 0
    %964 = vmatpush1.bf16.msra.mxu0 0
    %965 = vmatprep.subr.bf16.mxu0 0
    %966 = vmatpush1.bf16.msra.mxu0 0
    %967 = vmatprep.subr.bf16.mxu0 0
    %968 = vmatpush1.bf16.msra.mxu0 0
    %969 = vmatprep.subr.bf16.mxu0 0
    %970 = vmatpush1.bf16.msra.mxu0 0
    %971 = vmatprep.subr.bf16.mxu0 0
    %972 = vmatpush1.bf16.msra.mxu0 0
    %973 = vmatprep.mubr.bf16.mxu0 0
    %974 = vmatmul.mubr.bf16.gmra.mrb[0].mxu0 %v918
    %v975 = vpop.f32.mrb[0].mxu0
    %v976 = vadd.f32 0.0, %v975
    %v977 = vpop.f32.mrb[0].mxu0
    %v978 = vpop.f32.mrb[0].mxu0
    %v979 = vadd.f32 0.0, %v978
    %v980 = vpop.f32.mrb[0].mxu0
    %981 = vmatprep.mubr.bf16.mxu0 0
    %982 = vmatmul.mubr.bf16.gmra.mrb[0].mxu0 %v921
    %v983 = vpop.f32.mrb[0].mxu0
    %v984 = vadd.f32 0.0, %v983
    %v985 = vpop.f32.mrb[0].mxu0
    %v986 = vpop.f32.mrb[0].mxu0
    %v987 = vadd.f32 0.0, %v986
    %v988 = vpop.f32.mrb[0].mxu0
    %989 = vmatprep.mubr.bf16.mxu0 0
    %990 = vmatmul.mubr.bf16.gmra.mrb[0].mxu0 %v924
    %v991 = vpop.f32.mrb[0].mxu0
    %v992 = vadd.f32 0.0, %v991
    %v993 = vpop.f32.mrb[0].mxu0
    %v994 = vpop.f32.mrb[0].mxu0
    %v995 = vadd.f32 0.0, %v994
    %v996 = vpop.f32.mrb[0].mxu0
    %997 = vmatprep.mubr.bf16.mxu0 0
    %998 = vmatmul.mubr.bf16.gmra.mrb[0].mxu0 %v927
    %v999 = vpop.f32.mrb[0].mxu0
    %v1000 = vadd.f32 0.0, %v999
    %v1001 = vpop.f32.mrb[0].mxu0
    %v1002 = vpop.f32.mrb[0].mxu0
    %v1003 = vadd.f32 0.0, %v1002
    %v1004 = vpop.f32.mrb[0].mxu0
    %1005 = vmatprep.mubr.bf16.mxu0 0
    %1006 = vmatmul.mubr.bf16.gmra.mrb[0].mxu0 %v930
    %v1007 = vpop.f32.mrb[0].mxu0
    %v1008 = vadd.f32 0.0, %v1007
    %v1009 = vpop.f32.mrb[0].mxu0
    %v1010 = vpop.f32.mrb[0].mxu0
    %v1011 = vadd.f32 0.0, %v1010
    %v1012 = vpop.f32.mrb[0].mxu0
    %1013 = vmatprep.mubr.bf16.mxu0 0
    %1014 = vmatmul.mubr.bf16.gmra.mrb[0].mxu0 %v933
    %v1015 = vpop.f32.mrb[0].mxu0
    %v1016 = vadd.f32 0.0, %v1015
    %v1017 = vpop.f32.mrb[0].mxu0
    %v1018 = vpop.f32.mrb[0].mxu0
    %v1019 = vadd.f32 0.0, %v1018
    %v1020 = vpop.f32.mrb[0].mxu0
    %1021 = vmatprep.mubr.bf16.mxu0 0
    %1022 = vmatmul.mubr.bf16.gmra.mrb[0].mxu0 %v936
    %v1023 = vpop.f32.mrb[0].mxu0
    %v1024 = vadd.f32 0.0, %v1023
    %v1025 = vpop.f32.mrb[0].mxu0
    %v1026 = vpop.f32.mrb[0].mxu0
    %v1027 = vadd.f32 0.0, %v1026
    %v1028 = vpop.f32.mrb[0].mxu0
    %1029 = vmatprep.mubr.bf16.mxu0 0
    %1030 = vmatmul.mubr.bf16.gmra.mrb[0].mxu0 %v939
    %v1031 = vpop.f32.mrb[0].mxu0
    %v1032 = vadd.f32 0.0, %v1031
    %v1033 = vpop.f32.mrb[0].mxu0
    %v1034 = vpop.f32.mrb[0].mxu0
    %v1035 = vadd.f32 0.0, %v1034
    %v1036 = vpop.f32.mrb[0].mxu0
    %1037 = vdwg.mxu0
    %v1038 = vmul.f32 %v976, %v237
    %v1039 = vmul.f32 %v979, %v237
    %v1040 = vmul.f32 %v984, %v237
    %v1041 = vmul.f32 %v987, %v237
    %v1042 = vmul.f32 %v992, %v237
    %v1043 = vmul.f32 %v995, %v237
    %v1044 = vmul.f32 %v1000, %v237
    %v1045 = vmul.f32 %v1003, %v237
    %v1046 = vmul.f32 %v1008, %v241
    %v1047 = vmul.f32 %v1011, %v241
    %v1048 = vmul.f32 %v1016, %v241
    %v1049 = vmul.f32 %v1019, %v241
    %v1050 = vmul.f32 %v1024, %v241
    %v1051 = vmul.f32 %v1027, %v241
    %v1052 = vmul.f32 %v1032, %v241
    %v1053 = vmul.f32 %v1035, %v241
    %v1054 = vsel %vm196, %v1038, 0.0
    %v1055 = vrot.slane %v1054, 4
    %v1056 = vadd.f32 %v1054, %v1055
    %v1057 = vrot.slane %v1056, 2
    %v1058 = vadd.f32 %v1056, %v1057
    %v1059 = vrot.slane %v1058, 1
    %v1060 = vadd.f32 %v1058, %v1059
    %v1061 = vsel %vm196, %v1039, 0.0
    %v1062 = vrot.slane %v1061, 4
    %v1063 = vadd.f32 %v1061, %v1062
    %v1064 = vrot.slane %v1063, 2
    %v1065 = vadd.f32 %v1063, %v1064
    %v1066 = vrot.slane %v1065, 1
    %v1067 = vadd.f32 %v1065, %v1066
    %v1068 = vsel %vm196, %v1040, 0.0
    %v1069 = vrot.slane %v1068, 4
    %v1070 = vadd.f32 %v1068, %v1069
    %v1071 = vrot.slane %v1070, 2
    %v1072 = vadd.f32 %v1070, %v1071
    %v1073 = vrot.slane %v1072, 1
    %v1074 = vadd.f32 %v1072, %v1073
    %v1075 = vsel %vm196, %v1041, 0.0
    %v1076 = vrot.slane %v1075, 4
    %v1077 = vadd.f32 %v1075, %v1076
    %v1078 = vrot.slane %v1077, 2
    %v1079 = vadd.f32 %v1077, %v1078
    %v1080 = vrot.slane %v1079, 1
    %v1081 = vadd.f32 %v1079, %v1080
    %v1082 = vsel %vm196, %v1042, 0.0
    %v1083 = vrot.slane %v1082, 4
    %v1084 = vadd.f32 %v1082, %v1083
    %v1085 = vrot.slane %v1084, 2
    %v1086 = vadd.f32 %v1084, %v1085
    %v1087 = vrot.slane %v1086, 1
    %v1088 = vadd.f32 %v1086, %v1087
    %v1089 = vsel %vm196, %v1043, 0.0
    %v1090 = vrot.slane %v1089, 4
    %v1091 = vadd.f32 %v1089, %v1090
    %v1092 = vrot.slane %v1091, 2
    %v1093 = vadd.f32 %v1091, %v1092
    %v1094 = vrot.slane %v1093, 1
    %v1095 = vadd.f32 %v1093, %v1094
    %v1096 = vsel %vm196, %v1044, 0.0
    %v1097 = vrot.slane %v1096, 4
    %v1098 = vadd.f32 %v1096, %v1097
    %v1099 = vrot.slane %v1098, 2
    %v1100 = vadd.f32 %v1098, %v1099
    %v1101 = vrot.slane %v1100, 1
    %v1102 = vadd.f32 %v1100, %v1101
    %v1103 = vsel %vm196, %v1045, 0.0
    %v1104 = vrot.slane %v1103, 4
    %v1105 = vadd.f32 %v1103, %v1104
    %v1106 = vrot.slane %v1105, 2
    %v1107 = vadd.f32 %v1105, %v1106
    %v1108 = vrot.slane %v1107, 1
    %v1109 = vadd.f32 %v1107, %v1108
    %v1110 = vsel %vm196, %v1046, 0.0
    %v1111 = vrot.slane %v1110, 4
    %v1112 = vadd.f32 %v1110, %v1111
    %v1113 = vrot.slane %v1112, 2
    %v1114 = vadd.f32 %v1112, %v1113
    %v1115 = vrot.slane %v1114, 1
    %v1116 = vadd.f32 %v1114, %v1115
    %v1117 = vsel %vm196, %v1047, 0.0
    %v1118 = vrot.slane %v1117, 4
    %v1119 = vadd.f32 %v1117, %v1118
    %v1120 = vrot.slane %v1119, 2
    %v1121 = vadd.f32 %v1119, %v1120
    %v1122 = vrot.slane %v1121, 1
    %v1123 = vadd.f32 %v1121, %v1122
    %v1124 = vsel %vm196, %v1048, 0.0
    %v1125 = vrot.slane %v1124, 4
    %v1126 = vadd.f32 %v1124, %v1125
    %v1127 = vrot.slane %v1126, 2
    %v1128 = vadd.f32 %v1126, %v1127
    %v1129 = vrot.slane %v1128, 1
    %v1130 = vadd.f32 %v1128, %v1129
    %v1131 = vsel %vm196, %v1049, 0.0
    %v1132 = vrot.slane %v1131, 4
    %v1133 = vadd.f32 %v1131, %v1132
    %v1134 = vrot.slane %v1133, 2
    %v1135 = vadd.f32 %v1133, %v1134
    %v1136 = vrot.slane %v1135, 1
    %v1137 = vadd.f32 %v1135, %v1136
    %v1138 = vsel %vm196, %v1050, 0.0
    %v1139 = vrot.slane %v1138, 4
    %v1140 = vadd.f32 %v1138, %v1139
    %v1141 = vrot.slane %v1140, 2
    %v1142 = vadd.f32 %v1140, %v1141
    %v1143 = vrot.slane %v1142, 1
    %v1144 = vadd.f32 %v1142, %v1143
    %v1145 = vsel %vm196, %v1051, 0.0
    %v1146 = vrot.slane %v1145, 4
    %v1147 = vadd.f32 %v1145, %v1146
    %v1148 = vrot.slane %v1147, 2
    %v1149 = vadd.f32 %v1147, %v1148
    %v1150 = vrot.slane %v1149, 1
    %v1151 = vadd.f32 %v1149, %v1150
    %v1152 = vsel %vm196, %v1052, 0.0
    %v1153 = vrot.slane %v1152, 4
    %v1154 = vadd.f32 %v1152, %v1153
    %v1155 = vrot.slane %v1154, 2
    %v1156 = vadd.f32 %v1154, %v1155
    %v1157 = vrot.slane %v1156, 1
    %v1158 = vadd.f32 %v1156, %v1157
    %v1159 = vsel %vm196, %v1053, 0.0
    %v1160 = vrot.slane %v1159, 4
    %v1161 = vadd.f32 %v1159, %v1160
    %v1162 = vrot.slane %v1161, 2
    %v1163 = vadd.f32 %v1161, %v1162
    %v1164 = vrot.slane %v1163, 1
    %v1165 = vadd.f32 %v1163, %v1164
    %v1166 = vld [vmem:[#allocation5 + $0x60] sm:$0xf]
    %v1167 = vld [vmem:[#allocation5 + $0x68] sm:$0xf]
    %v1168 = vld [vmem:[#allocation5 + $0x70] sm:$0xf]
    %v1169 = vld [vmem:[#allocation5 + $0x78] sm:$0xf]
    %v1170 = vld [vmem:[#allocation5 + $0x80] sm:$0xf]
    %v1171 = vld [vmem:[#allocation5 + $0x88] sm:$0xf]
    %v1172 = vld [vmem:[#allocation5 + $0x90] sm:$0xf]
    %v1173 = vld [vmem:[#allocation5 + $0x98] sm:$0xf]
    %v1174 = vpack.c.bf16 %v1060, %v1060
    %v1175 = vpack.c.bf16 %v1067, %v1067
    %v1176 = vpack.c.bf16 %v1074, %v1074
    %v1177 = vpack.c.bf16 %v1081, %v1081
    %v1178 = vpack.c.bf16 %v1088, %v1088
    %v1179 = vpack.c.bf16 %v1095, %v1095
    %v1180 = vpack.c.bf16 %v1102, %v1102
    %v1181 = vpack.c.bf16 %v1109, %v1109
    %v1182 = vpack.c.bf16 %v1116, %v1116
    %v1183 = vpack.c.bf16 %v1123, %v1123
    %v1184 = vpack.c.bf16 %v1130, %v1130
    %v1185 = vpack.c.bf16 %v1137, %v1137
    %v1186 = vpack.c.bf16 %v1144, %v1144
    %v1187 = vpack.c.bf16 %v1151, %v1151
    %v1188 = vpack.c.bf16 %v1158, %v1158
    %v1189 = vpack.c.bf16 %v1165, %v1165
    %v1206 = vunpack.c.l.b16 %v1174
    %v1207 = vunpack.c.l.b16 %v1175
    %v1208 = vunpack.c.l.b16 %v1176
    %v1209 = vunpack.c.l.b16 %v1177
    %v1210 = vunpack.c.l.b16 %v1178
    %v1211 = vunpack.c.l.b16 %v1179
    %v1212 = vunpack.c.l.b16 %v1180
    %v1213 = vunpack.c.l.b16 %v1181
    %v1214 = vunpack.c.l.b16 %v1182
    %v1215 = vunpack.c.l.b16 %v1183
    %v1216 = vunpack.c.l.b16 %v1184
    %v1217 = vunpack.c.l.b16 %v1185
    %v1218 = vunpack.c.l.b16 %v1186
    %v1219 = vunpack.c.l.b16 %v1187
    %v1220 = vunpack.c.l.b16 %v1188
    %v1221 = vunpack.c.l.b16 %v1189
    %vm1222 = vcmask 1041409
    %v1223 = vsel %vm1222, %v1207, %v1206
    %vm1224 = vcmask 1042434
    %v1225 = vsel %vm1224, %v1208, %v1223
    %vm1226 = vcmask 1043459
    %v1227 = vsel %vm1226, %v1209, %v1225
    %vm1228 = vcmask 1044484
    %v1229 = vsel %vm1228, %v1210, %v1227
    %vm1230 = vcmask 1045509
    %v1231 = vsel %vm1230, %v1211, %v1229
    %vm1232 = vcmask 1046534
    %v1233 = vsel %vm1232, %v1212, %v1231
    %vm1234 = vcmask 1047559
    %v1235 = vsel %vm1234, %v1213, %v1233
    %v1236 = vsel %vm1222, %v1215, %v1214
    %v1237 = vsel %vm1224, %v1216, %v1236
    %v1238 = vsel %vm1226, %v1217, %v1237
    %v1239 = vsel %vm1228, %v1218, %v1238
    %v1240 = vsel %vm1230, %v1219, %v1239
    %v1241 = vsel %vm1232, %v1220, %v1240
    %v1242 = vsel %vm1234, %v1221, %v1241
    %v1243 = vpack.c.b16 %v1242, %v1235
    %v1252 = vunpack.c.l.b16 %v1166
    %v1253 = vunpack.c.l.b16 %v1167
    %v1254 = vunpack.c.l.b16 %v1168
    %v1255 = vunpack.c.l.b16 %v1169
    %v1256 = vunpack.c.l.b16 %v1170
    %v1257 = vunpack.c.l.b16 %v1171
    %v1258 = vunpack.c.l.b16 %v1172
    %v1259 = vunpack.c.l.b16 %v1173
    %v1260 = vpack.c.b16 %v1253, %v1252
    %v1261 = vpack.c.b16 %v1255, %v1254
    %v1262 = vpack.c.b16 %v1257, %v1256
    %v1263 = vpack.c.b16 %v1259, %v1258
    %v1269 = vsel %vm196, %v1243, 0
    %1271 = vmatprep.subr.bf16.mxu0 0
    %1272 = vmatpush1.bf16.msra.mxu0 %v1260
    %1273 = vmatprep.subr.bf16.mxu0 0
    %1274 = vmatpush1.bf16.msra.mxu0 %v1261
    %1275 = vmatprep.subr.bf16.mxu0 0
    %1276 = vmatpush1.bf16.msra.mxu0 %v1262
    %1277 = vmatprep.subr.bf16.mxu0 0
    %1278 = vmatpush1.bf16.msra.mxu0 %v1263
    %1279 = vmatprep.subr.bf16.mxu0 0
    %1280 = vmatpush1.bf16.msra.mxu0 0
    %1281 = vmatprep.subr.bf16.mxu0 0
    %1282 = vmatpush1.bf16.msra.mxu0 0
    %1283 = vmatprep.subr.bf16.mxu0 0
    %1284 = vmatpush1.bf16.msra.mxu0 0
    %1285 = vmatprep.subr.bf16.mxu0 0
    %1286 = vmatpush1.bf16.msra.mxu0 0
    %1287 = vmatprep.subr.bf16.mxu0 0
    %1288 = vmatpush1.bf16.msra.mxu0 0
    %1289 = vmatprep.subr.bf16.mxu0 0
    %1290 = vmatpush1.bf16.msra.mxu0 0
    %1291 = vmatprep.subr.bf16.mxu0 0
    %1292 = vmatpush1.bf16.msra.mxu0 0
    %1293 = vmatprep.subr.bf16.mxu0 0
    %1294 = vmatpush1.bf16.msra.mxu0 0
    %1295 = vmatprep.subr.bf16.mxu0 0
    %1296 = vmatpush1.bf16.msra.mxu0 0
    %1297 = vmatprep.subr.bf16.mxu0 0
    %1298 = vmatpush1.bf16.msra.mxu0 0
    %1299 = vmatprep.subr.bf16.mxu0 0
    %1300 = vmatpush1.bf16.msra.mxu0 0
    %1301 = vmatprep.subr.bf16.mxu0 0
    %1302 = vmatpush1.bf16.msra.mxu0 0
    %1303 = vmatprep.mubr.bf16.mxu0 0
    %1304 = vmatmul.mubr.bf16.gmra.mrb[0].mxu0 %v1269
    %v1305 = vpop.f32.mrb[0].mxu0
    %v1306 = vadd.f32 0.0, %v1305
    %v1307 = vpop.f32.mrb[0].mxu0
    %v1308 = vpop.f32.mrb[0].mxu0
    %v1309 = vadd.f32 0.0, %v1308
    %v1310 = vpop.f32.mrb[0].mxu0
    %1311 = vdwg.mxu0
    %v1312 = vadd.f32 %v132, %v1306
    %v1313 = vadd.f32 %v133, %v1309
    %v1314 = vld [vmem:[#allocation7 + $0x20] ss:$0 sm:$0xff]
    %v1315 = vadd.f32 %v1312, %v1314
    %v1316 = vadd.f32 %v1313, %v1314
    %v1317 = vld [vmem:[#allocation7 + $0x50] sm:$0x3]
    %v1318 = vlaneseq
    %v1319 = vand.u32 %v1318, 127
    %vm1320 = vcmp.lt.s32.totalorder %v1319, 32
    %v1321 = vsel %vm196, %v1315, 0.0
    %1322 = vadd.xlane.f32.xlu0 %v1321
    %v1323 = vpop.xlane.xlu0 %1322
    %v1324 = vsel %vm196, %v1316, 0.0
    %1325 = vadd.xlane.f32.xlu0 %v1324
    %v1326 = vpop.xlane.xlu0 %1325
    %v1327 = vsel %vm1320, %v1315, 0.0
    %v1328 = vsel %vm1320, %v1316, 0.0
    %v1329 = vsel %vm196, %v1327, 0.0
    %1330 = vadd.xlane.f32.xlu0 %v1329
    %v1331 = vpop.xlane.xlu0 %1330
    %v1332 = vsel %vm196, %v1328, 0.0
    %1333 = vadd.xlane.f32.xlu0 %v1332
    %v1334 = vpop.xlane.xlu0 %1333
    %v1335 = vsub.f32 %v1323, %v1331
    %v1336 = vsub.f32 %v1326, %v1334
    %v1337 = vsel %vm1320, %v1331, %v1335
    %v1338 = vsel %vm1320, %v1334, %v1336
    %v1339 = vmul.f32 %v1337, 0.03125
    %v1340 = vmul.f32 %v1338, 0.03125
    %v1341 = vsub.f32 %v1315, %v1339
    %v1342 = vsub.f32 %v1316, %v1340
    %v1343 = vmul.f32 %v1341, %v1341
    %v1344 = vmul.f32 %v1342, %v1342
    %v1345 = vsel %vm196, %v1343, 0.0
    %1346 = vadd.xlane.f32.xlu0 %v1345
    %v1347 = vpop.xlane.xlu0 %1346
    %v1348 = vsel %vm196, %v1344, 0.0
    %1349 = vadd.xlane.f32.xlu0 %v1348
    %v1350 = vpop.xlane.xlu0 %1349
    %v1351 = vsel %vm1320, %v1343, 0.0
    %v1352 = vsel %vm1320, %v1344, 0.0
    %v1353 = vsel %vm196, %v1351, 0.0
    %1354 = vadd.xlane.f32.xlu0 %v1353
    %v1355 = vpop.xlane.xlu0 %1354
    %v1356 = vsel %vm196, %v1352, 0.0
    %1357 = vadd.xlane.f32.xlu0 %v1356
    %v1358 = vpop.xlane.xlu0 %1357
    %v1359 = vsub.f32 %v1347, %v1355
    %v1360 = vsub.f32 %v1350, %v1358
    %v1361 = vsel %vm1320, %v1355, %v1359
    %v1362 = vsel %vm1320, %v1358, %v1360
    %v1363 = vmul.f32 %v1361, 0.03125
    %v1364 = vmul.f32 %v1362, 0.03125
    %v1365 = vadd.f32 %v1363, 1e-05
    %v1366 = vadd.f32 %v1364, 1e-05
    %v1367 = vrsqrt.pop %v1365
    %v1368 = vrsqrt.pop %v1366
    %v1369 = vmul.f32 %v1341, %v1367
    %v1370 = vmul.f32 %v1342, %v1368
    %v1371 = vlaneseq
    %v1372 = vshrl.u32 %v1371, 7
    %v1373 = vsub.s32 0, %v1372
    %v1374 = vrot.slane %v1317, %v1373
    %v1375 = vmul.f32 %v1369, %v1374
    %v1376 = vmul.f32 %v1370, %v1374
    %v1377 = vlaneseq
    %v1378 = vshrl.u32 %v1377, 7
    %v1379 = vsub.s32 1, %v1378
    %v1380 = vrot.slane %v1317, %v1379
    %v1381 = vadd.f32 %v1375, %v1380
    %v1382 = vadd.f32 %v1376, %v1380
    %v1383 = vld [vmem:[#allocation5 + $0xa0] sm:$0xff]
    %v1384 = vld [vmem:[#allocation5 + $0xa8] sm:$0xff]
    %v1385 = vld [vmem:[#allocation5 + $0xb0] sm:$0xff]
    %v1386 = vld [vmem:[#allocation5 + $0xb8] sm:$0xff]
    %v1387 = vld [vmem:[#allocation5 + $0xc0] sm:$0xff]
    %v1388 = vld [vmem:[#allocation5 + $0xc8] sm:$0xff]
    %v1389 = vld [vmem:[#allocation5 + $0xd0] sm:$0xff]
    %v1390 = vld [vmem:[#allocation5 + $0xd8] sm:$0xff]
    %v1391 = vpack.c.bf16 %v1382, %v1381
    %s1392 = scalar_lea.vmem [#allocation7], 48
    %v1393 = vld [vmem:[%s1392] ss:$8 sm:$0x3]
    %v1395 = vlaneseq
    %v1396 = vshrl.u32 %v1395, 7
    %v1397 = vsub.s32 0, %v1396
    %v1398 = vrot.slane %v1393, %v1397
    %v1399 = vlaneseq
    %v1400 = vshrl.u32 %v1399, 7
    %v1401 = vsub.s32 1, %v1400
    %v1402 = vrot.slane %v1393, %v1401
    %v1413 = vunpack.c.l.b16 %v1383
    %v1414 = vunpack.c.h.b16 %v1383
    %v1415 = vunpack.c.l.b16 %v1384
    %v1416 = vunpack.c.h.b16 %v1384
    %v1417 = vunpack.c.l.b16 %v1385
    %v1418 = vunpack.c.h.b16 %v1385
    %v1419 = vunpack.c.l.b16 %v1386
    %v1420 = vunpack.c.h.b16 %v1386
    %v1421 = vunpack.c.l.b16 %v1387
    %v1422 = vunpack.c.h.b16 %v1387
    %v1423 = vunpack.c.l.b16 %v1388
    %v1424 = vunpack.c.h.b16 %v1388
    %v1425 = vunpack.c.l.b16 %v1389
    %v1426 = vunpack.c.h.b16 %v1389
    %v1427 = vunpack.c.l.b16 %v1390
    %v1428 = vunpack.c.h.b16 %v1390
    %v1429 = vpack.c.b16 %v1415, %v1413
    %v1430 = vpack.c.b16 %v1416, %v1414
    %v1431 = vpack.c.b16 %v1419, %v1417
    %v1432 = vpack.c.b16 %v1420, %v1418
    %v1433 = vpack.c.b16 %v1423, %v1421
    %v1434 = vpack.c.b16 %v1424, %v1422
    %v1435 = vpack.c.b16 %v1427, %v1425
    %v1436 = vpack.c.b16 %v1428, %v1426
    %v1446 = vsel %vm196, %v1391, 0
    %1448 = vmatprep.subr.bf16.mxu0 %v1430
    %1449 = vmatpush1.bf16.msra.mxu0 %v1429
    %1450 = vmatprep.subr.bf16.mxu0 %v1432
    %1451 = vmatpush1.bf16.msra.mxu0 %v1431
    %1452 = vmatprep.subr.bf16.mxu0 %v1434
    %1453 = vmatpush1.bf16.msra.mxu0 %v1433
    %1454 = vmatprep.subr.bf16.mxu0 %v1436
    %1455 = vmatpush1.bf16.msra.mxu0 %v1435
    %1456 = vmatprep.subr.bf16.mxu0 0
    %1457 = vmatpush1.bf16.msra.mxu0 0
    %1458 = vmatprep.subr.bf16.mxu0 0
    %1459 = vmatpush1.bf16.msra.mxu0 0
    %1460 = vmatprep.subr.bf16.mxu0 0
    %1461 = vmatpush1.bf16.msra.mxu0 0
    %1462 = vmatprep.subr.bf16.mxu0 0
    %1463 = vmatpush1.bf16.msra.mxu0 0
    %1464 = vmatprep.subr.bf16.mxu0 0
    %1465 = vmatpush1.bf16.msra.mxu0 0
    %1466 = vmatprep.subr.bf16.mxu0 0
    %1467 = vmatpush1.bf16.msra.mxu0 0
    %1468 = vmatprep.subr.bf16.mxu0 0
    %1469 = vmatpush1.bf16.msra.mxu0 0
    %1470 = vmatprep.subr.bf16.mxu0 0
    %1471 = vmatpush1.bf16.msra.mxu0 0
    %1472 = vmatprep.subr.bf16.mxu0 0
    %1473 = vmatpush1.bf16.msra.mxu0 0
    %1474 = vmatprep.subr.bf16.mxu0 0
    %1475 = vmatpush1.bf16.msra.mxu0 0
    %1476 = vmatprep.subr.bf16.mxu0 0
    %1477 = vmatpush1.bf16.msra.mxu0 0
    %1478 = vmatprep.subr.bf16.mxu0 0
    %1479 = vmatpush1.bf16.msra.mxu0 0
    %1480 = vmatprep.mubr.bf16.mxu0 0
    %1481 = vmatmul.mubr.bf16.gmra.mrb[0].mxu0 %v1446
    %v1482 = vpop.f32.mrb[0].mxu0
    %v1483 = vadd.f32 %v1398, %v1482
    %v1484 = vpop.f32.mrb[0].mxu0
    %v1485 = vadd.f32 %v1402, %v1484
    %v1486 = vpop.f32.mrb[0].mxu0
    %v1487 = vadd.f32 %v1398, %v1486
    %v1488 = vpop.f32.mrb[0].mxu0
    %v1489 = vadd.f32 %v1402, %v1488
    %1490 = vdwg.mxu0
    %v1491 = vmax.f32 %v1483, 0.0
    %v1492 = vmax.f32 %v1485, 0.0
    %v1493 = vmax.f32 %v1487, 0.0
    %v1494 = vmax.f32 %v1489, 0.0
    %v1495 = vld [vmem:[#allocation5 + $0xe0] sm:$0xf]
    %v1496 = vld [vmem:[#allocation5 + $0xe8] sm:$0xf]
    %v1497 = vld [vmem:[#allocation5 + $0xf0] sm:$0xf]
    %v1498 = vld [vmem:[#allocation5 + $0xf8] sm:$0xf]
    %v1499 = vld [vmem:[#allocation5 + $0x100] sm:$0xf]
    %v1500 = vld [vmem:[#allocation5 + $0x108] sm:$0xf]
    %v1501 = vld [vmem:[#allocation5 + $0x110] sm:$0xf]
    %v1502 = vld [vmem:[#allocation5 + $0x118] sm:$0xf]
    %v1503 = vld [vmem:[#allocation5 + $0x120] sm:$0xf]
    %v1504 = vld [vmem:[#allocation5 + $0x128] sm:$0xf]
    %v1505 = vld [vmem:[#allocation5 + $0x130] sm:$0xf]
    %v1506 = vld [vmem:[#allocation5 + $0x138] sm:$0xf]
    %v1507 = vld [vmem:[#allocation5 + $0x140] sm:$0xf]
    %v1508 = vld [vmem:[#allocation5 + $0x148] sm:$0xf]
    %v1509 = vld [vmem:[#allocation5 + $0x150] sm:$0xf]
    %v1510 = vld [vmem:[#allocation5 + $0x158] sm:$0xf]
    %v1511 = vld [vmem:[#allocation5 + $0x160] sm:$0xf]
    %v1512 = vld [vmem:[#allocation5 + $0x168] sm:$0xf]
    %v1513 = vld [vmem:[#allocation5 + $0x170] sm:$0xf]
    %v1514 = vld [vmem:[#allocation5 + $0x178] sm:$0xf]
    %v1515 = vld [vmem:[#allocation5 + $0x180] sm:$0xf]
    %v1516 = vld [vmem:[#allocation5 + $0x188] sm:$0xf]
    %v1517 = vld [vmem:[#allocation5 + $0x190] sm:$0xf]
    %v1518 = vld [vmem:[#allocation5 + $0x198] sm:$0xf]
    %v1519 = vld [vmem:[#allocation5 + $0x1a0] sm:$0xf]
    %v1520 = vld [vmem:[#allocation5 + $0x1a8] sm:$0xf]
    %v1521 = vld [vmem:[#allocation5 + $0x1b0] sm:$0xf]
    %v1522 = vld [vmem:[#allocation5 + $0x1b8] sm:$0xf]
    %v1523 = vld [vmem:[#allocation5 + $0x1c0] sm:$0xf]
    %v1524 = vld [vmem:[#allocation5 + $0x1c8] sm:$0xf]
    %v1525 = vld [vmem:[#allocation5 + $0x1d0] sm:$0xf]
    %v1526 = vld [vmem:[#allocation5 + $0x1d8] sm:$0xf]
    %v1527 = vpack.c.bf16 %v1493, %v1491
    %v1528 = vpack.c.bf16 %v1494, %v1492
    %v1529 = vld [vmem:[#allocation7 + $0x40] ss:$0 sm:$0xff]
    %v1562 = vunpack.c.l.b16 %v1495
    %v1563 = vunpack.c.l.b16 %v1496
    %v1564 = vunpack.c.l.b16 %v1497
    %v1565 = vunpack.c.l.b16 %v1498
    %v1566 = vunpack.c.l.b16 %v1499
    %v1567 = vunpack.c.l.b16 %v1500
    %v1568 = vunpack.c.l.b16 %v1501
    %v1569 = vunpack.c.l.b16 %v1502
    %v1570 = vunpack.c.l.b16 %v1503
    %v1571 = vunpack.c.l.b16 %v1504
    %v1572 = vunpack.c.l.b16 %v1505
    %v1573 = vunpack.c.l.b16 %v1506
    %v1574 = vunpack.c.l.b16 %v1507
    %v1575 = vunpack.c.l.b16 %v1508
    %v1576 = vunpack.c.l.b16 %v1509
    %v1577 = vunpack.c.l.b16 %v1510
    %v1578 = vunpack.c.l.b16 %v1511
    %v1579 = vunpack.c.l.b16 %v1512
    %v1580 = vunpack.c.l.b16 %v1513
    %v1581 = vunpack.c.l.b16 %v1514
    %v1582 = vunpack.c.l.b16 %v1515
    %v1583 = vunpack.c.l.b16 %v1516
    %v1584 = vunpack.c.l.b16 %v1517
    %v1585 = vunpack.c.l.b16 %v1518
    %v1586 = vunpack.c.l.b16 %v1519
    %v1587 = vunpack.c.l.b16 %v1520
    %v1588 = vunpack.c.l.b16 %v1521
    %v1589 = vunpack.c.l.b16 %v1522
    %v1590 = vunpack.c.l.b16 %v1523
    %v1591 = vunpack.c.l.b16 %v1524
    %v1592 = vunpack.c.l.b16 %v1525
    %v1593 = vunpack.c.l.b16 %v1526
    %v1594 = vpack.c.b16 %v1563, %v1562
    %v1595 = vpack.c.b16 %v1565, %v1564
    %v1596 = vpack.c.b16 %v1567, %v1566
    %v1597 = vpack.c.b16 %v1569, %v1568
    %v1598 = vpack.c.b16 %v1571, %v1570
    %v1599 = vpack.c.b16 %v1573, %v1572
    %v1600 = vpack.c.b16 %v1575, %v1574
    %v1601 = vpack.c.b16 %v1577, %v1576
    %v1602 = vpack.c.b16 %v1579, %v1578
    %v1603 = vpack.c.b16 %v1581, %v1580
    %v1604 = vpack.c.b16 %v1583, %v1582
    %v1605 = vpack.c.b16 %v1585, %v1584
    %v1606 = vpack.c.b16 %v1587, %v1586
    %v1607 = vpack.c.b16 %v1589, %v1588
    %v1608 = vpack.c.b16 %v1591, %v1590
    %v1609 = vpack.c.b16 %v1593, %v1592
    %1626 = vmatprep.subr.bf16.mxu0 0
    %1627 = vmatpush1.bf16.msra.mxu0 %v1594
    %1628 = vmatprep.subr.bf16.mxu0 0
    %1629 = vmatpush1.bf16.msra.mxu0 %v1595
    %1630 = vmatprep.subr.bf16.mxu0 0
    %1631 = vmatpush1.bf16.msra.mxu0 %v1596
    %1632 = vmatprep.subr.bf16.mxu0 0
    %1633 = vmatpush1.bf16.msra.mxu0 %v1597
    %1634 = vmatprep.subr.bf16.mxu0 0
    %1635 = vmatpush1.bf16.msra.mxu0 %v1598
    %1636 = vmatprep.subr.bf16.mxu0 0
    %1637 = vmatpush1.bf16.msra.mxu0 %v1599
    %1638 = vmatprep.subr.bf16.mxu0 0
    %1639 = vmatpush1.bf16.msra.mxu0 %v1600
    %1640 = vmatprep.subr.bf16.mxu0 0
    %1641 = vmatpush1.bf16.msra.mxu0 %v1601
    %1642 = vmatprep.subr.bf16.mxu0 0
    %1643 = vmatpush1.bf16.msra.mxu0 %v1602
    %1644 = vmatprep.subr.bf16.mxu0 0
    %1645 = vmatpush1.bf16.msra.mxu0 %v1603
    %1646 = vmatprep.subr.bf16.mxu0 0
    %1647 = vmatpush1.bf16.msra.mxu0 %v1604
    %1648 = vmatprep.subr.bf16.mxu0 0
    %1649 = vmatpush1.bf16.msra.mxu0 %v1605
    %1650 = vmatprep.subr.bf16.mxu0 0
    %1651 = vmatpush1.bf16.msra.mxu0 %v1606
    %1652 = vmatprep.subr.bf16.mxu0 0
    %1653 = vmatpush1.bf16.msra.mxu0 %v1607
    %1654 = vmatprep.subr.bf16.mxu0 0
    %1655 = vmatpush1.bf16.msra.mxu0 %v1608
    %1656 = vmatprep.subr.bf16.mxu0 0
    %1657 = vmatpush1.bf16.msra.mxu0 %v1609
    %1658 = vmatprep.mubr.bf16.mxu0 %v1528
    %1659 = vmatmul.mubr.bf16.gmra.mrb[0].mxu0 %v1527
    %v1660 = vpop.f32.mrb[0].mxu0
    %v1661 = vadd.f32 %v1529, %v1660
    %v1662 = vpop.f32.mrb[0].mxu0
    %v1663 = vpop.f32.mrb[0].mxu0
    %v1664 = vadd.f32 %v1529, %v1663
    %v1665 = vpop.f32.mrb[0].mxu0
    %1666 = vdwg.mxu0
    %v1667 = vadd.f32 %v1381, %v1661
    %v1668 = vadd.f32 %v1382, %v1664
    %v1669 = vld [vmem:[#allocation7 + $0x60] sm:$0x3]
    %v1670 = vsel %vm196, %v1667, 0.0
    %1671 = vadd.xlane.f32.xlu0 %v1670
    %v1672 = vpop.xlane.xlu0 %1671
    %v1673 = vsel %vm196, %v1668, 0.0
    %1674 = vadd.xlane.f32.xlu0 %v1673
    %v1675 = vpop.xlane.xlu0 %1674
    %v1676 = vsel %vm1320, %v1667, 0.0
    %v1677 = vsel %vm1320, %v1668, 0.0
    %v1678 = vsel %vm196, %v1676, 0.0
    %1679 = vadd.xlane.f32.xlu0 %v1678
    %v1680 = vpop.xlane.xlu0 %1679
    %v1681 = vsel %vm196, %v1677, 0.0
    %1682 = vadd.xlane.f32.xlu0 %v1681
    %v1683 = vpop.xlane.xlu0 %1682
    %v1684 = vsub.f32 %v1672, %v1680
    %v1685 = vsub.f32 %v1675, %v1683
    %v1686 = vsel %vm1320, %v1680, %v1684
    %v1687 = vsel %vm1320, %v1683, %v1685
    %v1688 = vmul.f32 %v1686, 0.03125
    %v1689 = vmul.f32 %v1687, 0.03125
    %v1690 = vsub.f32 %v1667, %v1688
    %v1691 = vsub.f32 %v1668, %v1689
    %v1692 = vmul.f32 %v1690, %v1690
    %v1693 = vmul.f32 %v1691, %v1691
    %v1694 = vsel %vm196, %v1692, 0.0
    %1695 = vadd.xlane.f32.xlu0 %v1694
    %v1696 = vpop.xlane.xlu0 %1695
    %v1697 = vsel %vm196, %v1693, 0.0
    %1698 = vadd.xlane.f32.xlu0 %v1697
    %v1699 = vpop.xlane.xlu0 %1698
    %v1700 = vsel %vm1320, %v1692, 0.0
    %v1701 = vsel %vm1320, %v1693, 0.0
    %v1702 = vsel %vm196, %v1700, 0.0
    %1703 = vadd.xlane.f32.xlu0 %v1702
    %v1704 = vpop.xlane.xlu0 %1703
    %v1705 = vsel %vm196, %v1701, 0.0
    %1706 = vadd.xlane.f32.xlu0 %v1705
    %v1707 = vpop.xlane.xlu0 %1706
    %v1708 = vsub.f32 %v1696, %v1704
    %v1709 = vsub.f32 %v1699, %v1707
    %v1710 = vsel %vm1320, %v1704, %v1708
    %v1711 = vsel %vm1320, %v1707, %v1709
    %v1712 = vmul.f32 %v1710, 0.03125
    %v1713 = vmul.f32 %v1711, 0.03125
    %v1714 = vadd.f32 %v1712, 1e-05
    %v1715 = vadd.f32 %v1713, 1e-05
    %v1716 = vrsqrt.pop %v1714
    %v1717 = vrsqrt.pop %v1715
    %v1718 = vmul.f32 %v1690, %v1716
    %v1719 = vmul.f32 %v1691, %v1717
    %v1720 = vlaneseq
    %v1721 = vshrl.u32 %v1720, 7
    %v1722 = vsub.s32 0, %v1721
    %v1723 = vrot.slane %v1669, %v1722
    %v1724 = vmul.f32 %v1718, %v1723
    %v1725 = vmul.f32 %v1719, %v1723
    %v1726 = vlaneseq
    %v1727 = vshrl.u32 %v1726, 7
    %v1728 = vsub.s32 1, %v1727
    %v1729 = vrot.slane %v1669, %v1728
    %v1730 = vadd.f32 %v1724, %v1729
    %v1731 = vadd.f32 %v1725, %v1729
    %v1732 = vld [vmem:[#allocation5 + $0x1e0] sm:$0xff]
    %v1733 = vld [vmem:[#allocation5 + $0x1e8] sm:$0xff]
    %v1734 = vld [vmem:[#allocation5 + $0x1f0] sm:$0xff]
    %v1735 = vld [vmem:[#allocation5 + $0x1f8] sm:$0xff]
    %v1736 = vld [vmem:[#allocation5 + $0x200] sm:$0xff]
    %v1737 = vld [vmem:[#allocation5 + $0x208] sm:$0xff]
    %v1738 = vld [vmem:[#allocation5 + $0x210] sm:$0xff]
    %v1739 = vld [vmem:[#allocation5 + $0x218] sm:$0xff]
    %v1740 = vpack.c.bf16 %v1731, %v1730
    %s1741 = scalar_lea.vmem [#allocation7], 112
    %v1742 = vld [vmem:[%s1741] ss:$8 sm:$0x3]
    %v1744 = vlaneseq
    %v1745 = vshrl.u32 %v1744, 7
    %v1746 = vsub.s32 0, %v1745
    %v1747 = vrot.slane %v1742, %v1746
    %v1748 = vlaneseq
    %v1749 = vshrl.u32 %v1748, 7
    %v1750 = vsub.s32 1, %v1749
    %v1751 = vrot.slane %v1742, %v1750
    %v1762 = vunpack.c.l.b16 %v1732
    %v1763 = vunpack.c.h.b16 %v1732
    %v1764 = vunpack.c.l.b16 %v1733
    %v1765 = vunpack.c.h.b16 %v1733
    %v1766 = vunpack.c.l.b16 %v1734
    %v1767 = vunpack.c.h.b16 %v1734
    %v1768 = vunpack.c.l.b16 %v1735
    %v1769 = vunpack.c.h.b16 %v1735
    %v1770 = vunpack.c.l.b16 %v1736
    %v1771 = vunpack.c.h.b16 %v1736
    %v1772 = vunpack.c.l.b16 %v1737
    %v1773 = vunpack.c.h.b16 %v1737
    %v1774 = vunpack.c.l.b16 %v1738
    %v1775 = vunpack.c.h.b16 %v1738
    %v1776 = vunpack.c.l.b16 %v1739
    %v1777 = vunpack.c.h.b16 %v1739
    %v1778 = vpack.c.b16 %v1764, %v1762
    %v1779 = vpack.c.b16 %v1765, %v1763
    %v1780 = vpack.c.b16 %v1768, %v1766
    %v1781 = vpack.c.b16 %v1769, %v1767
    %v1782 = vpack.c.b16 %v1772, %v1770
    %v1783 = vpack.c.b16 %v1773, %v1771
    %v1784 = vpack.c.b16 %v1776, %v1774
    %v1785 = vpack.c.b16 %v1777, %v1775
    %v1795 = vsel %vm196, %v1740, 0
    %1797 = vmatprep.subr.bf16.mxu0 %v1779
    %1798 = vmatpush1.bf16.msra.mxu0 %v1778
    %1799 = vmatprep.subr.bf16.mxu0 %v1781
    %1800 = vmatpush1.bf16.msra.mxu0 %v1780
    %1801 = vmatprep.subr.bf16.mxu0 %v1783
    %1802 = vmatpush1.bf16.msra.mxu0 %v1782
    %1803 = vmatprep.subr.bf16.mxu0 %v1785
    %1804 = vmatpush1.bf16.msra.mxu0 %v1784
    %1805 = vmatprep.subr.bf16.mxu0 0
    %1806 = vmatpush1.bf16.msra.mxu0 0
    %1807 = vmatprep.subr.bf16.mxu0 0
    %1808 = vmatpush1.bf16.msra.mxu0 0
    %1809 = vmatprep.subr.bf16.mxu0 0
    %1810 = vmatpush1.bf16.msra.mxu0 0
    %1811 = vmatprep.subr.bf16.mxu0 0
    %1812 = vmatpush1.bf16.msra.mxu0 0
    %1813 = vmatprep.subr.bf16.mxu0 0
    %1814 = vmatpush1.bf16.msra.mxu0 0
    %1815 = vmatprep.subr.bf16.mxu0 0
    %1816 = vmatpush1.bf16.msra.mxu0 0
    %1817 = vmatprep.subr.bf16.mxu0 0
    %1818 = vmatpush1.bf16.msra.mxu0 0
    %1819 = vmatprep.subr.bf16.mxu0 0
    %1820 = vmatpush1.bf16.msra.mxu0 0
    %1821 = vmatprep.subr.bf16.mxu0 0
    %1822 = vmatpush1.bf16.msra.mxu0 0
    %1823 = vmatprep.subr.bf16.mxu0 0
    %1824 = vmatpush1.bf16.msra.mxu0 0
    %1825 = vmatprep.subr.bf16.mxu0 0
    %1826 = vmatpush1.bf16.msra.mxu0 0
    %1827 = vmatprep.subr.bf16.mxu0 0
    %1828 = vmatpush1.bf16.msra.mxu0 0
    %1829 = vmatprep.mubr.bf16.mxu0 0
    %1830 = vmatmul.mubr.bf16.gmra.mrb[0].mxu0 %v1795
    %v1831 = vpop.f32.mrb[0].mxu0
    %v1832 = vadd.f32 %v1747, %v1831
    %v1833 = vpop.f32.mrb[0].mxu0
    %v1834 = vadd.f32 %v1751, %v1833
    %v1835 = vpop.f32.mrb[0].mxu0
    %v1836 = vadd.f32 %v1747, %v1835
    %v1837 = vpop.f32.mrb[0].mxu0
    %v1838 = vadd.f32 %v1751, %v1837
    %1839 = vdwg.mxu0
    %v1842 = vcombine.high %v1832, %v1832
    %v1844 = vunpack.c.l.s4 1966171168
    %v1845 = vunpack.c.0.s8 %v1844
    %v1846 = vlaneseq
    %v1847 = vshrl.u32 %v1846, 7
    %v1848 = vsub.s32 %v1845, %v1847
    %v1849 = vrot.slane %v1832, %v1848
    %v1851 = vunpack.c.l.s4 1966171168
    %v1852 = vunpack.c.0.s8 %v1851
    %v1853 = vlaneseq
    %v1854 = vshrl.u32 %v1853, 7
    %v1855 = vsub.s32 %v1852, %v1854
    %v1856 = vrot.slane %v1842, %v1855
    %v1857 = vcombine.high %v1849, %v1849
    %v1858 = vcombine.high %v1856, %v1856
    %v1860 = vunpack.c.l.s4 1966171168
    %v1861 = vunpack.c.0.s8 %v1860
    %v1862 = vlaneseq
    %v1863 = vshrl.u32 %v1862, 7
    %v1864 = vsub.s32 %v1861, %v1863
    %v1865 = vrot.slane %v1849, %v1864
    %v1867 = vunpack.c.l.s4 1966171168
    %v1868 = vunpack.c.0.s8 %v1867
    %v1869 = vlaneseq
    %v1870 = vshrl.u32 %v1869, 7
    %v1871 = vsub.s32 %v1868, %v1870
    %v1872 = vrot.slane %v1856, %v1871
    %v1874 = vunpack.c.l.s4 1966171168
    %v1875 = vunpack.c.0.s8 %v1874
    %v1876 = vlaneseq
    %v1877 = vshrl.u32 %v1876, 7
    %v1878 = vsub.s32 %v1875, %v1877
    %v1879 = vrot.slane %v1857, %v1878
    %v1881 = vunpack.c.l.s4 1966171168
    %v1882 = vunpack.c.0.s8 %v1881
    %v1883 = vlaneseq
    %v1884 = vshrl.u32 %v1883, 7
    %v1885 = vsub.s32 %v1882, %v1884
    %v1886 = vrot.slane %v1858, %v1885
    %v1887 = vcombine.high %v1865, %v1865
    %v1888 = vcombine.high %v1872, %v1872
    %v1889 = vcombine.high %v1879, %v1879
    %v1890 = vcombine.high %v1886, %v1886
    %v1891 = vcombine.high %v1836, %v1836
    %v1893 = vunpack.c.l.s4 1966171168
    %v1894 = vunpack.c.0.s8 %v1893
    %v1895 = vlaneseq
    %v1896 = vshrl.u32 %v1895, 7
    %v1897 = vsub.s32 %v1894, %v1896
    %v1898 = vrot.slane %v1836, %v1897
    %v1900 = vunpack.c.l.s4 1966171168
    %v1901 = vunpack.c.0.s8 %v1900
    %v1902 = vlaneseq
    %v1903 = vshrl.u32 %v1902, 7
    %v1904 = vsub.s32 %v1901, %v1903
    %v1905 = vrot.slane %v1891, %v1904
    %v1906 = vcombine.high %v1898, %v1898
    %v1907 = vcombine.high %v1905, %v1905
    %v1909 = vunpack.c.l.s4 1966171168
    %v1910 = vunpack.c.0.s8 %v1909
    %v1911 = vlaneseq
    %v1912 = vshrl.u32 %v1911, 7
    %v1913 = vsub.s32 %v1910, %v1912
    %v1914 = vrot.slane %v1898, %v1913
    %v1916 = vunpack.c.l.s4 1966171168
    %v1917 = vunpack.c.0.s8 %v1916
    %v1918 = vlaneseq
    %v1919 = vshrl.u32 %v1918, 7
    %v1920 = vsub.s32 %v1917, %v1919
    %v1921 = vrot.slane %v1905, %v1920
    %v1923 = vunpack.c.l.s4 1966171168
    %v1924 = vunpack.c.0.s8 %v1923
    %v1925 = vlaneseq
    %v1926 = vshrl.u32 %v1925, 7
    %v1927 = vsub.s32 %v1924, %v1926
    %v1928 = vrot.slane %v1906, %v1927
    %v1930 = vunpack.c.l.s4 1966171168
    %v1931 = vunpack.c.0.s8 %v1930
    %v1932 = vlaneseq
    %v1933 = vshrl.u32 %v1932, 7
    %v1934 = vsub.s32 %v1931, %v1933
    %v1935 = vrot.slane %v1907, %v1934
    %v1936 = vcombine.high %v1914, %v1914
    %v1937 = vcombine.high %v1921, %v1921
    %v1938 = vcombine.high %v1928, %v1928
    %v1939 = vcombine.high %v1935, %v1935
    %v1940 = vlaneseq
    %v1941 = vshrl.u32 %v1940, 7
    %v1942 = vsub.s32 0, %v1941
    %v1943 = vrot.slane %v1865, %v1942
    %v1944 = vlaneseq
    %v1945 = vshrl.u32 %v1944, 7
    %v1946 = vsub.s32 0, %v1945
    %v1947 = vrot.slane %v1879, %v1946
    %v1948 = vlaneseq
    %v1949 = vshrl.u32 %v1948, 7
    %v1950 = vsub.s32 0, %v1949
    %v1951 = vrot.slane %v1887, %v1950
    %v1952 = vlaneseq
    %v1953 = vshrl.u32 %v1952, 7
    %v1954 = vsub.s32 0, %v1953
    %v1955 = vrot.slane %v1889, %v1954
    %v1956 = vlaneseq
    %v1957 = vshrl.u32 %v1956, 7
    %v1958 = vsub.s32 0, %v1957
    %v1959 = vrot.slane %v1872, %v1958
    %v1960 = vlaneseq
    %v1961 = vshrl.u32 %v1960, 7
    %v1962 = vsub.s32 0, %v1961
    %v1963 = vrot.slane %v1886, %v1962
    %v1964 = vlaneseq
    %v1965 = vshrl.u32 %v1964, 7
    %v1966 = vsub.s32 0, %v1965
    %v1967 = vrot.slane %v1888, %v1966
    %v1968 = vlaneseq
    %v1969 = vshrl.u32 %v1968, 7
    %v1970 = vsub.s32 0, %v1969
    %v1971 = vrot.slane %v1890, %v1970
    %v1972 = vlaneseq
    %v1973 = vshrl.u32 %v1972, 7
    %v1974 = vsub.s32 0, %v1973
    %v1975 = vrot.slane %v1914, %v1974
    %v1976 = vlaneseq
    %v1977 = vshrl.u32 %v1976, 7
    %v1978 = vsub.s32 0, %v1977
    %v1979 = vrot.slane %v1928, %v1978
    %v1980 = vlaneseq
    %v1981 = vshrl.u32 %v1980, 7
    %v1982 = vsub.s32 0, %v1981
    %v1983 = vrot.slane %v1936, %v1982
    %v1984 = vlaneseq
    %v1985 = vshrl.u32 %v1984, 7
    %v1986 = vsub.s32 0, %v1985
    %v1987 = vrot.slane %v1938, %v1986
    %v1988 = vlaneseq
    %v1989 = vshrl.u32 %v1988, 7
    %v1990 = vsub.s32 0, %v1989
    %v1991 = vrot.slane %v1921, %v1990
    %v1992 = vlaneseq
    %v1993 = vshrl.u32 %v1992, 7
    %v1994 = vsub.s32 0, %v1993
    %v1995 = vrot.slane %v1935, %v1994
    %v1996 = vlaneseq
    %v1997 = vshrl.u32 %v1996, 7
    %v1998 = vsub.s32 0, %v1997
    %v1999 = vrot.slane %v1937, %v1998
    %v2000 = vlaneseq
    %v2001 = vshrl.u32 %v2000, 7
    %v2002 = vsub.s32 0, %v2001
    %v2003 = vrot.slane %v1939, %v2002
    %2020 = vrot.lane.b32.xlu0 %v1832, 64
    %v2021 = vpop.permute.xlu0 %2020
    %2022 = vrot.lane.b32.xlu0 %v1836, 64
    %v2023 = vpop.permute.xlu0 %2022
    %v2026 = vmul.f32 %v1943, %v2021
    %v2027 = vmul.f32 %v1947, %v2021
    %v2028 = vmul.f32 %v1951, %v2021
    %v2029 = vmul.f32 %v1955, %v2021
    %v2030 = vmul.f32 %v1959, %v2021
    %v2031 = vmul.f32 %v1963, %v2021
    %v2032 = vmul.f32 %v1967, %v2021
    %v2033 = vmul.f32 %v1971, %v2021
    %v2034 = vmul.f32 %v1975, %v2023
    %v2035 = vmul.f32 %v1979, %v2023
    %v2036 = vmul.f32 %v1983, %v2023
    %v2037 = vmul.f32 %v1987, %v2023
    %v2038 = vmul.f32 %v1991, %v2023
    %v2039 = vmul.f32 %v1995, %v2023
    %v2040 = vmul.f32 %v1999, %v2023
    %v2041 = vmul.f32 %v2003, %v2023
    %v2042 = vpack.c.bf16 %v2027, %v2026
    %v2043 = vpack.c.bf16 %v2029, %v2028
    %v2044 = vpack.c.bf16 %v2031, %v2030
    %v2045 = vpack.c.bf16 %v2033, %v2032
    %v2046 = vpack.c.bf16 %v2035, %v2034
    %v2047 = vpack.c.bf16 %v2037, %v2036
    %v2048 = vpack.c.bf16 %v2039, %v2038
    %v2049 = vpack.c.bf16 %v2041, %v2040
    %v2051 = vsel %vm196, %v2042, 0
    %v2054 = vsel %vm196, %v2043, 0
    %v2057 = vsel %vm196, %v2044, 0
    %v2060 = vsel %vm196, %v2045, 0
    %v2063 = vsel %vm196, %v2046, 0
    %v2066 = vsel %vm196, %v2047, 0
    %v2069 = vsel %vm196, %v2048, 0
    %v2072 = vsel %vm196, %v2049, 0
    %2074 = vmatprep.subr.bf16.mxu0 0
    %2075 = vmatpush1.bf16.msra.mxu0 %v469
    %2076 = vmatprep.subr.bf16.mxu0 0
    %2077 = vmatpush1.bf16.msra.mxu0 %v470
    %2078 = vmatprep.subr.bf16.mxu0 0
    %2079 = vmatpush1.bf16.msra.mxu0 %v471
    %2080 = vmatprep.subr.bf16.mxu0 0
    %2081 = vmatpush1.bf16.msra.mxu0 %v472
    %2082 = vmatprep.subr.bf16.mxu0 0
    %2083 = vmatpush1.bf16.msra.mxu0 0
    %2084 = vmatprep.subr.bf16.mxu0 0
    %2085 = vmatpush1.bf16.msra.mxu0 0
    %2086 = vmatprep.subr.bf16.mxu0 0
    %2087 = vmatpush1.bf16.msra.mxu0 0
    %2088 = vmatprep.subr.bf16.mxu0 0
    %2089 = vmatpush1.bf16.msra.mxu0 0
    %2090 = vmatprep.subr.bf16.mxu0 0
    %2091 = vmatpush1.bf16.msra.mxu0 0
    %2092 = vmatprep.subr.bf16.mxu0 0
    %2093 = vmatpush1.bf16.msra.mxu0 0
    %2094 = vmatprep.subr.bf16.mxu0 0
    %2095 = vmatpush1.bf16.msra.mxu0 0
    %2096 = vmatprep.subr.bf16.mxu0 0
    %2097 = vmatpush1.bf16.msra.mxu0 0
    %2098 = vmatprep.subr.bf16.mxu0 0
    %2099 = vmatpush1.bf16.msra.mxu0 0
    %2100 = vmatprep.subr.bf16.mxu0 0
    %2101 = vmatpush1.bf16.msra.mxu0 0
    %2102 = vmatprep.subr.bf16.mxu0 0
    %2103 = vmatpush1.bf16.msra.mxu0 0
    %2104 = vmatprep.subr.bf16.mxu0 0
    %2105 = vmatpush1.bf16.msra.mxu0 0
    %2106 = vmatprep.mubr.bf16.mxu0 0
    %2107 = vmatmul.mubr.bf16.gmra.mrb[0].mxu0 %v2051
    %v2108 = vpop.f32.mrb[0].mxu0
    %v2109 = vadd.f32 0.0, %v2108
    %v2110 = vpop.f32.mrb[0].mxu0
    %v2111 = vpop.f32.mrb[0].mxu0
    %v2112 = vadd.f32 0.0, %v2111
    %v2113 = vpop.f32.mrb[0].mxu0
    %2114 = vmatprep.mubr.bf16.mxu0 0
    %2115 = vmatmul.mubr.bf16.gmra.mrb[0].mxu0 %v2054
    %v2116 = vpop.f32.mrb[0].mxu0
    %v2117 = vadd.f32 0.0, %v2116
    %v2118 = vpop.f32.mrb[0].mxu0
    %v2119 = vpop.f32.mrb[0].mxu0
    %v2120 = vadd.f32 0.0, %v2119
    %v2121 = vpop.f32.mrb[0].mxu0
    %2122 = vmatprep.mubr.bf16.mxu0 0
    %2123 = vmatmul.mubr.bf16.gmra.mrb[0].mxu0 %v2057
    %v2124 = vpop.f32.mrb[0].mxu0
    %v2125 = vadd.f32 0.0, %v2124
    %v2126 = vpop.f32.mrb[0].mxu0
    %v2127 = vpop.f32.mrb[0].mxu0
    %v2128 = vadd.f32 0.0, %v2127
    %v2129 = vpop.f32.mrb[0].mxu0
    %2130 = vmatprep.mubr.bf16.mxu0 0
    %2131 = vmatmul.mubr.bf16.gmra.mrb[0].mxu0 %v2060
    %v2132 = vpop.f32.mrb[0].mxu0
    %v2133 = vadd.f32 0.0, %v2132
    %v2134 = vpop.f32.mrb[0].mxu0
    %v2135 = vpop.f32.mrb[0].mxu0
    %v2136 = vadd.f32 0.0, %v2135
    %v2137 = vpop.f32.mrb[0].mxu0
    %2138 = vmatprep.mubr.bf16.mxu0 0
    %2139 = vmatmul.mubr.bf16.gmra.mrb[0].mxu0 %v2063
    %v2140 = vpop.f32.mrb[0].mxu0
    %v2141 = vadd.f32 0.0, %v2140
    %v2142 = vpop.f32.mrb[0].mxu0
    %v2143 = vpop.f32.mrb[0].mxu0
    %v2144 = vadd.f32 0.0, %v2143
    %v2145 = vpop.f32.mrb[0].mxu0
    %2146 = vmatprep.mubr.bf16.mxu0 0
    %2147 = vmatmul.mubr.bf16.gmra.mrb[0].mxu0 %v2066
    %v2148 = vpop.f32.mrb[0].mxu0
    %v2149 = vadd.f32 0.0, %v2148
    %v2150 = vpop.f32.mrb[0].mxu0
    %v2151 = vpop.f32.mrb[0].mxu0
    %v2152 = vadd.f32 0.0, %v2151
    %v2153 = vpop.f32.mrb[0].mxu0
    %2154 = vmatprep.mubr.bf16.mxu0 0
    %2155 = vmatmul.mubr.bf16.gmra.mrb[0].mxu0 %v2069
    %v2156 = vpop.f32.mrb[0].mxu0
    %v2157 = vadd.f32 0.0, %v2156
    %v2158 = vpop.f32.mrb[0].mxu0
    %v2159 = vpop.f32.mrb[0].mxu0
    %v2160 = vadd.f32 0.0, %v2159
    %v2161 = vpop.f32.mrb[0].mxu0
    %2162 = vmatprep.mubr.bf16.mxu0 0
    %2163 = vmatmul.mubr.bf16.gmra.mrb[0].mxu0 %v2072
    %v2164 = vpop.f32.mrb[0].mxu0
    %v2165 = vadd.f32 0.0, %v2164
    %v2166 = vpop.f32.mrb[0].mxu0
    %v2167 = vpop.f32.mrb[0].mxu0
    %v2168 = vadd.f32 0.0, %v2167
    %v2169 = vpop.f32.mrb[0].mxu0
    %2170 = vdwg.mxu0
    %v2171 = vsel %vm598, %v2109, -inf
    %v2172 = vrot.slane %v2171, 4
    %v2173 = vmax.f32 %v2171, %v2172
    %v2174 = vrot.slane %v2173, 2
    %v2175 = vmax.f32 %v2173, %v2174
    %v2176 = vrot.slane %v2175, 1
    %v2177 = vmax.f32 %v2175, %v2176
    %v2178 = vsel %vm598, %v2112, -inf
    %v2179 = vrot.slane %v2178, 4
    %v2180 = vmax.f32 %v2178, %v2179
    %v2181 = vrot.slane %v2180, 2
    %v2182 = vmax.f32 %v2180, %v2181
    %v2183 = vrot.slane %v2182, 1
    %v2184 = vmax.f32 %v2182, %v2183
    %v2185 = vsel %vm598, %v2117, -inf
    %v2186 = vrot.slane %v2185, 4
    %v2187 = vmax.f32 %v2185, %v2186
    %v2188 = vrot.slane %v2187, 2
    %v2189 = vmax.f32 %v2187, %v2188
    %v2190 = vrot.slane %v2189, 1
    %v2191 = vmax.f32 %v2189, %v2190
    %v2192 = vsel %vm598, %v2120, -inf
    %v2193 = vrot.slane %v2192, 4
    %v2194 = vmax.f32 %v2192, %v2193
    %v2195 = vrot.slane %v2194, 2
    %v2196 = vmax.f32 %v2194, %v2195
    %v2197 = vrot.slane %v2196, 1
    %v2198 = vmax.f32 %v2196, %v2197
    %v2199 = vsel %vm598, %v2125, -inf
    %v2200 = vrot.slane %v2199, 4
    %v2201 = vmax.f32 %v2199, %v2200
    %v2202 = vrot.slane %v2201, 2
    %v2203 = vmax.f32 %v2201, %v2202
    %v2204 = vrot.slane %v2203, 1
    %v2205 = vmax.f32 %v2203, %v2204
    %v2206 = vsel %vm598, %v2128, -inf
    %v2207 = vrot.slane %v2206, 4
    %v2208 = vmax.f32 %v2206, %v2207
    %v2209 = vrot.slane %v2208, 2
    %v2210 = vmax.f32 %v2208, %v2209
    %v2211 = vrot.slane %v2210, 1
    %v2212 = vmax.f32 %v2210, %v2211
    %v2213 = vsel %vm598, %v2133, -inf
    %v2214 = vrot.slane %v2213, 4
    %v2215 = vmax.f32 %v2213, %v2214
    %v2216 = vrot.slane %v2215, 2
    %v2217 = vmax.f32 %v2215, %v2216
    %v2218 = vrot.slane %v2217, 1
    %v2219 = vmax.f32 %v2217, %v2218
    %v2220 = vsel %vm598, %v2136, -inf
    %v2221 = vrot.slane %v2220, 4
    %v2222 = vmax.f32 %v2220, %v2221
    %v2223 = vrot.slane %v2222, 2
    %v2224 = vmax.f32 %v2222, %v2223
    %v2225 = vrot.slane %v2224, 1
    %v2226 = vmax.f32 %v2224, %v2225
    %v2227 = vsel %vm598, %v2141, -inf
    %v2228 = vrot.slane %v2227, 4
    %v2229 = vmax.f32 %v2227, %v2228
    %v2230 = vrot.slane %v2229, 2
    %v2231 = vmax.f32 %v2229, %v2230
    %v2232 = vrot.slane %v2231, 1
    %v2233 = vmax.f32 %v2231, %v2232
    %v2234 = vsel %vm598, %v2144, -inf
    %v2235 = vrot.slane %v2234, 4
    %v2236 = vmax.f32 %v2234, %v2235
    %v2237 = vrot.slane %v2236, 2
    %v2238 = vmax.f32 %v2236, %v2237
    %v2239 = vrot.slane %v2238, 1
    %v2240 = vmax.f32 %v2238, %v2239
    %v2241 = vsel %vm598, %v2149, -inf
    %v2242 = vrot.slane %v2241, 4
    %v2243 = vmax.f32 %v2241, %v2242
    %v2244 = vrot.slane %v2243, 2
    %v2245 = vmax.f32 %v2243, %v2244
    %v2246 = vrot.slane %v2245, 1
    %v2247 = vmax.f32 %v2245, %v2246
    %v2248 = vsel %vm598, %v2152, -inf
    %v2249 = vrot.slane %v2248, 4
    %v2250 = vmax.f32 %v2248, %v2249
    %v2251 = vrot.slane %v2250, 2
    %v2252 = vmax.f32 %v2250, %v2251
    %v2253 = vrot.slane %v2252, 1
    %v2254 = vmax.f32 %v2252, %v2253
    %v2255 = vsel %vm598, %v2157, -inf
    %v2256 = vrot.slane %v2255, 4
    %v2257 = vmax.f32 %v2255, %v2256
    %v2258 = vrot.slane %v2257, 2
    %v2259 = vmax.f32 %v2257, %v2258
    %v2260 = vrot.slane %v2259, 1
    %v2261 = vmax.f32 %v2259, %v2260
    %v2262 = vsel %vm598, %v2160, -inf
    %v2263 = vrot.slane %v2262, 4
    %v2264 = vmax.f32 %v2262, %v2263
    %v2265 = vrot.slane %v2264, 2
    %v2266 = vmax.f32 %v2264, %v2265
    %v2267 = vrot.slane %v2266, 1
    %v2268 = vmax.f32 %v2266, %v2267
    %v2269 = vsel %vm598, %v2165, -inf
    %v2270 = vrot.slane %v2269, 4
    %v2271 = vmax.f32 %v2269, %v2270
    %v2272 = vrot.slane %v2271, 2
    %v2273 = vmax.f32 %v2271, %v2272
    %v2274 = vrot.slane %v2273, 1
    %v2275 = vmax.f32 %v2273, %v2274
    %v2276 = vsel %vm598, %v2168, -inf
    %v2277 = vrot.slane %v2276, 4
    %v2278 = vmax.f32 %v2276, %v2277
    %v2279 = vrot.slane %v2278, 2
    %v2280 = vmax.f32 %v2278, %v2279
    %v2281 = vrot.slane %v2280, 1
    %v2282 = vmax.f32 %v2280, %v2281
    %v2283 = vsub.f32 %v2109, %v2177
    %v2284 = vsub.f32 %v2112, %v2184
    %v2285 = vsub.f32 %v2117, %v2191
    %v2286 = vsub.f32 %v2120, %v2198
    %v2287 = vsub.f32 %v2125, %v2205
    %v2288 = vsub.f32 %v2128, %v2212
    %v2289 = vsub.f32 %v2133, %v2219
    %v2290 = vsub.f32 %v2136, %v2226
    %v2291 = vsub.f32 %v2141, %v2233
    %v2292 = vsub.f32 %v2144, %v2240
    %v2293 = vsub.f32 %v2149, %v2247
    %v2294 = vsub.f32 %v2152, %v2254
    %v2295 = vsub.f32 %v2157, %v2261
    %v2296 = vsub.f32 %v2160, %v2268
    %v2297 = vsub.f32 %v2165, %v2275
    %v2298 = vsub.f32 %v2168, %v2282
    %v2299 = vmul.f32 %v2283, 1.442695
    %v2300 = vpow.pop %v2299
    %v2301 = vmul.f32 %v2284, 1.442695
    %v2302 = vpow.pop %v2301
    %v2303 = vmul.f32 %v2285, 1.442695
    %v2304 = vpow.pop %v2303
    %v2305 = vmul.f32 %v2286, 1.442695
    %v2306 = vpow.pop %v2305
    %v2307 = vmul.f32 %v2287, 1.442695
    %v2308 = vpow.pop %v2307
    %v2309 = vmul.f32 %v2288, 1.442695
    %v2310 = vpow.pop %v2309
    %v2311 = vmul.f32 %v2289, 1.442695
    %v2312 = vpow.pop %v2311
    %v2313 = vmul.f32 %v2290, 1.442695
    %v2314 = vpow.pop %v2313
    %v2315 = vmul.f32 %v2291, 1.442695
    %v2316 = vpow.pop %v2315
    %v2317 = vmul.f32 %v2292, 1.442695
    %v2318 = vpow.pop %v2317
    %v2319 = vmul.f32 %v2293, 1.442695
    %v2320 = vpow.pop %v2319
    %v2321 = vmul.f32 %v2294, 1.442695
    %v2322 = vpow.pop %v2321
    %v2323 = vmul.f32 %v2295, 1.442695
    %v2324 = vpow.pop %v2323
    %v2325 = vmul.f32 %v2296, 1.442695
    %v2326 = vpow.pop %v2325
    %v2327 = vmul.f32 %v2297, 1.442695
    %v2328 = vpow.pop %v2327
    %v2329 = vmul.f32 %v2298, 1.442695
    %v2330 = vpow.pop %v2329
    %v2331 = vsel %vm598, %v2300, 0.0
    %v2332 = vrot.slane %v2331, 4
    %v2333 = vadd.f32 %v2331, %v2332
    %v2334 = vrot.slane %v2333, 2
    %v2335 = vadd.f32 %v2333, %v2334
    %v2336 = vrot.slane %v2335, 1
    %v2337 = vadd.f32 %v2335, %v2336
    %v2338 = vsel %vm598, %v2302, 0.0
    %v2339 = vrot.slane %v2338, 4
    %v2340 = vadd.f32 %v2338, %v2339
    %v2341 = vrot.slane %v2340, 2
    %v2342 = vadd.f32 %v2340, %v2341
    %v2343 = vrot.slane %v2342, 1
    %v2344 = vadd.f32 %v2342, %v2343
    %v2345 = vsel %vm598, %v2304, 0.0
    %v2346 = vrot.slane %v2345, 4
    %v2347 = vadd.f32 %v2345, %v2346
    %v2348 = vrot.slane %v2347, 2
    %v2349 = vadd.f32 %v2347, %v2348
    %v2350 = vrot.slane %v2349, 1
    %v2351 = vadd.f32 %v2349, %v2350
    %v2352 = vsel %vm598, %v2306, 0.0
    %v2353 = vrot.slane %v2352, 4
    %v2354 = vadd.f32 %v2352, %v2353
    %v2355 = vrot.slane %v2354, 2
    %v2356 = vadd.f32 %v2354, %v2355
    %v2357 = vrot.slane %v2356, 1
    %v2358 = vadd.f32 %v2356, %v2357
    %v2359 = vsel %vm598, %v2308, 0.0
    %v2360 = vrot.slane %v2359, 4
    %v2361 = vadd.f32 %v2359, %v2360
    %v2362 = vrot.slane %v2361, 2
    %v2363 = vadd.f32 %v2361, %v2362
    %v2364 = vrot.slane %v2363, 1
    %v2365 = vadd.f32 %v2363, %v2364
    %v2366 = vsel %vm598, %v2310, 0.0
    %v2367 = vrot.slane %v2366, 4
    %v2368 = vadd.f32 %v2366, %v2367
    %v2369 = vrot.slane %v2368, 2
    %v2370 = vadd.f32 %v2368, %v2369
    %v2371 = vrot.slane %v2370, 1
    %v2372 = vadd.f32 %v2370, %v2371
    %v2373 = vsel %vm598, %v2312, 0.0
    %v2374 = vrot.slane %v2373, 4
    %v2375 = vadd.f32 %v2373, %v2374
    %v2376 = vrot.slane %v2375, 2
    %v2377 = vadd.f32 %v2375, %v2376
    %v2378 = vrot.slane %v2377, 1
    %v2379 = vadd.f32 %v2377, %v2378
    %v2380 = vsel %vm598, %v2314, 0.0
    %v2381 = vrot.slane %v2380, 4
    %v2382 = vadd.f32 %v2380, %v2381
    %v2383 = vrot.slane %v2382, 2
    %v2384 = vadd.f32 %v2382, %v2383
    %v2385 = vrot.slane %v2384, 1
    %v2386 = vadd.f32 %v2384, %v2385
    %v2387 = vsel %vm598, %v2316, 0.0
    %v2388 = vrot.slane %v2387, 4
    %v2389 = vadd.f32 %v2387, %v2388
    %v2390 = vrot.slane %v2389, 2
    %v2391 = vadd.f32 %v2389, %v2390
    %v2392 = vrot.slane %v2391, 1
    %v2393 = vadd.f32 %v2391, %v2392
    %v2394 = vsel %vm598, %v2318, 0.0
    %v2395 = vrot.slane %v2394, 4
    %v2396 = vadd.f32 %v2394, %v2395
    %v2397 = vrot.slane %v2396, 2
    %v2398 = vadd.f32 %v2396, %v2397
    %v2399 = vrot.slane %v2398, 1
    %v2400 = vadd.f32 %v2398, %v2399
    %v2401 = vsel %vm598, %v2320, 0.0
    %v2402 = vrot.slane %v2401, 4
    %v2403 = vadd.f32 %v2401, %v2402
    %v2404 = vrot.slane %v2403, 2
    %v2405 = vadd.f32 %v2403, %v2404
    %v2406 = vrot.slane %v2405, 1
    %v2407 = vadd.f32 %v2405, %v2406
    %v2408 = vsel %vm598, %v2322, 0.0
    %v2409 = vrot.slane %v2408, 4
    %v2410 = vadd.f32 %v2408, %v2409
    %v2411 = vrot.slane %v2410, 2
    %v2412 = vadd.f32 %v2410, %v2411
    %v2413 = vrot.slane %v2412, 1
    %v2414 = vadd.f32 %v2412, %v2413
    %v2415 = vsel %vm598, %v2324, 0.0
    %v2416 = vrot.slane %v2415, 4
    %v2417 = vadd.f32 %v2415, %v2416
    %v2418 = vrot.slane %v2417, 2
    %v2419 = vadd.f32 %v2417, %v2418
    %v2420 = vrot.slane %v2419, 1
    %v2421 = vadd.f32 %v2419, %v2420
    %v2422 = vsel %vm598, %v2326, 0.0
    %v2423 = vrot.slane %v2422, 4
    %v2424 = vadd.f32 %v2422, %v2423
    %v2425 = vrot.slane %v2424, 2
    %v2426 = vadd.f32 %v2424, %v2425
    %v2427 = vrot.slane %v2426, 1
    %v2428 = vadd.f32 %v2426, %v2427
    %v2429 = vsel %vm598, %v2328, 0.0
    %v2430 = vrot.slane %v2429, 4
    %v2431 = vadd.f32 %v2429, %v2430
    %v2432 = vrot.slane %v2431, 2
    %v2433 = vadd.f32 %v2431, %v2432
    %v2434 = vrot.slane %v2433, 1
    %v2435 = vadd.f32 %v2433, %v2434
    %v2436 = vsel %vm598, %v2330, 0.0
    %v2437 = vrot.slane %v2436, 4
    %v2438 = vadd.f32 %v2436, %v2437
    %v2439 = vrot.slane %v2438, 2
    %v2440 = vadd.f32 %v2438, %v2439
    %v2441 = vrot.slane %v2440, 1
    %v2442 = vadd.f32 %v2440, %v2441
    %v2443 = vrcp.pop %v2337
    %v2444 = vrcp.pop %v2344
    %v2445 = vrcp.pop %v2351
    %v2446 = vrcp.pop %v2358
    %v2447 = vrcp.pop %v2365
    %v2448 = vrcp.pop %v2372
    %v2449 = vrcp.pop %v2379
    %v2450 = vrcp.pop %v2386
    %v2451 = vrcp.pop %v2393
    %v2452 = vrcp.pop %v2400
    %v2453 = vrcp.pop %v2407
    %v2454 = vrcp.pop %v2414
    %v2455 = vrcp.pop %v2421
    %v2456 = vrcp.pop %v2428
    %v2457 = vrcp.pop %v2435
    %v2458 = vrcp.pop %v2442
    %v2459 = vmul.f32 %v2300, %v2443
    %v2460 = vmul.f32 %v2302, %v2444
    %v2461 = vmul.f32 %v2304, %v2445
    %v2462 = vmul.f32 %v2306, %v2446
    %v2463 = vmul.f32 %v2308, %v2447
    %v2464 = vmul.f32 %v2310, %v2448
    %v2465 = vmul.f32 %v2312, %v2449
    %v2466 = vmul.f32 %v2314, %v2450
    %v2467 = vmul.f32 %v2316, %v2451
    %v2468 = vmul.f32 %v2318, %v2452
    %v2469 = vmul.f32 %v2320, %v2453
    %v2470 = vmul.f32 %v2322, %v2454
    %v2471 = vmul.f32 %v2324, %v2455
    %v2472 = vmul.f32 %v2326, %v2456
    %v2473 = vmul.f32 %v2328, %v2457
    %v2474 = vmul.f32 %v2330, %v2458
    %v2475 = vpack.c.bf16 %v2460, %v2459
    %v2476 = vpack.c.bf16 %v2462, %v2461
    %v2477 = vpack.c.bf16 %v2464, %v2463
    %v2478 = vpack.c.bf16 %v2466, %v2465
    %v2479 = vpack.c.bf16 %v2468, %v2467
    %v2480 = vpack.c.bf16 %v2470, %v2469
    %v2481 = vpack.c.bf16 %v2472, %v2471
    %v2482 = vpack.c.bf16 %v2474, %v2473
    %v2484 = vsel %vm598, %v2475, 0
    %v2487 = vsel %vm598, %v2476, 0
    %v2490 = vsel %vm598, %v2477, 0
    %v2493 = vsel %vm598, %v2478, 0
    %v2496 = vsel %vm598, %v2479, 0
    %v2499 = vsel %vm598, %v2480, 0
    %v2502 = vsel %vm598, %v2481, 0
    %v2505 = vsel %vm598, %v2482, 0
    %2507 = vmatprep.subr.bf16.mxu0 0
    %2508 = vmatpush1.bf16.msra.mxu0 %v915
    %2509 = vmatprep.subr.bf16.mxu0 0
    %2510 = vmatpush1.bf16.msra.mxu0 0
    %2511 = vmatprep.subr.bf16.mxu0 0
    %2512 = vmatpush1.bf16.msra.mxu0 0
    %2513 = vmatprep.subr.bf16.mxu0 0
    %2514 = vmatpush1.bf16.msra.mxu0 0
    %2515 = vmatprep.subr.bf16.mxu0 0
    %2516 = vmatpush1.bf16.msra.mxu0 0
    %2517 = vmatprep.subr.bf16.mxu0 0
    %2518 = vmatpush1.bf16.msra.mxu0 0
    %2519 = vmatprep.subr.bf16.mxu0 0
    %2520 = vmatpush1.bf16.msra.mxu0 0
    %2521 = vmatprep.subr.bf16.mxu0 0
    %2522 = vmatpush1.bf16.msra.mxu0 0
    %2523 = vmatprep.subr.bf16.mxu0 0
    %2524 = vmatpush1.bf16.msra.mxu0 0
    %2525 = vmatprep.subr.bf16.mxu0 0
    %2526 = vmatpush1.bf16.msra.mxu0 0
    %2527 = vmatprep.subr.bf16.mxu0 0
    %2528 = vmatpush1.bf16.msra.mxu0 0
    %2529 = vmatprep.subr.bf16.mxu0 0
    %2530 = vmatpush1.bf16.msra.mxu0 0
    %2531 = vmatprep.subr.bf16.mxu0 0
    %2532 = vmatpush1.bf16.msra.mxu0 0
    %2533 = vmatprep.subr.bf16.mxu0 0
    %2534 = vmatpush1.bf16.msra.mxu0 0
    %2535 = vmatprep.subr.bf16.mxu0 0
    %2536 = vmatpush1.bf16.msra.mxu0 0
    %2537 = vmatprep.subr.bf16.mxu0 0
    %2538 = vmatpush1.bf16.msra.mxu0 0
    %2539 = vmatprep.mubr.bf16.mxu0 0
    %2540 = vmatmul.mubr.bf16.gmra.mrb[0].mxu0 %v2484
    %v2541 = vpop.f32.mrb[0].mxu0
    %v2542 = vadd.f32 0.0, %v2541
    %v2543 = vpop.f32.mrb[0].mxu0
    %v2544 = vpop.f32.mrb[0].mxu0
    %v2545 = vadd.f32 0.0, %v2544
    %v2546 = vpop.f32.mrb[0].mxu0
    %2547 = vmatprep.mubr.bf16.mxu0 0
    %2548 = vmatmul.mubr.bf16.gmra.mrb[0].mxu0 %v2487
    %v2549 = vpop.f32.mrb[0].mxu0
    %v2550 = vadd.f32 0.0, %v2549
    %v2551 = vpop.f32.mrb[0].mxu0
    %v2552 = vpop.f32.mrb[0].mxu0
    %v2553 = vadd.f32 0.0, %v2552
    %v2554 = vpop.f32.mrb[0].mxu0
    %2555 = vmatprep.mubr.bf16.mxu0 0
    %2556 = vmatmul.mubr.bf16.gmra.mrb[0].mxu0 %v2490
    %v2557 = vpop.f32.mrb[0].mxu0
    %v2558 = vadd.f32 0.0, %v2557
    %v2559 = vpop.f32.mrb[0].mxu0
    %v2560 = vpop.f32.mrb[0].mxu0
    %v2561 = vadd.f32 0.0, %v2560
    %v2562 = vpop.f32.mrb[0].mxu0
    %2563 = vmatprep.mubr.bf16.mxu0 0
    %2564 = vmatmul.mubr.bf16.gmra.mrb[0].mxu0 %v2493
    %v2565 = vpop.f32.mrb[0].mxu0
    %v2566 = vadd.f32 0.0, %v2565
    %v2567 = vpop.f32.mrb[0].mxu0
    %v2568 = vpop.f32.mrb[0].mxu0
    %v2569 = vadd.f32 0.0, %v2568
    %v2570 = vpop.f32.mrb[0].mxu0
    %2571 = vmatprep.mubr.bf16.mxu0 0
    %2572 = vmatmul.mubr.bf16.gmra.mrb[0].mxu0 %v2496
    %v2573 = vpop.f32.mrb[0].mxu0
    %v2574 = vadd.f32 0.0, %v2573
    %v2575 = vpop.f32.mrb[0].mxu0
    %v2576 = vpop.f32.mrb[0].mxu0
    %v2577 = vadd.f32 0.0, %v2576
    %v2578 = vpop.f32.mrb[0].mxu0
    %2579 = vmatprep.mubr.bf16.mxu0 0
    %2580 = vmatmul.mubr.bf16.gmra.mrb[0].mxu0 %v2499
    %v2581 = vpop.f32.mrb[0].mxu0
    %v2582 = vadd.f32 0.0, %v2581
    %v2583 = vpop.f32.mrb[0].mxu0
    %v2584 = vpop.f32.mrb[0].mxu0
    %v2585 = vadd.f32 0.0, %v2584
    %v2586 = vpop.f32.mrb[0].mxu0
    %2587 = vmatprep.mubr.bf16.mxu0 0
    %2588 = vmatmul.mubr.bf16.gmra.mrb[0].mxu0 %v2502
    %v2589 = vpop.f32.mrb[0].mxu0
    %v2590 = vadd.f32 0.0, %v2589
    %v2591 = vpop.f32.mrb[0].mxu0
    %v2592 = vpop.f32.mrb[0].mxu0
    %v2593 = vadd.f32 0.0, %v2592
    %v2594 = vpop.f32.mrb[0].mxu0
    %2595 = vmatprep.mubr.bf16.mxu0 0
    %2596 = vmatmul.mubr.bf16.gmra.mrb[0].mxu0 %v2505
    %v2597 = vpop.f32.mrb[0].mxu0
    %v2598 = vadd.f32 0.0, %v2597
    %v2599 = vpop.f32.mrb[0].mxu0
    %v2600 = vpop.f32.mrb[0].mxu0
    %v2601 = vadd.f32 0.0, %v2600
    %v2602 = vpop.f32.mrb[0].mxu0
    %2603 = vdwg.mxu0
    %v2604 = vmul.f32 %v2542, %v1834
    %v2605 = vmul.f32 %v2545, %v1834
    %v2606 = vmul.f32 %v2550, %v1834
    %v2607 = vmul.f32 %v2553, %v1834
    %v2608 = vmul.f32 %v2558, %v1834
    %v2609 = vmul.f32 %v2561, %v1834
    %v2610 = vmul.f32 %v2566, %v1834
    %v2611 = vmul.f32 %v2569, %v1834
    %v2612 = vmul.f32 %v2574, %v1838
    %v2613 = vmul.f32 %v2577, %v1838
    %v2614 = vmul.f32 %v2582, %v1838
    %v2615 = vmul.f32 %v2585, %v1838
    %v2616 = vmul.f32 %v2590, %v1838
    %v2617 = vmul.f32 %v2593, %v1838
    %v2618 = vmul.f32 %v2598, %v1838
    %v2619 = vmul.f32 %v2601, %v1838
    %v2620 = vsel %vm196, %v2604, 0.0
    %v2621 = vrot.slane %v2620, 4
    %v2622 = vadd.f32 %v2620, %v2621
    %v2623 = vrot.slane %v2622, 2
    %v2624 = vadd.f32 %v2622, %v2623
    %v2625 = vrot.slane %v2624, 1
    %v2626 = vadd.f32 %v2624, %v2625
    %v2627 = vsel %vm196, %v2605, 0.0
    %v2628 = vrot.slane %v2627, 4
    %v2629 = vadd.f32 %v2627, %v2628
    %v2630 = vrot.slane %v2629, 2
    %v2631 = vadd.f32 %v2629, %v2630
    %v2632 = vrot.slane %v2631, 1
    %v2633 = vadd.f32 %v2631, %v2632
    %v2634 = vsel %vm196, %v2606, 0.0
    %v2635 = vrot.slane %v2634, 4
    %v2636 = vadd.f32 %v2634, %v2635
    %v2637 = vrot.slane %v2636, 2
    %v2638 = vadd.f32 %v2636, %v2637
    %v2639 = vrot.slane %v2638, 1
    %v2640 = vadd.f32 %v2638, %v2639
    %v2641 = vsel %vm196, %v2607, 0.0
    %v2642 = vrot.slane %v2641, 4
    %v2643 = vadd.f32 %v2641, %v2642
    %v2644 = vrot.slane %v2643, 2
    %v2645 = vadd.f32 %v2643, %v2644
    %v2646 = vrot.slane %v2645, 1
    %v2647 = vadd.f32 %v2645, %v2646
    %v2648 = vsel %vm196, %v2608, 0.0
    %v2649 = vrot.slane %v2648, 4
    %v2650 = vadd.f32 %v2648, %v2649
    %v2651 = vrot.slane %v2650, 2
    %v2652 = vadd.f32 %v2650, %v2651
    %v2653 = vrot.slane %v2652, 1
    %v2654 = vadd.f32 %v2652, %v2653
    %v2655 = vsel %vm196, %v2609, 0.0
    %v2656 = vrot.slane %v2655, 4
    %v2657 = vadd.f32 %v2655, %v2656
    %v2658 = vrot.slane %v2657, 2
    %v2659 = vadd.f32 %v2657, %v2658
    %v2660 = vrot.slane %v2659, 1
    %v2661 = vadd.f32 %v2659, %v2660
    %v2662 = vsel %vm196, %v2610, 0.0
    %v2663 = vrot.slane %v2662, 4
    %v2664 = vadd.f32 %v2662, %v2663
    %v2665 = vrot.slane %v2664, 2
    %v2666 = vadd.f32 %v2664, %v2665
    %v2667 = vrot.slane %v2666, 1
    %v2668 = vadd.f32 %v2666, %v2667
    %v2669 = vsel %vm196, %v2611, 0.0
    %v2670 = vrot.slane %v2669, 4
    %v2671 = vadd.f32 %v2669, %v2670
    %v2672 = vrot.slane %v2671, 2
    %v2673 = vadd.f32 %v2671, %v2672
    %v2674 = vrot.slane %v2673, 1
    %v2675 = vadd.f32 %v2673, %v2674
    %v2676 = vsel %vm196, %v2612, 0.0
    %v2677 = vrot.slane %v2676, 4
    %v2678 = vadd.f32 %v2676, %v2677
    %v2679 = vrot.slane %v2678, 2
    %v2680 = vadd.f32 %v2678, %v2679
    %v2681 = vrot.slane %v2680, 1
    %v2682 = vadd.f32 %v2680, %v2681
    %v2683 = vsel %vm196, %v2613, 0.0
    %v2684 = vrot.slane %v2683, 4
    %v2685 = vadd.f32 %v2683, %v2684
    %v2686 = vrot.slane %v2685, 2
    %v2687 = vadd.f32 %v2685, %v2686
    %v2688 = vrot.slane %v2687, 1
    %v2689 = vadd.f32 %v2687, %v2688
    %v2690 = vsel %vm196, %v2614, 0.0
    %v2691 = vrot.slane %v2690, 4
    %v2692 = vadd.f32 %v2690, %v2691
    %v2693 = vrot.slane %v2692, 2
    %v2694 = vadd.f32 %v2692, %v2693
    %v2695 = vrot.slane %v2694, 1
    %v2696 = vadd.f32 %v2694, %v2695
    %v2697 = vsel %vm196, %v2615, 0.0
    %v2698 = vrot.slane %v2697, 4
    %v2699 = vadd.f32 %v2697, %v2698
    %v2700 = vrot.slane %v2699, 2
    %v2701 = vadd.f32 %v2699, %v2700
    %v2702 = vrot.slane %v2701, 1
    %v2703 = vadd.f32 %v2701, %v2702
    %v2704 = vsel %vm196, %v2616, 0.0
    %v2705 = vrot.slane %v2704, 4
    %v2706 = vadd.f32 %v2704, %v2705
    %v2707 = vrot.slane %v2706, 2
    %v2708 = vadd.f32 %v2706, %v2707
    %v2709 = vrot.slane %v2708, 1
    %v2710 = vadd.f32 %v2708, %v2709
    %v2711 = vsel %vm196, %v2617, 0.0
    %v2712 = vrot.slane %v2711, 4
    %v2713 = vadd.f32 %v2711, %v2712
    %v2714 = vrot.slane %v2713, 2
    %v2715 = vadd.f32 %v2713, %v2714
    %v2716 = vrot.slane %v2715, 1
    %v2717 = vadd.f32 %v2715, %v2716
    %v2718 = vsel %vm196, %v2618, 0.0
    %v2719 = vrot.slane %v2718, 4
    %v2720 = vadd.f32 %v2718, %v2719
    %v2721 = vrot.slane %v2720, 2
    %v2722 = vadd.f32 %v2720, %v2721
    %v2723 = vrot.slane %v2722, 1
    %v2724 = vadd.f32 %v2722, %v2723
    %v2725 = vsel %vm196, %v2619, 0.0
    %v2726 = vrot.slane %v2725, 4
    %v2727 = vadd.f32 %v2725, %v2726
    %v2728 = vrot.slane %v2727, 2
    %v2729 = vadd.f32 %v2727, %v2728
    %v2730 = vrot.slane %v2729, 1
    %v2731 = vadd.f32 %v2729, %v2730
    %v2732 = vld [vmem:[#allocation5 + $0x220] sm:$0xf]
    %v2733 = vld [vmem:[#allocation5 + $0x228] sm:$0xf]
    %v2734 = vld [vmem:[#allocation5 + $0x230] sm:$0xf]
    %v2735 = vld [vmem:[#allocation5 + $0x238] sm:$0xf]
    %v2736 = vld [vmem:[#allocation5 + $0x240] sm:$0xf]
    %v2737 = vld [vmem:[#allocation5 + $0x248] sm:$0xf]
    %v2738 = vld [vmem:[#allocation5 + $0x250] sm:$0xf]
    %v2739 = vld [vmem:[#allocation5 + $0x258] sm:$0xf]
    %v2740 = vpack.c.bf16 %v2626, %v2626
    %v2741 = vpack.c.bf16 %v2633, %v2633
    %v2742 = vpack.c.bf16 %v2640, %v2640
    %v2743 = vpack.c.bf16 %v2647, %v2647
    %v2744 = vpack.c.bf16 %v2654, %v2654
    %v2745 = vpack.c.bf16 %v2661, %v2661
    %v2746 = vpack.c.bf16 %v2668, %v2668
    %v2747 = vpack.c.bf16 %v2675, %v2675
    %v2748 = vpack.c.bf16 %v2682, %v2682
    %v2749 = vpack.c.bf16 %v2689, %v2689
    %v2750 = vpack.c.bf16 %v2696, %v2696
    %v2751 = vpack.c.bf16 %v2703, %v2703
    %v2752 = vpack.c.bf16 %v2710, %v2710
    %v2753 = vpack.c.bf16 %v2717, %v2717
    %v2754 = vpack.c.bf16 %v2724, %v2724
    %v2755 = vpack.c.bf16 %v2731, %v2731
    %v2772 = vunpack.c.l.b16 %v2740
    %v2773 = vunpack.c.l.b16 %v2741
    %v2774 = vunpack.c.l.b16 %v2742
    %v2775 = vunpack.c.l.b16 %v2743
    %v2776 = vunpack.c.l.b16 %v2744
    %v2777 = vunpack.c.l.b16 %v2745
    %v2778 = vunpack.c.l.b16 %v2746
    %v2779 = vunpack.c.l.b16 %v2747
    %v2780 = vunpack.c.l.b16 %v2748
    %v2781 = vunpack.c.l.b16 %v2749
    %v2782 = vunpack.c.l.b16 %v2750
    %v2783 = vunpack.c.l.b16 %v2751
    %v2784 = vunpack.c.l.b16 %v2752
    %v2785 = vunpack.c.l.b16 %v2753
    %v2786 = vunpack.c.l.b16 %v2754
    %v2787 = vunpack.c.l.b16 %v2755
    %v2788 = vsel %vm1222, %v2773, %v2772
    %v2789 = vsel %vm1224, %v2774, %v2788
    %v2790 = vsel %vm1226, %v2775, %v2789
    %v2791 = vsel %vm1228, %v2776, %v2790
    %v2792 = vsel %vm1230, %v2777, %v2791
    %v2793 = vsel %vm1232, %v2778, %v2792
    %v2794 = vsel %vm1234, %v2779, %v2793
    %v2795 = vsel %vm1222, %v2781, %v2780
    %v2796 = vsel %vm1224, %v2782, %v2795
    %v2797 = vsel %vm1226, %v2783, %v2796
    %v2798 = vsel %vm1228, %v2784, %v2797
    %v2799 = vsel %vm1230, %v2785, %v2798
    %v2800 = vsel %vm1232, %v2786, %v2799
    %v2801 = vsel %vm1234, %v2787, %v2800
    %v2802 = vpack.c.b16 %v2801, %v2794
    %v2811 = vunpack.c.l.b16 %v2732
    %v2812 = vunpack.c.l.b16 %v2733
    %v2813 = vunpack.c.l.b16 %v2734
    %v2814 = vunpack.c.l.b16 %v2735
    %v2815 = vunpack.c.l.b16 %v2736
    %v2816 = vunpack.c.l.b16 %v2737
    %v2817 = vunpack.c.l.b16 %v2738
    %v2818 = vunpack.c.l.b16 %v2739
    %v2819 = vpack.c.b16 %v2812, %v2811
    %v2820 = vpack.c.b16 %v2814, %v2813
    %v2821 = vpack.c.b16 %v2816, %v2815
    %v2822 = vpack.c.b16 %v2818, %v2817
    %v2828 = vsel %vm196, %v2802, 0
    %2830 = vmatprep.subr.bf16.mxu0 0
    %2831 = vmatpush1.bf16.msra.mxu0 %v2819
    %2832 = vmatprep.subr.bf16.mxu0 0
    %2833 = vmatpush1.bf16.msra.mxu0 %v2820
    %2834 = vmatprep.subr.bf16.mxu0 0
    %2835 = vmatpush1.bf16.msra.mxu0 %v2821
    %2836 = vmatprep.subr.bf16.mxu0 0
    %2837 = vmatpush1.bf16.msra.mxu0 %v2822
    %2838 = vmatprep.subr.bf16.mxu0 0
    %2839 = vmatpush1.bf16.msra.mxu0 0
    %2840 = vmatprep.subr.bf16.mxu0 0
    %2841 = vmatpush1.bf16.msra.mxu0 0
    %2842 = vmatprep.subr.bf16.mxu0 0
    %2843 = vmatpush1.bf16.msra.mxu0 0
    %2844 = vmatprep.subr.bf16.mxu0 0
    %2845 = vmatpush1.bf16.msra.mxu0 0
    %2846 = vmatprep.subr.bf16.mxu0 0
    %2847 = vmatpush1.bf16.msra.mxu0 0
    %2848 = vmatprep.subr.bf16.mxu0 0
    %2849 = vmatpush1.bf16.msra.mxu0 0
    %2850 = vmatprep.subr.bf16.mxu0 0
    %2851 = vmatpush1.bf16.msra.mxu0 0
    %2852 = vmatprep.subr.bf16.mxu0 0
    %2853 = vmatpush1.bf16.msra.mxu0 0
    %2854 = vmatprep.subr.bf16.mxu0 0
    %2855 = vmatpush1.bf16.msra.mxu0 0
    %2856 = vmatprep.subr.bf16.mxu0 0
    %2857 = vmatpush1.bf16.msra.mxu0 0
    %2858 = vmatprep.subr.bf16.mxu0 0
    %2859 = vmatpush1.bf16.msra.mxu0 0
    %2860 = vmatprep.subr.bf16.mxu0 0
    %2861 = vmatpush1.bf16.msra.mxu0 0
    %2862 = vmatprep.mubr.bf16.mxu0 0
    %2863 = vmatmul.mubr.bf16.gmra.mrb[0].mxu0 %v2828
    %v2864 = vpop.f32.mrb[0].mxu0
    %v2865 = vadd.f32 0.0, %v2864
    %v2866 = vpop.f32.mrb[0].mxu0
    %v2867 = vpop.f32.mrb[0].mxu0
    %v2868 = vadd.f32 0.0, %v2867
    %v2869 = vpop.f32.mrb[0].mxu0
    %2870 = vdwg.mxu0
    %v2871 = vadd.f32 %v1730, %v2865
    %v2872 = vadd.f32 %v1731, %v2868
    %v2873 = vld [vmem:[#allocation7 + $0x80] ss:$0 sm:$0xff]
    %v2874 = vadd.f32 %v2871, %v2873
    %v2875 = vadd.f32 %v2872, %v2873
    %v2876 = vld [vmem:[#allocation7 + $0xb0] sm:$0x3]
    %v2877 = vsel %vm196, %v2874, 0.0
    %2878 = vadd.xlane.f32.xlu0 %v2877
    %v2879 = vpop.xlane.xlu0 %2878
    %v2880 = vsel %vm196, %v2875, 0.0
    %2881 = vadd.xlane.f32.xlu0 %v2880
    %v2882 = vpop.xlane.xlu0 %2881
    %v2883 = vsel %vm1320, %v2874, 0.0
    %v2884 = vsel %vm1320, %v2875, 0.0
    %v2885 = vsel %vm196, %v2883, 0.0
    %2886 = vadd.xlane.f32.xlu0 %v2885
    %v2887 = vpop.xlane.xlu0 %2886
    %v2888 = vsel %vm196, %v2884, 0.0
    %2889 = vadd.xlane.f32.xlu0 %v2888
    %v2890 = vpop.xlane.xlu0 %2889
    %v2891 = vsub.f32 %v2879, %v2887
    %v2892 = vsub.f32 %v2882, %v2890
    %v2893 = vsel %vm1320, %v2887, %v2891
    %v2894 = vsel %vm1320, %v2890, %v2892
    %v2895 = vmul.f32 %v2893, 0.03125
    %v2896 = vmul.f32 %v2894, 0.03125
    %v2897 = vsub.f32 %v2874, %v2895
    %v2898 = vsub.f32 %v2875, %v2896
    %v2899 = vmul.f32 %v2897, %v2897
    %v2900 = vmul.f32 %v2898, %v2898
    %v2901 = vsel %vm196, %v2899, 0.0
    %2902 = vadd.xlane.f32.xlu0 %v2901
    %v2903 = vpop.xlane.xlu0 %2902
    %v2904 = vsel %vm196, %v2900, 0.0
    %2905 = vadd.xlane.f32.xlu0 %v2904
    %v2906 = vpop.xlane.xlu0 %2905
    %v2907 = vsel %vm1320, %v2899, 0.0
    %v2908 = vsel %vm1320, %v2900, 0.0
    %v2909 = vsel %vm196, %v2907, 0.0
    %2910 = vadd.xlane.f32.xlu0 %v2909
    %v2911 = vpop.xlane.xlu0 %2910
    %v2912 = vsel %vm196, %v2908, 0.0
    %2913 = vadd.xlane.f32.xlu0 %v2912
    %v2914 = vpop.xlane.xlu0 %2913
    %v2915 = vsub.f32 %v2903, %v2911
    %v2916 = vsub.f32 %v2906, %v2914
    %v2917 = vsel %vm1320, %v2911, %v2915
    %v2918 = vsel %vm1320, %v2914, %v2916
    %v2919 = vmul.f32 %v2917, 0.03125
    %v2920 = vmul.f32 %v2918, 0.03125
    %v2921 = vadd.f32 %v2919, 1e-05
    %v2922 = vadd.f32 %v2920, 1e-05
    %v2923 = vrsqrt.pop %v2921
    %v2924 = vrsqrt.pop %v2922
    %v2925 = vmul.f32 %v2897, %v2923
    %v2926 = vmul.f32 %v2898, %v2924
    %v2927 = vlaneseq
    %v2928 = vshrl.u32 %v2927, 7
    %v2929 = vsub.s32 0, %v2928
    %v2930 = vrot.slane %v2876, %v2929
    %v2931 = vmul.f32 %v2925, %v2930
    %v2932 = vmul.f32 %v2926, %v2930
    %v2933 = vlaneseq
    %v2934 = vshrl.u32 %v2933, 7
    %v2935 = vsub.s32 1, %v2934
    %v2936 = vrot.slane %v2876, %v2935
    %v2937 = vadd.f32 %v2931, %v2936
    %v2938 = vadd.f32 %v2932, %v2936
    %v2939 = vld [vmem:[#allocation5 + $0x260] sm:$0xff]
    %v2940 = vld [vmem:[#allocation5 + $0x268] sm:$0xff]
    %v2941 = vld [vmem:[#allocation5 + $0x270] sm:$0xff]
    %v2942 = vld [vmem:[#allocation5 + $0x278] sm:$0xff]
    %v2943 = vld [vmem:[#allocation5 + $0x280] sm:$0xff]
    %v2944 = vld [vmem:[#allocation5 + $0x288] sm:$0xff]
    %v2945 = vld [vmem:[#allocation5 + $0x290] sm:$0xff]
    %v2946 = vld [vmem:[#allocation5 + $0x298] sm:$0xff]
    %v2947 = vpack.c.bf16 %v2938, %v2937
    %s2948 = scalar_lea.vmem [#allocation7], 144
    %v2949 = vld [vmem:[%s2948] ss:$8 sm:$0x3]
    %v2951 = vlaneseq
    %v2952 = vshrl.u32 %v2951, 7
    %v2953 = vsub.s32 0, %v2952
    %v2954 = vrot.slane %v2949, %v2953
    %v2955 = vlaneseq
    %v2956 = vshrl.u32 %v2955, 7
    %v2957 = vsub.s32 1, %v2956
    %v2958 = vrot.slane %v2949, %v2957
    %v2969 = vunpack.c.l.b16 %v2939
    %v2970 = vunpack.c.h.b16 %v2939
    %v2971 = vunpack.c.l.b16 %v2940
    %v2972 = vunpack.c.h.b16 %v2940
    %v2973 = vunpack.c.l.b16 %v2941
    %v2974 = vunpack.c.h.b16 %v2941
    %v2975 = vunpack.c.l.b16 %v2942
    %v2976 = vunpack.c.h.b16 %v2942
    %v2977 = vunpack.c.l.b16 %v2943
    %v2978 = vunpack.c.h.b16 %v2943
    %v2979 = vunpack.c.l.b16 %v2944
    %v2980 = vunpack.c.h.b16 %v2944
    %v2981 = vunpack.c.l.b16 %v2945
    %v2982 = vunpack.c.h.b16 %v2945
    %v2983 = vunpack.c.l.b16 %v2946
    %v2984 = vunpack.c.h.b16 %v2946
    %v2985 = vpack.c.b16 %v2971, %v2969
    %v2986 = vpack.c.b16 %v2972, %v2970
    %v2987 = vpack.c.b16 %v2975, %v2973
    %v2988 = vpack.c.b16 %v2976, %v2974
    %v2989 = vpack.c.b16 %v2979, %v2977
    %v2990 = vpack.c.b16 %v2980, %v2978
    %v2991 = vpack.c.b16 %v2983, %v2981
    %v2992 = vpack.c.b16 %v2984, %v2982
    %v3002 = vsel %vm196, %v2947, 0
    %3004 = vmatprep.subr.bf16.mxu0 %v2986
    %3005 = vmatpush1.bf16.msra.mxu0 %v2985
    %3006 = vmatprep.subr.bf16.mxu0 %v2988
    %3007 = vmatpush1.bf16.msra.mxu0 %v2987
    %3008 = vmatprep.subr.bf16.mxu0 %v2990
    %3009 = vmatpush1.bf16.msra.mxu0 %v2989
    %3010 = vmatprep.subr.bf16.mxu0 %v2992
    %3011 = vmatpush1.bf16.msra.mxu0 %v2991
    %3012 = vmatprep.subr.bf16.mxu0 0
    %3013 = vmatpush1.bf16.msra.mxu0 0
    %3014 = vmatprep.subr.bf16.mxu0 0
    %3015 = vmatpush1.bf16.msra.mxu0 0
    %3016 = vmatprep.subr.bf16.mxu0 0
    %3017 = vmatpush1.bf16.msra.mxu0 0
    %3018 = vmatprep.subr.bf16.mxu0 0
    %3019 = vmatpush1.bf16.msra.mxu0 0
    %3020 = vmatprep.subr.bf16.mxu0 0
    %3021 = vmatpush1.bf16.msra.mxu0 0
    %3022 = vmatprep.subr.bf16.mxu0 0
    %3023 = vmatpush1.bf16.msra.mxu0 0
    %3024 = vmatprep.subr.bf16.mxu0 0
    %3025 = vmatpush1.bf16.msra.mxu0 0
    %3026 = vmatprep.subr.bf16.mxu0 0
    %3027 = vmatpush1.bf16.msra.mxu0 0
    %3028 = vmatprep.subr.bf16.mxu0 0
    %3029 = vmatpush1.bf16.msra.mxu0 0
    %3030 = vmatprep.subr.bf16.mxu0 0
    %3031 = vmatpush1.bf16.msra.mxu0 0
    %3032 = vmatprep.subr.bf16.mxu0 0
    %3033 = vmatpush1.bf16.msra.mxu0 0
    %3034 = vmatprep.subr.bf16.mxu0 0
    %3035 = vmatpush1.bf16.msra.mxu0 0
    %3036 = vmatprep.mubr.bf16.mxu0 0
    %3037 = vmatmul.mubr.bf16.gmra.mrb[0].mxu0 %v3002
    %v3038 = vpop.f32.mrb[0].mxu0
    %v3039 = vadd.f32 %v2954, %v3038
    %v3040 = vpop.f32.mrb[0].mxu0
    %v3041 = vadd.f32 %v2958, %v3040
    %v3042 = vpop.f32.mrb[0].mxu0
    %v3043 = vadd.f32 %v2954, %v3042
    %v3044 = vpop.f32.mrb[0].mxu0
    %v3045 = vadd.f32 %v2958, %v3044
    %3046 = vdwg.mxu0
    %v3047 = vmax.f32 %v3039, 0.0
    %v3048 = vmax.f32 %v3041, 0.0
    %v3049 = vmax.f32 %v3043, 0.0
    %v3050 = vmax.f32 %v3045, 0.0
    %v3051 = vld [vmem:[#allocation5 + $0x2a0] sm:$0xf]
    %v3052 = vld [vmem:[#allocation5 + $0x2a8] sm:$0xf]
    %v3053 = vld [vmem:[#allocation5 + $0x2b0] sm:$0xf]
    %v3054 = vld [vmem:[#allocation5 + $0x2b8] sm:$0xf]
    %v3055 = vld [vmem:[#allocation5 + $0x2c0] sm:$0xf]
    %v3056 = vld [vmem:[#allocation5 + $0x2c8] sm:$0xf]
    %v3057 = vld [vmem:[#allocation5 + $0x2d0] sm:$0xf]
    %v3058 = vld [vmem:[#allocation5 + $0x2d8] sm:$0xf]
    %v3059 = vld [vmem:[#allocation5 + $0x2e0] sm:$0xf]
    %v3060 = vld [vmem:[#allocation5 + $0x2e8] sm:$0xf]
    %v3061 = vld [vmem:[#allocation5 + $0x2f0] sm:$0xf]
    %v3062 = vld [vmem:[#allocation5 + $0x2f8] sm:$0xf]
    %v3063 = vld [vmem:[#allocation5 + $0x300] sm:$0xf]
    %v3064 = vld [vmem:[#allocation5 + $0x308] sm:$0xf]
    %v3065 = vld [vmem:[#allocation5 + $0x310] sm:$0xf]
    %v3066 = vld [vmem:[#allocation5 + $0x318] sm:$0xf]
    %v3067 = vld [vmem:[#allocation5 + $0x320] sm:$0xf]
    %v3068 = vld [vmem:[#allocation5 + $0x328] sm:$0xf]
    %v3069 = vld [vmem:[#allocation5 + $0x330] sm:$0xf]
    %v3070 = vld [vmem:[#allocation5 + $0x338] sm:$0xf]
    %v3071 = vld [vmem:[#allocation5 + $0x340] sm:$0xf]
    %v3072 = vld [vmem:[#allocation5 + $0x348] sm:$0xf]
    %v3073 = vld [vmem:[#allocation5 + $0x350] sm:$0xf]
    %v3074 = vld [vmem:[#allocation5 + $0x358] sm:$0xf]
    %v3075 = vld [vmem:[#allocation5 + $0x360] sm:$0xf]
    %v3076 = vld [vmem:[#allocation5 + $0x368] sm:$0xf]
    %v3077 = vld [vmem:[#allocation5 + $0x370] sm:$0xf]
    %v3078 = vld [vmem:[#allocation5 + $0x378] sm:$0xf]
    %v3079 = vld [vmem:[#allocation5 + $0x380] sm:$0xf]
    %v3080 = vld [vmem:[#allocation5 + $0x388] sm:$0xf]
    %v3081 = vld [vmem:[#allocation5 + $0x390] sm:$0xf]
    %v3082 = vld [vmem:[#allocation5 + $0x398] sm:$0xf]
    %v3083 = vpack.c.bf16 %v3049, %v3047
    %v3084 = vpack.c.bf16 %v3050, %v3048
    %v3085 = vld [vmem:[#allocation7 + $0xa0] ss:$0 sm:$0xff]
    %v3118 = vunpack.c.l.b16 %v3051
    %v3119 = vunpack.c.l.b16 %v3052
    %v3120 = vunpack.c.l.b16 %v3053
    %v3121 = vunpack.c.l.b16 %v3054
    %v3122 = vunpack.c.l.b16 %v3055
    %v3123 = vunpack.c.l.b16 %v3056
    %v3124 = vunpack.c.l.b16 %v3057
    %v3125 = vunpack.c.l.b16 %v3058
    %v3126 = vunpack.c.l.b16 %v3059
    %v3127 = vunpack.c.l.b16 %v3060
    %v3128 = vunpack.c.l.b16 %v3061
    %v3129 = vunpack.c.l.b16 %v3062
    %v3130 = vunpack.c.l.b16 %v3063
    %v3131 = vunpack.c.l.b16 %v3064
    %v3132 = vunpack.c.l.b16 %v3065
    %v3133 = vunpack.c.l.b16 %v3066
    %v3134 = vunpack.c.l.b16 %v3067
    %v3135 = vunpack.c.l.b16 %v3068
    %v3136 = vunpack.c.l.b16 %v3069
    %v3137 = vunpack.c.l.b16 %v3070
    %v3138 = vunpack.c.l.b16 %v3071
    %v3139 = vunpack.c.l.b16 %v3072
    %v3140 = vunpack.c.l.b16 %v3073
    %v3141 = vunpack.c.l.b16 %v3074
    %v3142 = vunpack.c.l.b16 %v3075
    %v3143 = vunpack.c.l.b16 %v3076
    %v3144 = vunpack.c.l.b16 %v3077
    %v3145 = vunpack.c.l.b16 %v3078
    %v3146 = vunpack.c.l.b16 %v3079
    %v3147 = vunpack.c.l.b16 %v3080
    %v3148 = vunpack.c.l.b16 %v3081
    %v3149 = vunpack.c.l.b16 %v3082
    %v3150 = vpack.c.b16 %v3119, %v3118
    %v3151 = vpack.c.b16 %v3121, %v3120
    %v3152 = vpack.c.b16 %v3123, %v3122
    %v3153 = vpack.c.b16 %v3125, %v3124
    %v3154 = vpack.c.b16 %v3127, %v3126
    %v3155 = vpack.c.b16 %v3129, %v3128
    %v3156 = vpack.c.b16 %v3131, %v3130
    %v3157 = vpack.c.b16 %v3133, %v3132
    %v3158 = vpack.c.b16 %v3135, %v3134
    %v3159 = vpack.c.b16 %v3137, %v3136
    %v3160 = vpack.c.b16 %v3139, %v3138
    %v3161 = vpack.c.b16 %v3141, %v3140
    %v3162 = vpack.c.b16 %v3143, %v3142
    %v3163 = vpack.c.b16 %v3145, %v3144
    %v3164 = vpack.c.b16 %v3147, %v3146
    %v3165 = vpack.c.b16 %v3149, %v3148
    %3182 = vmatprep.subr.bf16.mxu0 0
    %3183 = vmatpush1.bf16.msra.mxu0 %v3150
    %3184 = vmatprep.subr.bf16.mxu0 0
    %3185 = vmatpush1.bf16.msra.mxu0 %v3151
    %3186 = vmatprep.subr.bf16.mxu0 0
    %3187 = vmatpush1.bf16.msra.mxu0 %v3152
    %3188 = vmatprep.subr.bf16.mxu0 0
    %3189 = vmatpush1.bf16.msra.mxu0 %v3153
    %3190 = vmatprep.subr.bf16.mxu0 0
    %3191 = vmatpush1.bf16.msra.mxu0 %v3154
    %3192 = vmatprep.subr.bf16.mxu0 0
    %3193 = vmatpush1.bf16.msra.mxu0 %v3155
    %3194 = vmatprep.subr.bf16.mxu0 0
    %3195 = vmatpush1.bf16.msra.mxu0 %v3156
    %3196 = vmatprep.subr.bf16.mxu0 0
    %3197 = vmatpush1.bf16.msra.mxu0 %v3157
    %3198 = vmatprep.subr.bf16.mxu0 0
    %3199 = vmatpush1.bf16.msra.mxu0 %v3158
    %3200 = vmatprep.subr.bf16.mxu0 0
    %3201 = vmatpush1.bf16.msra.mxu0 %v3159
    %3202 = vmatprep.subr.bf16.mxu0 0
    %3203 = vmatpush1.bf16.msra.mxu0 %v3160
    %3204 = vmatprep.subr.bf16.mxu0 0
    %3205 = vmatpush1.bf16.msra.mxu0 %v3161
    %3206 = vmatprep.subr.bf16.mxu0 0
    %3207 = vmatpush1.bf16.msra.mxu0 %v3162
    %3208 = vmatprep.subr.bf16.mxu0 0
    %3209 = vmatpush1.bf16.msra.mxu0 %v3163
    %3210 = vmatprep.subr.bf16.mxu0 0
    %3211 = vmatpush1.bf16.msra.mxu0 %v3164
    %3212 = vmatprep.subr.bf16.mxu0 0
    %3213 = vmatpush1.bf16.msra.mxu0 %v3165
    %3214 = vmatprep.mubr.bf16.mxu0 %v3084
    %3215 = vmatmul.mubr.bf16.gmra.mrb[0].mxu0 %v3083
    %v3216 = vpop.f32.mrb[0].mxu0
    %v3217 = vadd.f32 %v3085, %v3216
    %v3218 = vpop.f32.mrb[0].mxu0
    %v3219 = vpop.f32.mrb[0].mxu0
    %v3220 = vadd.f32 %v3085, %v3219
    %v3221 = vpop.f32.mrb[0].mxu0
    %3222 = vdwg.mxu0
    %v3223 = vadd.f32 %v2937, %v3217
    %v3224 = vadd.f32 %v2938, %v3220
    %v3225 = vld [vmem:[#allocation7 + $0xc0] sm:$0x3]
    %v3226 = vsel %vm196, %v3223, 0.0
    %3227 = vadd.xlane.f32.xlu0 %v3226
    %v3228 = vpop.xlane.xlu0 %3227
    %v3229 = vsel %vm196, %v3224, 0.0
    %3230 = vadd.xlane.f32.xlu0 %v3229
    %v3231 = vpop.xlane.xlu0 %3230
    %v3232 = vsel %vm1320, %v3223, 0.0
    %v3233 = vsel %vm1320, %v3224, 0.0
    %v3234 = vsel %vm196, %v3232, 0.0
    %3235 = vadd.xlane.f32.xlu0 %v3234
    %v3236 = vpop.xlane.xlu0 %3235
    %v3237 = vsel %vm196, %v3233, 0.0
    %3238 = vadd.xlane.f32.xlu0 %v3237
    %v3239 = vpop.xlane.xlu0 %3238
    %v3240 = vsub.f32 %v3228, %v3236
    %v3241 = vsub.f32 %v3231, %v3239
    %v3242 = vsel %vm1320, %v3236, %v3240
    %v3243 = vsel %vm1320, %v3239, %v3241
    %v3244 = vmul.f32 %v3242, 0.03125
    %v3245 = vmul.f32 %v3243, 0.03125
    %v3246 = vsub.f32 %v3223, %v3244
    %v3247 = vsub.f32 %v3224, %v3245
    %v3248 = vmul.f32 %v3246, %v3246
    %v3249 = vmul.f32 %v3247, %v3247
    %v3250 = vsel %vm196, %v3248, 0.0
    %3251 = vadd.xlane.f32.xlu0 %v3250
    %v3252 = vpop.xlane.xlu0 %3251
    %v3253 = vsel %vm196, %v3249, 0.0
    %3254 = vadd.xlane.f32.xlu0 %v3253
    %v3255 = vpop.xlane.xlu0 %3254
    %v3256 = vsel %vm1320, %v3248, 0.0
    %v3257 = vsel %vm1320, %v3249, 0.0
    %v3258 = vsel %vm196, %v3256, 0.0
    %3259 = vadd.xlane.f32.xlu0 %v3258
    %v3260 = vpop.xlane.xlu0 %3259
    %v3261 = vsel %vm196, %v3257, 0.0
    %3262 = vadd.xlane.f32.xlu0 %v3261
    %v3263 = vpop.xlane.xlu0 %3262
    %v3264 = vsub.f32 %v3252, %v3260
    %v3265 = vsub.f32 %v3255, %v3263
    %v3266 = vsel %vm1320, %v3260, %v3264
    %v3267 = vsel %vm1320, %v3263, %v3265
    %v3268 = vmul.f32 %v3266, 0.03125
    %v3269 = vmul.f32 %v3267, 0.03125
    %v3270 = vadd.f32 %v3268, 1e-05
    %v3271 = vadd.f32 %v3269, 1e-05
    %v3272 = vrsqrt.pop %v3270
    %v3273 = vrsqrt.pop %v3271
    %v3274 = vmul.f32 %v3246, %v3272
    %v3275 = vmul.f32 %v3247, %v3273
    %v3276 = vlaneseq
    %v3277 = vshrl.u32 %v3276, 7
    %v3278 = vsub.s32 0, %v3277
    %v3279 = vrot.slane %v3225, %v3278
    %v3280 = vmul.f32 %v3274, %v3279
    %v3281 = vmul.f32 %v3275, %v3279
    %v3282 = vlaneseq
    %v3283 = vshrl.u32 %v3282, 7
    %v3284 = vsub.s32 1, %v3283
    %v3285 = vrot.slane %v3225, %v3284
    %v3286 = vadd.f32 %v3280, %v3285
    %v3287 = vadd.f32 %v3281, %v3285
    %v3288 = vld [vmem:[#allocation7 + $0xd0] sm:$0x3]
    %v3289 = vsel %vm196, %v3286, 0.0
    %3290 = vadd.xlane.f32.xlu0 %v3289
    %v3291 = vpop.xlane.xlu0 %3290
    %v3292 = vsel %vm196, %v3287, 0.0
    %3293 = vadd.xlane.f32.xlu0 %v3292
    %v3294 = vpop.xlane.xlu0 %3293
    %v3295 = vsel %vm1320, %v3286, 0.0
    %v3296 = vsel %vm1320, %v3287, 0.0
    %v3297 = vsel %vm196, %v3295, 0.0
    %3298 = vadd.xlane.f32.xlu0 %v3297
    %v3299 = vpop.xlane.xlu0 %3298
    %v3300 = vsel %vm196, %v3296, 0.0
    %3301 = vadd.xlane.f32.xlu0 %v3300
    %v3302 = vpop.xlane.xlu0 %3301
    %v3303 = vsub.f32 %v3291, %v3299
    %v3304 = vsub.f32 %v3294, %v3302
    %v3305 = vsel %vm1320, %v3299, %v3303
    %v3306 = vsel %vm1320, %v3302, %v3304
    %v3307 = vmul.f32 %v3305, 0.03125
    %v3308 = vmul.f32 %v3306, 0.03125
    %v3309 = vsub.f32 %v3286, %v3307
    %v3310 = vsub.f32 %v3287, %v3308
    %v3311 = vmul.f32 %v3309, %v3309
    %v3312 = vmul.f32 %v3310, %v3310
    %v3313 = vsel %vm196, %v3311, 0.0
    %3314 = vadd.xlane.f32.xlu0 %v3313
    %v3315 = vpop.xlane.xlu0 %3314
    %v3316 = vsel %vm196, %v3312, 0.0
    %3317 = vadd.xlane.f32.xlu0 %v3316
    %v3318 = vpop.xlane.xlu0 %3317
    %v3319 = vsel %vm1320, %v3311, 0.0
    %v3320 = vsel %vm1320, %v3312, 0.0
    %v3321 = vsel %vm196, %v3319, 0.0
    %3322 = vadd.xlane.f32.xlu0 %v3321
    %v3323 = vpop.xlane.xlu0 %3322
    %v3324 = vsel %vm196, %v3320, 0.0
    %3325 = vadd.xlane.f32.xlu0 %v3324
    %v3326 = vpop.xlane.xlu0 %3325
    %v3327 = vsub.f32 %v3315, %v3323
    %v3328 = vsub.f32 %v3318, %v3326
    %v3329 = vsel %vm1320, %v3323, %v3327
    %v3330 = vsel %vm1320, %v3326, %v3328
    %v3331 = vmul.f32 %v3329, 0.03125
    %v3332 = vmul.f32 %v3330, 0.03125
    %v3333 = vadd.f32 %v3331, 1e-05
    %v3334 = vadd.f32 %v3332, 1e-05
    %v3335 = vrsqrt.pop %v3333
    %v3336 = vrsqrt.pop %v3334
    %v3337 = vmul.f32 %v3309, %v3335
    %v3338 = vmul.f32 %v3310, %v3336
    %v3339 = vlaneseq
    %v3340 = vshrl.u32 %v3339, 7
    %v3341 = vsub.s32 0, %v3340
    %v3342 = vrot.slane %v3288, %v3341
    %v3343 = vmul.f32 %v3337, %v3342
    %v3344 = vmul.f32 %v3338, %v3342
    %v3345 = vlaneseq
    %v3346 = vshrl.u32 %v3345, 7
    %v3347 = vsub.s32 1, %v3346
    %v3348 = vrot.slane %v3288, %v3347
    %v3349 = vadd.f32 %v3343, %v3348
    %v3350 = vadd.f32 %v3344, %v3348
    %v3351 = vld [vmem:[#allocation7 + $0xf0] sm:$0x3]
    %v3352 = vsel %vm196, %v3349, 0.0
    %3353 = vadd.xlane.f32.xlu0 %v3352
    %v3354 = vpop.xlane.xlu0 %3353
    %v3355 = vsel %vm196, %v3350, 0.0
    %3356 = vadd.xlane.f32.xlu0 %v3355
    %v3357 = vpop.xlane.xlu0 %3356
    %v3358 = vsel %vm1320, %v3349, 0.0
    %v3359 = vsel %vm1320, %v3350, 0.0
    %v3360 = vsel %vm196, %v3358, 0.0
    %3361 = vadd.xlane.f32.xlu0 %v3360
    %v3362 = vpop.xlane.xlu0 %3361
    %v3363 = vsel %vm196, %v3359, 0.0
    %3364 = vadd.xlane.f32.xlu0 %v3363
    %v3365 = vpop.xlane.xlu0 %3364
    %v3366 = vsub.f32 %v3354, %v3362
    %v3367 = vsub.f32 %v3357, %v3365
    %v3368 = vsel %vm1320, %v3362, %v3366
    %v3369 = vsel %vm1320, %v3365, %v3367
    %v3370 = vmul.f32 %v3368, 0.03125
    %v3371 = vmul.f32 %v3369, 0.03125
    %v3372 = vsub.f32 %v3349, %v3370
    %v3373 = vsub.f32 %v3350, %v3371
    %v3374 = vmul.f32 %v3372, %v3372
    %v3375 = vmul.f32 %v3373, %v3373
    %v3376 = vsel %vm196, %v3374, 0.0
    %3377 = vadd.xlane.f32.xlu0 %v3376
    %v3378 = vpop.xlane.xlu0 %3377
    %v3379 = vsel %vm196, %v3375, 0.0
    %3380 = vadd.xlane.f32.xlu0 %v3379
    %v3381 = vpop.xlane.xlu0 %3380
    %v3382 = vsel %vm1320, %v3374, 0.0
    %v3383 = vsel %vm1320, %v3375, 0.0
    %v3384 = vsel %vm196, %v3382, 0.0
    %3385 = vadd.xlane.f32.xlu0 %v3384
    %v3386 = vpop.xlane.xlu0 %3385
    %v3387 = vsel %vm196, %v3383, 0.0
    %3388 = vadd.xlane.f32.xlu0 %v3387
    %v3389 = vpop.xlane.xlu0 %3388
    %v3390 = vsub.f32 %v3378, %v3386
    %v3391 = vsub.f32 %v3381, %v3389
    %v3392 = vsel %vm1320, %v3386, %v3390
    %v3393 = vsel %vm1320, %v3389, %v3391
    %v3394 = vmul.f32 %v3392, 0.03125
    %v3395 = vmul.f32 %v3393, 0.03125
    %v3396 = vadd.f32 %v3394, 1e-05
    %v3397 = vadd.f32 %v3395, 1e-05
    %v3398 = vrsqrt.pop %v3396
    %v3399 = vrsqrt.pop %v3397
    %v3400 = vmul.f32 %v3372, %v3398
    %v3401 = vmul.f32 %v3373, %v3399
    %v3402 = vlaneseq
    %v3403 = vshrl.u32 %v3402, 7
    %v3404 = vsub.s32 0, %v3403
    %v3405 = vrot.slane %v3351, %v3404
    %v3406 = vmul.f32 %v3400, %v3405
    %v3407 = vmul.f32 %v3401, %v3405
    %v3408 = vlaneseq
    %v3409 = vshrl.u32 %v3408, 7
    %v3410 = vsub.s32 1, %v3409
    %v3411 = vrot.slane %v3351, %v3410
    %v3412 = vadd.f32 %v3406, %v3411
    %v3413 = vadd.f32 %v3407, %v3411
    %v3414 = vld [vmem:[#allocation7 + $0xe0] sm:$0xff]
    %v3415 = vld [vmem:[#allocation7 + $0x100] sm:$0x3]
    %vm3416 = vcmask 261120
    %v3417 = vsel %vm3416, %v3414, 0.0
    %3418 = vadd.xlane.f32.xlu0 %v3417
    %v3419 = vpop.xlane.xlu0 %3418
    %v3420 = vrcp.pop 32.0
    %v3421 = vmul.f32 %v3419, %v3420
    %v3422 = vsub.f32 %v3414, %v3421
    %v3423 = vmul.f32 %v3422, %v3422
    %v3424 = vsel %vm3416, %v3423, 0.0
    %3425 = vadd.xlane.f32.xlu0 %v3424
    %v3426 = vpop.xlane.xlu0 %3425
    %v3427 = vmul.f32 %v3426, %v3420
    %v3428 = vadd.f32 %v3427, 1e-05
    %v3429 = vrsqrt.pop %v3428
    %v3430 = vmul.f32 %v3422, %v3429
    %v3431 = vlaneseq
    %v3432 = vshrl.u32 %v3431, 7
    %v3433 = vsub.s32 0, %v3432
    %v3434 = vrot.slane %v3415, %v3433
    %v3435 = vmul.f32 %v3430, %v3434
    %v3436 = vlaneseq
    %v3437 = vshrl.u32 %v3436, 7
    %v3438 = vsub.s32 1, %v3437
    %v3439 = vrot.slane %v3415, %v3438
    %v3440 = vadd.f32 %v3435, %v3439
    %v3441 = vld [vmem:[#allocation5 + $0x3a0] sm:$0xf]
    %v3442 = vld [vmem:[#allocation5 + $0x3a8] sm:$0xf]
    %v3443 = vld [vmem:[#allocation5 + $0x3b0] sm:$0xf]
    %v3444 = vld [vmem:[#allocation5 + $0x3b8] sm:$0xf]
    %v3445 = vpack.c.bf16 %v3440, %v3440
    %v3446 = vld [vmem:[#allocation7 + $0x140] ss:$0 sm:$0xff]
    %v3451 = vunpack.c.l.b16 %v3441
    %v3452 = vunpack.c.l.b16 %v3442
    %v3453 = vunpack.c.l.b16 %v3443
    %v3454 = vunpack.c.l.b16 %v3444
    %v3455 = vpack.c.b16 %v3452, %v3451
    %v3456 = vpack.c.b16 %v3454, %v3453
    %v3460 = vsel %vm3416, %v3445, 0
    %3462 = vmatprep.subr.bf16.mxu0 0
    %3463 = vmatpush1.bf16.msra.mxu0 %v3455
    %3464 = vmatprep.subr.bf16.mxu0 0
    %3465 = vmatpush1.bf16.msra.mxu0 %v3456
    %3466 = vmatprep.subr.bf16.mxu0 0
    %3467 = vmatpush1.bf16.msra.mxu0 0
    %3468 = vmatprep.subr.bf16.mxu0 0
    %3469 = vmatpush1.bf16.msra.mxu0 0
    %3470 = vmatprep.subr.bf16.mxu0 0
    %3471 = vmatpush1.bf16.msra.mxu0 0
    %3472 = vmatprep.subr.bf16.mxu0 0
    %3473 = vmatpush1.bf16.msra.mxu0 0
    %3474 = vmatprep.subr.bf16.mxu0 0
    %3475 = vmatpush1.bf16.msra.mxu0 0
    %3476 = vmatprep.subr.bf16.mxu0 0
    %3477 = vmatpush1.bf16.msra.mxu0 0
    %3478 = vmatprep.subr.bf16.mxu0 0
    %3479 = vmatpush1.bf16.msra.mxu0 0
    %3480 = vmatprep.subr.bf16.mxu0 0
    %3481 = vmatpush1.bf16.msra.mxu0 0
    %3482 = vmatprep.subr.bf16.mxu0 0
    %3483 = vmatpush1.bf16.msra.mxu0 0
    %3484 = vmatprep.subr.bf16.mxu0 0
    %3485 = vmatpush1.bf16.msra.mxu0 0
    %3486 = vmatprep.subr.bf16.mxu0 0
    %3487 = vmatpush1.bf16.msra.mxu0 0
    %3488 = vmatprep.subr.bf16.mxu0 0
    %3489 = vmatpush1.bf16.msra.mxu0 0
    %3490 = vmatprep.subr.bf16.mxu0 0
    %3491 = vmatpush1.bf16.msra.mxu0 0
    %3492 = vmatprep.subr.bf16.mxu0 0
    %3493 = vmatpush1.bf16.msra.mxu0 0
    %3494 = vmatprep.mubr.bf16.mxu0 0
    %3495 = vmatmul.mubr.bf16.gmra.mrb[0].mxu0 %v3460
    %v3496 = vpop.f32.mrb[0].mxu0
    %v3497 = vadd.f32 %v3446, %v3496
    %v3498 = vpop.f32.mrb[0].mxu0
    %v3499 = vpop.f32.mrb[0].mxu0
    %v3500 = vpop.f32.mrb[0].mxu0
    %3501 = vdwg.mxu0
    %v3502 = vld [vmem:[#allocation5 + $0x3c0] sm:$0xf]
    %v3503 = vld [vmem:[#allocation5 + $0x3c8] sm:$0xf]
    %v3504 = vld [vmem:[#allocation5 + $0x3d0] sm:$0xf]
    %v3505 = vld [vmem:[#allocation5 + $0x3d8] sm:$0xf]
    %v3506 = vld [vmem:[#allocation5 + $0x3e0] sm:$0xf]
    %v3507 = vld [vmem:[#allocation5 + $0x3e8] sm:$0xf]
    %v3508 = vld [vmem:[#allocation5 + $0x3f0] sm:$0xf]
    %v3509 = vld [vmem:[#allocation5 + $0x3f8] sm:$0xf]
    %v3510 = vpack.c.bf16 %v3413, %v3412
    %v3511 = vld [vmem:[#allocation7 + $0x150] ss:$0 sm:$0xff]
    %v3520 = vunpack.c.l.b16 %v3502
    %v3521 = vunpack.c.l.b16 %v3503
    %v3522 = vunpack.c.l.b16 %v3504
    %v3523 = vunpack.c.l.b16 %v3505
    %v3524 = vunpack.c.l.b16 %v3506
    %v3525 = vunpack.c.l.b16 %v3507
    %v3526 = vunpack.c.l.b16 %v3508
    %v3527 = vunpack.c.l.b16 %v3509
    %v3528 = vpack.c.b16 %v3521, %v3520
    %v3529 = vpack.c.b16 %v3523, %v3522
    %v3530 = vpack.c.b16 %v3525, %v3524
    %v3531 = vpack.c.b16 %v3527, %v3526
    %v3537 = vsel %vm196, %v3510, 0
    %3539 = vmatprep.subr.bf16.mxu0 0
    %3540 = vmatpush1.bf16.msra.mxu0 %v3528
    %3541 = vmatprep.subr.bf16.mxu0 0
    %3542 = vmatpush1.bf16.msra.mxu0 %v3529
    %3543 = vmatprep.subr.bf16.mxu0 0
    %3544 = vmatpush1.bf16.msra.mxu0 %v3530
    %3545 = vmatprep.subr.bf16.mxu0 0
    %3546 = vmatpush1.bf16.msra.mxu0 %v3531
    %3547 = vmatprep.subr.bf16.mxu0 0
    %3548 = vmatpush1.bf16.msra.mxu0 0
    %3549 = vmatprep.subr.bf16.mxu0 0
    %3550 = vmatpush1.bf16.msra.mxu0 0
    %3551 = vmatprep.subr.bf16.mxu0 0
    %3552 = vmatpush1.bf16.msra.mxu0 0
    %3553 = vmatprep.subr.bf16.mxu0 0
    %3554 = vmatpush1.bf16.msra.mxu0 0
    %3555 = vmatprep.subr.bf16.mxu0 0
    %3556 = vmatpush1.bf16.msra.mxu0 0
    %3557 = vmatprep.subr.bf16.mxu0 0
    %3558 = vmatpush1.bf16.msra.mxu0 0
    %3559 = vmatprep.subr.bf16.mxu0 0
    %3560 = vmatpush1.bf16.msra.mxu0 0
    %3561 = vmatprep.subr.bf16.mxu0 0
    %3562 = vmatpush1.bf16.msra.mxu0 0
    %3563 = vmatprep.subr.bf16.mxu0 0
    %3564 = vmatpush1.bf16.msra.mxu0 0
    %3565 = vmatprep.subr.bf16.mxu0 0
    %3566 = vmatpush1.bf16.msra.mxu0 0
    %3567 = vmatprep.subr.bf16.mxu0 0
    %3568 = vmatpush1.bf16.msra.mxu0 0
    %3569 = vmatprep.subr.bf16.mxu0 0
    %3570 = vmatpush1.bf16.msra.mxu0 0
    %3571 = vmatprep.mubr.bf16.mxu0 0
    %3572 = vmatmul.mubr.bf16.gmra.mrb[0].mxu0 %v3537
    %v3573 = vpop.f32.mrb[0].mxu0
    %v3574 = vadd.f32 %v3511, %v3573
    %v3575 = vpop.f32.mrb[0].mxu0
    %v3576 = vpop.f32.mrb[0].mxu0
    %v3577 = vadd.f32 %v3511, %v3576
    %v3578 = vpop.f32.mrb[0].mxu0
    %3579 = vdwg.mxu0
    %v3580 = vld [vmem:[#allocation7 + $0x160] sm:$0xff]
    %v3581 = vadd.f32 %v3574, %v3580
    %v3582 = vadd.f32 %v3577, %v3580
    %v3584 = vcombine.high %v3497, %v3497
    %v3586 = vunpack.c.l.s4 1966171168
    %v3587 = vunpack.c.0.s8 %v3586
    %v3588 = vlaneseq
    %v3589 = vshrl.u32 %v3588, 7
    %v3590 = vsub.s32 %v3587, %v3589
    %v3591 = vrot.slane %v3497, %v3590
    %v3593 = vunpack.c.l.s4 1966171168
    %v3594 = vunpack.c.0.s8 %v3593
    %v3595 = vlaneseq
    %v3596 = vshrl.u32 %v3595, 7
    %v3597 = vsub.s32 %v3594, %v3596
    %v3598 = vrot.slane %v3584, %v3597
    %v3599 = vcombine.high %v3591, %v3591
    %v3600 = vcombine.high %v3598, %v3598
    %v3602 = vunpack.c.l.s4 1966171168
    %v3603 = vunpack.c.0.s8 %v3602
    %v3604 = vlaneseq
    %v3605 = vshrl.u32 %v3604, 7
    %v3606 = vsub.s32 %v3603, %v3605
    %v3607 = vrot.slane %v3591, %v3606
    %v3609 = vunpack.c.l.s4 1966171168
    %v3610 = vunpack.c.0.s8 %v3609
    %v3611 = vlaneseq
    %v3612 = vshrl.u32 %v3611, 7
    %v3613 = vsub.s32 %v3610, %v3612
    %v3614 = vrot.slane %v3598, %v3613
    %v3616 = vunpack.c.l.s4 1966171168
    %v3617 = vunpack.c.0.s8 %v3616
    %v3618 = vlaneseq
    %v3619 = vshrl.u32 %v3618, 7
    %v3620 = vsub.s32 %v3617, %v3619
    %v3621 = vrot.slane %v3599, %v3620
    %v3623 = vunpack.c.l.s4 1966171168
    %v3624 = vunpack.c.0.s8 %v3623
    %v3625 = vlaneseq
    %v3626 = vshrl.u32 %v3625, 7
    %v3627 = vsub.s32 %v3624, %v3626
    %v3628 = vrot.slane %v3600, %v3627
    %v3629 = vcombine.high %v3607, %v3607
    %v3630 = vcombine.high %v3614, %v3614
    %v3631 = vcombine.high %v3621, %v3621
    %v3632 = vcombine.high %v3628, %v3628
    %v3633 = vlaneseq
    %v3634 = vshrl.u32 %v3633, 7
    %v3635 = vsub.s32 0, %v3634
    %v3636 = vrot.slane %v3607, %v3635
    %v3637 = vlaneseq
    %v3638 = vshrl.u32 %v3637, 7
    %v3639 = vsub.s32 0, %v3638
    %v3640 = vrot.slane %v3621, %v3639
    %v3641 = vlaneseq
    %v3642 = vshrl.u32 %v3641, 7
    %v3643 = vsub.s32 0, %v3642
    %v3644 = vrot.slane %v3629, %v3643
    %v3645 = vlaneseq
    %v3646 = vshrl.u32 %v3645, 7
    %v3647 = vsub.s32 0, %v3646
    %v3648 = vrot.slane %v3631, %v3647
    %v3649 = vlaneseq
    %v3650 = vshrl.u32 %v3649, 7
    %v3651 = vsub.s32 0, %v3650
    %v3652 = vrot.slane %v3614, %v3651
    %v3653 = vlaneseq
    %v3654 = vshrl.u32 %v3653, 7
    %v3655 = vsub.s32 0, %v3654
    %v3656 = vrot.slane %v3628, %v3655
    %v3657 = vlaneseq
    %v3658 = vshrl.u32 %v3657, 7
    %v3659 = vsub.s32 0, %v3658
    %v3660 = vrot.slane %v3630, %v3659
    %v3661 = vlaneseq
    %v3662 = vshrl.u32 %v3661, 7
    %v3663 = vsub.s32 0, %v3662
    %v3664 = vrot.slane %v3632, %v3663
    %v3673 = vmul.f32 %v3636, %v3581
    %v3674 = vmul.f32 %v3640, %v3581
    %v3675 = vmul.f32 %v3644, %v3581
    %v3676 = vmul.f32 %v3648, %v3581
    %v3677 = vmul.f32 %v3652, %v3581
    %v3678 = vmul.f32 %v3656, %v3581
    %v3679 = vmul.f32 %v3660, %v3581
    %v3680 = vmul.f32 %v3664, %v3581
    %v3681 = vmul.f32 %v3636, %v3582
    %v3682 = vmul.f32 %v3640, %v3582
    %v3683 = vmul.f32 %v3644, %v3582
    %v3684 = vmul.f32 %v3648, %v3582
    %v3685 = vmul.f32 %v3652, %v3582
    %v3686 = vmul.f32 %v3656, %v3582
    %v3687 = vmul.f32 %v3660, %v3582
    %v3688 = vmul.f32 %v3664, %v3582
    %v3689 = vpack.c.bf16 %v3674, %v3673
    %v3690 = vpack.c.bf16 %v3676, %v3675
    %v3691 = vpack.c.bf16 %v3678, %v3677
    %v3692 = vpack.c.bf16 %v3680, %v3679
    %v3693 = vpack.c.bf16 %v3682, %v3681
    %v3694 = vpack.c.bf16 %v3684, %v3683
    %v3695 = vpack.c.bf16 %v3686, %v3685
    %v3696 = vpack.c.bf16 %v3688, %v3687
    %v3698 = vsel %vm196, %v3689, 0
    %v3701 = vsel %vm196, %v3690, 0
    %v3704 = vsel %vm196, %v3691, 0
    %v3707 = vsel %vm196, %v3692, 0
    %v3710 = vsel %vm196, %v3693, 0
    %v3713 = vsel %vm196, %v3694, 0
    %v3716 = vsel %vm196, %v3695, 0
    %v3719 = vsel %vm196, %v3696, 0
    %3721 = vmatprep.subr.bf16.mxu0 0
    %3722 = vmatpush1.bf16.msra.mxu0 %v469
    %3723 = vmatprep.subr.bf16.mxu0 0
    %3724 = vmatpush1.bf16.msra.mxu0 %v470
    %3725 = vmatprep.subr.bf16.mxu0 0
    %3726 = vmatpush1.bf16.msra.mxu0 %v471
    %3727 = vmatprep.subr.bf16.mxu0 0
    %3728 = vmatpush1.bf16.msra.mxu0 %v472
    %3729 = vmatprep.subr.bf16.mxu0 0
    %3730 = vmatpush1.bf16.msra.mxu0 0
    %3731 = vmatprep.subr.bf16.mxu0 0
    %3732 = vmatpush1.bf16.msra.mxu0 0
    %3733 = vmatprep.subr.bf16.mxu0 0
    %3734 = vmatpush1.bf16.msra.mxu0 0
    %3735 = vmatprep.subr.bf16.mxu0 0
    %3736 = vmatpush1.bf16.msra.mxu0 0
    %3737 = vmatprep.subr.bf16.mxu0 0
    %3738 = vmatpush1.bf16.msra.mxu0 0
    %3739 = vmatprep.subr.bf16.mxu0 0
    %3740 = vmatpush1.bf16.msra.mxu0 0
    %3741 = vmatprep.subr.bf16.mxu0 0
    %3742 = vmatpush1.bf16.msra.mxu0 0
    %3743 = vmatprep.subr.bf16.mxu0 0
    %3744 = vmatpush1.bf16.msra.mxu0 0
    %3745 = vmatprep.subr.bf16.mxu0 0
    %3746 = vmatpush1.bf16.msra.mxu0 0
    %3747 = vmatprep.subr.bf16.mxu0 0
    %3748 = vmatpush1.bf16.msra.mxu0 0
    %3749 = vmatprep.subr.bf16.mxu0 0
    %3750 = vmatpush1.bf16.msra.mxu0 0
    %3751 = vmatprep.subr.bf16.mxu0 0
    %3752 = vmatpush1.bf16.msra.mxu0 0
    %3753 = vmatprep.mubr.bf16.mxu0 0
    %3754 = vmatmul.mubr.bf16.gmra.mrb[0].mxu0 %v3698
    %v3755 = vpop.f32.mrb[0].mxu0
    %v3756 = vadd.f32 0.0, %v3755
    %v3757 = vpop.f32.mrb[0].mxu0
    %v3758 = vpop.f32.mrb[0].mxu0
    %v3759 = vadd.f32 0.0, %v3758
    %v3760 = vpop.f32.mrb[0].mxu0
    %3761 = vmatprep.mubr.bf16.mxu0 0
    %3762 = vmatmul.mubr.bf16.gmra.mrb[0].mxu0 %v3701
    %v3763 = vpop.f32.mrb[0].mxu0
    %v3764 = vadd.f32 0.0, %v3763
    %v3765 = vpop.f32.mrb[0].mxu0
    %v3766 = vpop.f32.mrb[0].mxu0
    %v3767 = vadd.f32 0.0, %v3766
    %v3768 = vpop.f32.mrb[0].mxu0
    %3769 = vmatprep.mubr.bf16.mxu0 0
    %3770 = vmatmul.mubr.bf16.gmra.mrb[0].mxu0 %v3704
    %v3771 = vpop.f32.mrb[0].mxu0
    %v3772 = vadd.f32 0.0, %v3771
    %v3773 = vpop.f32.mrb[0].mxu0
    %v3774 = vpop.f32.mrb[0].mxu0
    %v3775 = vadd.f32 0.0, %v3774
    %v3776 = vpop.f32.mrb[0].mxu0
    %3777 = vmatprep.mubr.bf16.mxu0 0
    %3778 = vmatmul.mubr.bf16.gmra.mrb[0].mxu0 %v3707
    %v3779 = vpop.f32.mrb[0].mxu0
    %v3780 = vadd.f32 0.0, %v3779
    %v3781 = vpop.f32.mrb[0].mxu0
    %v3782 = vpop.f32.mrb[0].mxu0
    %v3783 = vadd.f32 0.0, %v3782
    %v3784 = vpop.f32.mrb[0].mxu0
    %3785 = vmatprep.mubr.bf16.mxu0 0
    %3786 = vmatmul.mubr.bf16.gmra.mrb[0].mxu0 %v3710
    %v3787 = vpop.f32.mrb[0].mxu0
    %v3788 = vadd.f32 0.0, %v3787
    %v3789 = vpop.f32.mrb[0].mxu0
    %v3790 = vpop.f32.mrb[0].mxu0
    %v3791 = vadd.f32 0.0, %v3790
    %v3792 = vpop.f32.mrb[0].mxu0
    %3793 = vmatprep.mubr.bf16.mxu0 0
    %3794 = vmatmul.mubr.bf16.gmra.mrb[0].mxu0 %v3713
    %v3795 = vpop.f32.mrb[0].mxu0
    %v3796 = vadd.f32 0.0, %v3795
    %v3797 = vpop.f32.mrb[0].mxu0
    %v3798 = vpop.f32.mrb[0].mxu0
    %v3799 = vadd.f32 0.0, %v3798
    %v3800 = vpop.f32.mrb[0].mxu0
    %3801 = vmatprep.mubr.bf16.mxu0 0
    %3802 = vmatmul.mubr.bf16.gmra.mrb[0].mxu0 %v3716
    %v3803 = vpop.f32.mrb[0].mxu0
    %v3804 = vadd.f32 0.0, %v3803
    %v3805 = vpop.f32.mrb[0].mxu0
    %v3806 = vpop.f32.mrb[0].mxu0
    %v3807 = vadd.f32 0.0, %v3806
    %v3808 = vpop.f32.mrb[0].mxu0
    %3809 = vmatprep.mubr.bf16.mxu0 0
    %3810 = vmatmul.mubr.bf16.gmra.mrb[0].mxu0 %v3719
    %v3811 = vpop.f32.mrb[0].mxu0
    %v3812 = vadd.f32 0.0, %v3811
    %v3813 = vpop.f32.mrb[0].mxu0
    %v3814 = vpop.f32.mrb[0].mxu0
    %v3815 = vadd.f32 0.0, %v3814
    %v3816 = vpop.f32.mrb[0].mxu0
    %3817 = vdwg.mxu0
    %v3818 = vsel %vm598, %v3756, -inf
    %v3819 = vrot.slane %v3818, 4
    %v3820 = vmax.f32 %v3818, %v3819
    %v3821 = vrot.slane %v3820, 2
    %v3822 = vmax.f32 %v3820, %v3821
    %v3823 = vrot.slane %v3822, 1
    %v3824 = vmax.f32 %v3822, %v3823
    %v3825 = vsel %vm598, %v3759, -inf
    %v3826 = vrot.slane %v3825, 4
    %v3827 = vmax.f32 %v3825, %v3826
    %v3828 = vrot.slane %v3827, 2
    %v3829 = vmax.f32 %v3827, %v3828
    %v3830 = vrot.slane %v3829, 1
    %v3831 = vmax.f32 %v3829, %v3830
    %v3832 = vsel %vm598, %v3764, -inf
    %v3833 = vrot.slane %v3832, 4
    %v3834 = vmax.f32 %v3832, %v3833
    %v3835 = vrot.slane %v3834, 2
    %v3836 = vmax.f32 %v3834, %v3835
    %v3837 = vrot.slane %v3836, 1
    %v3838 = vmax.f32 %v3836, %v3837
    %v3839 = vsel %vm598, %v3767, -inf
    %v3840 = vrot.slane %v3839, 4
    %v3841 = vmax.f32 %v3839, %v3840
    %v3842 = vrot.slane %v3841, 2
    %v3843 = vmax.f32 %v3841, %v3842
    %v3844 = vrot.slane %v3843, 1
    %v3845 = vmax.f32 %v3843, %v3844
    %v3846 = vsel %vm598, %v3772, -inf
    %v3847 = vrot.slane %v3846, 4
    %v3848 = vmax.f32 %v3846, %v3847
    %v3849 = vrot.slane %v3848, 2
    %v3850 = vmax.f32 %v3848, %v3849
    %v3851 = vrot.slane %v3850, 1
    %v3852 = vmax.f32 %v3850, %v3851
    %v3853 = vsel %vm598, %v3775, -inf
    %v3854 = vrot.slane %v3853, 4
    %v3855 = vmax.f32 %v3853, %v3854
    %v3856 = vrot.slane %v3855, 2
    %v3857 = vmax.f32 %v3855, %v3856
    %v3858 = vrot.slane %v3857, 1
    %v3859 = vmax.f32 %v3857, %v3858
    %v3860 = vsel %vm598, %v3780, -inf
    %v3861 = vrot.slane %v3860, 4
    %v3862 = vmax.f32 %v3860, %v3861
    %v3863 = vrot.slane %v3862, 2
    %v3864 = vmax.f32 %v3862, %v3863
    %v3865 = vrot.slane %v3864, 1
    %v3866 = vmax.f32 %v3864, %v3865
    %v3867 = vsel %vm598, %v3783, -inf
    %v3868 = vrot.slane %v3867, 4
    %v3869 = vmax.f32 %v3867, %v3868
    %v3870 = vrot.slane %v3869, 2
    %v3871 = vmax.f32 %v3869, %v3870
    %v3872 = vrot.slane %v3871, 1
    %v3873 = vmax.f32 %v3871, %v3872
    %v3874 = vsel %vm598, %v3788, -inf
    %v3875 = vrot.slane %v3874, 4
    %v3876 = vmax.f32 %v3874, %v3875
    %v3877 = vrot.slane %v3876, 2
    %v3878 = vmax.f32 %v3876, %v3877
    %v3879 = vrot.slane %v3878, 1
    %v3880 = vmax.f32 %v3878, %v3879
    %v3881 = vsel %vm598, %v3791, -inf
    %v3882 = vrot.slane %v3881, 4
    %v3883 = vmax.f32 %v3881, %v3882
    %v3884 = vrot.slane %v3883, 2
    %v3885 = vmax.f32 %v3883, %v3884
    %v3886 = vrot.slane %v3885, 1
    %v3887 = vmax.f32 %v3885, %v3886
    %v3888 = vsel %vm598, %v3796, -inf
    %v3889 = vrot.slane %v3888, 4
    %v3890 = vmax.f32 %v3888, %v3889
    %v3891 = vrot.slane %v3890, 2
    %v3892 = vmax.f32 %v3890, %v3891
    %v3893 = vrot.slane %v3892, 1
    %v3894 = vmax.f32 %v3892, %v3893
    %v3895 = vsel %vm598, %v3799, -inf
    %v3896 = vrot.slane %v3895, 4
    %v3897 = vmax.f32 %v3895, %v3896
    %v3898 = vrot.slane %v3897, 2
    %v3899 = vmax.f32 %v3897, %v3898
    %v3900 = vrot.slane %v3899, 1
    %v3901 = vmax.f32 %v3899, %v3900
    %v3902 = vsel %vm598, %v3804, -inf
    %v3903 = vrot.slane %v3902, 4
    %v3904 = vmax.f32 %v3902, %v3903
    %v3905 = vrot.slane %v3904, 2
    %v3906 = vmax.f32 %v3904, %v3905
    %v3907 = vrot.slane %v3906, 1
    %v3908 = vmax.f32 %v3906, %v3907
    %v3909 = vsel %vm598, %v3807, -inf
    %v3910 = vrot.slane %v3909, 4
    %v3911 = vmax.f32 %v3909, %v3910
    %v3912 = vrot.slane %v3911, 2
    %v3913 = vmax.f32 %v3911, %v3912
    %v3914 = vrot.slane %v3913, 1
    %v3915 = vmax.f32 %v3913, %v3914
    %v3916 = vsel %vm598, %v3812, -inf
    %v3917 = vrot.slane %v3916, 4
    %v3918 = vmax.f32 %v3916, %v3917
    %v3919 = vrot.slane %v3918, 2
    %v3920 = vmax.f32 %v3918, %v3919
    %v3921 = vrot.slane %v3920, 1
    %v3922 = vmax.f32 %v3920, %v3921
    %v3923 = vsel %vm598, %v3815, -inf
    %v3924 = vrot.slane %v3923, 4
    %v3925 = vmax.f32 %v3923, %v3924
    %v3926 = vrot.slane %v3925, 2
    %v3927 = vmax.f32 %v3925, %v3926
    %v3928 = vrot.slane %v3927, 1
    %v3929 = vmax.f32 %v3927, %v3928
    %v3930 = vsub.f32 %v3756, %v3824
    %v3931 = vsub.f32 %v3759, %v3831
    %v3932 = vsub.f32 %v3764, %v3838
    %v3933 = vsub.f32 %v3767, %v3845
    %v3934 = vsub.f32 %v3772, %v3852
    %v3935 = vsub.f32 %v3775, %v3859
    %v3936 = vsub.f32 %v3780, %v3866
    %v3937 = vsub.f32 %v3783, %v3873
    %v3938 = vsub.f32 %v3788, %v3880
    %v3939 = vsub.f32 %v3791, %v3887
    %v3940 = vsub.f32 %v3796, %v3894
    %v3941 = vsub.f32 %v3799, %v3901
    %v3942 = vsub.f32 %v3804, %v3908
    %v3943 = vsub.f32 %v3807, %v3915
    %v3944 = vsub.f32 %v3812, %v3922
    %v3945 = vsub.f32 %v3815, %v3929
    %v3946 = vmul.f32 %v3930, 1.442695
    %v3947 = vpow.pop %v3946
    %v3948 = vmul.f32 %v3931, 1.442695
    %v3949 = vpow.pop %v3948
    %v3950 = vmul.f32 %v3932, 1.442695
    %v3951 = vpow.pop %v3950
    %v3952 = vmul.f32 %v3933, 1.442695
    %v3953 = vpow.pop %v3952
    %v3954 = vmul.f32 %v3934, 1.442695
    %v3955 = vpow.pop %v3954
    %v3956 = vmul.f32 %v3935, 1.442695
    %v3957 = vpow.pop %v3956
    %v3958 = vmul.f32 %v3936, 1.442695
    %v3959 = vpow.pop %v3958
    %v3960 = vmul.f32 %v3937, 1.442695
    %v3961 = vpow.pop %v3960
    %v3962 = vmul.f32 %v3938, 1.442695
    %v3963 = vpow.pop %v3962
    %v3964 = vmul.f32 %v3939, 1.442695
    %v3965 = vpow.pop %v3964
    %v3966 = vmul.f32 %v3940, 1.442695
    %v3967 = vpow.pop %v3966
    %v3968 = vmul.f32 %v3941, 1.442695
    %v3969 = vpow.pop %v3968
    %v3970 = vmul.f32 %v3942, 1.442695
    %v3971 = vpow.pop %v3970
    %v3972 = vmul.f32 %v3943, 1.442695
    %v3973 = vpow.pop %v3972
    %v3974 = vmul.f32 %v3944, 1.442695
    %v3975 = vpow.pop %v3974
    %v3976 = vmul.f32 %v3945, 1.442695
    %v3977 = vpow.pop %v3976
    %v3978 = vsel %vm598, %v3947, 0.0
    %v3979 = vrot.slane %v3978, 4
    %v3980 = vadd.f32 %v3978, %v3979
    %v3981 = vrot.slane %v3980, 2
    %v3982 = vadd.f32 %v3980, %v3981
    %v3983 = vrot.slane %v3982, 1
    %v3984 = vadd.f32 %v3982, %v3983
    %v3985 = vsel %vm598, %v3949, 0.0
    %v3986 = vrot.slane %v3985, 4
    %v3987 = vadd.f32 %v3985, %v3986
    %v3988 = vrot.slane %v3987, 2
    %v3989 = vadd.f32 %v3987, %v3988
    %v3990 = vrot.slane %v3989, 1
    %v3991 = vadd.f32 %v3989, %v3990
    %v3992 = vsel %vm598, %v3951, 0.0
    %v3993 = vrot.slane %v3992, 4
    %v3994 = vadd.f32 %v3992, %v3993
    %v3995 = vrot.slane %v3994, 2
    %v3996 = vadd.f32 %v3994, %v3995
    %v3997 = vrot.slane %v3996, 1
    %v3998 = vadd.f32 %v3996, %v3997
    %v3999 = vsel %vm598, %v3953, 0.0
    %v4000 = vrot.slane %v3999, 4
    %v4001 = vadd.f32 %v3999, %v4000
    %v4002 = vrot.slane %v4001, 2
    %v4003 = vadd.f32 %v4001, %v4002
    %v4004 = vrot.slane %v4003, 1
    %v4005 = vadd.f32 %v4003, %v4004
    %v4006 = vsel %vm598, %v3955, 0.0
    %v4007 = vrot.slane %v4006, 4
    %v4008 = vadd.f32 %v4006, %v4007
    %v4009 = vrot.slane %v4008, 2
    %v4010 = vadd.f32 %v4008, %v4009
    %v4011 = vrot.slane %v4010, 1
    %v4012 = vadd.f32 %v4010, %v4011
    %v4013 = vsel %vm598, %v3957, 0.0
    %v4014 = vrot.slane %v4013, 4
    %v4015 = vadd.f32 %v4013, %v4014
    %v4016 = vrot.slane %v4015, 2
    %v4017 = vadd.f32 %v4015, %v4016
    %v4018 = vrot.slane %v4017, 1
    %v4019 = vadd.f32 %v4017, %v4018
    %v4020 = vsel %vm598, %v3959, 0.0
    %v4021 = vrot.slane %v4020, 4
    %v4022 = vadd.f32 %v4020, %v4021
    %v4023 = vrot.slane %v4022, 2
    %v4024 = vadd.f32 %v4022, %v4023
    %v4025 = vrot.slane %v4024, 1
    %v4026 = vadd.f32 %v4024, %v4025
    %v4027 = vsel %vm598, %v3961, 0.0
    %v4028 = vrot.slane %v4027, 4
    %v4029 = vadd.f32 %v4027, %v4028
    %v4030 = vrot.slane %v4029, 2
    %v4031 = vadd.f32 %v4029, %v4030
    %v4032 = vrot.slane %v4031, 1
    %v4033 = vadd.f32 %v4031, %v4032
    %v4034 = vsel %vm598, %v3963, 0.0
    %v4035 = vrot.slane %v4034, 4
    %v4036 = vadd.f32 %v4034, %v4035
    %v4037 = vrot.slane %v4036, 2
    %v4038 = vadd.f32 %v4036, %v4037
    %v4039 = vrot.slane %v4038, 1
    %v4040 = vadd.f32 %v4038, %v4039
    %v4041 = vsel %vm598, %v3965, 0.0
    %v4042 = vrot.slane %v4041, 4
    %v4043 = vadd.f32 %v4041, %v4042
    %v4044 = vrot.slane %v4043, 2
    %v4045 = vadd.f32 %v4043, %v4044
    %v4046 = vrot.slane %v4045, 1
    %v4047 = vadd.f32 %v4045, %v4046
    %v4048 = vsel %vm598, %v3967, 0.0
    %v4049 = vrot.slane %v4048, 4
    %v4050 = vadd.f32 %v4048, %v4049
    %v4051 = vrot.slane %v4050, 2
    %v4052 = vadd.f32 %v4050, %v4051
    %v4053 = vrot.slane %v4052, 1
    %v4054 = vadd.f32 %v4052, %v4053
    %v4055 = vsel %vm598, %v3969, 0.0
    %v4056 = vrot.slane %v4055, 4
    %v4057 = vadd.f32 %v4055, %v4056
    %v4058 = vrot.slane %v4057, 2
    %v4059 = vadd.f32 %v4057, %v4058
    %v4060 = vrot.slane %v4059, 1
    %v4061 = vadd.f32 %v4059, %v4060
    %v4062 = vsel %vm598, %v3971, 0.0
    %v4063 = vrot.slane %v4062, 4
    %v4064 = vadd.f32 %v4062, %v4063
    %v4065 = vrot.slane %v4064, 2
    %v4066 = vadd.f32 %v4064, %v4065
    %v4067 = vrot.slane %v4066, 1
    %v4068 = vadd.f32 %v4066, %v4067
    %v4069 = vsel %vm598, %v3973, 0.0
    %v4070 = vrot.slane %v4069, 4
    %v4071 = vadd.f32 %v4069, %v4070
    %v4072 = vrot.slane %v4071, 2
    %v4073 = vadd.f32 %v4071, %v4072
    %v4074 = vrot.slane %v4073, 1
    %v4075 = vadd.f32 %v4073, %v4074
    %v4076 = vsel %vm598, %v3975, 0.0
    %v4077 = vrot.slane %v4076, 4
    %v4078 = vadd.f32 %v4076, %v4077
    %v4079 = vrot.slane %v4078, 2
    %v4080 = vadd.f32 %v4078, %v4079
    %v4081 = vrot.slane %v4080, 1
    %v4082 = vadd.f32 %v4080, %v4081
    %v4083 = vsel %vm598, %v3977, 0.0
    %v4084 = vrot.slane %v4083, 4
    %v4085 = vadd.f32 %v4083, %v4084
    %v4086 = vrot.slane %v4085, 2
    %v4087 = vadd.f32 %v4085, %v4086
    %v4088 = vrot.slane %v4087, 1
    %v4089 = vadd.f32 %v4087, %v4088
    %v4090 = vrcp.pop %v3984
    %v4091 = vrcp.pop %v3991
    %v4092 = vrcp.pop %v3998
    %v4093 = vrcp.pop %v4005
    %v4094 = vrcp.pop %v4012
    %v4095 = vrcp.pop %v4019
    %v4096 = vrcp.pop %v4026
    %v4097 = vrcp.pop %v4033
    %v4098 = vrcp.pop %v4040
    %v4099 = vrcp.pop %v4047
    %v4100 = vrcp.pop %v4054
    %v4101 = vrcp.pop %v4061
    %v4102 = vrcp.pop %v4068
    %v4103 = vrcp.pop %v4075
    %v4104 = vrcp.pop %v4082
    %v4105 = vrcp.pop %v4089
    %v4106 = vmul.f32 %v3947, %v4090
    %v4107 = vmul.f32 %v3949, %v4091
    %v4108 = vmul.f32 %v3951, %v4092
    %v4109 = vmul.f32 %v3953, %v4093
    %v4110 = vmul.f32 %v3955, %v4094
    %v4111 = vmul.f32 %v3957, %v4095
    %v4112 = vmul.f32 %v3959, %v4096
    %v4113 = vmul.f32 %v3961, %v4097
    %v4114 = vmul.f32 %v3963, %v4098
    %v4115 = vmul.f32 %v3965, %v4099
    %v4116 = vmul.f32 %v3967, %v4100
    %v4117 = vmul.f32 %v3969, %v4101
    %v4118 = vmul.f32 %v3971, %v4102
    %v4119 = vmul.f32 %v3973, %v4103
    %v4120 = vmul.f32 %v3975, %v4104
    %v4121 = vmul.f32 %v3977, %v4105
    %v4122 = vpack.c.bf16 %v4107, %v4106
    %v4123 = vpack.c.bf16 %v4109, %v4108
    %v4124 = vpack.c.bf16 %v4111, %v4110
    %v4125 = vpack.c.bf16 %v4113, %v4112
    %v4126 = vpack.c.bf16 %v4115, %v4114
    %v4127 = vpack.c.bf16 %v4117, %v4116
    %v4128 = vpack.c.bf16 %v4119, %v4118
    %v4129 = vpack.c.bf16 %v4121, %v4120
    %v4131 = vsel %vm598, %v4122, 0
    %v4134 = vsel %vm598, %v4123, 0
    %v4137 = vsel %vm598, %v4124, 0
    %v4140 = vsel %vm598, %v4125, 0
    %v4143 = vsel %vm598, %v4126, 0
    %v4146 = vsel %vm598, %v4127, 0
    %v4149 = vsel %vm598, %v4128, 0
    %v4152 = vsel %vm598, %v4129, 0
    %4154 = vmatprep.subr.bf16.mxu0 0
    %4155 = vmatpush1.bf16.msra.mxu0 %v915
    %4156 = vmatprep.subr.bf16.mxu0 0
    %4157 = vmatpush1.bf16.msra.mxu0 0
    %4158 = vmatprep.subr.bf16.mxu0 0
    %4159 = vmatpush1.bf16.msra.mxu0 0
    %4160 = vmatprep.subr.bf16.mxu0 0
    %4161 = vmatpush1.bf16.msra.mxu0 0
    %4162 = vmatprep.subr.bf16.mxu0 0
    %4163 = vmatpush1.bf16.msra.mxu0 0
    %4164 = vmatprep.subr.bf16.mxu0 0
    %4165 = vmatpush1.bf16.msra.mxu0 0
    %4166 = vmatprep.subr.bf16.mxu0 0
    %4167 = vmatpush1.bf16.msra.mxu0 0
    %4168 = vmatprep.subr.bf16.mxu0 0
    %4169 = vmatpush1.bf16.msra.mxu0 0
    %4170 = vmatprep.subr.bf16.mxu0 0
    %4171 = vmatpush1.bf16.msra.mxu0 0
    %4172 = vmatprep.subr.bf16.mxu0 0
    %4173 = vmatpush1.bf16.msra.mxu0 0
    %4174 = vmatprep.subr.bf16.mxu0 0
    %4175 = vmatpush1.bf16.msra.mxu0 0
    %4176 = vmatprep.subr.bf16.mxu0 0
    %4177 = vmatpush1.bf16.msra.mxu0 0
    %4178 = vmatprep.subr.bf16.mxu0 0
    %4179 = vmatpush1.bf16.msra.mxu0 0
    %4180 = vmatprep.subr.bf16.mxu0 0
    %4181 = vmatpush1.bf16.msra.mxu0 0
    %4182 = vmatprep.subr.bf16.mxu0 0
    %4183 = vmatpush1.bf16.msra.mxu0 0
    %4184 = vmatprep.subr.bf16.mxu0 0
    %4185 = vmatpush1.bf16.msra.mxu0 0
    %4186 = vmatprep.mubr.bf16.mxu0 0
    %4187 = vmatmul.mubr.bf16.gmra.mrb[0].mxu0 %v4131
    %v4188 = vpop.f32.mrb[0].mxu0
    %v4189 = vadd.f32 0.0, %v4188
    %v4190 = vpop.f32.mrb[0].mxu0
    %v4191 = vpop.f32.mrb[0].mxu0
    %v4192 = vadd.f32 0.0, %v4191
    %v4193 = vpop.f32.mrb[0].mxu0
    %4194 = vmatprep.mubr.bf16.mxu0 0
    %4195 = vmatmul.mubr.bf16.gmra.mrb[0].mxu0 %v4134
    %v4196 = vpop.f32.mrb[0].mxu0
    %v4197 = vadd.f32 0.0, %v4196
    %v4198 = vpop.f32.mrb[0].mxu0
    %v4199 = vpop.f32.mrb[0].mxu0
    %v4200 = vadd.f32 0.0, %v4199
    %v4201 = vpop.f32.mrb[0].mxu0
    %4202 = vmatprep.mubr.bf16.mxu0 0
    %4203 = vmatmul.mubr.bf16.gmra.mrb[0].mxu0 %v4137
    %v4204 = vpop.f32.mrb[0].mxu0
    %v4205 = vadd.f32 0.0, %v4204
    %v4206 = vpop.f32.mrb[0].mxu0
    %v4207 = vpop.f32.mrb[0].mxu0
    %v4208 = vadd.f32 0.0, %v4207
    %v4209 = vpop.f32.mrb[0].mxu0
    %4210 = vmatprep.mubr.bf16.mxu0 0
    %4211 = vmatmul.mubr.bf16.gmra.mrb[0].mxu0 %v4140
    %v4212 = vpop.f32.mrb[0].mxu0
    %v4213 = vadd.f32 0.0, %v4212
    %v4214 = vpop.f32.mrb[0].mxu0
    %v4215 = vpop.f32.mrb[0].mxu0
    %v4216 = vadd.f32 0.0, %v4215
    %v4217 = vpop.f32.mrb[0].mxu0
    %4218 = vmatprep.mubr.bf16.mxu0 0
    %4219 = vmatmul.mubr.bf16.gmra.mrb[0].mxu0 %v4143
    %v4220 = vpop.f32.mrb[0].mxu0
    %v4221 = vadd.f32 0.0, %v4220
    %v4222 = vpop.f32.mrb[0].mxu0
    %v4223 = vpop.f32.mrb[0].mxu0
    %v4224 = vadd.f32 0.0, %v4223
    %v4225 = vpop.f32.mrb[0].mxu0
    %4226 = vmatprep.mubr.bf16.mxu0 0
    %4227 = vmatmul.mubr.bf16.gmra.mrb[0].mxu0 %v4146
    %v4228 = vpop.f32.mrb[0].mxu0
    %v4229 = vadd.f32 0.0, %v4228
    %v4230 = vpop.f32.mrb[0].mxu0
    %v4231 = vpop.f32.mrb[0].mxu0
    %v4232 = vadd.f32 0.0, %v4231
    %v4233 = vpop.f32.mrb[0].mxu0
    %4234 = vmatprep.mubr.bf16.mxu0 0
    %4235 = vmatmul.mubr.bf16.gmra.mrb[0].mxu0 %v4149
    %v4236 = vpop.f32.mrb[0].mxu0
    %v4237 = vadd.f32 0.0, %v4236
    %v4238 = vpop.f32.mrb[0].mxu0
    %v4239 = vpop.f32.mrb[0].mxu0
    %v4240 = vadd.f32 0.0, %v4239
    %v4241 = vpop.f32.mrb[0].mxu0
    %4242 = vmatprep.mubr.bf16.mxu0 0
    %4243 = vmatmul.mubr.bf16.gmra.mrb[0].mxu0 %v4152
    %v4244 = vpop.f32.mrb[0].mxu0
    %v4245 = vadd.f32 0.0, %v4244
    %v4246 = vpop.f32.mrb[0].mxu0
    %v4247 = vpop.f32.mrb[0].mxu0
    %v4248 = vadd.f32 0.0, %v4247
    %v4249 = vpop.f32.mrb[0].mxu0
    %4250 = vdwg.mxu0
    %4253 = vrot.lane.b32.xlu0 %v3581, 64
    %v4254 = vpop.permute.xlu0 %4253
    %4255 = vrot.lane.b32.xlu0 %v3582, 64
    %v4256 = vpop.permute.xlu0 %4255
    %v4259 = vmul.f32 %v4189, %v4254
    %v4260 = vmul.f32 %v4192, %v4254
    %v4261 = vmul.f32 %v4197, %v4254
    %v4262 = vmul.f32 %v4200, %v4254
    %v4263 = vmul.f32 %v4205, %v4254
    %v4264 = vmul.f32 %v4208, %v4254
    %v4265 = vmul.f32 %v4213, %v4254
    %v4266 = vmul.f32 %v4216, %v4254
    %v4267 = vmul.f32 %v4221, %v4256
    %v4268 = vmul.f32 %v4224, %v4256
    %v4269 = vmul.f32 %v4229, %v4256
    %v4270 = vmul.f32 %v4232, %v4256
    %v4271 = vmul.f32 %v4237, %v4256
    %v4272 = vmul.f32 %v4240, %v4256
    %v4273 = vmul.f32 %v4245, %v4256
    %v4274 = vmul.f32 %v4248, %v4256
    %v4275 = vsel %vm196, %v4259, 0.0
    %v4276 = vrot.slane %v4275, 4
    %v4277 = vadd.f32 %v4275, %v4276
    %v4278 = vrot.slane %v4277, 2
    %v4279 = vadd.f32 %v4277, %v4278
    %v4280 = vrot.slane %v4279, 1
    %v4281 = vadd.f32 %v4279, %v4280
    %v4282 = vsel %vm196, %v4260, 0.0
    %v4283 = vrot.slane %v4282, 4
    %v4284 = vadd.f32 %v4282, %v4283
    %v4285 = vrot.slane %v4284, 2
    %v4286 = vadd.f32 %v4284, %v4285
    %v4287 = vrot.slane %v4286, 1
    %v4288 = vadd.f32 %v4286, %v4287
    %v4289 = vsel %vm196, %v4261, 0.0
    %v4290 = vrot.slane %v4289, 4
    %v4291 = vadd.f32 %v4289, %v4290
    %v4292 = vrot.slane %v4291, 2
    %v4293 = vadd.f32 %v4291, %v4292
    %v4294 = vrot.slane %v4293, 1
    %v4295 = vadd.f32 %v4293, %v4294
    %v4296 = vsel %vm196, %v4262, 0.0
    %v4297 = vrot.slane %v4296, 4
    %v4298 = vadd.f32 %v4296, %v4297
    %v4299 = vrot.slane %v4298, 2
    %v4300 = vadd.f32 %v4298, %v4299
    %v4301 = vrot.slane %v4300, 1
    %v4302 = vadd.f32 %v4300, %v4301
    %v4303 = vsel %vm196, %v4263, 0.0
    %v4304 = vrot.slane %v4303, 4
    %v4305 = vadd.f32 %v4303, %v4304
    %v4306 = vrot.slane %v4305, 2
    %v4307 = vadd.f32 %v4305, %v4306
    %v4308 = vrot.slane %v4307, 1
    %v4309 = vadd.f32 %v4307, %v4308
    %v4310 = vsel %vm196, %v4264, 0.0
    %v4311 = vrot.slane %v4310, 4
    %v4312 = vadd.f32 %v4310, %v4311
    %v4313 = vrot.slane %v4312, 2
    %v4314 = vadd.f32 %v4312, %v4313
    %v4315 = vrot.slane %v4314, 1
    %v4316 = vadd.f32 %v4314, %v4315
    %v4317 = vsel %vm196, %v4265, 0.0
    %v4318 = vrot.slane %v4317, 4
    %v4319 = vadd.f32 %v4317, %v4318
    %v4320 = vrot.slane %v4319, 2
    %v4321 = vadd.f32 %v4319, %v4320
    %v4322 = vrot.slane %v4321, 1
    %v4323 = vadd.f32 %v4321, %v4322
    %v4324 = vsel %vm196, %v4266, 0.0
    %v4325 = vrot.slane %v4324, 4
    %v4326 = vadd.f32 %v4324, %v4325
    %v4327 = vrot.slane %v4326, 2
    %v4328 = vadd.f32 %v4326, %v4327
    %v4329 = vrot.slane %v4328, 1
    %v4330 = vadd.f32 %v4328, %v4329
    %v4331 = vsel %vm196, %v4267, 0.0
    %v4332 = vrot.slane %v4331, 4
    %v4333 = vadd.f32 %v4331, %v4332
    %v4334 = vrot.slane %v4333, 2
    %v4335 = vadd.f32 %v4333, %v4334
    %v4336 = vrot.slane %v4335, 1
    %v4337 = vadd.f32 %v4335, %v4336
    %v4338 = vsel %vm196, %v4268, 0.0
    %v4339 = vrot.slane %v4338, 4
    %v4340 = vadd.f32 %v4338, %v4339
    %v4341 = vrot.slane %v4340, 2
    %v4342 = vadd.f32 %v4340, %v4341
    %v4343 = vrot.slane %v4342, 1
    %v4344 = vadd.f32 %v4342, %v4343
    %v4345 = vsel %vm196, %v4269, 0.0
    %v4346 = vrot.slane %v4345, 4
    %v4347 = vadd.f32 %v4345, %v4346
    %v4348 = vrot.slane %v4347, 2
    %v4349 = vadd.f32 %v4347, %v4348
    %v4350 = vrot.slane %v4349, 1
    %v4351 = vadd.f32 %v4349, %v4350
    %v4352 = vsel %vm196, %v4270, 0.0
    %v4353 = vrot.slane %v4352, 4
    %v4354 = vadd.f32 %v4352, %v4353
    %v4355 = vrot.slane %v4354, 2
    %v4356 = vadd.f32 %v4354, %v4355
    %v4357 = vrot.slane %v4356, 1
    %v4358 = vadd.f32 %v4356, %v4357
    %v4359 = vsel %vm196, %v4271, 0.0
    %v4360 = vrot.slane %v4359, 4
    %v4361 = vadd.f32 %v4359, %v4360
    %v4362 = vrot.slane %v4361, 2
    %v4363 = vadd.f32 %v4361, %v4362
    %v4364 = vrot.slane %v4363, 1
    %v4365 = vadd.f32 %v4363, %v4364
    %v4366 = vsel %vm196, %v4272, 0.0
    %v4367 = vrot.slane %v4366, 4
    %v4368 = vadd.f32 %v4366, %v4367
    %v4369 = vrot.slane %v4368, 2
    %v4370 = vadd.f32 %v4368, %v4369
    %v4371 = vrot.slane %v4370, 1
    %v4372 = vadd.f32 %v4370, %v4371
    %v4373 = vsel %vm196, %v4273, 0.0
    %v4374 = vrot.slane %v4373, 4
    %v4375 = vadd.f32 %v4373, %v4374
    %v4376 = vrot.slane %v4375, 2
    %v4377 = vadd.f32 %v4375, %v4376
    %v4378 = vrot.slane %v4377, 1
    %v4379 = vadd.f32 %v4377, %v4378
    %v4380 = vsel %vm196, %v4274, 0.0
    %v4381 = vrot.slane %v4380, 4
    %v4382 = vadd.f32 %v4380, %v4381
    %v4383 = vrot.slane %v4382, 2
    %v4384 = vadd.f32 %v4382, %v4383
    %v4385 = vrot.slane %v4384, 1
    %v4386 = vadd.f32 %v4384, %v4385
    %v4387 = vld [vmem:[#allocation5 + $0x400] sm:$0xf]
    %v4388 = vld [vmem:[#allocation5 + $0x408] sm:$0xf]
    %v4389 = vld [vmem:[#allocation5 + $0x410] sm:$0xf]
    %v4390 = vld [vmem:[#allocation5 + $0x418] sm:$0xf]
    %v4391 = vld [vmem:[#allocation5 + $0x420] sm:$0xf]
    %v4392 = vld [vmem:[#allocation5 + $0x428] sm:$0xf]
    %v4393 = vld [vmem:[#allocation5 + $0x430] sm:$0xf]
    %v4394 = vld [vmem:[#allocation5 + $0x438] sm:$0xf]
    %v4395 = vpack.c.bf16 %v4281, %v4281
    %v4396 = vpack.c.bf16 %v4288, %v4288
    %v4397 = vpack.c.bf16 %v4295, %v4295
    %v4398 = vpack.c.bf16 %v4302, %v4302
    %v4399 = vpack.c.bf16 %v4309, %v4309
    %v4400 = vpack.c.bf16 %v4316, %v4316
    %v4401 = vpack.c.bf16 %v4323, %v4323
    %v4402 = vpack.c.bf16 %v4330, %v4330
    %v4403 = vpack.c.bf16 %v4337, %v4337
    %v4404 = vpack.c.bf16 %v4344, %v4344
    %v4405 = vpack.c.bf16 %v4351, %v4351
    %v4406 = vpack.c.bf16 %v4358, %v4358
    %v4407 = vpack.c.bf16 %v4365, %v4365
    %v4408 = vpack.c.bf16 %v4372, %v4372
    %v4409 = vpack.c.bf16 %v4379, %v4379
    %v4410 = vpack.c.bf16 %v4386, %v4386
    %v4411 = vld [vmem:[#allocation7 + $0x170] ss:$0 sm:$0xff]
    %v4428 = vunpack.c.l.b16 %v4395
    %v4429 = vunpack.c.l.b16 %v4396
    %v4430 = vunpack.c.l.b16 %v4397
    %v4431 = vunpack.c.l.b16 %v4398
    %v4432 = vunpack.c.l.b16 %v4399
    %v4433 = vunpack.c.l.b16 %v4400
    %v4434 = vunpack.c.l.b16 %v4401
    %v4435 = vunpack.c.l.b16 %v4402
    %v4436 = vunpack.c.l.b16 %v4403
    %v4437 = vunpack.c.l.b16 %v4404
    %v4438 = vunpack.c.l.b16 %v4405
    %v4439 = vunpack.c.l.b16 %v4406
    %v4440 = vunpack.c.l.b16 %v4407
    %v4441 = vunpack.c.l.b16 %v4408
    %v4442 = vunpack.c.l.b16 %v4409
    %v4443 = vunpack.c.l.b16 %v4410
    %v4444 = vsel %vm1222, %v4429, %v4428
    %v4445 = vsel %vm1224, %v4430, %v4444
    %v4446 = vsel %vm1226, %v4431, %v4445
    %v4447 = vsel %vm1228, %v4432, %v4446
    %v4448 = vsel %vm1230, %v4433, %v4447
    %v4449 = vsel %vm1232, %v4434, %v4448
    %v4450 = vsel %vm1234, %v4435, %v4449
    %v4451 = vsel %vm1222, %v4437, %v4436
    %v4452 = vsel %vm1224, %v4438, %v4451
    %v4453 = vsel %vm1226, %v4439, %v4452
    %v4454 = vsel %vm1228, %v4440, %v4453
    %v4455 = vsel %vm1230, %v4441, %v4454
    %v4456 = vsel %vm1232, %v4442, %v4455
    %v4457 = vsel %vm1234, %v4443, %v4456
    %v4458 = vpack.c.b16 %v4457, %v4450
    %v4467 = vunpack.c.l.b16 %v4387
    %v4468 = vunpack.c.l.b16 %v4388
    %v4469 = vunpack.c.l.b16 %v4389
    %v4470 = vunpack.c.l.b16 %v4390
    %v4471 = vunpack.c.l.b16 %v4391
    %v4472 = vunpack.c.l.b16 %v4392
    %v4473 = vunpack.c.l.b16 %v4393
    %v4474 = vunpack.c.l.b16 %v4394
    %v4475 = vpack.c.b16 %v4468, %v4467
    %v4476 = vpack.c.b16 %v4470, %v4469
    %v4477 = vpack.c.b16 %v4472, %v4471
    %v4478 = vpack.c.b16 %v4474, %v4473
    %v4484 = vsel %vm196, %v4458, 0
    %4486 = vmatprep.subr.bf16.mxu0 0
    %4487 = vmatpush1.bf16.msra.mxu0 %v4475
    %4488 = vmatprep.subr.bf16.mxu0 0
    %4489 = vmatpush1.bf16.msra.mxu0 %v4476
    %4490 = vmatprep.subr.bf16.mxu0 0
    %4491 = vmatpush1.bf16.msra.mxu0 %v4477
    %4492 = vmatprep.subr.bf16.mxu0 0
    %4493 = vmatpush1.bf16.msra.mxu0 %v4478
    %4494 = vmatprep.subr.bf16.mxu0 0
    %4495 = vmatpush1.bf16.msra.mxu0 0
    %4496 = vmatprep.subr.bf16.mxu0 0
    %4497 = vmatpush1.bf16.msra.mxu0 0
    %4498 = vmatprep.subr.bf16.mxu0 0
    %4499 = vmatpush1.bf16.msra.mxu0 0
    %4500 = vmatprep.subr.bf16.mxu0 0
    %4501 = vmatpush1.bf16.msra.mxu0 0
    %4502 = vmatprep.subr.bf16.mxu0 0
    %4503 = vmatpush1.bf16.msra.mxu0 0
    %4504 = vmatprep.subr.bf16.mxu0 0
    %4505 = vmatpush1.bf16.msra.mxu0 0
    %4506 = vmatprep.subr.bf16.mxu0 0
    %4507 = vmatpush1.bf16.msra.mxu0 0
    %4508 = vmatprep.subr.bf16.mxu0 0
    %4509 = vmatpush1.bf16.msra.mxu0 0
    %4510 = vmatprep.subr.bf16.mxu0 0
    %4511 = vmatpush1.bf16.msra.mxu0 0
    %4512 = vmatprep.subr.bf16.mxu0 0
    %4513 = vmatpush1.bf16.msra.mxu0 0
    %4514 = vmatprep.subr.bf16.mxu0 0
    %4515 = vmatpush1.bf16.msra.mxu0 0
    %4516 = vmatprep.subr.bf16.mxu0 0
    %4517 = vmatpush1.bf16.msra.mxu0 0
    %4518 = vmatprep.mubr.bf16.mxu0 0
    %4519 = vmatmul.mubr.bf16.gmra.mrb[0].mxu0 %v4484
    %v4520 = vpop.f32.mrb[0].mxu0
    %v4521 = vadd.f32 %v4411, %v4520
    %v4522 = vpop.f32.mrb[0].mxu0
    %v4523 = vpop.f32.mrb[0].mxu0
    %v4524 = vadd.f32 %v4411, %v4523
    %v4525 = vpop.f32.mrb[0].mxu0
    %4526 = vdwg.mxu0
    %v4527 = vadd.f32 %v3414, %v4521
    %v4528 = vadd.f32 %v3414, %v4524
    %4531 = vrot.lane.b32.xlu0 %v4521, 96
    %v4532 = vpop.permute.xlu0 %4531
    %4533 = vrot.lane.b32.xlu0 %v4524, 96
    %v4534 = vpop.permute.xlu0 %4533
    %v4537 = vadd.f32 %v4527, %v4532
    %v4538 = vadd.f32 %v4528, %v4534
    %v4539 = vld [vmem:[#allocation7 + $0x110] sm:$0x3]
    %v4540 = vsel %vm3416, %v4537, 0.0
    %4541 = vadd.xlane.f32.xlu0 %v4540
    %v4542 = vpop.xlane.xlu0 %4541
    %v4543 = vsel %vm3416, %v4538, 0.0
    %4544 = vadd.xlane.f32.xlu0 %v4543
    %v4545 = vpop.xlane.xlu0 %4544
    %v4546 = vmul.f32 %v4542, %v3420
    %v4547 = vmul.f32 %v4545, %v3420
    %v4548 = vsub.f32 %v4537, %v4546
    %v4549 = vsub.f32 %v4538, %v4547
    %v4550 = vmul.f32 %v4548, %v4548
    %v4551 = vmul.f32 %v4549, %v4549
    %v4552 = vsel %vm3416, %v4550, 0.0
    %4553 = vadd.xlane.f32.xlu0 %v4552
    %v4554 = vpop.xlane.xlu0 %4553
    %v4555 = vsel %vm3416, %v4551, 0.0
    %4556 = vadd.xlane.f32.xlu0 %v4555
    %v4557 = vpop.xlane.xlu0 %4556
    %v4558 = vmul.f32 %v4554, %v3420
    %v4559 = vmul.f32 %v4557, %v3420
    %v4560 = vadd.f32 %v4558, 1e-05
    %v4561 = vadd.f32 %v4559, 1e-05
    %v4562 = vrsqrt.pop %v4560
    %v4563 = vrsqrt.pop %v4561
    %v4564 = vmul.f32 %v4548, %v4562
    %v4565 = vmul.f32 %v4549, %v4563
    %v4566 = vlaneseq
    %v4567 = vshrl.u32 %v4566, 7
    %v4568 = vsub.s32 0, %v4567
    %v4569 = vrot.slane %v4539, %v4568
    %v4570 = vmul.f32 %v4564, %v4569
    %v4571 = vmul.f32 %v4565, %v4569
    %v4572 = vlaneseq
    %v4573 = vshrl.u32 %v4572, 7
    %v4574 = vsub.s32 1, %v4573
    %v4575 = vrot.slane %v4539, %v4574
    %v4576 = vadd.f32 %v4570, %v4575
    %v4577 = vadd.f32 %v4571, %v4575
    %v4578 = vld [vmem:[#allocation5 + $0x440] sm:$0xf]
    %v4579 = vld [vmem:[#allocation5 + $0x448] sm:$0xf]
    %v4580 = vld [vmem:[#allocation5 + $0x450] sm:$0xf]
    %v4581 = vld [vmem:[#allocation5 + $0x458] sm:$0xf]
    %v4582 = vld [vmem:[#allocation5 + $0x460] sm:$0xf]
    %v4583 = vld [vmem:[#allocation5 + $0x468] sm:$0xf]
    %v4584 = vld [vmem:[#allocation5 + $0x470] sm:$0xf]
    %v4585 = vld [vmem:[#allocation5 + $0x478] sm:$0xf]
    %v4586 = vld [vmem:[#allocation7 + $0x180] ss:$0 sm:$0xff]
    %v4595 = vunpack.c.l.b16 %v4578
    %v4596 = vunpack.c.l.b16 %v4579
    %v4597 = vunpack.c.l.b16 %v4580
    %v4598 = vunpack.c.l.b16 %v4581
    %v4599 = vunpack.c.l.b16 %v4582
    %v4600 = vunpack.c.l.b16 %v4583
    %v4601 = vunpack.c.l.b16 %v4584
    %v4602 = vunpack.c.l.b16 %v4585
    %v4603 = vpack.c.b16 %v4596, %v4595
    %v4604 = vpack.c.b16 %v4598, %v4597
    %v4605 = vpack.c.b16 %v4600, %v4599
    %v4606 = vpack.c.b16 %v4602, %v4601
    %4611 = vmatprep.subr.bf16.mxu0 0
    %4612 = vmatpush1.bf16.msra.mxu0 %v4603
    %4613 = vmatprep.subr.bf16.mxu0 0
    %4614 = vmatpush1.bf16.msra.mxu0 %v4604
    %4615 = vmatprep.subr.bf16.mxu0 0
    %4616 = vmatpush1.bf16.msra.mxu0 %v4605
    %4617 = vmatprep.subr.bf16.mxu0 0
    %4618 = vmatpush1.bf16.msra.mxu0 %v4606
    %4619 = vmatprep.subr.bf16.mxu0 0
    %4620 = vmatpush1.bf16.msra.mxu0 0
    %4621 = vmatprep.subr.bf16.mxu0 0
    %4622 = vmatpush1.bf16.msra.mxu0 0
    %4623 = vmatprep.subr.bf16.mxu0 0
    %4624 = vmatpush1.bf16.msra.mxu0 0
    %4625 = vmatprep.subr.bf16.mxu0 0
    %4626 = vmatpush1.bf16.msra.mxu0 0
    %4627 = vmatprep.subr.bf16.mxu0 0
    %4628 = vmatpush1.bf16.msra.mxu0 0
    %4629 = vmatprep.subr.bf16.mxu0 0
    %4630 = vmatpush1.bf16.msra.mxu0 0
    %4631 = vmatprep.subr.bf16.mxu0 0
    %4632 = vmatpush1.bf16.msra.mxu0 0
    %4633 = vmatprep.subr.bf16.mxu0 0
    %4634 = vmatpush1.bf16.msra.mxu0 0
    %4635 = vmatprep.subr.bf16.mxu0 0
    %4636 = vmatpush1.bf16.msra.mxu0 0
    %4637 = vmatprep.subr.bf16.mxu0 0
    %4638 = vmatpush1.bf16.msra.mxu0 0
    %4639 = vmatprep.subr.bf16.mxu0 0
    %4640 = vmatpush1.bf16.msra.mxu0 0
    %4641 = vmatprep.subr.bf16.mxu0 0
    %4642 = vmatpush1.bf16.msra.mxu0 0
    %4643 = vmatprep.mubr.bf16.mxu0 0
    %4644 = vmatmul.mubr.bf16.gmra.mrb[0].mxu0 %v3537
    %v4645 = vpop.f32.mrb[0].mxu0
    %v4646 = vadd.f32 %v4586, %v4645
    %v4647 = vpop.f32.mrb[0].mxu0
    %v4648 = vpop.f32.mrb[0].mxu0
    %v4649 = vadd.f32 %v4586, %v4648
    %v4650 = vpop.f32.mrb[0].mxu0
    %4651 = vdwg.mxu0
    %v4652 = vld [vmem:[#allocation7 + $0x190] sm:$0xff]
    %v4653 = vadd.f32 %v4646, %v4652
    %v4654 = vadd.f32 %v4649, %v4652
    %v4655 = vld [vmem:[#allocation5 + $0x480] sm:$0xf]
    %v4656 = vld [vmem:[#allocation5 + $0x488] sm:$0xf]
    %v4657 = vld [vmem:[#allocation5 + $0x490] sm:$0xf]
    %v4658 = vld [vmem:[#allocation5 + $0x498] sm:$0xf]
    %v4659 = vpack.c.bf16 %v4577, %v4576
    %v4660 = vld [vmem:[#allocation7 + $0x1a0] ss:$0 sm:$0xff]
    %v4665 = vunpack.c.l.b16 %v4655
    %v4666 = vunpack.c.l.b16 %v4656
    %v4667 = vunpack.c.l.b16 %v4657
    %v4668 = vunpack.c.l.b16 %v4658
    %v4669 = vpack.c.b16 %v4666, %v4665
    %v4670 = vpack.c.b16 %v4668, %v4667
    %v4674 = vsel %vm3416, %v4659, 0
    %4676 = vmatprep.subr.bf16.mxu0 0
    %4677 = vmatpush1.bf16.msra.mxu0 %v4669
    %4678 = vmatprep.subr.bf16.mxu0 0
    %4679 = vmatpush1.bf16.msra.mxu0 %v4670
    %4680 = vmatprep.subr.bf16.mxu0 0
    %4681 = vmatpush1.bf16.msra.mxu0 0
    %4682 = vmatprep.subr.bf16.mxu0 0
    %4683 = vmatpush1.bf16.msra.mxu0 0
    %4684 = vmatprep.subr.bf16.mxu0 0
    %4685 = vmatpush1.bf16.msra.mxu0 0
    %4686 = vmatprep.subr.bf16.mxu0 0
    %4687 = vmatpush1.bf16.msra.mxu0 0
    %4688 = vmatprep.subr.bf16.mxu0 0
    %4689 = vmatpush1.bf16.msra.mxu0 0
    %4690 = vmatprep.subr.bf16.mxu0 0
    %4691 = vmatpush1.bf16.msra.mxu0 0
    %4692 = vmatprep.subr.bf16.mxu0 0
    %4693 = vmatpush1.bf16.msra.mxu0 0
    %4694 = vmatprep.subr.bf16.mxu0 0
    %4695 = vmatpush1.bf16.msra.mxu0 0
    %4696 = vmatprep.subr.bf16.mxu0 0
    %4697 = vmatpush1.bf16.msra.mxu0 0
    %4698 = vmatprep.subr.bf16.mxu0 0
    %4699 = vmatpush1.bf16.msra.mxu0 0
    %4700 = vmatprep.subr.bf16.mxu0 0
    %4701 = vmatpush1.bf16.msra.mxu0 0
    %4702 = vmatprep.subr.bf16.mxu0 0
    %4703 = vmatpush1.bf16.msra.mxu0 0
    %4704 = vmatprep.subr.bf16.mxu0 0
    %4705 = vmatpush1.bf16.msra.mxu0 0
    %4706 = vmatprep.subr.bf16.mxu0 0
    %4707 = vmatpush1.bf16.msra.mxu0 0
    %4708 = vmatprep.mubr.bf16.mxu0 0
    %4709 = vmatmul.mubr.bf16.gmra.mrb[0].mxu0 %v4674
    %v4710 = vpop.f32.mrb[0].mxu0
    %v4711 = vadd.f32 %v4660, %v4710
    %v4712 = vpop.f32.mrb[0].mxu0
    %v4713 = vpop.f32.mrb[0].mxu0
    %v4714 = vadd.f32 %v4660, %v4713
    %v4715 = vpop.f32.mrb[0].mxu0
    %4716 = vdwg.mxu0
    %v4719 = vcombine.high %v4653, %v4653
    %v4721 = vunpack.c.l.s4 1966171168
    %v4722 = vunpack.c.0.s8 %v4721
    %v4723 = vlaneseq
    %v4724 = vshrl.u32 %v4723, 7
    %v4725 = vsub.s32 %v4722, %v4724
    %v4726 = vrot.slane %v4653, %v4725
    %v4728 = vunpack.c.l.s4 1966171168
    %v4729 = vunpack.c.0.s8 %v4728
    %v4730 = vlaneseq
    %v4731 = vshrl.u32 %v4730, 7
    %v4732 = vsub.s32 %v4729, %v4731
    %v4733 = vrot.slane %v4719, %v4732
    %v4734 = vcombine.high %v4726, %v4726
    %v4735 = vcombine.high %v4733, %v4733
    %v4737 = vunpack.c.l.s4 1966171168
    %v4738 = vunpack.c.0.s8 %v4737
    %v4739 = vlaneseq
    %v4740 = vshrl.u32 %v4739, 7
    %v4741 = vsub.s32 %v4738, %v4740
    %v4742 = vrot.slane %v4726, %v4741
    %v4744 = vunpack.c.l.s4 1966171168
    %v4745 = vunpack.c.0.s8 %v4744
    %v4746 = vlaneseq
    %v4747 = vshrl.u32 %v4746, 7
    %v4748 = vsub.s32 %v4745, %v4747
    %v4749 = vrot.slane %v4733, %v4748
    %v4751 = vunpack.c.l.s4 1966171168
    %v4752 = vunpack.c.0.s8 %v4751
    %v4753 = vlaneseq
    %v4754 = vshrl.u32 %v4753, 7
    %v4755 = vsub.s32 %v4752, %v4754
    %v4756 = vrot.slane %v4734, %v4755
    %v4758 = vunpack.c.l.s4 1966171168
    %v4759 = vunpack.c.0.s8 %v4758
    %v4760 = vlaneseq
    %v4761 = vshrl.u32 %v4760, 7
    %v4762 = vsub.s32 %v4759, %v4761
    %v4763 = vrot.slane %v4735, %v4762
    %v4764 = vcombine.high %v4742, %v4742
    %v4765 = vcombine.high %v4749, %v4749
    %v4766 = vcombine.high %v4756, %v4756
    %v4767 = vcombine.high %v4763, %v4763
    %v4768 = vcombine.high %v4654, %v4654
    %v4770 = vunpack.c.l.s4 1966171168
    %v4771 = vunpack.c.0.s8 %v4770
    %v4772 = vlaneseq
    %v4773 = vshrl.u32 %v4772, 7
    %v4774 = vsub.s32 %v4771, %v4773
    %v4775 = vrot.slane %v4654, %v4774
    %v4777 = vunpack.c.l.s4 1966171168
    %v4778 = vunpack.c.0.s8 %v4777
    %v4779 = vlaneseq
    %v4780 = vshrl.u32 %v4779, 7
    %v4781 = vsub.s32 %v4778, %v4780
    %v4782 = vrot.slane %v4768, %v4781
    %v4783 = vcombine.high %v4775, %v4775
    %v4784 = vcombine.high %v4782, %v4782
    %v4786 = vunpack.c.l.s4 1966171168
    %v4787 = vunpack.c.0.s8 %v4786
    %v4788 = vlaneseq
    %v4789 = vshrl.u32 %v4788, 7
    %v4790 = vsub.s32 %v4787, %v4789
    %v4791 = vrot.slane %v4775, %v4790
    %v4793 = vunpack.c.l.s4 1966171168
    %v4794 = vunpack.c.0.s8 %v4793
    %v4795 = vlaneseq
    %v4796 = vshrl.u32 %v4795, 7
    %v4797 = vsub.s32 %v4794, %v4796
    %v4798 = vrot.slane %v4782, %v4797
    %v4800 = vunpack.c.l.s4 1966171168
    %v4801 = vunpack.c.0.s8 %v4800
    %v4802 = vlaneseq
    %v4803 = vshrl.u32 %v4802, 7
    %v4804 = vsub.s32 %v4801, %v4803
    %v4805 = vrot.slane %v4783, %v4804
    %v4807 = vunpack.c.l.s4 1966171168
    %v4808 = vunpack.c.0.s8 %v4807
    %v4809 = vlaneseq
    %v4810 = vshrl.u32 %v4809, 7
    %v4811 = vsub.s32 %v4808, %v4810
    %v4812 = vrot.slane %v4784, %v4811
    %v4813 = vcombine.high %v4791, %v4791
    %v4814 = vcombine.high %v4798, %v4798
    %v4815 = vcombine.high %v4805, %v4805
    %v4816 = vcombine.high %v4812, %v4812
    %v4817 = vlaneseq
    %v4818 = vshrl.u32 %v4817, 7
    %v4819 = vsub.s32 0, %v4818
    %v4820 = vrot.slane %v4742, %v4819
    %v4821 = vlaneseq
    %v4822 = vshrl.u32 %v4821, 7
    %v4823 = vsub.s32 0, %v4822
    %v4824 = vrot.slane %v4756, %v4823
    %v4825 = vlaneseq
    %v4826 = vshrl.u32 %v4825, 7
    %v4827 = vsub.s32 0, %v4826
    %v4828 = vrot.slane %v4764, %v4827
    %v4829 = vlaneseq
    %v4830 = vshrl.u32 %v4829, 7
    %v4831 = vsub.s32 0, %v4830
    %v4832 = vrot.slane %v4766, %v4831
    %v4833 = vlaneseq
    %v4834 = vshrl.u32 %v4833, 7
    %v4835 = vsub.s32 0, %v4834
    %v4836 = vrot.slane %v4749, %v4835
    %v4837 = vlaneseq
    %v4838 = vshrl.u32 %v4837, 7
    %v4839 = vsub.s32 0, %v4838
    %v4840 = vrot.slane %v4763, %v4839
    %v4841 = vlaneseq
    %v4842 = vshrl.u32 %v4841, 7
    %v4843 = vsub.s32 0, %v4842
    %v4844 = vrot.slane %v4765, %v4843
    %v4845 = vlaneseq
    %v4846 = vshrl.u32 %v4845, 7
    %v4847 = vsub.s32 0, %v4846
    %v4848 = vrot.slane %v4767, %v4847
    %v4849 = vlaneseq
    %v4850 = vshrl.u32 %v4849, 7
    %v4851 = vsub.s32 0, %v4850
    %v4852 = vrot.slane %v4791, %v4851
    %v4853 = vlaneseq
    %v4854 = vshrl.u32 %v4853, 7
    %v4855 = vsub.s32 0, %v4854
    %v4856 = vrot.slane %v4805, %v4855
    %v4857 = vlaneseq
    %v4858 = vshrl.u32 %v4857, 7
    %v4859 = vsub.s32 0, %v4858
    %v4860 = vrot.slane %v4813, %v4859
    %v4861 = vlaneseq
    %v4862 = vshrl.u32 %v4861, 7
    %v4863 = vsub.s32 0, %v4862
    %v4864 = vrot.slane %v4815, %v4863
    %v4865 = vlaneseq
    %v4866 = vshrl.u32 %v4865, 7
    %v4867 = vsub.s32 0, %v4866
    %v4868 = vrot.slane %v4798, %v4867
    %v4869 = vlaneseq
    %v4870 = vshrl.u32 %v4869, 7
    %v4871 = vsub.s32 0, %v4870
    %v4872 = vrot.slane %v4812, %v4871
    %v4873 = vlaneseq
    %v4874 = vshrl.u32 %v4873, 7
    %v4875 = vsub.s32 0, %v4874
    %v4876 = vrot.slane %v4814, %v4875
    %v4877 = vlaneseq
    %v4878 = vshrl.u32 %v4877, 7
    %v4879 = vsub.s32 0, %v4878
    %v4880 = vrot.slane %v4816, %v4879
    %v4897 = vmul.f32 %v4820, %v4711
    %v4898 = vmul.f32 %v4824, %v4711
    %v4899 = vmul.f32 %v4828, %v4711
    %v4900 = vmul.f32 %v4832, %v4711
    %v4901 = vmul.f32 %v4836, %v4711
    %v4902 = vmul.f32 %v4840, %v4711
    %v4903 = vmul.f32 %v4844, %v4711
    %v4904 = vmul.f32 %v4848, %v4711
    %v4905 = vmul.f32 %v4852, %v4714
    %v4906 = vmul.f32 %v4856, %v4714
    %v4907 = vmul.f32 %v4860, %v4714
    %v4908 = vmul.f32 %v4864, %v4714
    %v4909 = vmul.f32 %v4868, %v4714
    %v4910 = vmul.f32 %v4872, %v4714
    %v4911 = vmul.f32 %v4876, %v4714
    %v4912 = vmul.f32 %v4880, %v4714
    %v4913 = vpack.c.bf16 %v4898, %v4897
    %v4914 = vpack.c.bf16 %v4900, %v4899
    %v4915 = vpack.c.bf16 %v4902, %v4901
    %v4916 = vpack.c.bf16 %v4904, %v4903
    %v4917 = vpack.c.bf16 %v4906, %v4905
    %v4918 = vpack.c.bf16 %v4908, %v4907
    %v4919 = vpack.c.bf16 %v4910, %v4909
    %v4920 = vpack.c.bf16 %v4912, %v4911
    %v4922 = vsel %vm196, %v4913, 0
    %v4925 = vsel %vm196, %v4914, 0
    %v4928 = vsel %vm196, %v4915, 0
    %v4931 = vsel %vm196, %v4916, 0
    %v4934 = vsel %vm196, %v4917, 0
    %v4937 = vsel %vm196, %v4918, 0
    %v4940 = vsel %vm196, %v4919, 0
    %v4943 = vsel %vm196, %v4920, 0
    %4945 = vmatprep.subr.bf16.mxu0 0
    %4946 = vmatpush1.bf16.msra.mxu0 %v469
    %4947 = vmatprep.subr.bf16.mxu0 0
    %4948 = vmatpush1.bf16.msra.mxu0 %v470
    %4949 = vmatprep.subr.bf16.mxu0 0
    %4950 = vmatpush1.bf16.msra.mxu0 %v471
    %4951 = vmatprep.subr.bf16.mxu0 0
    %4952 = vmatpush1.bf16.msra.mxu0 %v472
    %4953 = vmatprep.subr.bf16.mxu0 0
    %4954 = vmatpush1.bf16.msra.mxu0 0
    %4955 = vmatprep.subr.bf16.mxu0 0
    %4956 = vmatpush1.bf16.msra.mxu0 0
    %4957 = vmatprep.subr.bf16.mxu0 0
    %4958 = vmatpush1.bf16.msra.mxu0 0
    %4959 = vmatprep.subr.bf16.mxu0 0
    %4960 = vmatpush1.bf16.msra.mxu0 0
    %4961 = vmatprep.subr.bf16.mxu0 0
    %4962 = vmatpush1.bf16.msra.mxu0 0
    %4963 = vmatprep.subr.bf16.mxu0 0
    %4964 = vmatpush1.bf16.msra.mxu0 0
    %4965 = vmatprep.subr.bf16.mxu0 0
    %4966 = vmatpush1.bf16.msra.mxu0 0
    %4967 = vmatprep.subr.bf16.mxu0 0
    %4968 = vmatpush1.bf16.msra.mxu0 0
    %4969 = vmatprep.subr.bf16.mxu0 0
    %4970 = vmatpush1.bf16.msra.mxu0 0
    %4971 = vmatprep.subr.bf16.mxu0 0
    %4972 = vmatpush1.bf16.msra.mxu0 0
    %4973 = vmatprep.subr.bf16.mxu0 0
    %4974 = vmatpush1.bf16.msra.mxu0 0
    %4975 = vmatprep.subr.bf16.mxu0 0
    %4976 = vmatpush1.bf16.msra.mxu0 0
    %4977 = vmatprep.mubr.bf16.mxu0 0
    %4978 = vmatmul.mubr.bf16.gmra.mrb[0].mxu0 %v4922
    %v4979 = vpop.f32.mrb[0].mxu0
    %v4980 = vadd.f32 0.0, %v4979
    %v4981 = vpop.f32.mrb[0].mxu0
    %v4982 = vpop.f32.mrb[0].mxu0
    %v4983 = vadd.f32 0.0, %v4982
    %v4984 = vpop.f32.mrb[0].mxu0
    %4985 = vmatprep.mubr.bf16.mxu0 0
    %4986 = vmatmul.mubr.bf16.gmra.mrb[0].mxu0 %v4925
    %v4987 = vpop.f32.mrb[0].mxu0
    %v4988 = vadd.f32 0.0, %v4987
    %v4989 = vpop.f32.mrb[0].mxu0
    %v4990 = vpop.f32.mrb[0].mxu0
    %v4991 = vadd.f32 0.0, %v4990
    %v4992 = vpop.f32.mrb[0].mxu0
    %4993 = vmatprep.mubr.bf16.mxu0 0
    %4994 = vmatmul.mubr.bf16.gmra.mrb[0].mxu0 %v4928
    %v4995 = vpop.f32.mrb[0].mxu0
    %v4996 = vadd.f32 0.0, %v4995
    %v4997 = vpop.f32.mrb[0].mxu0
    %v4998 = vpop.f32.mrb[0].mxu0
    %v4999 = vadd.f32 0.0, %v4998
    %v5000 = vpop.f32.mrb[0].mxu0
    %5001 = vmatprep.mubr.bf16.mxu0 0
    %5002 = vmatmul.mubr.bf16.gmra.mrb[0].mxu0 %v4931
    %v5003 = vpop.f32.mrb[0].mxu0
    %v5004 = vadd.f32 0.0, %v5003
    %v5005 = vpop.f32.mrb[0].mxu0
    %v5006 = vpop.f32.mrb[0].mxu0
    %v5007 = vadd.f32 0.0, %v5006
    %v5008 = vpop.f32.mrb[0].mxu0
    %5009 = vmatprep.mubr.bf16.mxu0 0
    %5010 = vmatmul.mubr.bf16.gmra.mrb[0].mxu0 %v4934
    %v5011 = vpop.f32.mrb[0].mxu0
    %v5012 = vadd.f32 0.0, %v5011
    %v5013 = vpop.f32.mrb[0].mxu0
    %v5014 = vpop.f32.mrb[0].mxu0
    %v5015 = vadd.f32 0.0, %v5014
    %v5016 = vpop.f32.mrb[0].mxu0
    %5017 = vmatprep.mubr.bf16.mxu0 0
    %5018 = vmatmul.mubr.bf16.gmra.mrb[0].mxu0 %v4937
    %v5019 = vpop.f32.mrb[0].mxu0
    %v5020 = vadd.f32 0.0, %v5019
    %v5021 = vpop.f32.mrb[0].mxu0
    %v5022 = vpop.f32.mrb[0].mxu0
    %v5023 = vadd.f32 0.0, %v5022
    %v5024 = vpop.f32.mrb[0].mxu0
    %5025 = vmatprep.mubr.bf16.mxu0 0
    %5026 = vmatmul.mubr.bf16.gmra.mrb[0].mxu0 %v4940
    %v5027 = vpop.f32.mrb[0].mxu0
    %v5028 = vadd.f32 0.0, %v5027
    %v5029 = vpop.f32.mrb[0].mxu0
    %v5030 = vpop.f32.mrb[0].mxu0
    %v5031 = vadd.f32 0.0, %v5030
    %v5032 = vpop.f32.mrb[0].mxu0
    %5033 = vmatprep.mubr.bf16.mxu0 0
    %5034 = vmatmul.mubr.bf16.gmra.mrb[0].mxu0 %v4943
    %v5035 = vpop.f32.mrb[0].mxu0
    %v5036 = vadd.f32 0.0, %v5035
    %v5037 = vpop.f32.mrb[0].mxu0
    %v5038 = vpop.f32.mrb[0].mxu0
    %v5039 = vadd.f32 0.0, %v5038
    %v5040 = vpop.f32.mrb[0].mxu0
    %5041 = vdwg.mxu0
    %v5042 = vlaneseq
    %v5043 = vshrl.u32 %v5042, 7
    %vm5044 = vcmp.lt.s32.totalorder %v5043, 4
    %v5045 = vsel %vm5044, %v4980, -1e+30
    %v5046 = vsel %vm5044, %v4983, -1e+30
    %v5047 = vsel %vm5044, %v4988, -1e+30
    %v5048 = vsel %vm5044, %v4991, -1e+30
    %v5049 = vsel %vm5044, %v4996, -1e+30
    %v5050 = vsel %vm5044, %v4999, -1e+30
    %v5051 = vsel %vm5044, %v5004, -1e+30
    %v5052 = vsel %vm5044, %v5007, -1e+30
    %v5053 = vsel %vm5044, %v5012, -1e+30
    %v5054 = vsel %vm5044, %v5015, -1e+30
    %v5055 = vsel %vm5044, %v5020, -1e+30
    %v5056 = vsel %vm5044, %v5023, -1e+30
    %v5057 = vsel %vm5044, %v5028, -1e+30
    %v5058 = vsel %vm5044, %v5031, -1e+30
    %v5059 = vsel %vm5044, %v5036, -1e+30
    %v5060 = vsel %vm5044, %v5039, -1e+30
    %v5061 = vsel %vm598, %v5045, -inf
    %v5062 = vrot.slane %v5061, 4
    %v5063 = vmax.f32 %v5061, %v5062
    %v5064 = vrot.slane %v5063, 2
    %v5065 = vmax.f32 %v5063, %v5064
    %v5066 = vrot.slane %v5065, 1
    %v5067 = vmax.f32 %v5065, %v5066
    %v5068 = vsel %vm598, %v5046, -inf
    %v5069 = vrot.slane %v5068, 4
    %v5070 = vmax.f32 %v5068, %v5069
    %v5071 = vrot.slane %v5070, 2
    %v5072 = vmax.f32 %v5070, %v5071
    %v5073 = vrot.slane %v5072, 1
    %v5074 = vmax.f32 %v5072, %v5073
    %v5075 = vsel %vm598, %v5047, -inf
    %v5076 = vrot.slane %v5075, 4
    %v5077 = vmax.f32 %v5075, %v5076
    %v5078 = vrot.slane %v5077, 2
    %v5079 = vmax.f32 %v5077, %v5078
    %v5080 = vrot.slane %v5079, 1
    %v5081 = vmax.f32 %v5079, %v5080
    %v5082 = vsel %vm598, %v5048, -inf
    %v5083 = vrot.slane %v5082, 4
    %v5084 = vmax.f32 %v5082, %v5083
    %v5085 = vrot.slane %v5084, 2
    %v5086 = vmax.f32 %v5084, %v5085
    %v5087 = vrot.slane %v5086, 1
    %v5088 = vmax.f32 %v5086, %v5087
    %v5089 = vsel %vm598, %v5049, -inf
    %v5090 = vrot.slane %v5089, 4
    %v5091 = vmax.f32 %v5089, %v5090
    %v5092 = vrot.slane %v5091, 2
    %v5093 = vmax.f32 %v5091, %v5092
    %v5094 = vrot.slane %v5093, 1
    %v5095 = vmax.f32 %v5093, %v5094
    %v5096 = vsel %vm598, %v5050, -inf
    %v5097 = vrot.slane %v5096, 4
    %v5098 = vmax.f32 %v5096, %v5097
    %v5099 = vrot.slane %v5098, 2
    %v5100 = vmax.f32 %v5098, %v5099
    %v5101 = vrot.slane %v5100, 1
    %v5102 = vmax.f32 %v5100, %v5101
    %v5103 = vsel %vm598, %v5051, -inf
    %v5104 = vrot.slane %v5103, 4
    %v5105 = vmax.f32 %v5103, %v5104
    %v5106 = vrot.slane %v5105, 2
    %v5107 = vmax.f32 %v5105, %v5106
    %v5108 = vrot.slane %v5107, 1
    %v5109 = vmax.f32 %v5107, %v5108
    %v5110 = vsel %vm598, %v5052, -inf
    %v5111 = vrot.slane %v5110, 4
    %v5112 = vmax.f32 %v5110, %v5111
    %v5113 = vrot.slane %v5112, 2
    %v5114 = vmax.f32 %v5112, %v5113
    %v5115 = vrot.slane %v5114, 1
    %v5116 = vmax.f32 %v5114, %v5115
    %v5117 = vsel %vm598, %v5053, -inf
    %v5118 = vrot.slane %v5117, 4
    %v5119 = vmax.f32 %v5117, %v5118
    %v5120 = vrot.slane %v5119, 2
    %v5121 = vmax.f32 %v5119, %v5120
    %v5122 = vrot.slane %v5121, 1
    %v5123 = vmax.f32 %v5121, %v5122
    %v5124 = vsel %vm598, %v5054, -inf
    %v5125 = vrot.slane %v5124, 4
    %v5126 = vmax.f32 %v5124, %v5125
    %v5127 = vrot.slane %v5126, 2
    %v5128 = vmax.f32 %v5126, %v5127
    %v5129 = vrot.slane %v5128, 1
    %v5130 = vmax.f32 %v5128, %v5129
    %v5131 = vsel %vm598, %v5055, -inf
    %v5132 = vrot.slane %v5131, 4
    %v5133 = vmax.f32 %v5131, %v5132
    %v5134 = vrot.slane %v5133, 2
    %v5135 = vmax.f32 %v5133, %v5134
    %v5136 = vrot.slane %v5135, 1
    %v5137 = vmax.f32 %v5135, %v5136
    %v5138 = vsel %vm598, %v5056, -inf
    %v5139 = vrot.slane %v5138, 4
    %v5140 = vmax.f32 %v5138, %v5139
    %v5141 = vrot.slane %v5140, 2
    %v5142 = vmax.f32 %v5140, %v5141
    %v5143 = vrot.slane %v5142, 1
    %v5144 = vmax.f32 %v5142, %v5143
    %v5145 = vsel %vm598, %v5057, -inf
    %v5146 = vrot.slane %v5145, 4
    %v5147 = vmax.f32 %v5145, %v5146
    %v5148 = vrot.slane %v5147, 2
    %v5149 = vmax.f32 %v5147, %v5148
    %v5150 = vrot.slane %v5149, 1
    %v5151 = vmax.f32 %v5149, %v5150
    %v5152 = vsel %vm598, %v5058, -inf
    %v5153 = vrot.slane %v5152, 4
    %v5154 = vmax.f32 %v5152, %v5153
    %v5155 = vrot.slane %v5154, 2
    %v5156 = vmax.f32 %v5154, %v5155
    %v5157 = vrot.slane %v5156, 1
    %v5158 = vmax.f32 %v5156, %v5157
    %v5159 = vsel %vm598, %v5059, -inf
    %v5160 = vrot.slane %v5159, 4
    %v5161 = vmax.f32 %v5159, %v5160
    %v5162 = vrot.slane %v5161, 2
    %v5163 = vmax.f32 %v5161, %v5162
    %v5164 = vrot.slane %v5163, 1
    %v5165 = vmax.f32 %v5163, %v5164
    %v5166 = vsel %vm598, %v5060, -inf
    %v5167 = vrot.slane %v5166, 4
    %v5168 = vmax.f32 %v5166, %v5167
    %v5169 = vrot.slane %v5168, 2
    %v5170 = vmax.f32 %v5168, %v5169
    %v5171 = vrot.slane %v5170, 1
    %v5172 = vmax.f32 %v5170, %v5171
    %v5173 = vsub.f32 %v5045, %v5067
    %v5174 = vsub.f32 %v5046, %v5074
    %v5175 = vsub.f32 %v5047, %v5081
    %v5176 = vsub.f32 %v5048, %v5088
    %v5177 = vsub.f32 %v5049, %v5095
    %v5178 = vsub.f32 %v5050, %v5102
    %v5179 = vsub.f32 %v5051, %v5109
    %v5180 = vsub.f32 %v5052, %v5116
    %v5181 = vsub.f32 %v5053, %v5123
    %v5182 = vsub.f32 %v5054, %v5130
    %v5183 = vsub.f32 %v5055, %v5137
    %v5184 = vsub.f32 %v5056, %v5144
    %v5185 = vsub.f32 %v5057, %v5151
    %v5186 = vsub.f32 %v5058, %v5158
    %v5187 = vsub.f32 %v5059, %v5165
    %v5188 = vsub.f32 %v5060, %v5172
    %v5189 = vmul.f32 %v5173, 1.442695
    %v5190 = vpow.pop %v5189
    %v5191 = vmul.f32 %v5174, 1.442695
    %v5192 = vpow.pop %v5191
    %v5193 = vmul.f32 %v5175, 1.442695
    %v5194 = vpow.pop %v5193
    %v5195 = vmul.f32 %v5176, 1.442695
    %v5196 = vpow.pop %v5195
    %v5197 = vmul.f32 %v5177, 1.442695
    %v5198 = vpow.pop %v5197
    %v5199 = vmul.f32 %v5178, 1.442695
    %v5200 = vpow.pop %v5199
    %v5201 = vmul.f32 %v5179, 1.442695
    %v5202 = vpow.pop %v5201
    %v5203 = vmul.f32 %v5180, 1.442695
    %v5204 = vpow.pop %v5203
    %v5205 = vmul.f32 %v5181, 1.442695
    %v5206 = vpow.pop %v5205
    %v5207 = vmul.f32 %v5182, 1.442695
    %v5208 = vpow.pop %v5207
    %v5209 = vmul.f32 %v5183, 1.442695
    %v5210 = vpow.pop %v5209
    %v5211 = vmul.f32 %v5184, 1.442695
    %v5212 = vpow.pop %v5211
    %v5213 = vmul.f32 %v5185, 1.442695
    %v5214 = vpow.pop %v5213
    %v5215 = vmul.f32 %v5186, 1.442695
    %v5216 = vpow.pop %v5215
    %v5217 = vmul.f32 %v5187, 1.442695
    %v5218 = vpow.pop %v5217
    %v5219 = vmul.f32 %v5188, 1.442695
    %v5220 = vpow.pop %v5219
    %v5221 = vsel %vm598, %v5190, 0.0
    %v5222 = vrot.slane %v5221, 4
    %v5223 = vadd.f32 %v5221, %v5222
    %v5224 = vrot.slane %v5223, 2
    %v5225 = vadd.f32 %v5223, %v5224
    %v5226 = vrot.slane %v5225, 1
    %v5227 = vadd.f32 %v5225, %v5226
    %v5228 = vsel %vm598, %v5192, 0.0
    %v5229 = vrot.slane %v5228, 4
    %v5230 = vadd.f32 %v5228, %v5229
    %v5231 = vrot.slane %v5230, 2
    %v5232 = vadd.f32 %v5230, %v5231
    %v5233 = vrot.slane %v5232, 1
    %v5234 = vadd.f32 %v5232, %v5233
    %v5235 = vsel %vm598, %v5194, 0.0
    %v5236 = vrot.slane %v5235, 4
    %v5237 = vadd.f32 %v5235, %v5236
    %v5238 = vrot.slane %v5237, 2
    %v5239 = vadd.f32 %v5237, %v5238
    %v5240 = vrot.slane %v5239, 1
    %v5241 = vadd.f32 %v5239, %v5240
    %v5242 = vsel %vm598, %v5196, 0.0
    %v5243 = vrot.slane %v5242, 4
    %v5244 = vadd.f32 %v5242, %v5243
    %v5245 = vrot.slane %v5244, 2
    %v5246 = vadd.f32 %v5244, %v5245
    %v5247 = vrot.slane %v5246, 1
    %v5248 = vadd.f32 %v5246, %v5247
    %v5249 = vsel %vm598, %v5198, 0.0
    %v5250 = vrot.slane %v5249, 4
    %v5251 = vadd.f32 %v5249, %v5250
    %v5252 = vrot.slane %v5251, 2
    %v5253 = vadd.f32 %v5251, %v5252
    %v5254 = vrot.slane %v5253, 1
    %v5255 = vadd.f32 %v5253, %v5254
    %v5256 = vsel %vm598, %v5200, 0.0
    %v5257 = vrot.slane %v5256, 4
    %v5258 = vadd.f32 %v5256, %v5257
    %v5259 = vrot.slane %v5258, 2
    %v5260 = vadd.f32 %v5258, %v5259
    %v5261 = vrot.slane %v5260, 1
    %v5262 = vadd.f32 %v5260, %v5261
    %v5263 = vsel %vm598, %v5202, 0.0
    %v5264 = vrot.slane %v5263, 4
    %v5265 = vadd.f32 %v5263, %v5264
    %v5266 = vrot.slane %v5265, 2
    %v5267 = vadd.f32 %v5265, %v5266
    %v5268 = vrot.slane %v5267, 1
    %v5269 = vadd.f32 %v5267, %v5268
    %v5270 = vsel %vm598, %v5204, 0.0
    %v5271 = vrot.slane %v5270, 4
    %v5272 = vadd.f32 %v5270, %v5271
    %v5273 = vrot.slane %v5272, 2
    %v5274 = vadd.f32 %v5272, %v5273
    %v5275 = vrot.slane %v5274, 1
    %v5276 = vadd.f32 %v5274, %v5275
    %v5277 = vsel %vm598, %v5206, 0.0
    %v5278 = vrot.slane %v5277, 4
    %v5279 = vadd.f32 %v5277, %v5278
    %v5280 = vrot.slane %v5279, 2
    %v5281 = vadd.f32 %v5279, %v5280
    %v5282 = vrot.slane %v5281, 1
    %v5283 = vadd.f32 %v5281, %v5282
    %v5284 = vsel %vm598, %v5208, 0.0
    %v5285 = vrot.slane %v5284, 4
    %v5286 = vadd.f32 %v5284, %v5285
    %v5287 = vrot.slane %v5286, 2
    %v5288 = vadd.f32 %v5286, %v5287
    %v5289 = vrot.slane %v5288, 1
    %v5290 = vadd.f32 %v5288, %v5289
    %v5291 = vsel %vm598, %v5210, 0.0
    %v5292 = vrot.slane %v5291, 4
    %v5293 = vadd.f32 %v5291, %v5292
    %v5294 = vrot.slane %v5293, 2
    %v5295 = vadd.f32 %v5293, %v5294
    %v5296 = vrot.slane %v5295, 1
    %v5297 = vadd.f32 %v5295, %v5296
    %v5298 = vsel %vm598, %v5212, 0.0
    %v5299 = vrot.slane %v5298, 4
    %v5300 = vadd.f32 %v5298, %v5299
    %v5301 = vrot.slane %v5300, 2
    %v5302 = vadd.f32 %v5300, %v5301
    %v5303 = vrot.slane %v5302, 1
    %v5304 = vadd.f32 %v5302, %v5303
    %v5305 = vsel %vm598, %v5214, 0.0
    %v5306 = vrot.slane %v5305, 4
    %v5307 = vadd.f32 %v5305, %v5306
    %v5308 = vrot.slane %v5307, 2
    %v5309 = vadd.f32 %v5307, %v5308
    %v5310 = vrot.slane %v5309, 1
    %v5311 = vadd.f32 %v5309, %v5310
    %v5312 = vsel %vm598, %v5216, 0.0
    %v5313 = vrot.slane %v5312, 4
    %v5314 = vadd.f32 %v5312, %v5313
    %v5315 = vrot.slane %v5314, 2
    %v5316 = vadd.f32 %v5314, %v5315
    %v5317 = vrot.slane %v5316, 1
    %v5318 = vadd.f32 %v5316, %v5317
    %v5319 = vsel %vm598, %v5218, 0.0
    %v5320 = vrot.slane %v5319, 4
    %v5321 = vadd.f32 %v5319, %v5320
    %v5322 = vrot.slane %v5321, 2
    %v5323 = vadd.f32 %v5321, %v5322
    %v5324 = vrot.slane %v5323, 1
    %v5325 = vadd.f32 %v5323, %v5324
    %v5326 = vsel %vm598, %v5220, 0.0
    %v5327 = vrot.slane %v5326, 4
    %v5328 = vadd.f32 %v5326, %v5327
    %v5329 = vrot.slane %v5328, 2
    %v5330 = vadd.f32 %v5328, %v5329
    %v5331 = vrot.slane %v5330, 1
    %v5332 = vadd.f32 %v5330, %v5331
    %v5333 = vrcp.pop %v5227
    %v5334 = vrcp.pop %v5234
    %v5335 = vrcp.pop %v5241
    %v5336 = vrcp.pop %v5248
    %v5337 = vrcp.pop %v5255
    %v5338 = vrcp.pop %v5262
    %v5339 = vrcp.pop %v5269
    %v5340 = vrcp.pop %v5276
    %v5341 = vrcp.pop %v5283
    %v5342 = vrcp.pop %v5290
    %v5343 = vrcp.pop %v5297
    %v5344 = vrcp.pop %v5304
    %v5345 = vrcp.pop %v5311
    %v5346 = vrcp.pop %v5318
    %v5347 = vrcp.pop %v5325
    %v5348 = vrcp.pop %v5332
    %v5349 = vmul.f32 %v5190, %v5333
    %v5350 = vmul.f32 %v5192, %v5334
    %v5351 = vmul.f32 %v5194, %v5335
    %v5352 = vmul.f32 %v5196, %v5336
    %v5353 = vmul.f32 %v5198, %v5337
    %v5354 = vmul.f32 %v5200, %v5338
    %v5355 = vmul.f32 %v5202, %v5339
    %v5356 = vmul.f32 %v5204, %v5340
    %v5357 = vmul.f32 %v5206, %v5341
    %v5358 = vmul.f32 %v5208, %v5342
    %v5359 = vmul.f32 %v5210, %v5343
    %v5360 = vmul.f32 %v5212, %v5344
    %v5361 = vmul.f32 %v5214, %v5345
    %v5362 = vmul.f32 %v5216, %v5346
    %v5363 = vmul.f32 %v5218, %v5347
    %v5364 = vmul.f32 %v5220, %v5348
    %v5365 = vpack.c.bf16 %v5350, %v5349
    %v5366 = vpack.c.bf16 %v5352, %v5351
    %v5367 = vpack.c.bf16 %v5354, %v5353
    %v5368 = vpack.c.bf16 %v5356, %v5355
    %v5369 = vpack.c.bf16 %v5358, %v5357
    %v5370 = vpack.c.bf16 %v5360, %v5359
    %v5371 = vpack.c.bf16 %v5362, %v5361
    %v5372 = vpack.c.bf16 %v5364, %v5363
    %v5374 = vsel %vm598, %v5365, 0
    %v5377 = vsel %vm598, %v5366, 0
    %v5380 = vsel %vm598, %v5367, 0
    %v5383 = vsel %vm598, %v5368, 0
    %v5386 = vsel %vm598, %v5369, 0
    %v5389 = vsel %vm598, %v5370, 0
    %v5392 = vsel %vm598, %v5371, 0
    %v5395 = vsel %vm598, %v5372, 0
    %5397 = vmatprep.subr.bf16.mxu0 0
    %5398 = vmatpush1.bf16.msra.mxu0 %v915
    %5399 = vmatprep.subr.bf16.mxu0 0
    %5400 = vmatpush1.bf16.msra.mxu0 0
    %5401 = vmatprep.subr.bf16.mxu0 0
    %5402 = vmatpush1.bf16.msra.mxu0 0
    %5403 = vmatprep.subr.bf16.mxu0 0
    %5404 = vmatpush1.bf16.msra.mxu0 0
    %5405 = vmatprep.subr.bf16.mxu0 0
    %5406 = vmatpush1.bf16.msra.mxu0 0
    %5407 = vmatprep.subr.bf16.mxu0 0
    %5408 = vmatpush1.bf16.msra.mxu0 0
    %5409 = vmatprep.subr.bf16.mxu0 0
    %5410 = vmatpush1.bf16.msra.mxu0 0
    %5411 = vmatprep.subr.bf16.mxu0 0
    %5412 = vmatpush1.bf16.msra.mxu0 0
    %5413 = vmatprep.subr.bf16.mxu0 0
    %5414 = vmatpush1.bf16.msra.mxu0 0
    %5415 = vmatprep.subr.bf16.mxu0 0
    %5416 = vmatpush1.bf16.msra.mxu0 0
    %5417 = vmatprep.subr.bf16.mxu0 0
    %5418 = vmatpush1.bf16.msra.mxu0 0
    %5419 = vmatprep.subr.bf16.mxu0 0
    %5420 = vmatpush1.bf16.msra.mxu0 0
    %5421 = vmatprep.subr.bf16.mxu0 0
    %5422 = vmatpush1.bf16.msra.mxu0 0
    %5423 = vmatprep.subr.bf16.mxu0 0
    %5424 = vmatpush1.bf16.msra.mxu0 0
    %5425 = vmatprep.subr.bf16.mxu0 0
    %5426 = vmatpush1.bf16.msra.mxu0 0
    %5427 = vmatprep.subr.bf16.mxu0 0
    %5428 = vmatpush1.bf16.msra.mxu0 0
    %5429 = vmatprep.mubr.bf16.mxu0 0
    %5430 = vmatmul.mubr.bf16.gmra.mrb[0].mxu0 %v5374
    %v5431 = vpop.f32.mrb[0].mxu0
    %v5432 = vadd.f32 0.0, %v5431
    %v5433 = vpop.f32.mrb[0].mxu0
    %v5434 = vpop.f32.mrb[0].mxu0
    %v5435 = vadd.f32 0.0, %v5434
    %v5436 = vpop.f32.mrb[0].mxu0
    %5437 = vmatprep.mubr.bf16.mxu0 0
    %5438 = vmatmul.mubr.bf16.gmra.mrb[0].mxu0 %v5377
    %v5439 = vpop.f32.mrb[0].mxu0
    %v5440 = vadd.f32 0.0, %v5439
    %v5441 = vpop.f32.mrb[0].mxu0
    %v5442 = vpop.f32.mrb[0].mxu0
    %v5443 = vadd.f32 0.0, %v5442
    %v5444 = vpop.f32.mrb[0].mxu0
    %5445 = vmatprep.mubr.bf16.mxu0 0
    %5446 = vmatmul.mubr.bf16.gmra.mrb[0].mxu0 %v5380
    %v5447 = vpop.f32.mrb[0].mxu0
    %v5448 = vadd.f32 0.0, %v5447
    %v5449 = vpop.f32.mrb[0].mxu0
    %v5450 = vpop.f32.mrb[0].mxu0
    %v5451 = vadd.f32 0.0, %v5450
    %v5452 = vpop.f32.mrb[0].mxu0
    %5453 = vmatprep.mubr.bf16.mxu0 0
    %5454 = vmatmul.mubr.bf16.gmra.mrb[0].mxu0 %v5383
    %v5455 = vpop.f32.mrb[0].mxu0
    %v5456 = vadd.f32 0.0, %v5455
    %v5457 = vpop.f32.mrb[0].mxu0
    %v5458 = vpop.f32.mrb[0].mxu0
    %v5459 = vadd.f32 0.0, %v5458
    %v5460 = vpop.f32.mrb[0].mxu0
    %5461 = vmatprep.mubr.bf16.mxu0 0
    %5462 = vmatmul.mubr.bf16.gmra.mrb[0].mxu0 %v5386
    %v5463 = vpop.f32.mrb[0].mxu0
    %v5464 = vadd.f32 0.0, %v5463
    %v5465 = vpop.f32.mrb[0].mxu0
    %v5466 = vpop.f32.mrb[0].mxu0
    %v5467 = vadd.f32 0.0, %v5466
    %v5468 = vpop.f32.mrb[0].mxu0
    %5469 = vmatprep.mubr.bf16.mxu0 0
    %5470 = vmatmul.mubr.bf16.gmra.mrb[0].mxu0 %v5389
    %v5471 = vpop.f32.mrb[0].mxu0
    %v5472 = vadd.f32 0.0, %v5471
    %v5473 = vpop.f32.mrb[0].mxu0
    %v5474 = vpop.f32.mrb[0].mxu0
    %v5475 = vadd.f32 0.0, %v5474
    %v5476 = vpop.f32.mrb[0].mxu0
    %5477 = vmatprep.mubr.bf16.mxu0 0
    %5478 = vmatmul.mubr.bf16.gmra.mrb[0].mxu0 %v5392
    %v5479 = vpop.f32.mrb[0].mxu0
    %v5480 = vadd.f32 0.0, %v5479
    %v5481 = vpop.f32.mrb[0].mxu0
    %v5482 = vpop.f32.mrb[0].mxu0
    %v5483 = vadd.f32 0.0, %v5482
    %v5484 = vpop.f32.mrb[0].mxu0
    %5485 = vmatprep.mubr.bf16.mxu0 0
    %5486 = vmatmul.mubr.bf16.gmra.mrb[0].mxu0 %v5395
    %v5487 = vpop.f32.mrb[0].mxu0
    %v5488 = vadd.f32 0.0, %v5487
    %v5489 = vpop.f32.mrb[0].mxu0
    %v5490 = vpop.f32.mrb[0].mxu0
    %v5491 = vadd.f32 0.0, %v5490
    %v5492 = vpop.f32.mrb[0].mxu0
    %5493 = vdwg.mxu0
    %5496 = vrot.lane.b32.xlu0 %v4711, 64
    %v5497 = vpop.permute.xlu0 %5496
    %5498 = vrot.lane.b32.xlu0 %v4714, 64
    %v5499 = vpop.permute.xlu0 %5498
    %v5502 = vmul.f32 %v5432, %v5497
    %v5503 = vmul.f32 %v5435, %v5497
    %v5504 = vmul.f32 %v5440, %v5497
    %v5505 = vmul.f32 %v5443, %v5497
    %v5506 = vmul.f32 %v5448, %v5497
    %v5507 = vmul.f32 %v5451, %v5497
    %v5508 = vmul.f32 %v5456, %v5497
    %v5509 = vmul.f32 %v5459, %v5497
    %v5510 = vmul.f32 %v5464, %v5499
    %v5511 = vmul.f32 %v5467, %v5499
    %v5512 = vmul.f32 %v5472, %v5499
    %v5513 = vmul.f32 %v5475, %v5499
    %v5514 = vmul.f32 %v5480, %v5499
    %v5515 = vmul.f32 %v5483, %v5499
    %v5516 = vmul.f32 %v5488, %v5499
    %v5517 = vmul.f32 %v5491, %v5499
    %v5518 = vsel %vm196, %v5502, 0.0
    %v5519 = vrot.slane %v5518, 4
    %v5520 = vadd.f32 %v5518, %v5519
    %v5521 = vrot.slane %v5520, 2
    %v5522 = vadd.f32 %v5520, %v5521
    %v5523 = vrot.slane %v5522, 1
    %v5524 = vadd.f32 %v5522, %v5523
    %v5525 = vsel %vm196, %v5503, 0.0
    %v5526 = vrot.slane %v5525, 4
    %v5527 = vadd.f32 %v5525, %v5526
    %v5528 = vrot.slane %v5527, 2
    %v5529 = vadd.f32 %v5527, %v5528
    %v5530 = vrot.slane %v5529, 1
    %v5531 = vadd.f32 %v5529, %v5530
    %v5532 = vsel %vm196, %v5504, 0.0
    %v5533 = vrot.slane %v5532, 4
    %v5534 = vadd.f32 %v5532, %v5533
    %v5535 = vrot.slane %v5534, 2
    %v5536 = vadd.f32 %v5534, %v5535
    %v5537 = vrot.slane %v5536, 1
    %v5538 = vadd.f32 %v5536, %v5537
    %v5539 = vsel %vm196, %v5505, 0.0
    %v5540 = vrot.slane %v5539, 4
    %v5541 = vadd.f32 %v5539, %v5540
    %v5542 = vrot.slane %v5541, 2
    %v5543 = vadd.f32 %v5541, %v5542
    %v5544 = vrot.slane %v5543, 1
    %v5545 = vadd.f32 %v5543, %v5544
    %v5546 = vsel %vm196, %v5506, 0.0
    %v5547 = vrot.slane %v5546, 4
    %v5548 = vadd.f32 %v5546, %v5547
    %v5549 = vrot.slane %v5548, 2
    %v5550 = vadd.f32 %v5548, %v5549
    %v5551 = vrot.slane %v5550, 1
    %v5552 = vadd.f32 %v5550, %v5551
    %v5553 = vsel %vm196, %v5507, 0.0
    %v5554 = vrot.slane %v5553, 4
    %v5555 = vadd.f32 %v5553, %v5554
    %v5556 = vrot.slane %v5555, 2
    %v5557 = vadd.f32 %v5555, %v5556
    %v5558 = vrot.slane %v5557, 1
    %v5559 = vadd.f32 %v5557, %v5558
    %v5560 = vsel %vm196, %v5508, 0.0
    %v5561 = vrot.slane %v5560, 4
    %v5562 = vadd.f32 %v5560, %v5561
    %v5563 = vrot.slane %v5562, 2
    %v5564 = vadd.f32 %v5562, %v5563
    %v5565 = vrot.slane %v5564, 1
    %v5566 = vadd.f32 %v5564, %v5565
    %v5567 = vsel %vm196, %v5509, 0.0
    %v5568 = vrot.slane %v5567, 4
    %v5569 = vadd.f32 %v5567, %v5568
    %v5570 = vrot.slane %v5569, 2
    %v5571 = vadd.f32 %v5569, %v5570
    %v5572 = vrot.slane %v5571, 1
    %v5573 = vadd.f32 %v5571, %v5572
    %v5574 = vsel %vm196, %v5510, 0.0
    %v5575 = vrot.slane %v5574, 4
    %v5576 = vadd.f32 %v5574, %v5575
    %v5577 = vrot.slane %v5576, 2
    %v5578 = vadd.f32 %v5576, %v5577
    %v5579 = vrot.slane %v5578, 1
    %v5580 = vadd.f32 %v5578, %v5579
    %v5581 = vsel %vm196, %v5511, 0.0
    %v5582 = vrot.slane %v5581, 4
    %v5583 = vadd.f32 %v5581, %v5582
    %v5584 = vrot.slane %v5583, 2
    %v5585 = vadd.f32 %v5583, %v5584
    %v5586 = vrot.slane %v5585, 1
    %v5587 = vadd.f32 %v5585, %v5586
    %v5588 = vsel %vm196, %v5512, 0.0
    %v5589 = vrot.slane %v5588, 4
    %v5590 = vadd.f32 %v5588, %v5589
    %v5591 = vrot.slane %v5590, 2
    %v5592 = vadd.f32 %v5590, %v5591
    %v5593 = vrot.slane %v5592, 1
    %v5594 = vadd.f32 %v5592, %v5593
    %v5595 = vsel %vm196, %v5513, 0.0
    %v5596 = vrot.slane %v5595, 4
    %v5597 = vadd.f32 %v5595, %v5596
    %v5598 = vrot.slane %v5597, 2
    %v5599 = vadd.f32 %v5597, %v5598
    %v5600 = vrot.slane %v5599, 1
    %v5601 = vadd.f32 %v5599, %v5600
    %v5602 = vsel %vm196, %v5514, 0.0
    %v5603 = vrot.slane %v5602, 4
    %v5604 = vadd.f32 %v5602, %v5603
    %v5605 = vrot.slane %v5604, 2
    %v5606 = vadd.f32 %v5604, %v5605
    %v5607 = vrot.slane %v5606, 1
    %v5608 = vadd.f32 %v5606, %v5607
    %v5609 = vsel %vm196, %v5515, 0.0
    %v5610 = vrot.slane %v5609, 4
    %v5611 = vadd.f32 %v5609, %v5610
    %v5612 = vrot.slane %v5611, 2
    %v5613 = vadd.f32 %v5611, %v5612
    %v5614 = vrot.slane %v5613, 1
    %v5615 = vadd.f32 %v5613, %v5614
    %v5616 = vsel %vm196, %v5516, 0.0
    %v5617 = vrot.slane %v5616, 4
    %v5618 = vadd.f32 %v5616, %v5617
    %v5619 = vrot.slane %v5618, 2
    %v5620 = vadd.f32 %v5618, %v5619
    %v5621 = vrot.slane %v5620, 1
    %v5622 = vadd.f32 %v5620, %v5621
    %v5623 = vsel %vm196, %v5517, 0.0
    %v5624 = vrot.slane %v5623, 4
    %v5625 = vadd.f32 %v5623, %v5624
    %v5626 = vrot.slane %v5625, 2
    %v5627 = vadd.f32 %v5625, %v5626
    %v5628 = vrot.slane %v5627, 1
    %v5629 = vadd.f32 %v5627, %v5628
    %v5630 = vld [vmem:[#allocation5 + $0x4a0] sm:$0xf]
    %v5631 = vld [vmem:[#allocation5 + $0x4a8] sm:$0xf]
    %v5632 = vld [vmem:[#allocation5 + $0x4b0] sm:$0xf]
    %v5633 = vld [vmem:[#allocation5 + $0x4b8] sm:$0xf]
    %v5634 = vld [vmem:[#allocation5 + $0x4c0] sm:$0xf]
    %v5635 = vld [vmem:[#allocation5 + $0x4c8] sm:$0xf]
    %v5636 = vld [vmem:[#allocation5 + $0x4d0] sm:$0xf]
    %v5637 = vld [vmem:[#allocation5 + $0x4d8] sm:$0xf]
    %v5638 = vpack.c.bf16 %v5524, %v5524
    %v5639 = vpack.c.bf16 %v5531, %v5531
    %v5640 = vpack.c.bf16 %v5538, %v5538
    %v5641 = vpack.c.bf16 %v5545, %v5545
    %v5642 = vpack.c.bf16 %v5552, %v5552
    %v5643 = vpack.c.bf16 %v5559, %v5559
    %v5644 = vpack.c.bf16 %v5566, %v5566
    %v5645 = vpack.c.bf16 %v5573, %v5573
    %v5646 = vpack.c.bf16 %v5580, %v5580
    %v5647 = vpack.c.bf16 %v5587, %v5587
    %v5648 = vpack.c.bf16 %v5594, %v5594
    %v5649 = vpack.c.bf16 %v5601, %v5601
    %v5650 = vpack.c.bf16 %v5608, %v5608
    %v5651 = vpack.c.bf16 %v5615, %v5615
    %v5652 = vpack.c.bf16 %v5622, %v5622
    %v5653 = vpack.c.bf16 %v5629, %v5629
    %v5670 = vunpack.c.l.b16 %v5638
    %v5671 = vunpack.c.l.b16 %v5639
    %v5672 = vunpack.c.l.b16 %v5640
    %v5673 = vunpack.c.l.b16 %v5641
    %v5674 = vunpack.c.l.b16 %v5642
    %v5675 = vunpack.c.l.b16 %v5643
    %v5676 = vunpack.c.l.b16 %v5644
    %v5677 = vunpack.c.l.b16 %v5645
    %v5678 = vunpack.c.l.b16 %v5646
    %v5679 = vunpack.c.l.b16 %v5647
    %v5680 = vunpack.c.l.b16 %v5648
    %v5681 = vunpack.c.l.b16 %v5649
    %v5682 = vunpack.c.l.b16 %v5650
    %v5683 = vunpack.c.l.b16 %v5651
    %v5684 = vunpack.c.l.b16 %v5652
    %v5685 = vunpack.c.l.b16 %v5653
    %v5686 = vsel %vm1222, %v5671, %v5670
    %v5687 = vsel %vm1224, %v5672, %v5686
    %v5688 = vsel %vm1226, %v5673, %v5687
    %v5689 = vsel %vm1228, %v5674, %v5688
    %v5690 = vsel %vm1230, %v5675, %v5689
    %v5691 = vsel %vm1232, %v5676, %v5690
    %v5692 = vsel %vm1234, %v5677, %v5691
    %v5693 = vsel %vm1222, %v5679, %v5678
    %v5694 = vsel %vm1224, %v5680, %v5693
    %v5695 = vsel %vm1226, %v5681, %v5694
    %v5696 = vsel %vm1228, %v5682, %v5695
    %v5697 = vsel %vm1230, %v5683, %v5696
    %v5698 = vsel %vm1232, %v5684, %v5697
    %v5699 = vsel %vm1234, %v5685, %v5698
    %v5700 = vpack.c.b16 %v5699, %v5692
    %v5709 = vunpack.c.l.b16 %v5630
    %v5710 = vunpack.c.l.b16 %v5631
    %v5711 = vunpack.c.l.b16 %v5632
    %v5712 = vunpack.c.l.b16 %v5633
    %v5713 = vunpack.c.l.b16 %v5634
    %v5714 = vunpack.c.l.b16 %v5635
    %v5715 = vunpack.c.l.b16 %v5636
    %v5716 = vunpack.c.l.b16 %v5637
    %v5717 = vpack.c.b16 %v5710, %v5709
    %v5718 = vpack.c.b16 %v5712, %v5711
    %v5719 = vpack.c.b16 %v5714, %v5713
    %v5720 = vpack.c.b16 %v5716, %v5715
    %v5726 = vsel %vm196, %v5700, 0
    %5728 = vmatprep.subr.bf16.mxu0 0
    %5729 = vmatpush1.bf16.msra.mxu0 %v5717
    %5730 = vmatprep.subr.bf16.mxu0 0
    %5731 = vmatpush1.bf16.msra.mxu0 %v5718
    %5732 = vmatprep.subr.bf16.mxu0 0
    %5733 = vmatpush1.bf16.msra.mxu0 %v5719
    %5734 = vmatprep.subr.bf16.mxu0 0
    %5735 = vmatpush1.bf16.msra.mxu0 %v5720
    %5736 = vmatprep.subr.bf16.mxu0 0
    %5737 = vmatpush1.bf16.msra.mxu0 0
    %5738 = vmatprep.subr.bf16.mxu0 0
    %5739 = vmatpush1.bf16.msra.mxu0 0
    %5740 = vmatprep.subr.bf16.mxu0 0
    %5741 = vmatpush1.bf16.msra.mxu0 0
    %5742 = vmatprep.subr.bf16.mxu0 0
    %5743 = vmatpush1.bf16.msra.mxu0 0
    %5744 = vmatprep.subr.bf16.mxu0 0
    %5745 = vmatpush1.bf16.msra.mxu0 0
    %5746 = vmatprep.subr.bf16.mxu0 0
    %5747 = vmatpush1.bf16.msra.mxu0 0
    %5748 = vmatprep.subr.bf16.mxu0 0
    %5749 = vmatpush1.bf16.msra.mxu0 0
    %5750 = vmatprep.subr.bf16.mxu0 0
    %5751 = vmatpush1.bf16.msra.mxu0 0
    %5752 = vmatprep.subr.bf16.mxu0 0
    %5753 = vmatpush1.bf16.msra.mxu0 0
    %5754 = vmatprep.subr.bf16.mxu0 0
    %5755 = vmatpush1.bf16.msra.mxu0 0
    %5756 = vmatprep.subr.bf16.mxu0 0
    %5757 = vmatpush1.bf16.msra.mxu0 0
    %5758 = vmatprep.subr.bf16.mxu0 0
    %5759 = vmatpush1.bf16.msra.mxu0 0
    %5760 = vmatprep.mubr.bf16.mxu0 0
    %5761 = vmatmul.mubr.bf16.gmra.mrb[0].mxu0 %v5726
    %v5762 = vpop.f32.mrb[0].mxu0
    %v5763 = vadd.f32 0.0, %v5762
    %v5764 = vpop.f32.mrb[0].mxu0
    %v5765 = vpop.f32.mrb[0].mxu0
    %v5766 = vadd.f32 0.0, %v5765
    %v5767 = vpop.f32.mrb[0].mxu0
    %5768 = vdwg.mxu0
    %v5769 = vadd.f32 %v3349, %v5763
    %v5770 = vadd.f32 %v3350, %v5766
    %v5771 = vld [vmem:[#allocation7 + $0x1b0] ss:$0 sm:$0xff]
    %v5772 = vadd.f32 %v5769, %v5771
    %v5773 = vadd.f32 %v5770, %v5771
    %v5774 = vld [vmem:[#allocation7 + $0x120] sm:$0x3]
    %v5775 = vsel %vm196, %v5772, 0.0
    %5776 = vadd.xlane.f32.xlu0 %v5775
    %v5777 = vpop.xlane.xlu0 %5776
    %v5778 = vsel %vm196, %v5773, 0.0
    %5779 = vadd.xlane.f32.xlu0 %v5778
    %v5780 = vpop.xlane.xlu0 %5779
    %v5781 = vsel %vm1320, %v5772, 0.0
    %v5782 = vsel %vm1320, %v5773, 0.0
    %v5783 = vsel %vm196, %v5781, 0.0
    %5784 = vadd.xlane.f32.xlu0 %v5783
    %v5785 = vpop.xlane.xlu0 %5784
    %v5786 = vsel %vm196, %v5782, 0.0
    %5787 = vadd.xlane.f32.xlu0 %v5786
    %v5788 = vpop.xlane.xlu0 %5787
    %v5789 = vsub.f32 %v5777, %v5785
    %v5790 = vsub.f32 %v5780, %v5788
    %v5791 = vsel %vm1320, %v5785, %v5789
    %v5792 = vsel %vm1320, %v5788, %v5790
    %v5793 = vmul.f32 %v5791, 0.03125
    %v5794 = vmul.f32 %v5792, 0.03125
    %v5795 = vsub.f32 %v5772, %v5793
    %v5796 = vsub.f32 %v5773, %v5794
    %v5797 = vmul.f32 %v5795, %v5795
    %v5798 = vmul.f32 %v5796, %v5796
    %v5799 = vsel %vm196, %v5797, 0.0
    %5800 = vadd.xlane.f32.xlu0 %v5799
    %v5801 = vpop.xlane.xlu0 %5800
    %v5802 = vsel %vm196, %v5798, 0.0
    %5803 = vadd.xlane.f32.xlu0 %v5802
    %v5804 = vpop.xlane.xlu0 %5803
    %v5805 = vsel %vm1320, %v5797, 0.0
    %v5806 = vsel %vm1320, %v5798, 0.0
    %v5807 = vsel %vm196, %v5805, 0.0
    %5808 = vadd.xlane.f32.xlu0 %v5807
    %v5809 = vpop.xlane.xlu0 %5808
    %v5810 = vsel %vm196, %v5806, 0.0
    %5811 = vadd.xlane.f32.xlu0 %v5810
    %v5812 = vpop.xlane.xlu0 %5811
    %v5813 = vsub.f32 %v5801, %v5809
    %v5814 = vsub.f32 %v5804, %v5812
    %v5815 = vsel %vm1320, %v5809, %v5813
    %v5816 = vsel %vm1320, %v5812, %v5814
    %v5817 = vmul.f32 %v5815, 0.03125
    %v5818 = vmul.f32 %v5816, 0.03125
    %v5819 = vadd.f32 %v5817, 1e-05
    %v5820 = vadd.f32 %v5818, 1e-05
    %v5821 = vrsqrt.pop %v5819
    %v5822 = vrsqrt.pop %v5820
    %v5823 = vmul.f32 %v5795, %v5821
    %v5824 = vmul.f32 %v5796, %v5822
    %v5825 = vlaneseq
    %v5826 = vshrl.u32 %v5825, 7
    %v5827 = vsub.s32 0, %v5826
    %v5828 = vrot.slane %v5774, %v5827
    %v5829 = vmul.f32 %v5823, %v5828
    %v5830 = vmul.f32 %v5824, %v5828
    %v5831 = vlaneseq
    %v5832 = vshrl.u32 %v5831, 7
    %v5833 = vsub.s32 1, %v5832
    %v5834 = vrot.slane %v5774, %v5833
    %v5835 = vadd.f32 %v5829, %v5834
    %v5836 = vadd.f32 %v5830, %v5834
    %v5837 = vld [vmem:[#allocation5 + $0x4e0] sm:$0xff]
    %v5838 = vld [vmem:[#allocation5 + $0x4e8] sm:$0xff]
    %v5839 = vld [vmem:[#allocation5 + $0x4f0] sm:$0xff]
    %v5840 = vld [vmem:[#allocation5 + $0x4f8] sm:$0xff]
    %v5841 = vld [vmem:[#allocation5 + $0x500] sm:$0xff]
    %v5842 = vld [vmem:[#allocation5 + $0x508] sm:$0xff]
    %v5843 = vld [vmem:[#allocation5 + $0x510] sm:$0xff]
    %v5844 = vld [vmem:[#allocation5 + $0x518] sm:$0xff]
    %v5845 = vpack.c.bf16 %v5836, %v5835
    %s5846 = scalar_lea.vmem [#allocation7], 448
    %v5847 = vld [vmem:[%s5846] ss:$8 sm:$0x3]
    %v5849 = vlaneseq
    %v5850 = vshrl.u32 %v5849, 7
    %v5851 = vsub.s32 0, %v5850
    %v5852 = vrot.slane %v5847, %v5851
    %v5853 = vlaneseq
    %v5854 = vshrl.u32 %v5853, 7
    %v5855 = vsub.s32 1, %v5854
    %v5856 = vrot.slane %v5847, %v5855
    %v5867 = vunpack.c.l.b16 %v5837
    %v5868 = vunpack.c.h.b16 %v5837
    %v5869 = vunpack.c.l.b16 %v5838
    %v5870 = vunpack.c.h.b16 %v5838
    %v5871 = vunpack.c.l.b16 %v5839
    %v5872 = vunpack.c.h.b16 %v5839
    %v5873 = vunpack.c.l.b16 %v5840
    %v5874 = vunpack.c.h.b16 %v5840
    %v5875 = vunpack.c.l.b16 %v5841
    %v5876 = vunpack.c.h.b16 %v5841
    %v5877 = vunpack.c.l.b16 %v5842
    %v5878 = vunpack.c.h.b16 %v5842
    %v5879 = vunpack.c.l.b16 %v5843
    %v5880 = vunpack.c.h.b16 %v5843
    %v5881 = vunpack.c.l.b16 %v5844
    %v5882 = vunpack.c.h.b16 %v5844
    %v5883 = vpack.c.b16 %v5869, %v5867
    %v5884 = vpack.c.b16 %v5870, %v5868
    %v5885 = vpack.c.b16 %v5873, %v5871
    %v5886 = vpack.c.b16 %v5874, %v5872
    %v5887 = vpack.c.b16 %v5877, %v5875
    %v5888 = vpack.c.b16 %v5878, %v5876
    %v5889 = vpack.c.b16 %v5881, %v5879
    %v5890 = vpack.c.b16 %v5882, %v5880
    %v5900 = vsel %vm196, %v5845, 0
    %5902 = vmatprep.subr.bf16.mxu0 %v5884
    %5903 = vmatpush1.bf16.msra.mxu0 %v5883
    %5904 = vmatprep.subr.bf16.mxu0 %v5886
    %5905 = vmatpush1.bf16.msra.mxu0 %v5885
    %5906 = vmatprep.subr.bf16.mxu0 %v5888
    %5907 = vmatpush1.bf16.msra.mxu0 %v5887
    %5908 = vmatprep.subr.bf16.mxu0 %v5890
    %5909 = vmatpush1.bf16.msra.mxu0 %v5889
    %5910 = vmatprep.subr.bf16.mxu0 0
    %5911 = vmatpush1.bf16.msra.mxu0 0
    %5912 = vmatprep.subr.bf16.mxu0 0
    %5913 = vmatpush1.bf16.msra.mxu0 0
    %5914 = vmatprep.subr.bf16.mxu0 0
    %5915 = vmatpush1.bf16.msra.mxu0 0
    %5916 = vmatprep.subr.bf16.mxu0 0
    %5917 = vmatpush1.bf16.msra.mxu0 0
    %5918 = vmatprep.subr.bf16.mxu0 0
    %5919 = vmatpush1.bf16.msra.mxu0 0
    %5920 = vmatprep.subr.bf16.mxu0 0
    %5921 = vmatpush1.bf16.msra.mxu0 0
    %5922 = vmatprep.subr.bf16.mxu0 0
    %5923 = vmatpush1.bf16.msra.mxu0 0
    %5924 = vmatprep.subr.bf16.mxu0 0
    %5925 = vmatpush1.bf16.msra.mxu0 0
    %5926 = vmatprep.subr.bf16.mxu0 0
    %5927 = vmatpush1.bf16.msra.mxu0 0
    %5928 = vmatprep.subr.bf16.mxu0 0
    %5929 = vmatpush1.bf16.msra.mxu0 0
    %5930 = vmatprep.subr.bf16.mxu0 0
    %5931 = vmatpush1.bf16.msra.mxu0 0
    %5932 = vmatprep.subr.bf16.mxu0 0
    %5933 = vmatpush1.bf16.msra.mxu0 0
    %5934 = vmatprep.mubr.bf16.mxu0 0
    %5935 = vmatmul.mubr.bf16.gmra.mrb[0].mxu0 %v5900
    %v5936 = vpop.f32.mrb[0].mxu0
    %v5937 = vadd.f32 %v5852, %v5936
    %v5938 = vpop.f32.mrb[0].mxu0
    %v5939 = vadd.f32 %v5856, %v5938
    %v5940 = vpop.f32.mrb[0].mxu0
    %v5941 = vadd.f32 %v5852, %v5940
    %v5942 = vpop.f32.mrb[0].mxu0
    %v5943 = vadd.f32 %v5856, %v5942
    %5944 = vdwg.mxu0
    %v5945 = vmax.f32 %v5937, 0.0
    %v5946 = vmax.f32 %v5939, 0.0
    %v5947 = vmax.f32 %v5941, 0.0
    %v5948 = vmax.f32 %v5943, 0.0
    %v5949 = vld [vmem:[#allocation5 + $0x520] sm:$0xf]
    %v5950 = vld [vmem:[#allocation5 + $0x528] sm:$0xf]
    %v5951 = vld [vmem:[#allocation5 + $0x530] sm:$0xf]
    %v5952 = vld [vmem:[#allocation5 + $0x538] sm:$0xf]
    %v5953 = vld [vmem:[#allocation5 + $0x540] sm:$0xf]
    %v5954 = vld [vmem:[#allocation5 + $0x548] sm:$0xf]
    %v5955 = vld [vmem:[#allocation5 + $0x550] sm:$0xf]
    %v5956 = vld [vmem:[#allocation5 + $0x558] sm:$0xf]
    %v5957 = vld [vmem:[#allocation5 + $0x560] sm:$0xf]
    %v5958 = vld [vmem:[#allocation5 + $0x568] sm:$0xf]
    %v5959 = vld [vmem:[#allocation5 + $0x570] sm:$0xf]
    %v5960 = vld [vmem:[#allocation5 + $0x578] sm:$0xf]
    %v5961 = vld [vmem:[#allocation5 + $0x580] sm:$0xf]
    %v5962 = vld [vmem:[#allocation5 + $0x588] sm:$0xf]
    %v5963 = vld [vmem:[#allocation5 + $0x590] sm:$0xf]
    %v5964 = vld [vmem:[#allocation5 + $0x598] sm:$0xf]
    %v5965 = vld [vmem:[#allocation5 + $0x5a0] sm:$0xf]
    %v5966 = vld [vmem:[#allocation5 + $0x5a8] sm:$0xf]
    %v5967 = vld [vmem:[#allocation5 + $0x5b0] sm:$0xf]
    %v5968 = vld [vmem:[#allocation5 + $0x5b8] sm:$0xf]
    %v5969 = vld [vmem:[#allocation5 + $0x5c0] sm:$0xf]
    %v5970 = vld [vmem:[#allocation5 + $0x5c8] sm:$0xf]
    %v5971 = vld [vmem:[#allocation5 + $0x5d0] sm:$0xf]
    %v5972 = vld [vmem:[#allocation5 + $0x5d8] sm:$0xf]
    %v5973 = vld [vmem:[#allocation5 + $0x5e0] sm:$0xf]
    %v5974 = vld [vmem:[#allocation5 + $0x5e8] sm:$0xf]
    %v5975 = vld [vmem:[#allocation5 + $0x5f0] sm:$0xf]
    %v5976 = vld [vmem:[#allocation5 + $0x5f8] sm:$0xf]
    %v5977 = vld [vmem:[#allocation5 + $0x600] sm:$0xf]
    %v5978 = vld [vmem:[#allocation5 + $0x608] sm:$0xf]
    %v5979 = vld [vmem:[#allocation5 + $0x610] sm:$0xf]
    %v5980 = vld [vmem:[#allocation5 + $0x618] sm:$0xf]
    %v5981 = vpack.c.bf16 %v5947, %v5945
    %v5982 = vpack.c.bf16 %v5948, %v5946
    %v5983 = vld [vmem:[#allocation7 + $0x1d0] ss:$0 sm:$0xff]
    %v6016 = vunpack.c.l.b16 %v5949
    %v6017 = vunpack.c.l.b16 %v5950
    %v6018 = vunpack.c.l.b16 %v5951
    %v6019 = vunpack.c.l.b16 %v5952
    %v6020 = vunpack.c.l.b16 %v5953
    %v6021 = vunpack.c.l.b16 %v5954
    %v6022 = vunpack.c.l.b16 %v5955
    %v6023 = vunpack.c.l.b16 %v5956
    %v6024 = vunpack.c.l.b16 %v5957
    %v6025 = vunpack.c.l.b16 %v5958
    %v6026 = vunpack.c.l.b16 %v5959
    %v6027 = vunpack.c.l.b16 %v5960
    %v6028 = vunpack.c.l.b16 %v5961
    %v6029 = vunpack.c.l.b16 %v5962
    %v6030 = vunpack.c.l.b16 %v5963
    %v6031 = vunpack.c.l.b16 %v5964
    %v6032 = vunpack.c.l.b16 %v5965
    %v6033 = vunpack.c.l.b16 %v5966
    %v6034 = vunpack.c.l.b16 %v5967
    %v6035 = vunpack.c.l.b16 %v5968
    %v6036 = vunpack.c.l.b16 %v5969
    %v6037 = vunpack.c.l.b16 %v5970
    %v6038 = vunpack.c.l.b16 %v5971
    %v6039 = vunpack.c.l.b16 %v5972
    %v6040 = vunpack.c.l.b16 %v5973
    %v6041 = vunpack.c.l.b16 %v5974
    %v6042 = vunpack.c.l.b16 %v5975
    %v6043 = vunpack.c.l.b16 %v5976
    %v6044 = vunpack.c.l.b16 %v5977
    %v6045 = vunpack.c.l.b16 %v5978
    %v6046 = vunpack.c.l.b16 %v5979
    %v6047 = vunpack.c.l.b16 %v5980
    %v6048 = vpack.c.b16 %v6017, %v6016
    %v6049 = vpack.c.b16 %v6019, %v6018
    %v6050 = vpack.c.b16 %v6021, %v6020
    %v6051 = vpack.c.b16 %v6023, %v6022
    %v6052 = vpack.c.b16 %v6025, %v6024
    %v6053 = vpack.c.b16 %v6027, %v6026
    %v6054 = vpack.c.b16 %v6029, %v6028
    %v6055 = vpack.c.b16 %v6031, %v6030
    %v6056 = vpack.c.b16 %v6033, %v6032
    %v6057 = vpack.c.b16 %v6035, %v6034
    %v6058 = vpack.c.b16 %v6037, %v6036
    %v6059 = vpack.c.b16 %v6039, %v6038
    %v6060 = vpack.c.b16 %v6041, %v6040
    %v6061 = vpack.c.b16 %v6043, %v6042
    %v6062 = vpack.c.b16 %v6045, %v6044
    %v6063 = vpack.c.b16 %v6047, %v6046
    %6080 = vmatprep.subr.bf16.mxu0 0
    %6081 = vmatpush1.bf16.msra.mxu0 %v6048
    %6082 = vmatprep.subr.bf16.mxu0 0
    %6083 = vmatpush1.bf16.msra.mxu0 %v6049
    %6084 = vmatprep.subr.bf16.mxu0 0
    %6085 = vmatpush1.bf16.msra.mxu0 %v6050
    %6086 = vmatprep.subr.bf16.mxu0 0
    %6087 = vmatpush1.bf16.msra.mxu0 %v6051
    %6088 = vmatprep.subr.bf16.mxu0 0
    %6089 = vmatpush1.bf16.msra.mxu0 %v6052
    %6090 = vmatprep.subr.bf16.mxu0 0
    %6091 = vmatpush1.bf16.msra.mxu0 %v6053
    %6092 = vmatprep.subr.bf16.mxu0 0
    %6093 = vmatpush1.bf16.msra.mxu0 %v6054
    %6094 = vmatprep.subr.bf16.mxu0 0
    %6095 = vmatpush1.bf16.msra.mxu0 %v6055
    %6096 = vmatprep.subr.bf16.mxu0 0
    %6097 = vmatpush1.bf16.msra.mxu0 %v6056
    %6098 = vmatprep.subr.bf16.mxu0 0
    %6099 = vmatpush1.bf16.msra.mxu0 %v6057
    %6100 = vmatprep.subr.bf16.mxu0 0
    %6101 = vmatpush1.bf16.msra.mxu0 %v6058
    %6102 = vmatprep.subr.bf16.mxu0 0
    %6103 = vmatpush1.bf16.msra.mxu0 %v6059
    %6104 = vmatprep.subr.bf16.mxu0 0
    %6105 = vmatpush1.bf16.msra.mxu0 %v6060
    %6106 = vmatprep.subr.bf16.mxu0 0
    %6107 = vmatpush1.bf16.msra.mxu0 %v6061
    %6108 = vmatprep.subr.bf16.mxu0 0
    %6109 = vmatpush1.bf16.msra.mxu0 %v6062
    %6110 = vmatprep.subr.bf16.mxu0 0
    %6111 = vmatpush1.bf16.msra.mxu0 %v6063
    %6112 = vmatprep.mubr.bf16.mxu0 %v5982
    %6113 = vmatmul.mubr.bf16.gmra.mrb[0].mxu0 %v5981
    %v6114 = vpop.f32.mrb[0].mxu0
    %v6115 = vadd.f32 %v5983, %v6114
    %v6116 = vpop.f32.mrb[0].mxu0
    %v6117 = vpop.f32.mrb[0].mxu0
    %v6118 = vadd.f32 %v5983, %v6117
    %v6119 = vpop.f32.mrb[0].mxu0
    %6120 = vdwg.mxu0
    %v6121 = vadd.f32 %v5772, %v6115
    %v6122 = vadd.f32 %v5773, %v6118
    %6125 = vrot.lane.b32.xlu0 %v6121, 96
    %v6126 = vpop.permute.xlu0 %6125
    %6127 = vrot.lane.b32.xlu0 %v6122, 96
    %v6128 = vpop.permute.xlu0 %6127
    %v6131 = vadd.f32 %v6121, %v6126
    %v6132 = vadd.f32 %v6122, %v6128
    %v6133 = vld [vmem:[#allocation7 + $0x130] sm:$0x3]
    %v6134 = vsel %vm3416, %v6131, 0.0
    %6135 = vadd.xlane.f32.xlu0 %v6134
    %v6136 = vpop.xlane.xlu0 %6135
    %v6137 = vsel %vm3416, %v6132, 0.0
    %6138 = vadd.xlane.f32.xlu0 %v6137
    %v6139 = vpop.xlane.xlu0 %6138
    %v6140 = vmul.f32 %v6136, %v3420
    %v6141 = vmul.f32 %v6139, %v3420
    %v6142 = vsub.f32 %v6131, %v6140
    %v6143 = vsub.f32 %v6132, %v6141
    %v6144 = vmul.f32 %v6142, %v6142
    %v6145 = vmul.f32 %v6143, %v6143
    %v6146 = vsel %vm3416, %v6144, 0.0
    %6147 = vadd.xlane.f32.xlu0 %v6146
    %v6148 = vpop.xlane.xlu0 %6147
    %v6149 = vsel %vm3416, %v6145, 0.0
    %6150 = vadd.xlane.f32.xlu0 %v6149
    %v6151 = vpop.xlane.xlu0 %6150
    %v6152 = vmul.f32 %v6148, %v3420
    %v6153 = vmul.f32 %v6151, %v3420
    %v6154 = vadd.f32 %v6152, 1e-05
    %v6155 = vadd.f32 %v6153, 1e-05
    %v6156 = vrsqrt.pop %v6154
    %v6157 = vrsqrt.pop %v6155
    %v6158 = vmul.f32 %v6142, %v6156
    %v6159 = vmul.f32 %v6143, %v6157
    %v6160 = vlaneseq
    %v6161 = vshrl.u32 %v6160, 7
    %v6162 = vsub.s32 0, %v6161
    %v6163 = vrot.slane %v6133, %v6162
    %v6164 = vmul.f32 %v6158, %v6163
    %v6165 = vmul.f32 %v6159, %v6163
    %v6166 = vlaneseq
    %v6167 = vshrl.u32 %v6166, 7
    %v6168 = vsub.s32 1, %v6167
    %v6169 = vrot.slane %v6133, %v6168
    %v6170 = vadd.f32 %v6164, %v6169
    %v6171 = vadd.f32 %v6165, %v6169
    %6172 = vst.msk [vmem:[#allocation8] sm:$0xff] %vm3416, %v6170
    %6173 = vst.msk [vmem:[#allocation8 + $0x8] sm:$0xff] %vm3416, %v6171
    // Predicated region
    $region26: #{tpu_custom_call.1} parent=1 // pred_check
      _
    $region27: #{tpu_custom_call.1} parent=1 // pred_check_branch
      %6175 = sbr.rel (0) target = $region29
    $region28: #{tpu_custom_call.1} parent=1 // pred_region
      %s6177 = ssub.s32 256, 256
      %6178 = vsyncadd [#allocation4], %s6177
      %s6179 = sshll.u32 [#allocation8], 4
      %s6180 = int_to_ptr.vmem [resolvable:$true] %s6179
      %6185 = dma.vmem_to_hbm [thread:$0]  %s6180, 256, %s3, [#allocation4], 128, 128, 8
    $region29: #{tpu_custom_call.1} parent=1 // pred_fallthru
      _
    // Predicated region
    $region30: #{tpu_custom_call.1} parent=1 // pred_check
      _
    $region31: #{tpu_custom_call.1} parent=1 // pred_check_branch
      %6187 = sbr.rel (0) target = $region33
    $region32: #{tpu_custom_call.1} parent=1 // pred_region
      %6188 = dma.done [#allocation4], 256
    $region33: #{tpu_custom_call.1} parent=1 // pred_fallthru
      _
    %6189 = vsyncpa [#allocation3], 1
    %6190 = vsyncpa [#allocation6], 1
    %6191 = vsyncpa [#allocation4], 1

</llo_original>
